<compile_context>
chip_gen: v7x
topology: tpu7x:2x2x1
jax: 0.10.0
libtpu: 0.0.40
codegen_flags: <defaults>
</compile_context>

<pallas_src>
import jax
import jax.numpy as jnp
from jax.experimental import pallas as pl
from jax.experimental.pallas import tpu as pltpu


def _layernorm(x, g, b, eps=1e-5):
    mu = jnp.mean(x, axis=-1, keepdims=True)
    xc = x - mu
    var = jnp.mean(xc * xc, axis=-1, keepdims=True)
    return xc * jax.lax.rsqrt(var + eps) * g + b


def _text_encoder_kernel(eot_ref,                       # SMEM (scalar prefetch), (N_pad,) i32
                         prompts_ref, pos_ref,
                         wqkv_ref, wo_ref, w1_ref, w2_ref, proj_ref,
                         slab_ref,
                         out_ref):
    f32, bf16 = jnp.float32, jnp.bfloat16
    TB, L, D = prompts_ref.shape
    R = TB * L

    # Packed LN/bias slab: row 0 = b_mlp1 (4D wide); rows 1..7 = D-wide params.
    slab = slab_ref[...]
    bm1 = slab[0:1, :]
    ln1_g, ln1_b = slab[1:2, :D], slab[2:3, :D]
    ln2_g, ln2_b = slab[3:4, :D], slab[4:5, :D]
    lnf_g, lnf_b = slab[5:6, :D], slab[6:7, :D]
    bm2 = slab[7:8, :D]

    # x = prompts + positional_embedding ; residual stream kept in f32.
    x = prompts_ref[...].astype(f32) + pos_ref[...].astype(f32)[None]
    x2 = x.reshape(R, D)

    # ---- residual attention block (synthetic stand-in for the transformer) ----
    h = _layernorm(x2, ln1_g, ln1_b)
    qkv = jnp.dot(h.astype(bf16), wqkv_ref[...],
                  preferred_element_type=f32)                     # [R, 3D]
    # NOTE: 1/sqrt(D) is already folded into the q-columns of w_qkv (wrapper).
    q = qkv[:, :D].reshape(TB, L, D)
    k = qkv[:, D:2 * D].reshape(TB, L, D)
    v = qkv[:, 2 * D:].reshape(TB, L, D)

    s = jnp.einsum('bld,bmd->blm', q.astype(bf16), k.astype(bf16),
                   preferred_element_type=f32)                    # [TB, L, L]
    row = jax.lax.broadcasted_iota(jnp.int32, (L, L), 0)
    col = jax.lax.broadcasted_iota(jnp.int32, (L, L), 1)
    s = jnp.where((col <= row)[None], s, -1e30)                   # causal mask
    m = jnp.max(s, axis=-1, keepdims=True)
    e = jnp.exp(s - m)
    # approx reciprocal (EUP) -> ~1e-3 relative error vs exact softmax; within
    # the test tolerance.  Use approx=False if exact parity is required.
    p = (e * pl.reciprocal(jnp.sum(e, axis=-1, keepdims=True), approx=True)
         ).astype(bf16)

    attn = jnp.einsum('blm,bmd->bld', p, v.astype(bf16),
                      preferred_element_type=f32).reshape(R, D)
    attn = jnp.dot(attn.astype(bf16), wo_ref[...], preferred_element_type=f32)
    x2 = x2 + attn

    # ---- MLP block ----
    h = _layernorm(x2, ln2_g, ln2_b)
    hmid = jnp.dot(h.astype(bf16), w1_ref[...], preferred_element_type=f32)
    hmid = jax.nn.gelu(hmid + bm1).astype(bf16)     # cast right after GELU
    hout = jnp.dot(hmid, w2_ref[...], preferred_element_type=f32)
    x2 = x2 + hout + bm2

    # ---- EOT gather BEFORE ln_final (LN is per-row, so order commutes) ----
    b0 = pl.program_id(0) * TB
    sub = jax.lax.broadcasted_iota(jnp.int32, (TB, L), 0)
    lane = jax.lax.broadcasted_iota(jnp.int32, (TB, L), 1)
    onehot = jnp.zeros((TB, L), f32)
    for i in range(TB):                             # TB SMEM scalar reads, unrolled
        e_i = eot_ref[b0 + i]
        onehot = jnp.where((sub == i) & (lane == e_i), 1.0, onehot)
    feats = jnp.sum(onehot[:, :, None] * x2.reshape(TB, L, D), axis=1)   # [TB, D]

    # ---- ln_final + text_projection on [TB, D] only ----
    feats = _layernorm(feats, lnf_g, lnf_b)
    out_ref[...] = jnp.dot(feats.astype(bf16), proj_ref[...],
                           preferred_element_type=f32).astype(out_ref.dtype)


def init_params(key, *, seq_len, width, proj_dim):
    ks = jax.random.split(key, 6)
    s = 1.0 / (width ** 0.5)
    return {
        "positional_embedding": jax.random.normal(ks[0], (seq_len, width), jnp.float32) * 0.01,
        "w_qkv": jax.random.normal(ks[1], (width, 3 * width), jnp.float32) * s,
        "w_o": jax.random.normal(ks[2], (width, width), jnp.float32) * s,
        "ln1_g": jnp.ones((1, width), jnp.float32),
        "ln1_b": jnp.zeros((1, width), jnp.float32),
        "ln2_g": jnp.ones((1, width), jnp.float32),
        "ln2_b": jnp.zeros((1, width), jnp.float32),
        "w_mlp1": jax.random.normal(ks[3], (width, 4 * width), jnp.float32) * s,
        "b_mlp1": jnp.zeros((1, 4 * width), jnp.float32),
        "w_mlp2": jax.random.normal(ks[4], (4 * width, width), jnp.float32) * (1.0 / (4 * width) ** 0.5),
        "b_mlp2": jnp.zeros((1, width), jnp.float32),
        "lnf_g": jnp.ones((1, width), jnp.float32),
        "lnf_b": jnp.zeros((1, width), jnp.float32),
        "text_projection": jax.random.normal(ks[5], (width, proj_dim), jnp.float32) * s,
    }


def _round_up(x, m):
    return ((x + m - 1) // m) * m


def text_encoder_forward(prompts, tokenized_prompts, params, *, tb=None):
    """prompts: [N, L, D] f32; tokenized_prompts: [N, L] int -> [N, P] f32."""
    f32, bf16 = jnp.float32, jnp.bfloat16
    N, L0, D = prompts.shape
    P = params["text_projection"].shape[-1]

    # Pad the sequence axis to a multiple of 8 so (TB*L, D) <-> (TB, L, D)
    # reshapes are layout-neutral.  Padded positions sit at indices >= L0, so
    # the causal mask hides them from every real row and the EOT gather never
    # selects them.
    L = _round_up(L0, 8)

    # Batch tile: target >= 256 matmul rows per grid step (fills the 256-wide
    # MXU on v6e/v7x; a multiple of 128 rows on v5e).  For realistic batch
    # sizes this leaves many grid steps so the "parallel" axis can shard
    # across v7x's two TensorCores.
    if tb is None:
        tb = min(128, max(8, _round_up(pl.cdiv(256, L), 8)))
    TB = tb
    N_pad = _round_up(N, TB)

    # EOT position per prompt (argmax over token ids) -> SMEM via scalar prefetch.
    eot = jnp.argmax(tokenized_prompts, axis=-1).astype(jnp.int32)
    if N_pad != N:
        eot = jnp.pad(eot, ((0, N_pad - N),))

    prompts_p = prompts
    if N_pad != N or L != L0:
        prompts_p = jnp.pad(prompts, ((0, N_pad - N), (0, L - L0), (0, 0)))
    pos = params["positional_embedding"]
    if L != L0:
        pos = jnp.pad(pos, ((0, L - L0), (0, 0)))

    # Fold the 1/sqrt(D) attention scale into the q-columns of w_qkv.
    w_qkv = params["w_qkv"].at[:, :D].multiply(D ** -0.5)

    # bf16 for everything the MXU touches; f32 accumulation inside the kernel.
    prompts_b = prompts_p.astype(bf16)
    pos_b = pos.astype(bf16)
    wqkv_b = w_qkv.astype(bf16)
    wo_b = params["w_o"].astype(bf16)
    w1_b = params["w_mlp1"].astype(bf16)
    w2_b = params["w_mlp2"].astype(bf16)
    proj_b = params["text_projection"].astype(bf16)

    # Pack the 8 tiny LN/bias params into one lane-dense (8, 4D) f32 slab.
    slab = jnp.zeros((8, 4 * D), f32)
    slab = slab.at[0, :].set(params["b_mlp1"][0])
    slab = slab.at[1, :D].set(params["ln1_g"][0])
    slab = slab.at[2, :D].set(params["ln1_b"][0])
    slab = slab.at[3, :D].set(params["ln2_g"][0])
    slab = slab.at[4, :D].set(params["ln2_b"][0])
    slab = slab.at[5, :D].set(params["lnf_g"][0])
    slab = slab.at[6, :D].set(params["lnf_b"][0])
    slab = slab.at[7, :D].set(params["b_mlp2"][0])

    const2 = lambda i, eot_ref: (0, 0)             # resident blocks: no re-DMA
    grid = (N_pad // TB,)

    in_specs = [
        pl.BlockSpec((TB, L, D), lambda i, eot_ref: (i, 0, 0)),    # prompts
        pl.BlockSpec((L, D), const2),                               # positional emb
        pl.BlockSpec((D, 3 * D), const2),                           # w_qkv (scaled)
        pl.BlockSpec((D, D), const2),                               # w_o
        pl.BlockSpec((D, 4 * D), const2),                           # w_mlp1
        pl.BlockSpec((4 * D, D), const2),                           # w_mlp2
        pl.BlockSpec((D, P), const2),                               # text_projection
        pl.BlockSpec((8, 4 * D), const2),                           # LN/bias slab
    ]
    out_specs = pl.BlockSpec((TB, P), lambda i, eot_ref: (i, 0))    # lane-dense out

    R = N_pad * L
    flops = int(2 * R * D * 3 * D              # qkv projection
                + 2 * N_pad * L * L * D * 2    # q@k^T and p@v
                + 2 * R * D * D                # attention output projection
                + 2 * R * D * 4 * D * 2        # MLP
                + 2 * N_pad * D * P)           # text projection
    transcendentals = int(N_pad * L * L + R * 4 * D)
    bytes_accessed = int(prompts_b.size * 2 + pos_b.size * 2 + eot.size * 4
                         + wqkv_b.size * 2 + wo_b.size * 2 + w1_b.size * 2
                         + w2_b.size * 2 + proj_b.size * 2 + slab.size * 4
                         + N_pad * P * 4)

    out = pl.pallas_call(
        _text_encoder_kernel,
        out_shape=jax.ShapeDtypeStruct((N_pad, P), f32),
        grid_spec=pltpu.PrefetchScalarGridSpec(
            num_scalar_prefetch=1,             # eot indices -> SMEM
            grid=grid,
            in_specs=in_specs,
            out_specs=out_specs,
        ),
        compiler_params=pltpu.CompilerParams(
            dimension_semantics=("parallel",),    # shard batch steps across TCs
            vmem_limit_bytes=48 * 1024 * 1024,    # safe on v5e/v6e/v7x
        ),
        cost_estimate=pl.CostEstimate(
            flops=flops, transcendentals=transcendentals,
            bytes_accessed=bytes_accessed),
    )(eot, prompts_b, pos_b, wqkv_b, wo_b, w1_b, w2_b, proj_b, slab)

    return out[:N]


def _reference_forward(prompts, tokenized_prompts, params):
    """Pure-JAX reference of the same synthetic text encoder (mirrors bf16 casts
    and the 1/sqrt(D)-folded w_qkv)."""
    f32, bf16 = jnp.float32, jnp.bfloat16
    N, L, D = prompts.shape
    w_qkv = params["w_qkv"].at[:, :D].multiply(D ** -0.5).astype(bf16)
    x = (prompts.astype(bf16).astype(f32)
         + params["positional_embedding"].astype(bf16).astype(f32)[None])

    h = _layernorm(x, params["ln1_g"], params["ln1_b"])
    qkv = jnp.einsum('nld,de->nle', h.astype(bf16), w_qkv, preferred_element_type=f32)
    q, k, v = qkv[..., :D], qkv[..., D:2 * D], qkv[..., 2 * D:]
    s = jnp.einsum('nld,nmd->nlm', q.astype(bf16), k.astype(bf16),
                   preferred_element_type=f32)
    mask = jnp.tril(jnp.ones((L, L), bool))
    s = jnp.where(mask[None], s, -1e30)
    p = jax.nn.softmax(s, axis=-1).astype(bf16)
    attn = jnp.einsum('nlm,nmd->nld', p, v.astype(bf16), preferred_element_type=f32)
    attn = jnp.einsum('nld,de->nle', attn.astype(bf16), params["w_o"].astype(bf16),
                      preferred_element_type=f32)
    x = x + attn

    h = _layernorm(x, params["ln2_g"], params["ln2_b"])
    hmid = jax.nn.gelu(jnp.einsum('nld,de->nle', h.astype(bf16),
                                  params["w_mlp1"].astype(bf16),
                                  preferred_element_type=f32)
                       + params["b_mlp1"]).astype(bf16)
    hout = jnp.einsum('nle,ed->nld', hmid, params["w_mlp2"].astype(bf16),
                      preferred_element_type=f32)
    x = x + hout + params["b_mlp2"]

    xf = _layernorm(x, params["lnf_g"], params["lnf_b"])
    eot = jnp.argmax(tokenized_prompts, axis=-1)
    feats = xf[jnp.arange(N), eot]
    return jnp.dot(feats.astype(bf16), params["text_projection"].astype(bf16),
                   preferred_element_type=f32)


if __name__ == "__main__":
    # Small, lane/sublane-friendly shapes: 2 prompts, seq 8, width 128, proj 128.
    N, L, D, P = 2, 8, 128, 128

    key = jax.random.PRNGKey(0)
    k_prompt, k_tok, k_par = jax.random.split(key, 3)

    prompts = jax.random.normal(k_prompt, (N, L, D), jnp.float32) * 0.02
    tokenized = jax.random.randint(k_tok, (N, L), 1, 400, jnp.int32)
    eot_pos = jnp.array([5, 3], dtype=jnp.int32)
    tokenized = tokenized.at[jnp.arange(N), eot_pos].set(49406)   # EOT = largest id

    params = init_params(k_par, seq_len=L, width=D, proj_dim=P)

    out = text_encoder_forward(prompts, tokenized, params)
    out = jax.block_until_ready(out)
    assert out.shape == (N, P)
    assert bool(jnp.all(jnp.isfinite(out)))

    ref = jax.block_until_ready(_reference_forward(prompts, tokenized, params))
    assert bool(jnp.allclose(out, ref, atol=5e-2, rtol=5e-2)), \
        float(jnp.max(jnp.abs(out - ref)))

    print("KERNEL_OK")
</pallas_src>

<mosaic_0001>
module attributes {stable_mosaic.version = 11 : i64} {
  func.func @_text_encoder_kernel(%arg0: i32, %arg1: memref<32xi32, #tpu.memory_space<smem>>, %arg2: memref<32x8x128xbf16, #tpu.memory_space<vmem>>, %arg3: memref<8x128xbf16, #tpu.memory_space<vmem>>, %arg4: memref<128x384xbf16, #tpu.memory_space<vmem>>, %arg5: memref<128x128xbf16, #tpu.memory_space<vmem>>, %arg6: memref<128x512xbf16, #tpu.memory_space<vmem>>, %arg7: memref<512x128xbf16, #tpu.memory_space<vmem>>, %arg8: memref<128x128xbf16, #tpu.memory_space<vmem>>, %arg9: memref<8x512xf32, #tpu.memory_space<vmem>>, %arg10: memref<32x128xf32, #tpu.memory_space<vmem>>) attributes {dimension_semantics = [#tpu.dimension_semantics<parallel>], iteration_bounds = array<i64: 1>, scalar_prefetch = 1 : i64, scratch_operands = 0 : i64, tpu.core_type = #tpu.core_type<tc>, window_params = [{transform_indices = @transform_0, window_bounds = array<i64: 32, 8, 128>}, {pipeline_mode = #tpu.pipeline_mode<synchronous>, transform_indices = @transform_1, window_bounds = array<i64: 8, 128>}, {pipeline_mode = #tpu.pipeline_mode<synchronous>, transform_indices = @transform_2, window_bounds = array<i64: 128, 384>}, {pipeline_mode = #tpu.pipeline_mode<synchronous>, transform_indices = @transform_3, window_bounds = array<i64: 128, 128>}, {pipeline_mode = #tpu.pipeline_mode<synchronous>, transform_indices = @transform_4, window_bounds = array<i64: 128, 512>}, {pipeline_mode = #tpu.pipeline_mode<synchronous>, transform_indices = @transform_5, window_bounds = array<i64: 512, 128>}, {pipeline_mode = #tpu.pipeline_mode<synchronous>, transform_indices = @transform_6, window_bounds = array<i64: 128, 128>}, {pipeline_mode = #tpu.pipeline_mode<synchronous>, transform_indices = @transform_7, window_bounds = array<i64: 8, 512>}, {transform_indices = @transform_8, window_bounds = array<i64: 32, 128>}]} {
    %c0 = arith.constant 0 : index
    %c0_0 = arith.constant 0 : index
    %0 = vector.load %arg9[%c0, %c0_0] : memref<8x512xf32, #tpu.memory_space<vmem>>, vector<8x512xf32>
    %1 = vector.extract_strided_slice %0 {offsets = [0, 0], sizes = [1, 512], strides = [1, 1]} : vector<8x512xf32> to vector<1x512xf32>
    %2 = vector.extract_strided_slice %0 {offsets = [1, 0], sizes = [1, 128], strides = [1, 1]} : vector<8x512xf32> to vector<1x128xf32>
    %3 = vector.extract_strided_slice %0 {offsets = [2, 0], sizes = [1, 128], strides = [1, 1]} : vector<8x512xf32> to vector<1x128xf32>
    %4 = vector.extract_strided_slice %0 {offsets = [3, 0], sizes = [1, 128], strides = [1, 1]} : vector<8x512xf32> to vector<1x128xf32>
    %5 = vector.extract_strided_slice %0 {offsets = [4, 0], sizes = [1, 128], strides = [1, 1]} : vector<8x512xf32> to vector<1x128xf32>
    %6 = vector.extract_strided_slice %0 {offsets = [5, 0], sizes = [1, 128], strides = [1, 1]} : vector<8x512xf32> to vector<1x128xf32>
    %7 = vector.extract_strided_slice %0 {offsets = [6, 0], sizes = [1, 128], strides = [1, 1]} : vector<8x512xf32> to vector<1x128xf32>
    %8 = vector.extract_strided_slice %0 {offsets = [7, 0], sizes = [1, 128], strides = [1, 1]} : vector<8x512xf32> to vector<1x128xf32>
    %c0_1 = arith.constant 0 : index
    %c0_2 = arith.constant 0 : index
    %c0_3 = arith.constant 0 : index
    %9 = vector.load %arg2[%c0_1, %c0_2, %c0_3] : memref<32x8x128xbf16, #tpu.memory_space<vmem>>, vector<32x8x128xbf16>
    %10 = arith.extf %9 : vector<32x8x128xbf16> to vector<32x8x128xf32>
    %c0_4 = arith.constant 0 : index
    %c0_5 = arith.constant 0 : index
    %11 = vector.load %arg3[%c0_4, %c0_5] : memref<8x128xbf16, #tpu.memory_space<vmem>>, vector<8x128xbf16>
    %12 = arith.extf %11 : vector<8x128xbf16> to vector<8x128xf32>
    %13 = vector.shape_cast %12 : vector<8x128xf32> to vector<1x8x128xf32>
    %14 = vector.broadcast %13 : vector<1x8x128xf32> to vector<32x8x128xf32>
    %15 = arith.addf %10, %14 : vector<32x8x128xf32>
    %16 = vector.shape_cast %15 : vector<32x8x128xf32> to vector<256x128xf32>
    %cst = arith.constant dense<0.000000e+00> : vector<256xf32>
    %17 = vector.multi_reduction <add>, %16, %cst [1] : vector<256x128xf32> to vector<256xf32>
    %18 = vector.shape_cast %17 : vector<256xf32> to vector<256x1xf32>
    %cst_6 = arith.constant 1.280000e+02 : f32
    %19 = vector.broadcast %cst_6 : f32 to vector<256x1xf32>
    %20 = arith.divf %18, %19 : vector<256x1xf32>
    %21 = vector.broadcast %20 : vector<256x1xf32> to vector<256x128xf32>
    %22 = arith.subf %16, %21 : vector<256x128xf32>
    %23 = arith.mulf %22, %22 : vector<256x128xf32>
    %cst_7 = arith.constant dense<0.000000e+00> : vector<256xf32>
    %24 = vector.multi_reduction <add>, %23, %cst_7 [1] : vector<256x128xf32> to vector<256xf32>
    %25 = vector.shape_cast %24 : vector<256xf32> to vector<256x1xf32>
    %cst_8 = arith.constant 1.280000e+02 : f32
    %26 = vector.broadcast %cst_8 : f32 to vector<256x1xf32>
    %27 = arith.divf %25, %26 : vector<256x1xf32>
    %cst_9 = arith.constant 9.99999974E-6 : f32
    %28 = vector.broadcast %cst_9 : f32 to vector<256x1xf32>
    %29 = arith.addf %27, %28 : vector<256x1xf32>
    %30 = math.rsqrt %29 : vector<256x1xf32>
    %31 = vector.broadcast %30 : vector<256x1xf32> to vector<256x128xf32>
    %32 = arith.mulf %22, %31 : vector<256x128xf32>
    %33 = vector.broadcast %2 : vector<1x128xf32> to vector<256x128xf32>
    %34 = arith.mulf %32, %33 : vector<256x128xf32>
    %35 = vector.broadcast %3 : vector<1x128xf32> to vector<256x128xf32>
    %36 = arith.addf %34, %35 : vector<256x128xf32>
    %37 = arith.truncf %36 : vector<256x128xf32> to vector<256x128xbf16>
    %c0_10 = arith.constant 0 : index
    %c0_11 = arith.constant 0 : index
    %38 = vector.load %arg4[%c0_10, %c0_11] : memref<128x384xbf16, #tpu.memory_space<vmem>>, vector<128x384xbf16>
    %cst_12 = arith.constant dense<0.000000e+00> : vector<256x384xf32>
    %39 = tpu.matmul %37, %38, %cst_12 {dimension_numbers = #tpu.dot_dimension_numbers<[1], [0], [0], [1], [0, 0, 1, 1], [], []>} : vector<256x128xbf16>, vector<128x384xbf16>, vector<256x384xf32> -> vector<256x384xf32>
    %40 = vector.extract_strided_slice %39 {offsets = [0, 0], sizes = [256, 128], strides = [1, 1]} : vector<256x384xf32> to vector<256x128xf32>
    %41 = vector.shape_cast %40 : vector<256x128xf32> to vector<32x8x128xf32>
    %42 = vector.extract_strided_slice %39 {offsets = [0, 128], sizes = [256, 128], strides = [1, 1]} : vector<256x384xf32> to vector<256x128xf32>
    %43 = vector.shape_cast %42 : vector<256x128xf32> to vector<32x8x128xf32>
    %44 = vector.extract_strided_slice %39 {offsets = [0, 256], sizes = [256, 128], strides = [1, 1]} : vector<256x384xf32> to vector<256x128xf32>
    %45 = vector.shape_cast %44 : vector<256x128xf32> to vector<32x8x128xf32>
    %46 = arith.truncf %41 : vector<32x8x128xf32> to vector<32x8x128xbf16>
    %47 = arith.truncf %43 : vector<32x8x128xf32> to vector<32x8x128xbf16>
    "tpu.trace_start"() <{level = 10 : i32, message = "bld,bmd->blm"}> : () -> ()
    %cst_13 = arith.constant dense<0.000000e+00> : vector<32x8x8xf32>
    %48 = tpu.matmul %46, %47, %cst_13 {dimension_numbers = #tpu.dot_dimension_numbers<[2], [2], [1], [1], [0, 0, 0, 1, 1, 1], [0], [0]>} : vector<32x8x128xbf16>, vector<32x8x128xbf16>, vector<32x8x8xf32> -> vector<32x8x8xf32>
    "tpu.trace_stop"() : () -> ()
    %49 = tpu.iota {dimensions = array<i32: 0>} : vector<8x8xi32>
    %50 = tpu.iota {dimensions = array<i32: 1>} : vector<8x8xi32>
    %51 = arith.cmpi sle, %50, %49 : vector<8x8xi32>
    %52 = vector.shape_cast %51 : vector<8x8xi1> to vector<1x8x8xi1>
    %cst_14 = arith.constant -1.000000e+30 : f32
    %53 = vector.shape_cast %52 : vector<1x8x8xi1> to vector<1x8x8xi1>
    %54 = vector.broadcast %53 : vector<1x8x8xi1> to vector<32x8x8xi1>
    %55 = vector.broadcast %cst_14 : f32 to vector<32x8x8xf32>
    %56 = arith.select %54, %48, %55 : vector<32x8x8xi1>, vector<32x8x8xf32>
    %cst_15 = arith.constant dense<0xFF800000> : vector<32x8xf32>
    %57 = vector.multi_reduction <maximumf>, %56, %cst_15 [2] : vector<32x8x8xf32> to vector<32x8xf32>
    %58 = vector.shape_cast %57 : vector<32x8xf32> to vector<32x8x1xf32>
    %59 = vector.broadcast %58 : vector<32x8x1xf32> to vector<32x8x8xf32>
    %60 = arith.subf %56, %59 : vector<32x8x8xf32>
    %61 = math.exp %60 : vector<32x8x8xf32>
    %cst_16 = arith.constant dense<0.000000e+00> : vector<32x8xf32>
    %62 = vector.multi_reduction <add>, %61, %cst_16 [2] : vector<32x8x8xf32> to vector<32x8xf32>
    %63 = vector.shape_cast %62 : vector<32x8xf32> to vector<32x8x1xf32>
    %64 = tpu.reciprocal %63 {approx = true} : vector<32x8x1xf32> -> vector<32x8x1xf32>
    %65 = vector.broadcast %64 : vector<32x8x1xf32> to vector<32x8x8xf32>
    %66 = arith.mulf %61, %65 : vector<32x8x8xf32>
    %67 = arith.truncf %66 : vector<32x8x8xf32> to vector<32x8x8xbf16>
    %68 = arith.truncf %45 : vector<32x8x128xf32> to vector<32x8x128xbf16>
    "tpu.trace_start"() <{level = 10 : i32, message = "blm,bmd->bld"}> : () -> ()
    %cst_17 = arith.constant dense<0.000000e+00> : vector<32x8x128xf32>
    %69 = tpu.matmul %67, %68, %cst_17 {dimension_numbers = #tpu.dot_dimension_numbers<[2], [1], [1], [2], [0, 0, 0, 1, 1, 2], [0], [0]>} : vector<32x8x8xbf16>, vector<32x8x128xbf16>, vector<32x8x128xf32> -> vector<32x8x128xf32>
    "tpu.trace_stop"() : () -> ()
    %70 = vector.shape_cast %69 : vector<32x8x128xf32> to vector<256x128xf32>
    %71 = arith.truncf %70 : vector<256x128xf32> to vector<256x128xbf16>
    %c0_18 = arith.constant 0 : index
    %c0_19 = arith.constant 0 : index
    %72 = vector.load %arg5[%c0_18, %c0_19] : memref<128x128xbf16, #tpu.memory_space<vmem>>, vector<128x128xbf16>
    %cst_20 = arith.constant dense<0.000000e+00> : vector<256x128xf32>
    %73 = tpu.matmul %71, %72, %cst_20 {dimension_numbers = #tpu.dot_dimension_numbers<[1], [0], [0], [1], [0, 0, 1, 1], [], []>} : vector<256x128xbf16>, vector<128x128xbf16>, vector<256x128xf32> -> vector<256x128xf32>
    %74 = arith.addf %16, %73 : vector<256x128xf32>
    %cst_21 = arith.constant dense<0.000000e+00> : vector<256xf32>
    %75 = vector.multi_reduction <add>, %74, %cst_21 [1] : vector<256x128xf32> to vector<256xf32>
    %76 = vector.shape_cast %75 : vector<256xf32> to vector<256x1xf32>
    %cst_22 = arith.constant 1.280000e+02 : f32
    %77 = vector.broadcast %cst_22 : f32 to vector<256x1xf32>
    %78 = arith.divf %76, %77 : vector<256x1xf32>
    %79 = vector.broadcast %78 : vector<256x1xf32> to vector<256x128xf32>
    %80 = arith.subf %74, %79 : vector<256x128xf32>
    %81 = arith.mulf %80, %80 : vector<256x128xf32>
    %cst_23 = arith.constant dense<0.000000e+00> : vector<256xf32>
    %82 = vector.multi_reduction <add>, %81, %cst_23 [1] : vector<256x128xf32> to vector<256xf32>
    %83 = vector.shape_cast %82 : vector<256xf32> to vector<256x1xf32>
    %cst_24 = arith.constant 1.280000e+02 : f32
    %84 = vector.broadcast %cst_24 : f32 to vector<256x1xf32>
    %85 = arith.divf %83, %84 : vector<256x1xf32>
    %cst_25 = arith.constant 9.99999974E-6 : f32
    %86 = vector.broadcast %cst_25 : f32 to vector<256x1xf32>
    %87 = arith.addf %85, %86 : vector<256x1xf32>
    %88 = math.rsqrt %87 : vector<256x1xf32>
    %89 = vector.broadcast %88 : vector<256x1xf32> to vector<256x128xf32>
    %90 = arith.mulf %80, %89 : vector<256x128xf32>
    %91 = vector.broadcast %4 : vector<1x128xf32> to vector<256x128xf32>
    %92 = arith.mulf %90, %91 : vector<256x128xf32>
    %93 = vector.broadcast %5 : vector<1x128xf32> to vector<256x128xf32>
    %94 = arith.addf %92, %93 : vector<256x128xf32>
    %95 = arith.truncf %94 : vector<256x128xf32> to vector<256x128xbf16>
    %c0_26 = arith.constant 0 : index
    %c0_27 = arith.constant 0 : index
    %96 = vector.load %arg6[%c0_26, %c0_27] : memref<128x512xbf16, #tpu.memory_space<vmem>>, vector<128x512xbf16>
    %cst_28 = arith.constant dense<0.000000e+00> : vector<256x512xf32>
    %97 = tpu.matmul %95, %96, %cst_28 {dimension_numbers = #tpu.dot_dimension_numbers<[1], [0], [0], [1], [0, 0, 1, 1], [], []>} : vector<256x128xbf16>, vector<128x512xbf16>, vector<256x512xf32> -> vector<256x512xf32>
    %98 = vector.broadcast %1 : vector<1x512xf32> to vector<256x512xf32>
    %99 = arith.addf %97, %98 : vector<256x512xf32>
    %100 = arith.mulf %99, %99 : vector<256x512xf32>
    %101 = arith.mulf %99, %100 : vector<256x512xf32>
    %cst_29 = arith.constant 4.471500e-02 : f32
    %102 = vector.broadcast %cst_29 : f32 to vector<256x512xf32>
    %103 = arith.mulf %102, %101 : vector<256x512xf32>
    %104 = arith.addf %99, %103 : vector<256x512xf32>
    %cst_30 = arith.constant 0.797884583 : f32
    %105 = vector.broadcast %cst_30 : f32 to vector<256x512xf32>
    %106 = arith.mulf %105, %104 : vector<256x512xf32>
    %107 = math.tanh %106 : vector<256x512xf32>
    %cst_31 = arith.constant 1.000000e+00 : f32
    %108 = vector.broadcast %cst_31 : f32 to vector<256x512xf32>
    %109 = arith.addf %108, %107 : vector<256x512xf32>
    %cst_32 = arith.constant 5.000000e-01 : f32
    %110 = vector.broadcast %cst_32 : f32 to vector<256x512xf32>
    %111 = arith.mulf %110, %109 : vector<256x512xf32>
    %112 = arith.mulf %99, %111 : vector<256x512xf32>
    %113 = arith.truncf %112 : vector<256x512xf32> to vector<256x512xbf16>
    %c0_33 = arith.constant 0 : index
    %c0_34 = arith.constant 0 : index
    %114 = vector.load %arg7[%c0_33, %c0_34] : memref<512x128xbf16, #tpu.memory_space<vmem>>, vector<512x128xbf16>
    %cst_35 = arith.constant dense<0.000000e+00> : vector<256x128xf32>
    %115 = tpu.matmul %113, %114, %cst_35 {dimension_numbers = #tpu.dot_dimension_numbers<[1], [0], [0], [1], [0, 0, 1, 1], [], []>} : vector<256x512xbf16>, vector<512x128xbf16>, vector<256x128xf32> -> vector<256x128xf32>
    %116 = arith.addf %74, %115 : vector<256x128xf32>
    %117 = vector.broadcast %8 : vector<1x128xf32> to vector<256x128xf32>
    %118 = arith.addf %116, %117 : vector<256x128xf32>
    %c32_i32 = arith.constant 32 : i32
    %119 = arith.muli %arg0, %c32_i32 : i32
    %120 = tpu.iota {dimensions = array<i32: 0>} : vector<32x8xi32>
    %121 = tpu.iota {dimensions = array<i32: 1>} : vector<32x8xi32>
    %cst_36 = arith.constant 0.000000e+00 : f32
    %122 = vector.broadcast %cst_36 : f32 to vector<32x8xf32>
    %c0_i32 = arith.constant 0 : i32
    %123 = arith.addi %119, %c0_i32 : i32
    %124 = arith.index_cast %123 : i32 to index
    %125 = memref.load %arg1[%124] : memref<32xi32, #tpu.memory_space<smem>>
    %c0_i32_37 = arith.constant 0 : i32
    %126 = vector.broadcast %c0_i32_37 : i32 to vector<32x8xi32>
    %127 = arith.cmpi eq, %120, %126 : vector<32x8xi32>
    %128 = vector.broadcast %125 : i32 to vector<32x8xi32>
    %129 = arith.cmpi eq, %121, %128 : vector<32x8xi32>
    %130 = arith.andi %127, %129 : vector<32x8xi1>
    %cst_38 = arith.constant 1.000000e+00 : f32
    %131 = vector.broadcast %cst_38 : f32 to vector<32x8xf32>
    %132 = arith.select %130, %131, %122 : vector<32x8xi1>, vector<32x8xf32>
    %c1_i32 = arith.constant 1 : i32
    %133 = arith.addi %119, %c1_i32 : i32
    %134 = arith.index_cast %133 : i32 to index
    %135 = memref.load %arg1[%134] : memref<32xi32, #tpu.memory_space<smem>>
    %c1_i32_39 = arith.constant 1 : i32
    %136 = vector.broadcast %c1_i32_39 : i32 to vector<32x8xi32>
    %137 = arith.cmpi eq, %120, %136 : vector<32x8xi32>
    %138 = vector.broadcast %135 : i32 to vector<32x8xi32>
    %139 = arith.cmpi eq, %121, %138 : vector<32x8xi32>
    %140 = arith.andi %137, %139 : vector<32x8xi1>
    %cst_40 = arith.constant 1.000000e+00 : f32
    %141 = vector.broadcast %cst_40 : f32 to vector<32x8xf32>
    %142 = arith.select %140, %141, %132 : vector<32x8xi1>, vector<32x8xf32>
    %c2_i32 = arith.constant 2 : i32
    %143 = arith.addi %119, %c2_i32 : i32
    %144 = arith.index_cast %143 : i32 to index
    %145 = memref.load %arg1[%144] : memref<32xi32, #tpu.memory_space<smem>>
    %c2_i32_41 = arith.constant 2 : i32
    %146 = vector.broadcast %c2_i32_41 : i32 to vector<32x8xi32>
    %147 = arith.cmpi eq, %120, %146 : vector<32x8xi32>
    %148 = vector.broadcast %145 : i32 to vector<32x8xi32>
    %149 = arith.cmpi eq, %121, %148 : vector<32x8xi32>
    %150 = arith.andi %147, %149 : vector<32x8xi1>
    %cst_42 = arith.constant 1.000000e+00 : f32
    %151 = vector.broadcast %cst_42 : f32 to vector<32x8xf32>
    %152 = arith.select %150, %151, %142 : vector<32x8xi1>, vector<32x8xf32>
    %c3_i32 = arith.constant 3 : i32
    %153 = arith.addi %119, %c3_i32 : i32
    %154 = arith.index_cast %153 : i32 to index
    %155 = memref.load %arg1[%154] : memref<32xi32, #tpu.memory_space<smem>>
    %c3_i32_43 = arith.constant 3 : i32
    %156 = vector.broadcast %c3_i32_43 : i32 to vector<32x8xi32>
    %157 = arith.cmpi eq, %120, %156 : vector<32x8xi32>
    %158 = vector.broadcast %155 : i32 to vector<32x8xi32>
    %159 = arith.cmpi eq, %121, %158 : vector<32x8xi32>
    %160 = arith.andi %157, %159 : vector<32x8xi1>
    %cst_44 = arith.constant 1.000000e+00 : f32
    %161 = vector.broadcast %cst_44 : f32 to vector<32x8xf32>
    %162 = arith.select %160, %161, %152 : vector<32x8xi1>, vector<32x8xf32>
    %c4_i32 = arith.constant 4 : i32
    %163 = arith.addi %119, %c4_i32 : i32
    %164 = arith.index_cast %163 : i32 to index
    %165 = memref.load %arg1[%164] : memref<32xi32, #tpu.memory_space<smem>>
    %c4_i32_45 = arith.constant 4 : i32
    %166 = vector.broadcast %c4_i32_45 : i32 to vector<32x8xi32>
    %167 = arith.cmpi eq, %120, %166 : vector<32x8xi32>
    %168 = vector.broadcast %165 : i32 to vector<32x8xi32>
    %169 = arith.cmpi eq, %121, %168 : vector<32x8xi32>
    %170 = arith.andi %167, %169 : vector<32x8xi1>
    %cst_46 = arith.constant 1.000000e+00 : f32
    %171 = vector.broadcast %cst_46 : f32 to vector<32x8xf32>
    %172 = arith.select %170, %171, %162 : vector<32x8xi1>, vector<32x8xf32>
    %c5_i32 = arith.constant 5 : i32
    %173 = arith.addi %119, %c5_i32 : i32
    %174 = arith.index_cast %173 : i32 to index
    %175 = memref.load %arg1[%174] : memref<32xi32, #tpu.memory_space<smem>>
    %c5_i32_47 = arith.constant 5 : i32
    %176 = vector.broadcast %c5_i32_47 : i32 to vector<32x8xi32>
    %177 = arith.cmpi eq, %120, %176 : vector<32x8xi32>
    %178 = vector.broadcast %175 : i32 to vector<32x8xi32>
    %179 = arith.cmpi eq, %121, %178 : vector<32x8xi32>
    %180 = arith.andi %177, %179 : vector<32x8xi1>
    %cst_48 = arith.constant 1.000000e+00 : f32
    %181 = vector.broadcast %cst_48 : f32 to vector<32x8xf32>
    %182 = arith.select %180, %181, %172 : vector<32x8xi1>, vector<32x8xf32>
    %c6_i32 = arith.constant 6 : i32
    %183 = arith.addi %119, %c6_i32 : i32
    %184 = arith.index_cast %183 : i32 to index
    %185 = memref.load %arg1[%184] : memref<32xi32, #tpu.memory_space<smem>>
    %c6_i32_49 = arith.constant 6 : i32
    %186 = vector.broadcast %c6_i32_49 : i32 to vector<32x8xi32>
    %187 = arith.cmpi eq, %120, %186 : vector<32x8xi32>
    %188 = vector.broadcast %185 : i32 to vector<32x8xi32>
    %189 = arith.cmpi eq, %121, %188 : vector<32x8xi32>
    %190 = arith.andi %187, %189 : vector<32x8xi1>
    %cst_50 = arith.constant 1.000000e+00 : f32
    %191 = vector.broadcast %cst_50 : f32 to vector<32x8xf32>
    %192 = arith.select %190, %191, %182 : vector<32x8xi1>, vector<32x8xf32>
    %c7_i32 = arith.constant 7 : i32
    %193 = arith.addi %119, %c7_i32 : i32
    %194 = arith.index_cast %193 : i32 to index
    %195 = memref.load %arg1[%194] : memref<32xi32, #tpu.memory_space<smem>>
    %c7_i32_51 = arith.constant 7 : i32
    %196 = vector.broadcast %c7_i32_51 : i32 to vector<32x8xi32>
    %197 = arith.cmpi eq, %120, %196 : vector<32x8xi32>
    %198 = vector.broadcast %195 : i32 to vector<32x8xi32>
    %199 = arith.cmpi eq, %121, %198 : vector<32x8xi32>
    %200 = arith.andi %197, %199 : vector<32x8xi1>
    %cst_52 = arith.constant 1.000000e+00 : f32
    %201 = vector.broadcast %cst_52 : f32 to vector<32x8xf32>
    %202 = arith.select %200, %201, %192 : vector<32x8xi1>, vector<32x8xf32>
    %c8_i32 = arith.constant 8 : i32
    %203 = arith.addi %119, %c8_i32 : i32
    %204 = arith.index_cast %203 : i32 to index
    %205 = memref.load %arg1[%204] : memref<32xi32, #tpu.memory_space<smem>>
    %c8_i32_53 = arith.constant 8 : i32
    %206 = vector.broadcast %c8_i32_53 : i32 to vector<32x8xi32>
    %207 = arith.cmpi eq, %120, %206 : vector<32x8xi32>
    %208 = vector.broadcast %205 : i32 to vector<32x8xi32>
    %209 = arith.cmpi eq, %121, %208 : vector<32x8xi32>
    %210 = arith.andi %207, %209 : vector<32x8xi1>
    %cst_54 = arith.constant 1.000000e+00 : f32
    %211 = vector.broadcast %cst_54 : f32 to vector<32x8xf32>
    %212 = arith.select %210, %211, %202 : vector<32x8xi1>, vector<32x8xf32>
    %c9_i32 = arith.constant 9 : i32
    %213 = arith.addi %119, %c9_i32 : i32
    %214 = arith.index_cast %213 : i32 to index
    %215 = memref.load %arg1[%214] : memref<32xi32, #tpu.memory_space<smem>>
    %c9_i32_55 = arith.constant 9 : i32
    %216 = vector.broadcast %c9_i32_55 : i32 to vector<32x8xi32>
    %217 = arith.cmpi eq, %120, %216 : vector<32x8xi32>
    %218 = vector.broadcast %215 : i32 to vector<32x8xi32>
    %219 = arith.cmpi eq, %121, %218 : vector<32x8xi32>
    %220 = arith.andi %217, %219 : vector<32x8xi1>
    %cst_56 = arith.constant 1.000000e+00 : f32
    %221 = vector.broadcast %cst_56 : f32 to vector<32x8xf32>
    %222 = arith.select %220, %221, %212 : vector<32x8xi1>, vector<32x8xf32>
    %c10_i32 = arith.constant 10 : i32
    %223 = arith.addi %119, %c10_i32 : i32
    %224 = arith.index_cast %223 : i32 to index
    %225 = memref.load %arg1[%224] : memref<32xi32, #tpu.memory_space<smem>>
    %c10_i32_57 = arith.constant 10 : i32
    %226 = vector.broadcast %c10_i32_57 : i32 to vector<32x8xi32>
    %227 = arith.cmpi eq, %120, %226 : vector<32x8xi32>
    %228 = vector.broadcast %225 : i32 to vector<32x8xi32>
    %229 = arith.cmpi eq, %121, %228 : vector<32x8xi32>
    %230 = arith.andi %227, %229 : vector<32x8xi1>
    %cst_58 = arith.constant 1.000000e+00 : f32
    %231 = vector.broadcast %cst_58 : f32 to vector<32x8xf32>
    %232 = arith.select %230, %231, %222 : vector<32x8xi1>, vector<32x8xf32>
    %c11_i32 = arith.constant 11 : i32
    %233 = arith.addi %119, %c11_i32 : i32
    %234 = arith.index_cast %233 : i32 to index
    %235 = memref.load %arg1[%234] : memref<32xi32, #tpu.memory_space<smem>>
    %c11_i32_59 = arith.constant 11 : i32
    %236 = vector.broadcast %c11_i32_59 : i32 to vector<32x8xi32>
    %237 = arith.cmpi eq, %120, %236 : vector<32x8xi32>
    %238 = vector.broadcast %235 : i32 to vector<32x8xi32>
    %239 = arith.cmpi eq, %121, %238 : vector<32x8xi32>
    %240 = arith.andi %237, %239 : vector<32x8xi1>
    %cst_60 = arith.constant 1.000000e+00 : f32
    %241 = vector.broadcast %cst_60 : f32 to vector<32x8xf32>
    %242 = arith.select %240, %241, %232 : vector<32x8xi1>, vector<32x8xf32>
    %c12_i32 = arith.constant 12 : i32
    %243 = arith.addi %119, %c12_i32 : i32
    %244 = arith.index_cast %243 : i32 to index
    %245 = memref.load %arg1[%244] : memref<32xi32, #tpu.memory_space<smem>>
    %c12_i32_61 = arith.constant 12 : i32
    %246 = vector.broadcast %c12_i32_61 : i32 to vector<32x8xi32>
    %247 = arith.cmpi eq, %120, %246 : vector<32x8xi32>
    %248 = vector.broadcast %245 : i32 to vector<32x8xi32>
    %249 = arith.cmpi eq, %121, %248 : vector<32x8xi32>
    %250 = arith.andi %247, %249 : vector<32x8xi1>
    %cst_62 = arith.constant 1.000000e+00 : f32
    %251 = vector.broadcast %cst_62 : f32 to vector<32x8xf32>
    %252 = arith.select %250, %251, %242 : vector<32x8xi1>, vector<32x8xf32>
    %c13_i32 = arith.constant 13 : i32
    %253 = arith.addi %119, %c13_i32 : i32
    %254 = arith.index_cast %253 : i32 to index
    %255 = memref.load %arg1[%254] : memref<32xi32, #tpu.memory_space<smem>>
    %c13_i32_63 = arith.constant 13 : i32
    %256 = vector.broadcast %c13_i32_63 : i32 to vector<32x8xi32>
    %257 = arith.cmpi eq, %120, %256 : vector<32x8xi32>
    %258 = vector.broadcast %255 : i32 to vector<32x8xi32>
    %259 = arith.cmpi eq, %121, %258 : vector<32x8xi32>
    %260 = arith.andi %257, %259 : vector<32x8xi1>
    %cst_64 = arith.constant 1.000000e+00 : f32
    %261 = vector.broadcast %cst_64 : f32 to vector<32x8xf32>
    %262 = arith.select %260, %261, %252 : vector<32x8xi1>, vector<32x8xf32>
    %c14_i32 = arith.constant 14 : i32
    %263 = arith.addi %119, %c14_i32 : i32
    %264 = arith.index_cast %263 : i32 to index
    %265 = memref.load %arg1[%264] : memref<32xi32, #tpu.memory_space<smem>>
    %c14_i32_65 = arith.constant 14 : i32
    %266 = vector.broadcast %c14_i32_65 : i32 to vector<32x8xi32>
    %267 = arith.cmpi eq, %120, %266 : vector<32x8xi32>
    %268 = vector.broadcast %265 : i32 to vector<32x8xi32>
    %269 = arith.cmpi eq, %121, %268 : vector<32x8xi32>
    %270 = arith.andi %267, %269 : vector<32x8xi1>
    %cst_66 = arith.constant 1.000000e+00 : f32
    %271 = vector.broadcast %cst_66 : f32 to vector<32x8xf32>
    %272 = arith.select %270, %271, %262 : vector<32x8xi1>, vector<32x8xf32>
    %c15_i32 = arith.constant 15 : i32
    %273 = arith.addi %119, %c15_i32 : i32
    %274 = arith.index_cast %273 : i32 to index
    %275 = memref.load %arg1[%274] : memref<32xi32, #tpu.memory_space<smem>>
    %c15_i32_67 = arith.constant 15 : i32
    %276 = vector.broadcast %c15_i32_67 : i32 to vector<32x8xi32>
    %277 = arith.cmpi eq, %120, %276 : vector<32x8xi32>
    %278 = vector.broadcast %275 : i32 to vector<32x8xi32>
    %279 = arith.cmpi eq, %121, %278 : vector<32x8xi32>
    %280 = arith.andi %277, %279 : vector<32x8xi1>
    %cst_68 = arith.constant 1.000000e+00 : f32
    %281 = vector.broadcast %cst_68 : f32 to vector<32x8xf32>
    %282 = arith.select %280, %281, %272 : vector<32x8xi1>, vector<32x8xf32>
    %c16_i32 = arith.constant 16 : i32
    %283 = arith.addi %119, %c16_i32 : i32
    %284 = arith.index_cast %283 : i32 to index
    %285 = memref.load %arg1[%284] : memref<32xi32, #tpu.memory_space<smem>>
    %c16_i32_69 = arith.constant 16 : i32
    %286 = vector.broadcast %c16_i32_69 : i32 to vector<32x8xi32>
    %287 = arith.cmpi eq, %120, %286 : vector<32x8xi32>
    %288 = vector.broadcast %285 : i32 to vector<32x8xi32>
    %289 = arith.cmpi eq, %121, %288 : vector<32x8xi32>
    %290 = arith.andi %287, %289 : vector<32x8xi1>
    %cst_70 = arith.constant 1.000000e+00 : f32
    %291 = vector.broadcast %cst_70 : f32 to vector<32x8xf32>
    %292 = arith.select %290, %291, %282 : vector<32x8xi1>, vector<32x8xf32>
    %c17_i32 = arith.constant 17 : i32
    %293 = arith.addi %119, %c17_i32 : i32
    %294 = arith.index_cast %293 : i32 to index
    %295 = memref.load %arg1[%294] : memref<32xi32, #tpu.memory_space<smem>>
    %c17_i32_71 = arith.constant 17 : i32
    %296 = vector.broadcast %c17_i32_71 : i32 to vector<32x8xi32>
    %297 = arith.cmpi eq, %120, %296 : vector<32x8xi32>
    %298 = vector.broadcast %295 : i32 to vector<32x8xi32>
    %299 = arith.cmpi eq, %121, %298 : vector<32x8xi32>
    %300 = arith.andi %297, %299 : vector<32x8xi1>
    %cst_72 = arith.constant 1.000000e+00 : f32
    %301 = vector.broadcast %cst_72 : f32 to vector<32x8xf32>
    %302 = arith.select %300, %301, %292 : vector<32x8xi1>, vector<32x8xf32>
    %c18_i32 = arith.constant 18 : i32
    %303 = arith.addi %119, %c18_i32 : i32
    %304 = arith.index_cast %303 : i32 to index
    %305 = memref.load %arg1[%304] : memref<32xi32, #tpu.memory_space<smem>>
    %c18_i32_73 = arith.constant 18 : i32
    %306 = vector.broadcast %c18_i32_73 : i32 to vector<32x8xi32>
    %307 = arith.cmpi eq, %120, %306 : vector<32x8xi32>
    %308 = vector.broadcast %305 : i32 to vector<32x8xi32>
    %309 = arith.cmpi eq, %121, %308 : vector<32x8xi32>
    %310 = arith.andi %307, %309 : vector<32x8xi1>
    %cst_74 = arith.constant 1.000000e+00 : f32
    %311 = vector.broadcast %cst_74 : f32 to vector<32x8xf32>
    %312 = arith.select %310, %311, %302 : vector<32x8xi1>, vector<32x8xf32>
    %c19_i32 = arith.constant 19 : i32
    %313 = arith.addi %119, %c19_i32 : i32
    %314 = arith.index_cast %313 : i32 to index
    %315 = memref.load %arg1[%314] : memref<32xi32, #tpu.memory_space<smem>>
    %c19_i32_75 = arith.constant 19 : i32
    %316 = vector.broadcast %c19_i32_75 : i32 to vector<32x8xi32>
    %317 = arith.cmpi eq, %120, %316 : vector<32x8xi32>
    %318 = vector.broadcast %315 : i32 to vector<32x8xi32>
    %319 = arith.cmpi eq, %121, %318 : vector<32x8xi32>
    %320 = arith.andi %317, %319 : vector<32x8xi1>
    %cst_76 = arith.constant 1.000000e+00 : f32
    %321 = vector.broadcast %cst_76 : f32 to vector<32x8xf32>
    %322 = arith.select %320, %321, %312 : vector<32x8xi1>, vector<32x8xf32>
    %c20_i32 = arith.constant 20 : i32
    %323 = arith.addi %119, %c20_i32 : i32
    %324 = arith.index_cast %323 : i32 to index
    %325 = memref.load %arg1[%324] : memref<32xi32, #tpu.memory_space<smem>>
    %c20_i32_77 = arith.constant 20 : i32
    %326 = vector.broadcast %c20_i32_77 : i32 to vector<32x8xi32>
    %327 = arith.cmpi eq, %120, %326 : vector<32x8xi32>
    %328 = vector.broadcast %325 : i32 to vector<32x8xi32>
    %329 = arith.cmpi eq, %121, %328 : vector<32x8xi32>
    %330 = arith.andi %327, %329 : vector<32x8xi1>
    %cst_78 = arith.constant 1.000000e+00 : f32
    %331 = vector.broadcast %cst_78 : f32 to vector<32x8xf32>
    %332 = arith.select %330, %331, %322 : vector<32x8xi1>, vector<32x8xf32>
    %c21_i32 = arith.constant 21 : i32
    %333 = arith.addi %119, %c21_i32 : i32
    %334 = arith.index_cast %333 : i32 to index
    %335 = memref.load %arg1[%334] : memref<32xi32, #tpu.memory_space<smem>>
    %c21_i32_79 = arith.constant 21 : i32
    %336 = vector.broadcast %c21_i32_79 : i32 to vector<32x8xi32>
    %337 = arith.cmpi eq, %120, %336 : vector<32x8xi32>
    %338 = vector.broadcast %335 : i32 to vector<32x8xi32>
    %339 = arith.cmpi eq, %121, %338 : vector<32x8xi32>
    %340 = arith.andi %337, %339 : vector<32x8xi1>
    %cst_80 = arith.constant 1.000000e+00 : f32
    %341 = vector.broadcast %cst_80 : f32 to vector<32x8xf32>
    %342 = arith.select %340, %341, %332 : vector<32x8xi1>, vector<32x8xf32>
    %c22_i32 = arith.constant 22 : i32
    %343 = arith.addi %119, %c22_i32 : i32
    %344 = arith.index_cast %343 : i32 to index
    %345 = memref.load %arg1[%344] : memref<32xi32, #tpu.memory_space<smem>>
    %c22_i32_81 = arith.constant 22 : i32
    %346 = vector.broadcast %c22_i32_81 : i32 to vector<32x8xi32>
    %347 = arith.cmpi eq, %120, %346 : vector<32x8xi32>
    %348 = vector.broadcast %345 : i32 to vector<32x8xi32>
    %349 = arith.cmpi eq, %121, %348 : vector<32x8xi32>
    %350 = arith.andi %347, %349 : vector<32x8xi1>
    %cst_82 = arith.constant 1.000000e+00 : f32
    %351 = vector.broadcast %cst_82 : f32 to vector<32x8xf32>
    %352 = arith.select %350, %351, %342 : vector<32x8xi1>, vector<32x8xf32>
    %c23_i32 = arith.constant 23 : i32
    %353 = arith.addi %119, %c23_i32 : i32
    %354 = arith.index_cast %353 : i32 to index
    %355 = memref.load %arg1[%354] : memref<32xi32, #tpu.memory_space<smem>>
    %c23_i32_83 = arith.constant 23 : i32
    %356 = vector.broadcast %c23_i32_83 : i32 to vector<32x8xi32>
    %357 = arith.cmpi eq, %120, %356 : vector<32x8xi32>
    %358 = vector.broadcast %355 : i32 to vector<32x8xi32>
    %359 = arith.cmpi eq, %121, %358 : vector<32x8xi32>
    %360 = arith.andi %357, %359 : vector<32x8xi1>
    %cst_84 = arith.constant 1.000000e+00 : f32
    %361 = vector.broadcast %cst_84 : f32 to vector<32x8xf32>
    %362 = arith.select %360, %361, %352 : vector<32x8xi1>, vector<32x8xf32>
    %c24_i32 = arith.constant 24 : i32
    %363 = arith.addi %119, %c24_i32 : i32
    %364 = arith.index_cast %363 : i32 to index
    %365 = memref.load %arg1[%364] : memref<32xi32, #tpu.memory_space<smem>>
    %c24_i32_85 = arith.constant 24 : i32
    %366 = vector.broadcast %c24_i32_85 : i32 to vector<32x8xi32>
    %367 = arith.cmpi eq, %120, %366 : vector<32x8xi32>
    %368 = vector.broadcast %365 : i32 to vector<32x8xi32>
    %369 = arith.cmpi eq, %121, %368 : vector<32x8xi32>
    %370 = arith.andi %367, %369 : vector<32x8xi1>
    %cst_86 = arith.constant 1.000000e+00 : f32
    %371 = vector.broadcast %cst_86 : f32 to vector<32x8xf32>
    %372 = arith.select %370, %371, %362 : vector<32x8xi1>, vector<32x8xf32>
    %c25_i32 = arith.constant 25 : i32
    %373 = arith.addi %119, %c25_i32 : i32
    %374 = arith.index_cast %373 : i32 to index
    %375 = memref.load %arg1[%374] : memref<32xi32, #tpu.memory_space<smem>>
    %c25_i32_87 = arith.constant 25 : i32
    %376 = vector.broadcast %c25_i32_87 : i32 to vector<32x8xi32>
    %377 = arith.cmpi eq, %120, %376 : vector<32x8xi32>
    %378 = vector.broadcast %375 : i32 to vector<32x8xi32>
    %379 = arith.cmpi eq, %121, %378 : vector<32x8xi32>
    %380 = arith.andi %377, %379 : vector<32x8xi1>
    %cst_88 = arith.constant 1.000000e+00 : f32
    %381 = vector.broadcast %cst_88 : f32 to vector<32x8xf32>
    %382 = arith.select %380, %381, %372 : vector<32x8xi1>, vector<32x8xf32>
    %c26_i32 = arith.constant 26 : i32
    %383 = arith.addi %119, %c26_i32 : i32
    %384 = arith.index_cast %383 : i32 to index
    %385 = memref.load %arg1[%384] : memref<32xi32, #tpu.memory_space<smem>>
    %c26_i32_89 = arith.constant 26 : i32
    %386 = vector.broadcast %c26_i32_89 : i32 to vector<32x8xi32>
    %387 = arith.cmpi eq, %120, %386 : vector<32x8xi32>
    %388 = vector.broadcast %385 : i32 to vector<32x8xi32>
    %389 = arith.cmpi eq, %121, %388 : vector<32x8xi32>
    %390 = arith.andi %387, %389 : vector<32x8xi1>
    %cst_90 = arith.constant 1.000000e+00 : f32
    %391 = vector.broadcast %cst_90 : f32 to vector<32x8xf32>
    %392 = arith.select %390, %391, %382 : vector<32x8xi1>, vector<32x8xf32>
    %c27_i32 = arith.constant 27 : i32
    %393 = arith.addi %119, %c27_i32 : i32
    %394 = arith.index_cast %393 : i32 to index
    %395 = memref.load %arg1[%394] : memref<32xi32, #tpu.memory_space<smem>>
    %c27_i32_91 = arith.constant 27 : i32
    %396 = vector.broadcast %c27_i32_91 : i32 to vector<32x8xi32>
    %397 = arith.cmpi eq, %120, %396 : vector<32x8xi32>
    %398 = vector.broadcast %395 : i32 to vector<32x8xi32>
    %399 = arith.cmpi eq, %121, %398 : vector<32x8xi32>
    %400 = arith.andi %397, %399 : vector<32x8xi1>
    %cst_92 = arith.constant 1.000000e+00 : f32
    %401 = vector.broadcast %cst_92 : f32 to vector<32x8xf32>
    %402 = arith.select %400, %401, %392 : vector<32x8xi1>, vector<32x8xf32>
    %c28_i32 = arith.constant 28 : i32
    %403 = arith.addi %119, %c28_i32 : i32
    %404 = arith.index_cast %403 : i32 to index
    %405 = memref.load %arg1[%404] : memref<32xi32, #tpu.memory_space<smem>>
    %c28_i32_93 = arith.constant 28 : i32
    %406 = vector.broadcast %c28_i32_93 : i32 to vector<32x8xi32>
    %407 = arith.cmpi eq, %120, %406 : vector<32x8xi32>
    %408 = vector.broadcast %405 : i32 to vector<32x8xi32>
    %409 = arith.cmpi eq, %121, %408 : vector<32x8xi32>
    %410 = arith.andi %407, %409 : vector<32x8xi1>
    %cst_94 = arith.constant 1.000000e+00 : f32
    %411 = vector.broadcast %cst_94 : f32 to vector<32x8xf32>
    %412 = arith.select %410, %411, %402 : vector<32x8xi1>, vector<32x8xf32>
    %c29_i32 = arith.constant 29 : i32
    %413 = arith.addi %119, %c29_i32 : i32
    %414 = arith.index_cast %413 : i32 to index
    %415 = memref.load %arg1[%414] : memref<32xi32, #tpu.memory_space<smem>>
    %c29_i32_95 = arith.constant 29 : i32
    %416 = vector.broadcast %c29_i32_95 : i32 to vector<32x8xi32>
    %417 = arith.cmpi eq, %120, %416 : vector<32x8xi32>
    %418 = vector.broadcast %415 : i32 to vector<32x8xi32>
    %419 = arith.cmpi eq, %121, %418 : vector<32x8xi32>
    %420 = arith.andi %417, %419 : vector<32x8xi1>
    %cst_96 = arith.constant 1.000000e+00 : f32
    %421 = vector.broadcast %cst_96 : f32 to vector<32x8xf32>
    %422 = arith.select %420, %421, %412 : vector<32x8xi1>, vector<32x8xf32>
    %c30_i32 = arith.constant 30 : i32
    %423 = arith.addi %119, %c30_i32 : i32
    %424 = arith.index_cast %423 : i32 to index
    %425 = memref.load %arg1[%424] : memref<32xi32, #tpu.memory_space<smem>>
    %c30_i32_97 = arith.constant 30 : i32
    %426 = vector.broadcast %c30_i32_97 : i32 to vector<32x8xi32>
    %427 = arith.cmpi eq, %120, %426 : vector<32x8xi32>
    %428 = vector.broadcast %425 : i32 to vector<32x8xi32>
    %429 = arith.cmpi eq, %121, %428 : vector<32x8xi32>
    %430 = arith.andi %427, %429 : vector<32x8xi1>
    %cst_98 = arith.constant 1.000000e+00 : f32
    %431 = vector.broadcast %cst_98 : f32 to vector<32x8xf32>
    %432 = arith.select %430, %431, %422 : vector<32x8xi1>, vector<32x8xf32>
    %c31_i32 = arith.constant 31 : i32
    %433 = arith.addi %119, %c31_i32 : i32
    %434 = arith.index_cast %433 : i32 to index
    %435 = memref.load %arg1[%434] : memref<32xi32, #tpu.memory_space<smem>>
    %c31_i32_99 = arith.constant 31 : i32
    %436 = vector.broadcast %c31_i32_99 : i32 to vector<32x8xi32>
    %437 = arith.cmpi eq, %120, %436 : vector<32x8xi32>
    %438 = vector.broadcast %435 : i32 to vector<32x8xi32>
    %439 = arith.cmpi eq, %121, %438 : vector<32x8xi32>
    %440 = arith.andi %437, %439 : vector<32x8xi1>
    %cst_100 = arith.constant 1.000000e+00 : f32
    %441 = vector.broadcast %cst_100 : f32 to vector<32x8xf32>
    %442 = arith.select %440, %441, %432 : vector<32x8xi1>, vector<32x8xf32>
    %443 = vector.shape_cast %442 : vector<32x8xf32> to vector<32x8x1xf32>
    %444 = vector.shape_cast %118 : vector<256x128xf32> to vector<32x8x128xf32>
    %445 = vector.broadcast %443 : vector<32x8x1xf32> to vector<32x8x128xf32>
    %446 = arith.mulf %445, %444 : vector<32x8x128xf32>
    %cst_101 = arith.constant dense<0.000000e+00> : vector<32x128xf32>
    %447 = vector.multi_reduction <add>, %446, %cst_101 [1] : vector<32x8x128xf32> to vector<32x128xf32>
    %cst_102 = arith.constant dense<0.000000e+00> : vector<32xf32>
    %448 = vector.multi_reduction <add>, %447, %cst_102 [1] : vector<32x128xf32> to vector<32xf32>
    %449 = vector.shape_cast %448 : vector<32xf32> to vector<32x1xf32>
    %cst_103 = arith.constant 1.280000e+02 : f32
    %450 = vector.broadcast %cst_103 : f32 to vector<32x1xf32>
    %451 = arith.divf %449, %450 : vector<32x1xf32>
    %452 = vector.broadcast %451 : vector<32x1xf32> to vector<32x128xf32>
    %453 = arith.subf %447, %452 : vector<32x128xf32>
    %454 = arith.mulf %453, %453 : vector<32x128xf32>
    %cst_104 = arith.constant dense<0.000000e+00> : vector<32xf32>
    %455 = vector.multi_reduction <add>, %454, %cst_104 [1] : vector<32x128xf32> to vector<32xf32>
    %456 = vector.shape_cast %455 : vector<32xf32> to vector<32x1xf32>
    %cst_105 = arith.constant 1.280000e+02 : f32
    %457 = vector.broadcast %cst_105 : f32 to vector<32x1xf32>
    %458 = arith.divf %456, %457 : vector<32x1xf32>
    %cst_106 = arith.constant 9.99999974E-6 : f32
    %459 = vector.broadcast %cst_106 : f32 to vector<32x1xf32>
    %460 = arith.addf %458, %459 : vector<32x1xf32>
    %461 = math.rsqrt %460 : vector<32x1xf32>
    %462 = vector.broadcast %461 : vector<32x1xf32> to vector<32x128xf32>
    %463 = arith.mulf %453, %462 : vector<32x128xf32>
    %464 = vector.broadcast %6 : vector<1x128xf32> to vector<32x128xf32>
    %465 = arith.mulf %463, %464 : vector<32x128xf32>
    %466 = vector.broadcast %7 : vector<1x128xf32> to vector<32x128xf32>
    %467 = arith.addf %465, %466 : vector<32x128xf32>
    %468 = arith.truncf %467 : vector<32x128xf32> to vector<32x128xbf16>
    %c0_107 = arith.constant 0 : index
    %c0_108 = arith.constant 0 : index
    %469 = vector.load %arg8[%c0_107, %c0_108] : memref<128x128xbf16, #tpu.memory_space<vmem>>, vector<128x128xbf16>
    %cst_109 = arith.constant dense<0.000000e+00> : vector<32x128xf32>
    %470 = tpu.matmul %468, %469, %cst_109 {dimension_numbers = #tpu.dot_dimension_numbers<[1], [0], [0], [1], [0, 0, 1, 1], [], []>} : vector<32x128xbf16>, vector<128x128xbf16>, vector<32x128xf32> -> vector<32x128xf32>
    %c0_110 = arith.constant 0 : index
    %c0_111 = arith.constant 0 : index
    %471 = vector.load %arg10[%c0_110, %c0_111] : memref<32x128xf32, #tpu.memory_space<vmem>>, vector<32x128xf32>
    tpu.vector_store %arg10[%c0_110, %c0_111], %470 {strides = array<i32>} : memref<32x128xf32, #tpu.memory_space<vmem>>, vector<32x128xf32>,
    return
  }
  func.func @transform_0(%arg0: i32, %arg1: memref<32xi32, #tpu.memory_space<smem>>) -> (i32, i32, i32) {
    %c0_i32 = arith.constant 0 : i32
    %c0_i32_0 = arith.constant 0 : i32
    %c0_i32_1 = arith.constant 0 : i32
    return %arg0, %c0_i32, %c0_i32_0 : i32, i32, i32
  }
  func.func @transform_1(%arg0: i32, %arg1: memref<32xi32, #tpu.memory_space<smem>>) -> (i32, i32) {
    %c0_i32 = arith.constant 0 : i32
    %c0_i32_0 = arith.constant 0 : i32
    %c0_i32_1 = arith.constant 0 : i32
    return %c0_i32, %c0_i32_0 : i32, i32
  }
  func.func @transform_2(%arg0: i32, %arg1: memref<32xi32, #tpu.memory_space<smem>>) -> (i32, i32) {
    %c0_i32 = arith.constant 0 : i32
    %c0_i32_0 = arith.constant 0 : i32
    %c0_i32_1 = arith.constant 0 : i32
    return %c0_i32, %c0_i32_0 : i32, i32
  }
  func.func @transform_3(%arg0: i32, %arg1: memref<32xi32, #tpu.memory_space<smem>>) -> (i32, i32) {
    %c0_i32 = arith.constant 0 : i32
    %c0_i32_0 = arith.constant 0 : i32
    %c0_i32_1 = arith.constant 0 : i32
    return %c0_i32, %c0_i32_0 : i32, i32
  }
  func.func @transform_4(%arg0: i32, %arg1: memref<32xi32, #tpu.memory_space<smem>>) -> (i32, i32) {
    %c0_i32 = arith.constant 0 : i32
    %c0_i32_0 = arith.constant 0 : i32
    %c0_i32_1 = arith.constant 0 : i32
    return %c0_i32, %c0_i32_0 : i32, i32
  }
  func.func @transform_5(%arg0: i32, %arg1: memref<32xi32, #tpu.memory_space<smem>>) -> (i32, i32) {
    %c0_i32 = arith.constant 0 : i32
    %c0_i32_0 = arith.constant 0 : i32
    %c0_i32_1 = arith.constant 0 : i32
    return %c0_i32, %c0_i32_0 : i32, i32
  }
  func.func @transform_6(%arg0: i32, %arg1: memref<32xi32, #tpu.memory_space<smem>>) -> (i32, i32) {
    %c0_i32 = arith.constant 0 : i32
    %c0_i32_0 = arith.constant 0 : i32
    %c0_i32_1 = arith.constant 0 : i32
    return %c0_i32, %c0_i32_0 : i32, i32
  }
  func.func @transform_7(%arg0: i32, %arg1: memref<32xi32, #tpu.memory_space<smem>>) -> (i32, i32) {
    %c0_i32 = arith.constant 0 : i32
    %c0_i32_0 = arith.constant 0 : i32
    %c0_i32_1 = arith.constant 0 : i32
    return %c0_i32, %c0_i32_0 : i32, i32
  }
  func.func @transform_8(%arg0: i32, %arg1: memref<32xi32, #tpu.memory_space<smem>>) -> (i32, i32) {
    %c0_i32 = arith.constant 0 : i32
    %c0_i32_0 = arith.constant 0 : i32
    return %arg0, %c0_i32 : i32, i32
  }
}

</mosaic_0001>

<llo_original>
// kernel: tpu_custom_call.1
$region0: #{tpu_custom_call.1}
  #allocation0 [shape = 'u32[]', space=smem, size = 0x4, offset = 0x4, fixed_abs, tag = 'smem constant byte address 0x4 - core index']
  #allocation1 [shape = 'u32[144,128]{1,0:T(1,128)}', space=vmem, size = 0x12000, scoped, tag = 'internal scratch']
  #allocation2 [shape = 's32[1]{0}', space=sflag, size = 0x4, scoped, tag = 'scoped memory for tpu_custom_call.1']
  #allocation3 [shape = 'u8[512]{0}', space=smem, size = 0x200, scoped, tag = 'prefetched SMEM operand 0']
  %s0 = inlined_call_operand.hbm [shape: s32[32], index: 0, kind: input, shape index: {}]
  %s1 = inlined_call_operand.hbm [shape: bf16[32,8,128], index: 1, kind: input, shape index: {}]
  %s2 = inlined_call_operand.vmem [shape: bf16[8,128], index: 2, kind: input, shape index: {}]
  %s3 = inlined_call_operand.hbm [shape: bf16[128,384], index: 3, kind: input, shape index: {}]
  %s4 = inlined_call_operand.hbm [shape: bf16[128,128], index: 4, kind: input, shape index: {}]
  %s5 = inlined_call_operand.hbm [shape: bf16[128,512], index: 5, kind: input, shape index: {}]
  %s6 = inlined_call_operand.hbm [shape: bf16[512,128], index: 6, kind: input, shape index: {}]
  %s7 = inlined_call_operand.hbm [shape: bf16[128,128], index: 7, kind: input, shape index: {}]
  %s8 = inlined_call_operand.hbm [shape: f32[8,512], index: 8, kind: input, shape index: {}]
  %s9 = inlined_call_operand.hbm [shape: f32[32,128], index: 9, kind: output, shape index: {}]
  %s10 = sld [smem:[#allocation0]]
  $region70: #{tpu_custom_call.1} parent=0
    _
  %s12 = ssub.s32 1, %s10
  %s13 = scalar_select 0, %s12, %s10
  %15 = dma.hbm_to_smem %s0, 16, [#allocation3], [#allocation2]
  %16 = dma.done [#allocation2], 16
  %17 = sfence
  $region1: #{tpu_custom_call.1} parent=0
    #allocation4 [shape = 'u8[65536]{0}', space=vmem, size = 0x10000, scoped, tag = 'input window, operand 1, single buffered']
    #allocation5 [shape = 's32[1]{0}', space=sflag, size = 0x4, scoped, tag = 'scoped memory for tpu_custom_call.1']
    #allocation6 [shape = 's32[1]{0}', space=sflag, size = 0x4, scoped, tag = 'scoped memory for tpu_custom_call.1']
    #allocation7 [shape = 'u8[98304]{0}', space=vmem, size = 0x18000, scoped, tag = 'input window, operand 3, single buffered']
    #allocation8 [shape = 's32[1]{0}', space=sflag, size = 0x4, scoped, tag = 'scoped memory for tpu_custom_call.1']
    #allocation9 [shape = 'u8[32768]{0}', space=vmem, size = 0x8000, scoped, tag = 'input window, operand 4, single buffered']
    #allocation10 [shape = 'u8[131072]{0}', space=vmem, size = 0x20000, scoped, tag = 'input window, operand 5, single buffered']
    #allocation11 [shape = 's32[1]{0}', space=sflag, size = 0x4, scoped, tag = 'scoped memory for tpu_custom_call.1']
    #allocation12 [shape = 'u8[131072]{0}', space=vmem, size = 0x20000, scoped, tag = 'input window, operand 6, single buffered']
    #allocation13 [shape = 'u8[32768]{0}', space=vmem, size = 0x8000, scoped, tag = 'input window, operand 7, single buffered']
    #allocation14 [shape = 's32[1]{0}', space=sflag, size = 0x4, scoped, tag = 'scoped memory for tpu_custom_call.1']
    #allocation15 [shape = 'u8[16384]{0}', space=vmem, size = 0x4000, scoped, tag = 'input window, operand 8, single buffered']
    #allocation16 [shape = 'u8[16384]{0}', space=vmem, size = 0x4000, scoped, tag = 'output window, operand 0, single buffered']
    %18 = vsyncpa [#allocation5], 0
    %19 = vsyncpa [#allocation8], 0
    %20 = vsyncpa [#allocation11], 0
    %21 = vsyncpa [#allocation14], 0
    %22 = vsyncpa [#allocation6], 0
    // Predicated region
    $region2: #{tpu_custom_call.1} parent=1 // pred_check
      _
    $region3: #{tpu_custom_call.1} parent=1 // pred_check_branch
      %24 = sbr.rel (0) target = $region5
    $region4: #{tpu_custom_call.1} parent=1 // pred_region
      %s26 = ssub.s32 2048, 2048
      %27 = vsyncadd [#allocation5], %s26
      %s28 = sshll.u32 [#allocation4], 4
      %s29 = int_to_ptr.vmem [resolvable:$true] %s28
      %34 = dma.hbm_to_vmem [thread:$0]  %s1, 2048, %s29, [#allocation5], 64, 64, 4
    $region5: #{tpu_custom_call.1} parent=1 // pred_fallthru
      _
    // Predicated region
    $region6: #{tpu_custom_call.1} parent=1 // pred_check
      _
    $region7: #{tpu_custom_call.1} parent=1 // pred_check_branch
      %36 = sbr.rel (0) target = $region9
    $region8: #{tpu_custom_call.1} parent=1 // pred_region
      _
    $region9: #{tpu_custom_call.1} parent=1 // pred_fallthru
      _
    // Predicated region
    $region10: #{tpu_custom_call.1} parent=1 // pred_check
      _
    $region11: #{tpu_custom_call.1} parent=1 // pred_check_branch
      %38 = sbr.rel (0) target = $region13
    $region12: #{tpu_custom_call.1} parent=1 // pred_region
      %s40 = ssub.s32 3072, 3072
      %41 = vsyncadd [#allocation8], %s40
      %s42 = sshll.u32 [#allocation7], 4
      %s43 = int_to_ptr.vmem [resolvable:$true] %s42
      %48 = dma.hbm_to_vmem [thread:$0]  %s3, 3072, %s43, [#allocation8], 192, 192, 12
    $region13: #{tpu_custom_call.1} parent=1 // pred_fallthru
      _
    // Predicated region
    $region14: #{tpu_custom_call.1} parent=1 // pred_check
      _
    $region15: #{tpu_custom_call.1} parent=1 // pred_check_branch
      %50 = sbr.rel (0) target = $region17
    $region16: #{tpu_custom_call.1} parent=1 // pred_region
      %s52 = ssub.s32 1024, 1024
      %53 = vsyncadd [#allocation8], %s52
      %s54 = sshll.u32 [#allocation9], 4
      %s55 = int_to_ptr.vmem [resolvable:$true] %s54
      %60 = dma.hbm_to_vmem [thread:$0]  %s4, 1024, %s55, [#allocation8], 64, 64, 4
    $region17: #{tpu_custom_call.1} parent=1 // pred_fallthru
      _
    // Predicated region
    $region18: #{tpu_custom_call.1} parent=1 // pred_check
      _
    $region19: #{tpu_custom_call.1} parent=1 // pred_check_branch
      %62 = sbr.rel (0) target = $region21
    $region20: #{tpu_custom_call.1} parent=1 // pred_region
      %s64 = ssub.s32 4096, 4096
      %65 = vsyncadd [#allocation11], %s64
      %s66 = sshll.u32 [#allocation10], 4
      %s67 = int_to_ptr.vmem [resolvable:$true] %s66
      %72 = dma.hbm_to_vmem [thread:$0]  %s5, 4096, %s67, [#allocation11], 256, 256, 16
    $region21: #{tpu_custom_call.1} parent=1 // pred_fallthru
      _
    // Predicated region
    $region22: #{tpu_custom_call.1} parent=1 // pred_check
      _
    $region23: #{tpu_custom_call.1} parent=1 // pred_check_branch
      %74 = sbr.rel (0) target = $region25
    $region24: #{tpu_custom_call.1} parent=1 // pred_region
      %s76 = ssub.s32 4096, 4096
      %77 = vsyncadd [#allocation11], %s76
      %s78 = sshll.u32 [#allocation12], 4
      %s79 = int_to_ptr.vmem [resolvable:$true] %s78
      %84 = dma.hbm_to_vmem [thread:$0]  %s6, 4096, %s79, [#allocation11], 64, 64, 4
    $region25: #{tpu_custom_call.1} parent=1 // pred_fallthru
      _
    // Predicated region
    $region26: #{tpu_custom_call.1} parent=1 // pred_check
      _
    $region27: #{tpu_custom_call.1} parent=1 // pred_check_branch
      %86 = sbr.rel (0) target = $region29
    $region28: #{tpu_custom_call.1} parent=1 // pred_region
      %s88 = ssub.s32 1024, 1024
      %89 = vsyncadd [#allocation14], %s88
      %s90 = sshll.u32 [#allocation13], 4
      %s91 = int_to_ptr.vmem [resolvable:$true] %s90
      %96 = dma.hbm_to_vmem [thread:$0]  %s7, 1024, %s91, [#allocation14], 64, 64, 4
    $region29: #{tpu_custom_call.1} parent=1 // pred_fallthru
      _
    // Predicated region
    $region30: #{tpu_custom_call.1} parent=1 // pred_check
      _
    $region31: #{tpu_custom_call.1} parent=1 // pred_check_branch
      %98 = sbr.rel (0) target = $region33
    $region32: #{tpu_custom_call.1} parent=1 // pred_region
      %s100 = ssub.s32 512, 512
      %101 = vsyncadd [#allocation14], %s100
      %s103 = sshll.u32 [#allocation15], 4
      %s104 = int_to_ptr.vmem [resolvable:$true] %s103
      %106 = dma.hbm_to_vmem [thread:$0]  %s8, 512, %s104, [#allocation14]
    $region33: #{tpu_custom_call.1} parent=1 // pred_fallthru
      _
    // Predicated region
    $region34: #{tpu_custom_call.1} parent=1 // pred_check
      _
    $region35: #{tpu_custom_call.1} parent=1 // pred_check_branch
      %108 = sbr.rel (0) target = $region37
    $region36: #{tpu_custom_call.1} parent=1 // pred_region
      %109 = dma.done [#allocation5], 2048
    $region37: #{tpu_custom_call.1} parent=1 // pred_fallthru
      _
    // Predicated region
    $region38: #{tpu_custom_call.1} parent=1 // pred_check
      _
    $region39: #{tpu_custom_call.1} parent=1 // pred_check_branch
      %111 = sbr.rel (0) target = $region41
    $region40: #{tpu_custom_call.1} parent=1 // pred_region
      %112 = dma.done [#allocation8], 3072
    $region41: #{tpu_custom_call.1} parent=1 // pred_fallthru
      _
    // Predicated region
    $region42: #{tpu_custom_call.1} parent=1 // pred_check
      _
    $region43: #{tpu_custom_call.1} parent=1 // pred_check_branch
      %114 = sbr.rel (0) target = $region45
    $region44: #{tpu_custom_call.1} parent=1 // pred_region
      %115 = dma.done [#allocation8], 1024
    $region45: #{tpu_custom_call.1} parent=1 // pred_fallthru
      _
    // Predicated region
    $region46: #{tpu_custom_call.1} parent=1 // pred_check
      _
    $region47: #{tpu_custom_call.1} parent=1 // pred_check_branch
      %117 = sbr.rel (0) target = $region49
    $region48: #{tpu_custom_call.1} parent=1 // pred_region
      %118 = dma.done [#allocation11], 4096
    $region49: #{tpu_custom_call.1} parent=1 // pred_fallthru
      _
    // Predicated region
    $region50: #{tpu_custom_call.1} parent=1 // pred_check
      _
    $region51: #{tpu_custom_call.1} parent=1 // pred_check_branch
      %120 = sbr.rel (0) target = $region53
    $region52: #{tpu_custom_call.1} parent=1 // pred_region
      %121 = dma.done [#allocation11], 4096
    $region53: #{tpu_custom_call.1} parent=1 // pred_fallthru
      _
    // Predicated region
    $region54: #{tpu_custom_call.1} parent=1 // pred_check
      _
    $region55: #{tpu_custom_call.1} parent=1 // pred_check_branch
      %123 = sbr.rel (0) target = $region57
    $region56: #{tpu_custom_call.1} parent=1 // pred_region
      %124 = dma.done [#allocation14], 1024
    $region57: #{tpu_custom_call.1} parent=1 // pred_fallthru
      _
    // Predicated region
    $region58: #{tpu_custom_call.1} parent=1 // pred_check
      _
    $region59: #{tpu_custom_call.1} parent=1 // pred_check_branch
      %126 = sbr.rel (0) target = $region61
    $region60: #{tpu_custom_call.1} parent=1 // pred_region
      %127 = dma.done [#allocation14], 512
    $region61: #{tpu_custom_call.1} parent=1 // pred_fallthru
      _
    %v129 = vld [vmem:[#allocation15] sm:$0xff]
    %v130 = vld [vmem:[#allocation15 + $0x8] sm:$0xff]
    %v131 = vld [vmem:[#allocation15 + $0x10] sm:$0xff]
    %v132 = vld [vmem:[#allocation15 + $0x18] sm:$0xff]
    %v133 = vld [vmem:[#allocation4] sm:$0xf]
    %v134 = vld [vmem:[#allocation4 + $0x4] sm:$0xf]
    %v135 = vld [vmem:[#allocation4 + $0x8] sm:$0xf]
    %v136 = vld [vmem:[#allocation4 + $0xc] sm:$0xf]
    %v137 = vld [vmem:[#allocation4 + $0x10] sm:$0xf]
    %v138 = vld [vmem:[#allocation4 + $0x14] sm:$0xf]
    %v139 = vld [vmem:[#allocation4 + $0x18] sm:$0xf]
    %v140 = vld [vmem:[#allocation4 + $0x1c] sm:$0xf]
    %v141 = vld [vmem:[#allocation4 + $0x20] sm:$0xf]
    %v142 = vld [vmem:[#allocation4 + $0x24] sm:$0xf]
    %v143 = vld [vmem:[#allocation4 + $0x28] sm:$0xf]
    %v144 = vld [vmem:[#allocation4 + $0x2c] sm:$0xf]
    %v145 = vld [vmem:[#allocation4 + $0x30] sm:$0xf]
    %v146 = vld [vmem:[#allocation4 + $0x34] sm:$0xf]
    %v147 = vld [vmem:[#allocation4 + $0x38] sm:$0xf]
    %v148 = vld [vmem:[#allocation4 + $0x3c] sm:$0xf]
    %v149 = vld [vmem:[#allocation4 + $0x40] sm:$0xf]
    %v150 = vld [vmem:[#allocation4 + $0x44] sm:$0xf]
    %v151 = vld [vmem:[#allocation4 + $0x48] sm:$0xf]
    %v152 = vld [vmem:[#allocation4 + $0x4c] sm:$0xf]
    %v153 = vld [vmem:[#allocation4 + $0x50] sm:$0xf]
    %v154 = vld [vmem:[#allocation4 + $0x54] sm:$0xf]
    %v155 = vld [vmem:[#allocation4 + $0x58] sm:$0xf]
    %v156 = vld [vmem:[#allocation4 + $0x5c] sm:$0xf]
    %v157 = vld [vmem:[#allocation4 + $0x60] sm:$0xf]
    %v158 = vld [vmem:[#allocation4 + $0x64] sm:$0xf]
    %v159 = vld [vmem:[#allocation4 + $0x68] sm:$0xf]
    %v160 = vld [vmem:[#allocation4 + $0x6c] sm:$0xf]
    %v161 = vld [vmem:[#allocation4 + $0x70] sm:$0xf]
    %v162 = vld [vmem:[#allocation4 + $0x74] sm:$0xf]
    %v163 = vld [vmem:[#allocation4 + $0x78] sm:$0xf]
    %v164 = vld [vmem:[#allocation4 + $0x7c] sm:$0xf]
    %v165 = vunpack.c.l.bf16 %v133
    %v166 = vunpack.c.l.bf16 %v134
    %v167 = vunpack.c.l.bf16 %v135
    %v168 = vunpack.c.l.bf16 %v136
    %v169 = vunpack.c.l.bf16 %v137
    %v170 = vunpack.c.l.bf16 %v138
    %v171 = vunpack.c.l.bf16 %v139
    %v172 = vunpack.c.l.bf16 %v140
    %v173 = vunpack.c.l.bf16 %v141
    %v174 = vunpack.c.l.bf16 %v142
    %v175 = vunpack.c.l.bf16 %v143
    %v176 = vunpack.c.l.bf16 %v144
    %v177 = vunpack.c.l.bf16 %v145
    %v178 = vunpack.c.l.bf16 %v146
    %v179 = vunpack.c.l.bf16 %v147
    %v180 = vunpack.c.l.bf16 %v148
    %v181 = vunpack.c.l.bf16 %v149
    %v182 = vunpack.c.l.bf16 %v150
    %v183 = vunpack.c.l.bf16 %v151
    %v184 = vunpack.c.l.bf16 %v152
    %v185 = vunpack.c.l.bf16 %v153
    %v186 = vunpack.c.l.bf16 %v154
    %v187 = vunpack.c.l.bf16 %v155
    %v188 = vunpack.c.l.bf16 %v156
    %v189 = vunpack.c.l.bf16 %v157
    %v190 = vunpack.c.l.bf16 %v158
    %v191 = vunpack.c.l.bf16 %v159
    %v192 = vunpack.c.l.bf16 %v160
    %v193 = vunpack.c.l.bf16 %v161
    %v194 = vunpack.c.l.bf16 %v162
    %v195 = vunpack.c.l.bf16 %v163
    %v196 = vunpack.c.l.bf16 %v164
    %v197 = vld [vmem:[%s2] sm:$0xf]
    %v198 = vunpack.c.l.bf16 %v197
    %v199 = vadd.f32 %v165, %v198
    %v200 = vadd.f32 %v166, %v198
    %v201 = vadd.f32 %v167, %v198
    %v202 = vadd.f32 %v168, %v198
    %v203 = vadd.f32 %v169, %v198
    %v204 = vadd.f32 %v170, %v198
    %v205 = vadd.f32 %v171, %v198
    %v206 = vadd.f32 %v172, %v198
    %v207 = vadd.f32 %v173, %v198
    %v208 = vadd.f32 %v174, %v198
    %v209 = vadd.f32 %v175, %v198
    %v210 = vadd.f32 %v176, %v198
    %v211 = vadd.f32 %v177, %v198
    %v212 = vadd.f32 %v178, %v198
    %v213 = vadd.f32 %v179, %v198
    %v214 = vadd.f32 %v180, %v198
    %v215 = vadd.f32 %v181, %v198
    %v216 = vadd.f32 %v182, %v198
    %v217 = vadd.f32 %v183, %v198
    %v218 = vadd.f32 %v184, %v198
    %v219 = vadd.f32 %v185, %v198
    %v220 = vadd.f32 %v186, %v198
    %v221 = vadd.f32 %v187, %v198
    %v222 = vadd.f32 %v188, %v198
    %v223 = vadd.f32 %v189, %v198
    %v224 = vadd.f32 %v190, %v198
    %v225 = vadd.f32 %v191, %v198
    %v226 = vadd.f32 %v192, %v198
    %v227 = vadd.f32 %v193, %v198
    %v228 = vadd.f32 %v194, %v198
    %v229 = vadd.f32 %v195, %v198
    %v230 = vadd.f32 %v196, %v198
    %231 = vadd.xlane.f32.xlu0 %v199
    %v232 = vpop.xlane.xlu0 %231
    %233 = vadd.xlane.f32.xlu0 %v200
    %v234 = vpop.xlane.xlu0 %233
    %235 = vadd.xlane.f32.xlu0 %v201
    %v236 = vpop.xlane.xlu0 %235
    %237 = vadd.xlane.f32.xlu0 %v202
    %v238 = vpop.xlane.xlu0 %237
    %239 = vadd.xlane.f32.xlu0 %v203
    %v240 = vpop.xlane.xlu0 %239
    %241 = vadd.xlane.f32.xlu0 %v204
    %v242 = vpop.xlane.xlu0 %241
    %243 = vadd.xlane.f32.xlu0 %v205
    %v244 = vpop.xlane.xlu0 %243
    %245 = vadd.xlane.f32.xlu0 %v206
    %v246 = vpop.xlane.xlu0 %245
    %247 = vadd.xlane.f32.xlu0 %v207
    %v248 = vpop.xlane.xlu0 %247
    %249 = vadd.xlane.f32.xlu0 %v208
    %v250 = vpop.xlane.xlu0 %249
    %251 = vadd.xlane.f32.xlu0 %v209
    %v252 = vpop.xlane.xlu0 %251
    %253 = vadd.xlane.f32.xlu0 %v210
    %v254 = vpop.xlane.xlu0 %253
    %255 = vadd.xlane.f32.xlu0 %v211
    %v256 = vpop.xlane.xlu0 %255
    %257 = vadd.xlane.f32.xlu0 %v212
    %v258 = vpop.xlane.xlu0 %257
    %259 = vadd.xlane.f32.xlu0 %v213
    %v260 = vpop.xlane.xlu0 %259
    %261 = vadd.xlane.f32.xlu0 %v214
    %v262 = vpop.xlane.xlu0 %261
    %263 = vadd.xlane.f32.xlu0 %v215
    %v264 = vpop.xlane.xlu0 %263
    %265 = vadd.xlane.f32.xlu0 %v216
    %v266 = vpop.xlane.xlu0 %265
    %267 = vadd.xlane.f32.xlu0 %v217
    %v268 = vpop.xlane.xlu0 %267
    %269 = vadd.xlane.f32.xlu0 %v218
    %v270 = vpop.xlane.xlu0 %269
    %271 = vadd.xlane.f32.xlu0 %v219
    %v272 = vpop.xlane.xlu0 %271
    %273 = vadd.xlane.f32.xlu0 %v220
    %v274 = vpop.xlane.xlu0 %273
    %275 = vadd.xlane.f32.xlu0 %v221
    %v276 = vpop.xlane.xlu0 %275
    %277 = vadd.xlane.f32.xlu0 %v222
    %v278 = vpop.xlane.xlu0 %277
    %279 = vadd.xlane.f32.xlu0 %v223
    %v280 = vpop.xlane.xlu0 %279
    %281 = vadd.xlane.f32.xlu0 %v224
    %v282 = vpop.xlane.xlu0 %281
    %283 = vadd.xlane.f32.xlu0 %v225
    %v284 = vpop.xlane.xlu0 %283
    %285 = vadd.xlane.f32.xlu0 %v226
    %v286 = vpop.xlane.xlu0 %285
    %287 = vadd.xlane.f32.xlu0 %v227
    %v288 = vpop.xlane.xlu0 %287
    %289 = vadd.xlane.f32.xlu0 %v228
    %v290 = vpop.xlane.xlu0 %289
    %291 = vadd.xlane.f32.xlu0 %v229
    %v292 = vpop.xlane.xlu0 %291
    %293 = vadd.xlane.f32.xlu0 %v230
    %v294 = vpop.xlane.xlu0 %293
    %v295 = vrcp.pop 128.0
    %v296 = vmul.f32 %v232, %v295
    %v297 = vmul.f32 %v234, %v295
    %v298 = vmul.f32 %v236, %v295
    %v299 = vmul.f32 %v238, %v295
    %v300 = vmul.f32 %v240, %v295
    %v301 = vmul.f32 %v242, %v295
    %v302 = vmul.f32 %v244, %v295
    %v303 = vmul.f32 %v246, %v295
    %v304 = vmul.f32 %v248, %v295
    %v305 = vmul.f32 %v250, %v295
    %v306 = vmul.f32 %v252, %v295
    %v307 = vmul.f32 %v254, %v295
    %v308 = vmul.f32 %v256, %v295
    %v309 = vmul.f32 %v258, %v295
    %v310 = vmul.f32 %v260, %v295
    %v311 = vmul.f32 %v262, %v295
    %v312 = vmul.f32 %v264, %v295
    %v313 = vmul.f32 %v266, %v295
    %v314 = vmul.f32 %v268, %v295
    %v315 = vmul.f32 %v270, %v295
    %v316 = vmul.f32 %v272, %v295
    %v317 = vmul.f32 %v274, %v295
    %v318 = vmul.f32 %v276, %v295
    %v319 = vmul.f32 %v278, %v295
    %v320 = vmul.f32 %v280, %v295
    %v321 = vmul.f32 %v282, %v295
    %v322 = vmul.f32 %v284, %v295
    %v323 = vmul.f32 %v286, %v295
    %v324 = vmul.f32 %v288, %v295
    %v325 = vmul.f32 %v290, %v295
    %v326 = vmul.f32 %v292, %v295
    %v327 = vmul.f32 %v294, %v295
    %v328 = vsub.f32 %v199, %v296
    %v329 = vsub.f32 %v200, %v297
    %v330 = vsub.f32 %v201, %v298
    %v331 = vsub.f32 %v202, %v299
    %v332 = vsub.f32 %v203, %v300
    %v333 = vsub.f32 %v204, %v301
    %v334 = vsub.f32 %v205, %v302
    %v335 = vsub.f32 %v206, %v303
    %v336 = vsub.f32 %v207, %v304
    %v337 = vsub.f32 %v208, %v305
    %v338 = vsub.f32 %v209, %v306
    %v339 = vsub.f32 %v210, %v307
    %v340 = vsub.f32 %v211, %v308
    %v341 = vsub.f32 %v212, %v309
    %v342 = vsub.f32 %v213, %v310
    %v343 = vsub.f32 %v214, %v311
    %v344 = vsub.f32 %v215, %v312
    %v345 = vsub.f32 %v216, %v313
    %v346 = vsub.f32 %v217, %v314
    %v347 = vsub.f32 %v218, %v315
    %v348 = vsub.f32 %v219, %v316
    %v349 = vsub.f32 %v220, %v317
    %v350 = vsub.f32 %v221, %v318
    %v351 = vsub.f32 %v222, %v319
    %v352 = vsub.f32 %v223, %v320
    %v353 = vsub.f32 %v224, %v321
    %v354 = vsub.f32 %v225, %v322
    %v355 = vsub.f32 %v226, %v323
    %v356 = vsub.f32 %v227, %v324
    %v357 = vsub.f32 %v228, %v325
    %v358 = vsub.f32 %v229, %v326
    %v359 = vsub.f32 %v230, %v327
    %v360 = vmul.f32 %v328, %v328
    %v361 = vmul.f32 %v329, %v329
    %v362 = vmul.f32 %v330, %v330
    %v363 = vmul.f32 %v331, %v331
    %v364 = vmul.f32 %v332, %v332
    %v365 = vmul.f32 %v333, %v333
    %v366 = vmul.f32 %v334, %v334
    %v367 = vmul.f32 %v335, %v335
    %v368 = vmul.f32 %v336, %v336
    %v369 = vmul.f32 %v337, %v337
    %v370 = vmul.f32 %v338, %v338
    %v371 = vmul.f32 %v339, %v339
    %v372 = vmul.f32 %v340, %v340
    %v373 = vmul.f32 %v341, %v341
    %v374 = vmul.f32 %v342, %v342
    %v375 = vmul.f32 %v343, %v343
    %v376 = vmul.f32 %v344, %v344
    %v377 = vmul.f32 %v345, %v345
    %v378 = vmul.f32 %v346, %v346
    %v379 = vmul.f32 %v347, %v347
    %v380 = vmul.f32 %v348, %v348
    %v381 = vmul.f32 %v349, %v349
    %v382 = vmul.f32 %v350, %v350
    %v383 = vmul.f32 %v351, %v351
    %v384 = vmul.f32 %v352, %v352
    %v385 = vmul.f32 %v353, %v353
    %v386 = vmul.f32 %v354, %v354
    %v387 = vmul.f32 %v355, %v355
    %v388 = vmul.f32 %v356, %v356
    %v389 = vmul.f32 %v357, %v357
    %v390 = vmul.f32 %v358, %v358
    %v391 = vmul.f32 %v359, %v359
    %392 = vadd.xlane.f32.xlu0 %v360
    %v393 = vpop.xlane.xlu0 %392
    %394 = vadd.xlane.f32.xlu0 %v361
    %v395 = vpop.xlane.xlu0 %394
    %396 = vadd.xlane.f32.xlu0 %v362
    %v397 = vpop.xlane.xlu0 %396
    %398 = vadd.xlane.f32.xlu0 %v363
    %v399 = vpop.xlane.xlu0 %398
    %400 = vadd.xlane.f32.xlu0 %v364
    %v401 = vpop.xlane.xlu0 %400
    %402 = vadd.xlane.f32.xlu0 %v365
    %v403 = vpop.xlane.xlu0 %402
    %404 = vadd.xlane.f32.xlu0 %v366
    %v405 = vpop.xlane.xlu0 %404
    %406 = vadd.xlane.f32.xlu0 %v367
    %v407 = vpop.xlane.xlu0 %406
    %408 = vadd.xlane.f32.xlu0 %v368
    %v409 = vpop.xlane.xlu0 %408
    %410 = vadd.xlane.f32.xlu0 %v369
    %v411 = vpop.xlane.xlu0 %410
    %412 = vadd.xlane.f32.xlu0 %v370
    %v413 = vpop.xlane.xlu0 %412
    %414 = vadd.xlane.f32.xlu0 %v371
    %v415 = vpop.xlane.xlu0 %414
    %416 = vadd.xlane.f32.xlu0 %v372
    %v417 = vpop.xlane.xlu0 %416
    %418 = vadd.xlane.f32.xlu0 %v373
    %v419 = vpop.xlane.xlu0 %418
    %420 = vadd.xlane.f32.xlu0 %v374
    %v421 = vpop.xlane.xlu0 %420
    %422 = vadd.xlane.f32.xlu0 %v375
    %v423 = vpop.xlane.xlu0 %422
    %424 = vadd.xlane.f32.xlu0 %v376
    %v425 = vpop.xlane.xlu0 %424
    %426 = vadd.xlane.f32.xlu0 %v377
    %v427 = vpop.xlane.xlu0 %426
    %428 = vadd.xlane.f32.xlu0 %v378
    %v429 = vpop.xlane.xlu0 %428
    %430 = vadd.xlane.f32.xlu0 %v379
    %v431 = vpop.xlane.xlu0 %430
    %432 = vadd.xlane.f32.xlu0 %v380
    %v433 = vpop.xlane.xlu0 %432
    %434 = vadd.xlane.f32.xlu0 %v381
    %v435 = vpop.xlane.xlu0 %434
    %436 = vadd.xlane.f32.xlu0 %v382
    %v437 = vpop.xlane.xlu0 %436
    %438 = vadd.xlane.f32.xlu0 %v383
    %v439 = vpop.xlane.xlu0 %438
    %440 = vadd.xlane.f32.xlu0 %v384
    %v441 = vpop.xlane.xlu0 %440
    %442 = vadd.xlane.f32.xlu0 %v385
    %v443 = vpop.xlane.xlu0 %442
    %444 = vadd.xlane.f32.xlu0 %v386
    %v445 = vpop.xlane.xlu0 %444
    %446 = vadd.xlane.f32.xlu0 %v387
    %v447 = vpop.xlane.xlu0 %446
    %448 = vadd.xlane.f32.xlu0 %v388
    %v449 = vpop.xlane.xlu0 %448
    %450 = vadd.xlane.f32.xlu0 %v389
    %v451 = vpop.xlane.xlu0 %450
    %452 = vadd.xlane.f32.xlu0 %v390
    %v453 = vpop.xlane.xlu0 %452
    %454 = vadd.xlane.f32.xlu0 %v391
    %v455 = vpop.xlane.xlu0 %454
    %v456 = vmul.f32 %v393, %v295
    %v457 = vmul.f32 %v395, %v295
    %v458 = vmul.f32 %v397, %v295
    %v459 = vmul.f32 %v399, %v295
    %v460 = vmul.f32 %v401, %v295
    %v461 = vmul.f32 %v403, %v295
    %v462 = vmul.f32 %v405, %v295
    %v463 = vmul.f32 %v407, %v295
    %v464 = vmul.f32 %v409, %v295
    %v465 = vmul.f32 %v411, %v295
    %v466 = vmul.f32 %v413, %v295
    %v467 = vmul.f32 %v415, %v295
    %v468 = vmul.f32 %v417, %v295
    %v469 = vmul.f32 %v419, %v295
    %v470 = vmul.f32 %v421, %v295
    %v471 = vmul.f32 %v423, %v295
    %v472 = vmul.f32 %v425, %v295
    %v473 = vmul.f32 %v427, %v295
    %v474 = vmul.f32 %v429, %v295
    %v475 = vmul.f32 %v431, %v295
    %v476 = vmul.f32 %v433, %v295
    %v477 = vmul.f32 %v435, %v295
    %v478 = vmul.f32 %v437, %v295
    %v479 = vmul.f32 %v439, %v295
    %v480 = vmul.f32 %v441, %v295
    %v481 = vmul.f32 %v443, %v295
    %v482 = vmul.f32 %v445, %v295
    %v483 = vmul.f32 %v447, %v295
    %v484 = vmul.f32 %v449, %v295
    %v485 = vmul.f32 %v451, %v295
    %v486 = vmul.f32 %v453, %v295
    %v487 = vmul.f32 %v455, %v295
    %v488 = vadd.f32 %v456, 1e-05
    %v489 = vadd.f32 %v457, 1e-05
    %v490 = vadd.f32 %v458, 1e-05
    %v491 = vadd.f32 %v459, 1e-05
    %v492 = vadd.f32 %v460, 1e-05
    %v493 = vadd.f32 %v461, 1e-05
    %v494 = vadd.f32 %v462, 1e-05
    %v495 = vadd.f32 %v463, 1e-05
    %v496 = vadd.f32 %v464, 1e-05
    %v497 = vadd.f32 %v465, 1e-05
    %v498 = vadd.f32 %v466, 1e-05
    %v499 = vadd.f32 %v467, 1e-05
    %v500 = vadd.f32 %v468, 1e-05
    %v501 = vadd.f32 %v469, 1e-05
    %v502 = vadd.f32 %v470, 1e-05
    %v503 = vadd.f32 %v471, 1e-05
    %v504 = vadd.f32 %v472, 1e-05
    %v505 = vadd.f32 %v473, 1e-05
    %v506 = vadd.f32 %v474, 1e-05
    %v507 = vadd.f32 %v475, 1e-05
    %v508 = vadd.f32 %v476, 1e-05
    %v509 = vadd.f32 %v477, 1e-05
    %v510 = vadd.f32 %v478, 1e-05
    %v511 = vadd.f32 %v479, 1e-05
    %v512 = vadd.f32 %v480, 1e-05
    %v513 = vadd.f32 %v481, 1e-05
    %v514 = vadd.f32 %v482, 1e-05
    %v515 = vadd.f32 %v483, 1e-05
    %v516 = vadd.f32 %v484, 1e-05
    %v517 = vadd.f32 %v485, 1e-05
    %v518 = vadd.f32 %v486, 1e-05
    %v519 = vadd.f32 %v487, 1e-05
    %v520 = vrsqrt.pop %v488
    %v521 = vrsqrt.pop %v489
    %v522 = vrsqrt.pop %v490
    %v523 = vrsqrt.pop %v491
    %v524 = vrsqrt.pop %v492
    %v525 = vrsqrt.pop %v493
    %v526 = vrsqrt.pop %v494
    %v527 = vrsqrt.pop %v495
    %v528 = vrsqrt.pop %v496
    %v529 = vrsqrt.pop %v497
    %v530 = vrsqrt.pop %v498
    %v531 = vrsqrt.pop %v499
    %v532 = vrsqrt.pop %v500
    %v533 = vrsqrt.pop %v501
    %v534 = vrsqrt.pop %v502
    %v535 = vrsqrt.pop %v503
    %v536 = vrsqrt.pop %v504
    %v537 = vrsqrt.pop %v505
    %v538 = vrsqrt.pop %v506
    %v539 = vrsqrt.pop %v507
    %v540 = vrsqrt.pop %v508
    %v541 = vrsqrt.pop %v509
    %v542 = vrsqrt.pop %v510
    %v543 = vrsqrt.pop %v511
    %v544 = vrsqrt.pop %v512
    %v545 = vrsqrt.pop %v513
    %v546 = vrsqrt.pop %v514
    %v547 = vrsqrt.pop %v515
    %v548 = vrsqrt.pop %v516
    %v549 = vrsqrt.pop %v517
    %v550 = vrsqrt.pop %v518
    %v551 = vrsqrt.pop %v519
    %v552 = vmul.f32 %v328, %v520
    %v553 = vmul.f32 %v329, %v521
    %v554 = vmul.f32 %v330, %v522
    %v555 = vmul.f32 %v331, %v523
    %v556 = vmul.f32 %v332, %v524
    %v557 = vmul.f32 %v333, %v525
    %v558 = vmul.f32 %v334, %v526
    %v559 = vmul.f32 %v335, %v527
    %v560 = vmul.f32 %v336, %v528
    %v561 = vmul.f32 %v337, %v529
    %v562 = vmul.f32 %v338, %v530
    %v563 = vmul.f32 %v339, %v531
    %v564 = vmul.f32 %v340, %v532
    %v565 = vmul.f32 %v341, %v533
    %v566 = vmul.f32 %v342, %v534
    %v567 = vmul.f32 %v343, %v535
    %v568 = vmul.f32 %v344, %v536
    %v569 = vmul.f32 %v345, %v537
    %v570 = vmul.f32 %v346, %v538
    %v571 = vmul.f32 %v347, %v539
    %v572 = vmul.f32 %v348, %v540
    %v573 = vmul.f32 %v349, %v541
    %v574 = vmul.f32 %v350, %v542
    %v575 = vmul.f32 %v351, %v543
    %v576 = vmul.f32 %v352, %v544
    %v577 = vmul.f32 %v353, %v545
    %v578 = vmul.f32 %v354, %v546
    %v579 = vmul.f32 %v355, %v547
    %v580 = vmul.f32 %v356, %v548
    %v581 = vmul.f32 %v357, %v549
    %v582 = vmul.f32 %v358, %v550
    %v583 = vmul.f32 %v359, %v551
    %v584 = vlaneseq
    %v585 = vshrl.u32 %v584, 7
    %v586 = vsub.s32 1, %v585
    %v587 = vrot.slane %v129, %v586
    %v588 = vmul.f32 %v552, %v587
    %v589 = vmul.f32 %v553, %v587
    %v590 = vmul.f32 %v554, %v587
    %v591 = vmul.f32 %v555, %v587
    %v592 = vmul.f32 %v556, %v587
    %v593 = vmul.f32 %v557, %v587
    %v594 = vmul.f32 %v558, %v587
    %v595 = vmul.f32 %v559, %v587
    %v596 = vmul.f32 %v560, %v587
    %v597 = vmul.f32 %v561, %v587
    %v598 = vmul.f32 %v562, %v587
    %v599 = vmul.f32 %v563, %v587
    %v600 = vmul.f32 %v564, %v587
    %v601 = vmul.f32 %v565, %v587
    %v602 = vmul.f32 %v566, %v587
    %v603 = vmul.f32 %v567, %v587
    %v604 = vmul.f32 %v568, %v587
    %v605 = vmul.f32 %v569, %v587
    %v606 = vmul.f32 %v570, %v587
    %v607 = vmul.f32 %v571, %v587
    %v608 = vmul.f32 %v572, %v587
    %v609 = vmul.f32 %v573, %v587
    %v610 = vmul.f32 %v574, %v587
    %v611 = vmul.f32 %v575, %v587
    %v612 = vmul.f32 %v576, %v587
    %v613 = vmul.f32 %v577, %v587
    %v614 = vmul.f32 %v578, %v587
    %v615 = vmul.f32 %v579, %v587
    %v616 = vmul.f32 %v580, %v587
    %v617 = vmul.f32 %v581, %v587
    %v618 = vmul.f32 %v582, %v587
    %v619 = vmul.f32 %v583, %v587
    %v620 = vlaneseq
    %v621 = vshrl.u32 %v620, 7
    %v622 = vsub.s32 2, %v621
    %v623 = vrot.slane %v129, %v622
    %v624 = vadd.f32 %v588, %v623
    %v625 = vadd.f32 %v589, %v623
    %v626 = vadd.f32 %v590, %v623
    %v627 = vadd.f32 %v591, %v623
    %v628 = vadd.f32 %v592, %v623
    %v629 = vadd.f32 %v593, %v623
    %v630 = vadd.f32 %v594, %v623
    %v631 = vadd.f32 %v595, %v623
    %v632 = vadd.f32 %v596, %v623
    %v633 = vadd.f32 %v597, %v623
    %v634 = vadd.f32 %v598, %v623
    %v635 = vadd.f32 %v599, %v623
    %v636 = vadd.f32 %v600, %v623
    %v637 = vadd.f32 %v601, %v623
    %v638 = vadd.f32 %v602, %v623
    %v639 = vadd.f32 %v603, %v623
    %v640 = vadd.f32 %v604, %v623
    %v641 = vadd.f32 %v605, %v623
    %v642 = vadd.f32 %v606, %v623
    %v643 = vadd.f32 %v607, %v623
    %v644 = vadd.f32 %v608, %v623
    %v645 = vadd.f32 %v609, %v623
    %v646 = vadd.f32 %v610, %v623
    %v647 = vadd.f32 %v611, %v623
    %v648 = vadd.f32 %v612, %v623
    %v649 = vadd.f32 %v613, %v623
    %v650 = vadd.f32 %v614, %v623
    %v651 = vadd.f32 %v615, %v623
    %v652 = vadd.f32 %v616, %v623
    %v653 = vadd.f32 %v617, %v623
    %v654 = vadd.f32 %v618, %v623
    %v655 = vadd.f32 %v619, %v623
    %v656 = vpack.c.bf16 %v625, %v624
    %v657 = vpack.c.bf16 %v627, %v626
    %v658 = vpack.c.bf16 %v629, %v628
    %v659 = vpack.c.bf16 %v631, %v630
    %v660 = vpack.c.bf16 %v633, %v632
    %v661 = vpack.c.bf16 %v635, %v634
    %v662 = vpack.c.bf16 %v637, %v636
    %v663 = vpack.c.bf16 %v639, %v638
    %v664 = vpack.c.bf16 %v641, %v640
    %v665 = vpack.c.bf16 %v643, %v642
    %v666 = vpack.c.bf16 %v645, %v644
    %v667 = vpack.c.bf16 %v647, %v646
    %v668 = vpack.c.bf16 %v649, %v648
    %v669 = vpack.c.bf16 %v651, %v650
    %v670 = vpack.c.bf16 %v653, %v652
    %v671 = vpack.c.bf16 %v655, %v654
    %v672 = vld [vmem:[#allocation7] sm:$0xff]
    %v673 = vld [vmem:[#allocation7 + $0x8] sm:$0xf]
    %v674 = vld [vmem:[#allocation7 + $0xc] sm:$0xff]
    %v675 = vld [vmem:[#allocation7 + $0x14] sm:$0xf]
    %v676 = vld [vmem:[#allocation7 + $0x18] sm:$0xff]
    %v677 = vld [vmem:[#allocation7 + $0x20] sm:$0xf]
    %v678 = vld [vmem:[#allocation7 + $0x24] sm:$0xff]
    %v679 = vld [vmem:[#allocation7 + $0x2c] sm:$0xf]
    %v680 = vld [vmem:[#allocation7 + $0x30] sm:$0xff]
    %v681 = vld [vmem:[#allocation7 + $0x38] sm:$0xf]
    %v682 = vld [vmem:[#allocation7 + $0x3c] sm:$0xff]
    %v683 = vld [vmem:[#allocation7 + $0x44] sm:$0xf]
    %v684 = vld [vmem:[#allocation7 + $0x48] sm:$0xff]
    %v685 = vld [vmem:[#allocation7 + $0x50] sm:$0xf]
    %v686 = vld [vmem:[#allocation7 + $0x54] sm:$0xff]
    %v687 = vld [vmem:[#allocation7 + $0x5c] sm:$0xf]
    %v688 = vld [vmem:[#allocation7 + $0x60] sm:$0xff]
    %v689 = vld [vmem:[#allocation7 + $0x68] sm:$0xf]
    %v690 = vld [vmem:[#allocation7 + $0x6c] sm:$0xff]
    %v691 = vld [vmem:[#allocation7 + $0x74] sm:$0xf]
    %v692 = vld [vmem:[#allocation7 + $0x78] sm:$0xff]
    %v693 = vld [vmem:[#allocation7 + $0x80] sm:$0xf]
    %v694 = vld [vmem:[#allocation7 + $0x84] sm:$0xff]
    %v695 = vld [vmem:[#allocation7 + $0x8c] sm:$0xf]
    %v696 = vld [vmem:[#allocation7 + $0x90] sm:$0xff]
    %v697 = vld [vmem:[#allocation7 + $0x98] sm:$0xf]
    %v698 = vld [vmem:[#allocation7 + $0x9c] sm:$0xff]
    %v699 = vld [vmem:[#allocation7 + $0xa4] sm:$0xf]
    %v700 = vld [vmem:[#allocation7 + $0xa8] sm:$0xff]
    %v701 = vld [vmem:[#allocation7 + $0xb0] sm:$0xf]
    %v702 = vld [vmem:[#allocation7 + $0xb4] sm:$0xff]
    %v703 = vld [vmem:[#allocation7 + $0xbc] sm:$0xf]
    %v736 = vunpack.c.l.b16 %v672
    %v737 = vunpack.c.h.b16 %v672
    %v738 = vunpack.c.l.b16 %v673
    %v739 = vunpack.c.l.b16 %v674
    %v740 = vunpack.c.h.b16 %v674
    %v741 = vunpack.c.l.b16 %v675
    %v742 = vunpack.c.l.b16 %v676
    %v743 = vunpack.c.h.b16 %v676
    %v744 = vunpack.c.l.b16 %v677
    %v745 = vunpack.c.l.b16 %v678
    %v746 = vunpack.c.h.b16 %v678
    %v747 = vunpack.c.l.b16 %v679
    %v748 = vunpack.c.l.b16 %v680
    %v749 = vunpack.c.h.b16 %v680
    %v750 = vunpack.c.l.b16 %v681
    %v751 = vunpack.c.l.b16 %v682
    %v752 = vunpack.c.h.b16 %v682
    %v753 = vunpack.c.l.b16 %v683
    %v754 = vunpack.c.l.b16 %v684
    %v755 = vunpack.c.h.b16 %v684
    %v756 = vunpack.c.l.b16 %v685
    %v757 = vunpack.c.l.b16 %v686
    %v758 = vunpack.c.h.b16 %v686
    %v759 = vunpack.c.l.b16 %v687
    %v760 = vunpack.c.l.b16 %v688
    %v761 = vunpack.c.h.b16 %v688
    %v762 = vunpack.c.l.b16 %v689
    %v763 = vunpack.c.l.b16 %v690
    %v764 = vunpack.c.h.b16 %v690
    %v765 = vunpack.c.l.b16 %v691
    %v766 = vunpack.c.l.b16 %v692
    %v767 = vunpack.c.h.b16 %v692
    %v768 = vunpack.c.l.b16 %v693
    %v769 = vunpack.c.l.b16 %v694
    %v770 = vunpack.c.h.b16 %v694
    %v771 = vunpack.c.l.b16 %v695
    %v772 = vunpack.c.l.b16 %v696
    %v773 = vunpack.c.h.b16 %v696
    %v774 = vunpack.c.l.b16 %v697
    %v775 = vunpack.c.l.b16 %v698
    %v776 = vunpack.c.h.b16 %v698
    %v777 = vunpack.c.l.b16 %v699
    %v778 = vunpack.c.l.b16 %v700
    %v779 = vunpack.c.h.b16 %v700
    %v780 = vunpack.c.l.b16 %v701
    %v781 = vunpack.c.l.b16 %v702
    %v782 = vunpack.c.h.b16 %v702
    %v783 = vunpack.c.l.b16 %v703
    %v784 = vpack.c.b16 %v739, %v736
    %v785 = vpack.c.b16 %v740, %v737
    %v786 = vpack.c.b16 %v741, %v738
    %v787 = vpack.c.b16 %v745, %v742
    %v788 = vpack.c.b16 %v746, %v743
    %v789 = vpack.c.b16 %v747, %v744
    %v790 = vpack.c.b16 %v751, %v748
    %v791 = vpack.c.b16 %v752, %v749
    %v792 = vpack.c.b16 %v753, %v750
    %v793 = vpack.c.b16 %v757, %v754
    %v794 = vpack.c.b16 %v758, %v755
    %v795 = vpack.c.b16 %v759, %v756
    %v796 = vpack.c.b16 %v763, %v760
    %v797 = vpack.c.b16 %v764, %v761
    %v798 = vpack.c.b16 %v765, %v762
    %v799 = vpack.c.b16 %v769, %v766
    %v800 = vpack.c.b16 %v770, %v767
    %v801 = vpack.c.b16 %v771, %v768
    %v802 = vpack.c.b16 %v775, %v772
    %v803 = vpack.c.b16 %v776, %v773
    %v804 = vpack.c.b16 %v777, %v774
    %v805 = vpack.c.b16 %v781, %v778
    %v806 = vpack.c.b16 %v782, %v779
    %v807 = vpack.c.b16 %v783, %v780
    %832 = vmatprep.subr.bf16.mxu0 %v785
    %833 = vmatpush1.bf16.msra.mxu0 %v784
    %834 = vmatprep.subr.bf16.mxu0 %v788
    %835 = vmatpush1.bf16.msra.mxu0 %v787
    %836 = vmatprep.subr.bf16.mxu0 %v791
    %837 = vmatpush1.bf16.msra.mxu0 %v790
    %838 = vmatprep.subr.bf16.mxu0 %v794
    %839 = vmatpush1.bf16.msra.mxu0 %v793
    %840 = vmatprep.subr.bf16.mxu0 %v797
    %841 = vmatpush1.bf16.msra.mxu0 %v796
    %842 = vmatprep.subr.bf16.mxu0 %v800
    %843 = vmatpush1.bf16.msra.mxu0 %v799
    %844 = vmatprep.subr.bf16.mxu0 %v803
    %845 = vmatpush1.bf16.msra.mxu0 %v802
    %846 = vmatprep.subr.bf16.mxu0 %v806
    %847 = vmatpush1.bf16.msra.mxu0 %v805
    %848 = vmatprep.subr.bf16.mxu0 0
    %849 = vmatpush1.bf16.msra.mxu0 0
    %850 = vmatprep.subr.bf16.mxu0 0
    %851 = vmatpush1.bf16.msra.mxu0 0
    %852 = vmatprep.subr.bf16.mxu0 0
    %853 = vmatpush1.bf16.msra.mxu0 0
    %854 = vmatprep.subr.bf16.mxu0 0
    %855 = vmatpush1.bf16.msra.mxu0 0
    %856 = vmatprep.subr.bf16.mxu0 0
    %857 = vmatpush1.bf16.msra.mxu0 0
    %858 = vmatprep.subr.bf16.mxu0 0
    %859 = vmatpush1.bf16.msra.mxu0 0
    %860 = vmatprep.subr.bf16.mxu0 0
    %861 = vmatpush1.bf16.msra.mxu0 0
    %862 = vmatprep.subr.bf16.mxu0 0
    %863 = vmatpush1.bf16.msra.mxu0 0
    %864 = vmatprep.mubr.bf16.mxu0 0
    %865 = vmatmul.mubr.bf16.gmra.mrb[0].mxu0 %v656
    %v866 = vpop.f32.mrb[0].mxu0
    %v867 = vadd.f32 0.0, %v866
    %v868 = vpop.f32.mrb[0].mxu0
    %v869 = vadd.f32 0.0, %v868
    %v870 = vpop.f32.mrb[0].mxu0
    %v871 = vadd.f32 0.0, %v870
    %v872 = vpop.f32.mrb[0].mxu0
    %v873 = vadd.f32 0.0, %v872
    %874 = vmatprep.mubr.bf16.mxu0 0
    %875 = vmatmul.mubr.bf16.gmra.mrb[0].mxu0 %v657
    %v876 = vpop.f32.mrb[0].mxu0
    %v877 = vadd.f32 0.0, %v876
    %v878 = vpop.f32.mrb[0].mxu0
    %v879 = vadd.f32 0.0, %v878
    %v880 = vpop.f32.mrb[0].mxu0
    %v881 = vadd.f32 0.0, %v880
    %v882 = vpop.f32.mrb[0].mxu0
    %v883 = vadd.f32 0.0, %v882
    %884 = vmatprep.mubr.bf16.mxu0 0
    %885 = vmatmul.mubr.bf16.gmra.mrb[0].mxu0 %v658
    %v886 = vpop.f32.mrb[0].mxu0
    %v887 = vadd.f32 0.0, %v886
    %v888 = vpop.f32.mrb[0].mxu0
    %v889 = vadd.f32 0.0, %v888
    %v890 = vpop.f32.mrb[0].mxu0
    %v891 = vadd.f32 0.0, %v890
    %v892 = vpop.f32.mrb[0].mxu0
    %v893 = vadd.f32 0.0, %v892
    %894 = vmatprep.mubr.bf16.mxu0 0
    %895 = vmatmul.mubr.bf16.gmra.mrb[0].mxu0 %v659
    %v896 = vpop.f32.mrb[0].mxu0
    %v897 = vadd.f32 0.0, %v896
    %v898 = vpop.f32.mrb[0].mxu0
    %v899 = vadd.f32 0.0, %v898
    %v900 = vpop.f32.mrb[0].mxu0
    %v901 = vadd.f32 0.0, %v900
    %v902 = vpop.f32.mrb[0].mxu0
    %v903 = vadd.f32 0.0, %v902
    %904 = vmatprep.mubr.bf16.mxu0 0
    %905 = vmatmul.mubr.bf16.gmra.mrb[0].mxu0 %v660
    %v906 = vpop.f32.mrb[0].mxu0
    %v907 = vadd.f32 0.0, %v906
    %v908 = vpop.f32.mrb[0].mxu0
    %v909 = vadd.f32 0.0, %v908
    %v910 = vpop.f32.mrb[0].mxu0
    %v911 = vadd.f32 0.0, %v910
    %v912 = vpop.f32.mrb[0].mxu0
    %v913 = vadd.f32 0.0, %v912
    %914 = vmatprep.mubr.bf16.mxu0 0
    %915 = vmatmul.mubr.bf16.gmra.mrb[0].mxu0 %v661
    %v916 = vpop.f32.mrb[0].mxu0
    %v917 = vadd.f32 0.0, %v916
    %v918 = vpop.f32.mrb[0].mxu0
    %v919 = vadd.f32 0.0, %v918
    %v920 = vpop.f32.mrb[0].mxu0
    %v921 = vadd.f32 0.0, %v920
    %v922 = vpop.f32.mrb[0].mxu0
    %v923 = vadd.f32 0.0, %v922
    %924 = vmatprep.mubr.bf16.mxu0 0
    %925 = vmatmul.mubr.bf16.gmra.mrb[0].mxu0 %v662
    %v926 = vpop.f32.mrb[0].mxu0
    %v927 = vadd.f32 0.0, %v926
    %v928 = vpop.f32.mrb[0].mxu0
    %v929 = vadd.f32 0.0, %v928
    %v930 = vpop.f32.mrb[0].mxu0
    %v931 = vadd.f32 0.0, %v930
    %v932 = vpop.f32.mrb[0].mxu0
    %v933 = vadd.f32 0.0, %v932
    %934 = vmatprep.mubr.bf16.mxu0 0
    %935 = vmatmul.mubr.bf16.gmra.mrb[0].mxu0 %v663
    %v936 = vpop.f32.mrb[0].mxu0
    %v937 = vadd.f32 0.0, %v936
    %v938 = vpop.f32.mrb[0].mxu0
    %v939 = vadd.f32 0.0, %v938
    %v940 = vpop.f32.mrb[0].mxu0
    %v941 = vadd.f32 0.0, %v940
    %v942 = vpop.f32.mrb[0].mxu0
    %v943 = vadd.f32 0.0, %v942
    %944 = vmatprep.mubr.bf16.mxu0 0
    %945 = vmatmul.mubr.bf16.gmra.mrb[0].mxu0 %v664
    %v946 = vpop.f32.mrb[0].mxu0
    %v947 = vadd.f32 0.0, %v946
    %v948 = vpop.f32.mrb[0].mxu0
    %v949 = vadd.f32 0.0, %v948
    %v950 = vpop.f32.mrb[0].mxu0
    %v951 = vadd.f32 0.0, %v950
    %v952 = vpop.f32.mrb[0].mxu0
    %v953 = vadd.f32 0.0, %v952
    %954 = vmatprep.mubr.bf16.mxu0 0
    %955 = vmatmul.mubr.bf16.gmra.mrb[0].mxu0 %v665
    %v956 = vpop.f32.mrb[0].mxu0
    %v957 = vadd.f32 0.0, %v956
    %v958 = vpop.f32.mrb[0].mxu0
    %v959 = vadd.f32 0.0, %v958
    %v960 = vpop.f32.mrb[0].mxu0
    %v961 = vadd.f32 0.0, %v960
    %v962 = vpop.f32.mrb[0].mxu0
    %v963 = vadd.f32 0.0, %v962
    %964 = vmatprep.mubr.bf16.mxu0 0
    %965 = vmatmul.mubr.bf16.gmra.mrb[0].mxu0 %v666
    %v966 = vpop.f32.mrb[0].mxu0
    %v967 = vadd.f32 0.0, %v966
    %v968 = vpop.f32.mrb[0].mxu0
    %v969 = vadd.f32 0.0, %v968
    %v970 = vpop.f32.mrb[0].mxu0
    %v971 = vadd.f32 0.0, %v970
    %v972 = vpop.f32.mrb[0].mxu0
    %v973 = vadd.f32 0.0, %v972
    %974 = vmatprep.mubr.bf16.mxu0 0
    %975 = vmatmul.mubr.bf16.gmra.mrb[0].mxu0 %v667
    %v976 = vpop.f32.mrb[0].mxu0
    %v977 = vadd.f32 0.0, %v976
    %v978 = vpop.f32.mrb[0].mxu0
    %v979 = vadd.f32 0.0, %v978
    %v980 = vpop.f32.mrb[0].mxu0
    %v981 = vadd.f32 0.0, %v980
    %v982 = vpop.f32.mrb[0].mxu0
    %v983 = vadd.f32 0.0, %v982
    %984 = vmatprep.mubr.bf16.mxu0 0
    %985 = vmatmul.mubr.bf16.gmra.mrb[0].mxu0 %v668
    %v986 = vpop.f32.mrb[0].mxu0
    %v987 = vadd.f32 0.0, %v986
    %v988 = vpop.f32.mrb[0].mxu0
    %v989 = vadd.f32 0.0, %v988
    %v990 = vpop.f32.mrb[0].mxu0
    %v991 = vadd.f32 0.0, %v990
    %v992 = vpop.f32.mrb[0].mxu0
    %v993 = vadd.f32 0.0, %v992
    %994 = vmatprep.mubr.bf16.mxu0 0
    %995 = vmatmul.mubr.bf16.gmra.mrb[0].mxu0 %v669
    %v996 = vpop.f32.mrb[0].mxu0
    %v997 = vadd.f32 0.0, %v996
    %v998 = vpop.f32.mrb[0].mxu0
    %v999 = vadd.f32 0.0, %v998
    %v1000 = vpop.f32.mrb[0].mxu0
    %v1001 = vadd.f32 0.0, %v1000
    %v1002 = vpop.f32.mrb[0].mxu0
    %v1003 = vadd.f32 0.0, %v1002
    %1004 = vmatprep.mubr.bf16.mxu0 0
    %1005 = vmatmul.mubr.bf16.gmra.mrb[0].mxu0 %v670
    %v1006 = vpop.f32.mrb[0].mxu0
    %v1007 = vadd.f32 0.0, %v1006
    %v1008 = vpop.f32.mrb[0].mxu0
    %v1009 = vadd.f32 0.0, %v1008
    %v1010 = vpop.f32.mrb[0].mxu0
    %v1011 = vadd.f32 0.0, %v1010
    %v1012 = vpop.f32.mrb[0].mxu0
    %v1013 = vadd.f32 0.0, %v1012
    %1014 = vmatprep.mubr.bf16.mxu0 0
    %1015 = vmatmul.mubr.bf16.gmra.mrb[0].mxu0 %v671
    %v1016 = vpop.f32.mrb[0].mxu0
    %v1017 = vadd.f32 0.0, %v1016
    %v1018 = vpop.f32.mrb[0].mxu0
    %v1019 = vadd.f32 0.0, %v1018
    %v1020 = vpop.f32.mrb[0].mxu0
    %v1021 = vadd.f32 0.0, %v1020
    %v1022 = vpop.f32.mrb[0].mxu0
    %v1023 = vadd.f32 0.0, %v1022
    %1024 = vdwg.mxu0
    %1025 = vmatprep.subr.bf16.mxu0 0
    %1026 = vmatpush1.bf16.msra.mxu0 %v786
    %1027 = vmatprep.subr.bf16.mxu0 0
    %1028 = vmatpush1.bf16.msra.mxu0 %v789
    %1029 = vmatprep.subr.bf16.mxu0 0
    %1030 = vmatpush1.bf16.msra.mxu0 %v792
    %1031 = vmatprep.subr.bf16.mxu0 0
    %1032 = vmatpush1.bf16.msra.mxu0 %v795
    %1033 = vmatprep.subr.bf16.mxu0 0
    %1034 = vmatpush1.bf16.msra.mxu0 %v798
    %1035 = vmatprep.subr.bf16.mxu0 0
    %1036 = vmatpush1.bf16.msra.mxu0 %v801
    %1037 = vmatprep.subr.bf16.mxu0 0
    %1038 = vmatpush1.bf16.msra.mxu0 %v804
    %1039 = vmatprep.subr.bf16.mxu0 0
    %1040 = vmatpush1.bf16.msra.mxu0 %v807
    %1041 = vmatprep.subr.bf16.mxu0 0
    %1042 = vmatpush1.bf16.msra.mxu0 0
    %1043 = vmatprep.subr.bf16.mxu0 0
    %1044 = vmatpush1.bf16.msra.mxu0 0
    %1045 = vmatprep.subr.bf16.mxu0 0
    %1046 = vmatpush1.bf16.msra.mxu0 0
    %1047 = vmatprep.subr.bf16.mxu0 0
    %1048 = vmatpush1.bf16.msra.mxu0 0
    %1049 = vmatprep.subr.bf16.mxu0 0
    %1050 = vmatpush1.bf16.msra.mxu0 0
    %1051 = vmatprep.subr.bf16.mxu0 0
    %1052 = vmatpush1.bf16.msra.mxu0 0
    %1053 = vmatprep.subr.bf16.mxu0 0
    %1054 = vmatpush1.bf16.msra.mxu0 0
    %1055 = vmatprep.subr.bf16.mxu0 0
    %1056 = vmatpush1.bf16.msra.mxu0 0
    %1057 = vmatprep.mubr.bf16.mxu0 0
    %1058 = vmatmul.mubr.bf16.gmra.mrb[0].mxu0 %v656
    %v1059 = vpop.f32.mrb[0].mxu0
    %v1060 = vadd.f32 0.0, %v1059
    %v1061 = vpop.f32.mrb[0].mxu0
    %v1062 = vpop.f32.mrb[0].mxu0
    %v1063 = vadd.f32 0.0, %v1062
    %v1064 = vpop.f32.mrb[0].mxu0
    %1065 = vmatprep.mubr.bf16.mxu0 0
    %1066 = vmatmul.mubr.bf16.gmra.mrb[0].mxu0 %v657
    %v1067 = vpop.f32.mrb[0].mxu0
    %v1068 = vadd.f32 0.0, %v1067
    %v1069 = vpop.f32.mrb[0].mxu0
    %v1070 = vpop.f32.mrb[0].mxu0
    %v1071 = vadd.f32 0.0, %v1070
    %v1072 = vpop.f32.mrb[0].mxu0
    %1073 = vmatprep.mubr.bf16.mxu0 0
    %1074 = vmatmul.mubr.bf16.gmra.mrb[0].mxu0 %v658
    %v1075 = vpop.f32.mrb[0].mxu0
    %v1076 = vadd.f32 0.0, %v1075
    %v1077 = vpop.f32.mrb[0].mxu0
    %v1078 = vpop.f32.mrb[0].mxu0
    %v1079 = vadd.f32 0.0, %v1078
    %v1080 = vpop.f32.mrb[0].mxu0
    %1081 = vmatprep.mubr.bf16.mxu0 0
    %1082 = vmatmul.mubr.bf16.gmra.mrb[0].mxu0 %v659
    %v1083 = vpop.f32.mrb[0].mxu0
    %v1084 = vadd.f32 0.0, %v1083
    %v1085 = vpop.f32.mrb[0].mxu0
    %v1086 = vpop.f32.mrb[0].mxu0
    %v1087 = vadd.f32 0.0, %v1086
    %v1088 = vpop.f32.mrb[0].mxu0
    %1089 = vmatprep.mubr.bf16.mxu0 0
    %1090 = vmatmul.mubr.bf16.gmra.mrb[0].mxu0 %v660
    %v1091 = vpop.f32.mrb[0].mxu0
    %v1092 = vadd.f32 0.0, %v1091
    %v1093 = vpop.f32.mrb[0].mxu0
    %v1094 = vpop.f32.mrb[0].mxu0
    %v1095 = vadd.f32 0.0, %v1094
    %v1096 = vpop.f32.mrb[0].mxu0
    %1097 = vmatprep.mubr.bf16.mxu0 0
    %1098 = vmatmul.mubr.bf16.gmra.mrb[0].mxu0 %v661
    %v1099 = vpop.f32.mrb[0].mxu0
    %v1100 = vadd.f32 0.0, %v1099
    %v1101 = vpop.f32.mrb[0].mxu0
    %v1102 = vpop.f32.mrb[0].mxu0
    %v1103 = vadd.f32 0.0, %v1102
    %v1104 = vpop.f32.mrb[0].mxu0
    %1105 = vmatprep.mubr.bf16.mxu0 0
    %1106 = vmatmul.mubr.bf16.gmra.mrb[0].mxu0 %v662
    %v1107 = vpop.f32.mrb[0].mxu0
    %v1108 = vadd.f32 0.0, %v1107
    %v1109 = vpop.f32.mrb[0].mxu0
    %v1110 = vpop.f32.mrb[0].mxu0
    %v1111 = vadd.f32 0.0, %v1110
    %v1112 = vpop.f32.mrb[0].mxu0
    %1113 = vmatprep.mubr.bf16.mxu0 0
    %1114 = vmatmul.mubr.bf16.gmra.mrb[0].mxu0 %v663
    %v1115 = vpop.f32.mrb[0].mxu0
    %v1116 = vadd.f32 0.0, %v1115
    %v1117 = vpop.f32.mrb[0].mxu0
    %v1118 = vpop.f32.mrb[0].mxu0
    %v1119 = vadd.f32 0.0, %v1118
    %v1120 = vpop.f32.mrb[0].mxu0
    %1121 = vmatprep.mubr.bf16.mxu0 0
    %1122 = vmatmul.mubr.bf16.gmra.mrb[0].mxu0 %v664
    %v1123 = vpop.f32.mrb[0].mxu0
    %v1124 = vadd.f32 0.0, %v1123
    %v1125 = vpop.f32.mrb[0].mxu0
    %v1126 = vpop.f32.mrb[0].mxu0
    %v1127 = vadd.f32 0.0, %v1126
    %v1128 = vpop.f32.mrb[0].mxu0
    %1129 = vmatprep.mubr.bf16.mxu0 0
    %1130 = vmatmul.mubr.bf16.gmra.mrb[0].mxu0 %v665
    %v1131 = vpop.f32.mrb[0].mxu0
    %v1132 = vadd.f32 0.0, %v1131
    %v1133 = vpop.f32.mrb[0].mxu0
    %v1134 = vpop.f32.mrb[0].mxu0
    %v1135 = vadd.f32 0.0, %v1134
    %v1136 = vpop.f32.mrb[0].mxu0
    %1137 = vmatprep.mubr.bf16.mxu0 0
    %1138 = vmatmul.mubr.bf16.gmra.mrb[0].mxu0 %v666
    %v1139 = vpop.f32.mrb[0].mxu0
    %v1140 = vadd.f32 0.0, %v1139
    %v1141 = vpop.f32.mrb[0].mxu0
    %v1142 = vpop.f32.mrb[0].mxu0
    %v1143 = vadd.f32 0.0, %v1142
    %v1144 = vpop.f32.mrb[0].mxu0
    %1145 = vmatprep.mubr.bf16.mxu0 0
    %1146 = vmatmul.mubr.bf16.gmra.mrb[0].mxu0 %v667
    %v1147 = vpop.f32.mrb[0].mxu0
    %v1148 = vadd.f32 0.0, %v1147
    %v1149 = vpop.f32.mrb[0].mxu0
    %v1150 = vpop.f32.mrb[0].mxu0
    %v1151 = vadd.f32 0.0, %v1150
    %v1152 = vpop.f32.mrb[0].mxu0
    %1153 = vmatprep.mubr.bf16.mxu0 0
    %1154 = vmatmul.mubr.bf16.gmra.mrb[0].mxu0 %v668
    %v1155 = vpop.f32.mrb[0].mxu0
    %v1156 = vadd.f32 0.0, %v1155
    %v1157 = vpop.f32.mrb[0].mxu0
    %v1158 = vpop.f32.mrb[0].mxu0
    %v1159 = vadd.f32 0.0, %v1158
    %v1160 = vpop.f32.mrb[0].mxu0
    %1161 = vmatprep.mubr.bf16.mxu0 0
    %1162 = vmatmul.mubr.bf16.gmra.mrb[0].mxu0 %v669
    %v1163 = vpop.f32.mrb[0].mxu0
    %v1164 = vadd.f32 0.0, %v1163
    %v1165 = vpop.f32.mrb[0].mxu0
    %v1166 = vpop.f32.mrb[0].mxu0
    %v1167 = vadd.f32 0.0, %v1166
    %v1168 = vpop.f32.mrb[0].mxu0
    %1169 = vmatprep.mubr.bf16.mxu0 0
    %1170 = vmatmul.mubr.bf16.gmra.mrb[0].mxu0 %v670
    %v1171 = vpop.f32.mrb[0].mxu0
    %v1172 = vadd.f32 0.0, %v1171
    %v1173 = vpop.f32.mrb[0].mxu0
    %v1174 = vpop.f32.mrb[0].mxu0
    %v1175 = vadd.f32 0.0, %v1174
    %v1176 = vpop.f32.mrb[0].mxu0
    %1177 = vmatprep.mubr.bf16.mxu0 0
    %1178 = vmatmul.mubr.bf16.gmra.mrb[0].mxu0 %v671
    %v1179 = vpop.f32.mrb[0].mxu0
    %v1180 = vadd.f32 0.0, %v1179
    %v1181 = vpop.f32.mrb[0].mxu0
    %v1182 = vpop.f32.mrb[0].mxu0
    %v1183 = vadd.f32 0.0, %v1182
    %v1184 = vpop.f32.mrb[0].mxu0
    %1185 = vdwg.mxu0
    %v1186 = vpack.c.bf16 %v867, %v867
    %v1187 = vpack.c.bf16 %v871, %v871
    %v1188 = vpack.c.bf16 %v877, %v877
    %v1189 = vpack.c.bf16 %v881, %v881
    %v1190 = vpack.c.bf16 %v887, %v887
    %v1191 = vpack.c.bf16 %v891, %v891
    %v1192 = vpack.c.bf16 %v897, %v897
    %v1193 = vpack.c.bf16 %v901, %v901
    %v1194 = vpack.c.bf16 %v907, %v907
    %v1195 = vpack.c.bf16 %v911, %v911
    %v1196 = vpack.c.bf16 %v917, %v917
    %v1197 = vpack.c.bf16 %v921, %v921
    %v1198 = vpack.c.bf16 %v927, %v927
    %v1199 = vpack.c.bf16 %v931, %v931
    %v1200 = vpack.c.bf16 %v937, %v937
    %v1201 = vpack.c.bf16 %v941, %v941
    %v1202 = vpack.c.bf16 %v947, %v947
    %v1203 = vpack.c.bf16 %v951, %v951
    %v1204 = vpack.c.bf16 %v957, %v957
    %v1205 = vpack.c.bf16 %v961, %v961
    %v1206 = vpack.c.bf16 %v967, %v967
    %v1207 = vpack.c.bf16 %v971, %v971
    %v1208 = vpack.c.bf16 %v977, %v977
    %v1209 = vpack.c.bf16 %v981, %v981
    %v1210 = vpack.c.bf16 %v987, %v987
    %v1211 = vpack.c.bf16 %v991, %v991
    %v1212 = vpack.c.bf16 %v997, %v997
    %v1213 = vpack.c.bf16 %v1001, %v1001
    %v1214 = vpack.c.bf16 %v1007, %v1007
    %v1215 = vpack.c.bf16 %v1011, %v1011
    %v1216 = vpack.c.bf16 %v1017, %v1017
    %v1217 = vpack.c.bf16 %v1021, %v1021
    %v1218 = vpack.c.bf16 %v869, %v869
    %v1219 = vpack.c.bf16 %v873, %v873
    %v1220 = vpack.c.bf16 %v879, %v879
    %v1221 = vpack.c.bf16 %v883, %v883
    %v1222 = vpack.c.bf16 %v889, %v889
    %v1223 = vpack.c.bf16 %v893, %v893
    %v1224 = vpack.c.bf16 %v899, %v899
    %v1225 = vpack.c.bf16 %v903, %v903
    %v1226 = vpack.c.bf16 %v909, %v909
    %v1227 = vpack.c.bf16 %v913, %v913
    %v1228 = vpack.c.bf16 %v919, %v919
    %v1229 = vpack.c.bf16 %v923, %v923
    %v1230 = vpack.c.bf16 %v929, %v929
    %v1231 = vpack.c.bf16 %v933, %v933
    %v1232 = vpack.c.bf16 %v939, %v939
    %v1233 = vpack.c.bf16 %v943, %v943
    %v1234 = vpack.c.bf16 %v949, %v949
    %v1235 = vpack.c.bf16 %v953, %v953
    %v1236 = vpack.c.bf16 %v959, %v959
    %v1237 = vpack.c.bf16 %v963, %v963
    %v1238 = vpack.c.bf16 %v969, %v969
    %v1239 = vpack.c.bf16 %v973, %v973
    %v1240 = vpack.c.bf16 %v979, %v979
    %v1241 = vpack.c.bf16 %v983, %v983
    %v1242 = vpack.c.bf16 %v989, %v989
    %v1243 = vpack.c.bf16 %v993, %v993
    %v1244 = vpack.c.bf16 %v999, %v999
    %v1245 = vpack.c.bf16 %v1003, %v1003
    %v1246 = vpack.c.bf16 %v1009, %v1009
    %v1247 = vpack.c.bf16 %v1013, %v1013
    %v1248 = vpack.c.bf16 %v1019, %v1019
    %v1249 = vpack.c.bf16 %v1023, %v1023
    %1250 = vmatprep.subr.bf16.mxu0 0
    %1251 = vmatpush1.bf16.xpose.msra.mxu0 %v1218
    %1252 = vmatprep.subr.bf16.mxu0 0
    %1253 = vmatpush1.bf16.xpose.msra.mxu0 0
    %1254 = vmatprep.subr.bf16.mxu0 0
    %1255 = vmatpush1.bf16.xpose.msra.mxu0 0
    %1256 = vmatprep.subr.bf16.mxu0 0
    %1257 = vmatpush1.bf16.xpose.msra.mxu0 0
    %1258 = vmatprep.subr.bf16.mxu0 0
    %1259 = vmatpush1.bf16.xpose.msra.mxu0 0
    %1260 = vmatprep.subr.bf16.mxu0 0
    %1261 = vmatpush1.bf16.xpose.msra.mxu0 0
    %1262 = vmatprep.subr.bf16.mxu0 0
    %1263 = vmatpush1.bf16.xpose.msra.mxu0 0
    %1264 = vmatprep.subr.bf16.mxu0 0
    %1265 = vmatpush1.bf16.xpose.msra.mxu0 0
    %1266 = vmatprep.subr.bf16.mxu0 0
    %1267 = vmatpush1.bf16.xpose.msra.mxu0 0
    %1268 = vmatprep.subr.bf16.mxu0 0
    %1269 = vmatpush1.bf16.xpose.msra.mxu0 0
    %1270 = vmatprep.subr.bf16.mxu0 0
    %1271 = vmatpush1.bf16.xpose.msra.mxu0 0
    %1272 = vmatprep.subr.bf16.mxu0 0
    %1273 = vmatpush1.bf16.xpose.msra.mxu0 0
    %1274 = vmatprep.subr.bf16.mxu0 0
    %1275 = vmatpush1.bf16.xpose.msra.mxu0 0
    %1276 = vmatprep.subr.bf16.mxu0 0
    %1277 = vmatpush1.bf16.xpose.msra.mxu0 0
    %1278 = vmatprep.subr.bf16.mxu0 0
    %1279 = vmatpush1.bf16.xpose.msra.mxu0 0
    %1280 = vmatprep.subr.bf16.mxu0 0
    %1281 = vmatpush1.bf16.xpose.msra.mxu0 0
    %1282 = vmatprep.mubr.bf16.mxu0 0
    %1283 = vmatmul.mubr.bf16.gmra.mrb[0].mxu0 %v1186
    %v1284 = vpop.f32.mrb[0].mxu0
    %v1285 = vadd.f32 0.0, %v1284
    %v1286 = vpop.f32.mrb[0].mxu0
    %v1287 = vpop.f32.mrb[0].mxu0
    %v1288 = vpop.f32.mrb[0].mxu0
    %1289 = vdwg.mxu0
    %1290 = vmatprep.subr.bf16.mxu0 0
    %1291 = vmatpush1.bf16.xpose.msra.mxu0 %v1219
    %1292 = vmatprep.subr.bf16.mxu0 0
    %1293 = vmatpush1.bf16.xpose.msra.mxu0 0
    %1294 = vmatprep.subr.bf16.mxu0 0
    %1295 = vmatpush1.bf16.xpose.msra.mxu0 0
    %1296 = vmatprep.subr.bf16.mxu0 0
    %1297 = vmatpush1.bf16.xpose.msra.mxu0 0
    %1298 = vmatprep.subr.bf16.mxu0 0
    %1299 = vmatpush1.bf16.xpose.msra.mxu0 0
    %1300 = vmatprep.subr.bf16.mxu0 0
    %1301 = vmatpush1.bf16.xpose.msra.mxu0 0
    %1302 = vmatprep.subr.bf16.mxu0 0
    %1303 = vmatpush1.bf16.xpose.msra.mxu0 0
    %1304 = vmatprep.subr.bf16.mxu0 0
    %1305 = vmatpush1.bf16.xpose.msra.mxu0 0
    %1306 = vmatprep.subr.bf16.mxu0 0
    %1307 = vmatpush1.bf16.xpose.msra.mxu0 0
    %1308 = vmatprep.subr.bf16.mxu0 0
    %1309 = vmatpush1.bf16.xpose.msra.mxu0 0
    %1310 = vmatprep.subr.bf16.mxu0 0
    %1311 = vmatpush1.bf16.xpose.msra.mxu0 0
    %1312 = vmatprep.subr.bf16.mxu0 0
    %1313 = vmatpush1.bf16.xpose.msra.mxu0 0
    %1314 = vmatprep.subr.bf16.mxu0 0
    %1315 = vmatpush1.bf16.xpose.msra.mxu0 0
    %1316 = vmatprep.subr.bf16.mxu0 0
    %1317 = vmatpush1.bf16.xpose.msra.mxu0 0
    %1318 = vmatprep.subr.bf16.mxu0 0
    %1319 = vmatpush1.bf16.xpose.msra.mxu0 0
    %1320 = vmatprep.subr.bf16.mxu0 0
    %1321 = vmatpush1.bf16.xpose.msra.mxu0 0
    %1322 = vmatprep.mubr.bf16.mxu0 0
    %1323 = vmatmul.mubr.bf16.gmra.mrb[0].mxu0 %v1187
    %v1324 = vpop.f32.mrb[0].mxu0
    %v1325 = vadd.f32 0.0, %v1324
    %v1326 = vpop.f32.mrb[0].mxu0
    %v1327 = vpop.f32.mrb[0].mxu0
    %v1328 = vpop.f32.mrb[0].mxu0
    %1329 = vdwg.mxu0
    %1330 = vmatprep.subr.bf16.mxu0 0
    %1331 = vmatpush1.bf16.xpose.msra.mxu0 %v1220
    %1332 = vmatprep.subr.bf16.mxu0 0
    %1333 = vmatpush1.bf16.xpose.msra.mxu0 0
    %1334 = vmatprep.subr.bf16.mxu0 0
    %1335 = vmatpush1.bf16.xpose.msra.mxu0 0
    %1336 = vmatprep.subr.bf16.mxu0 0
    %1337 = vmatpush1.bf16.xpose.msra.mxu0 0
    %1338 = vmatprep.subr.bf16.mxu0 0
    %1339 = vmatpush1.bf16.xpose.msra.mxu0 0
    %1340 = vmatprep.subr.bf16.mxu0 0
    %1341 = vmatpush1.bf16.xpose.msra.mxu0 0
    %1342 = vmatprep.subr.bf16.mxu0 0
    %1343 = vmatpush1.bf16.xpose.msra.mxu0 0
    %1344 = vmatprep.subr.bf16.mxu0 0
    %1345 = vmatpush1.bf16.xpose.msra.mxu0 0
    %1346 = vmatprep.subr.bf16.mxu0 0
    %1347 = vmatpush1.bf16.xpose.msra.mxu0 0
    %1348 = vmatprep.subr.bf16.mxu0 0
    %1349 = vmatpush1.bf16.xpose.msra.mxu0 0
    %1350 = vmatprep.subr.bf16.mxu0 0
    %1351 = vmatpush1.bf16.xpose.msra.mxu0 0
    %1352 = vmatprep.subr.bf16.mxu0 0
    %1353 = vmatpush1.bf16.xpose.msra.mxu0 0
    %1354 = vmatprep.subr.bf16.mxu0 0
    %1355 = vmatpush1.bf16.xpose.msra.mxu0 0
    %1356 = vmatprep.subr.bf16.mxu0 0
    %1357 = vmatpush1.bf16.xpose.msra.mxu0 0
    %1358 = vmatprep.subr.bf16.mxu0 0
    %1359 = vmatpush1.bf16.xpose.msra.mxu0 0
    %1360 = vmatprep.subr.bf16.mxu0 0
    %1361 = vmatpush1.bf16.xpose.msra.mxu0 0
    %1362 = vmatprep.mubr.bf16.mxu0 0
    %1363 = vmatmul.mubr.bf16.gmra.mrb[0].mxu0 %v1188
    %v1364 = vpop.f32.mrb[0].mxu0
    %v1365 = vadd.f32 0.0, %v1364
    %v1366 = vpop.f32.mrb[0].mxu0
    %v1367 = vpop.f32.mrb[0].mxu0
    %v1368 = vpop.f32.mrb[0].mxu0
    %1369 = vdwg.mxu0
    %1370 = vmatprep.subr.bf16.mxu0 0
    %1371 = vmatpush1.bf16.xpose.msra.mxu0 %v1221
    %1372 = vmatprep.subr.bf16.mxu0 0
    %1373 = vmatpush1.bf16.xpose.msra.mxu0 0
    %1374 = vmatprep.subr.bf16.mxu0 0
    %1375 = vmatpush1.bf16.xpose.msra.mxu0 0
    %1376 = vmatprep.subr.bf16.mxu0 0
    %1377 = vmatpush1.bf16.xpose.msra.mxu0 0
    %1378 = vmatprep.subr.bf16.mxu0 0
    %1379 = vmatpush1.bf16.xpose.msra.mxu0 0
    %1380 = vmatprep.subr.bf16.mxu0 0
    %1381 = vmatpush1.bf16.xpose.msra.mxu0 0
    %1382 = vmatprep.subr.bf16.mxu0 0
    %1383 = vmatpush1.bf16.xpose.msra.mxu0 0
    %1384 = vmatprep.subr.bf16.mxu0 0
    %1385 = vmatpush1.bf16.xpose.msra.mxu0 0
    %1386 = vmatprep.subr.bf16.mxu0 0
    %1387 = vmatpush1.bf16.xpose.msra.mxu0 0
    %1388 = vmatprep.subr.bf16.mxu0 0
    %1389 = vmatpush1.bf16.xpose.msra.mxu0 0
    %1390 = vmatprep.subr.bf16.mxu0 0
    %1391 = vmatpush1.bf16.xpose.msra.mxu0 0
    %1392 = vmatprep.subr.bf16.mxu0 0
    %1393 = vmatpush1.bf16.xpose.msra.mxu0 0
    %1394 = vmatprep.subr.bf16.mxu0 0
    %1395 = vmatpush1.bf16.xpose.msra.mxu0 0
    %1396 = vmatprep.subr.bf16.mxu0 0
    %1397 = vmatpush1.bf16.xpose.msra.mxu0 0
    %1398 = vmatprep.subr.bf16.mxu0 0
    %1399 = vmatpush1.bf16.xpose.msra.mxu0 0
    %1400 = vmatprep.subr.bf16.mxu0 0
    %1401 = vmatpush1.bf16.xpose.msra.mxu0 0
    %1402 = vmatprep.mubr.bf16.mxu0 0
    %1403 = vmatmul.mubr.bf16.gmra.mrb[0].mxu0 %v1189
    %v1404 = vpop.f32.mrb[0].mxu0
    %v1405 = vadd.f32 0.0, %v1404
    %v1406 = vpop.f32.mrb[0].mxu0
    %v1407 = vpop.f32.mrb[0].mxu0
    %v1408 = vpop.f32.mrb[0].mxu0
    %1409 = vdwg.mxu0
    %1410 = vmatprep.subr.bf16.mxu0 0
    %1411 = vmatpush1.bf16.xpose.msra.mxu0 %v1222
    %1412 = vmatprep.subr.bf16.mxu0 0
    %1413 = vmatpush1.bf16.xpose.msra.mxu0 0
    %1414 = vmatprep.subr.bf16.mxu0 0
    %1415 = vmatpush1.bf16.xpose.msra.mxu0 0
    %1416 = vmatprep.subr.bf16.mxu0 0
    %1417 = vmatpush1.bf16.xpose.msra.mxu0 0
    %1418 = vmatprep.subr.bf16.mxu0 0
    %1419 = vmatpush1.bf16.xpose.msra.mxu0 0
    %1420 = vmatprep.subr.bf16.mxu0 0
    %1421 = vmatpush1.bf16.xpose.msra.mxu0 0
    %1422 = vmatprep.subr.bf16.mxu0 0
    %1423 = vmatpush1.bf16.xpose.msra.mxu0 0
    %1424 = vmatprep.subr.bf16.mxu0 0
    %1425 = vmatpush1.bf16.xpose.msra.mxu0 0
    %1426 = vmatprep.subr.bf16.mxu0 0
    %1427 = vmatpush1.bf16.xpose.msra.mxu0 0
    %1428 = vmatprep.subr.bf16.mxu0 0
    %1429 = vmatpush1.bf16.xpose.msra.mxu0 0
    %1430 = vmatprep.subr.bf16.mxu0 0
    %1431 = vmatpush1.bf16.xpose.msra.mxu0 0
    %1432 = vmatprep.subr.bf16.mxu0 0
    %1433 = vmatpush1.bf16.xpose.msra.mxu0 0
    %1434 = vmatprep.subr.bf16.mxu0 0
    %1435 = vmatpush1.bf16.xpose.msra.mxu0 0
    %1436 = vmatprep.subr.bf16.mxu0 0
    %1437 = vmatpush1.bf16.xpose.msra.mxu0 0
    %1438 = vmatprep.subr.bf16.mxu0 0
    %1439 = vmatpush1.bf16.xpose.msra.mxu0 0
    %1440 = vmatprep.subr.bf16.mxu0 0
    %1441 = vmatpush1.bf16.xpose.msra.mxu0 0
    %1442 = vmatprep.mubr.bf16.mxu0 0
    %1443 = vmatmul.mubr.bf16.gmra.mrb[0].mxu0 %v1190
    %v1444 = vpop.f32.mrb[0].mxu0
    %v1445 = vadd.f32 0.0, %v1444
    %v1446 = vpop.f32.mrb[0].mxu0
    %v1447 = vpop.f32.mrb[0].mxu0
    %v1448 = vpop.f32.mrb[0].mxu0
    %1449 = vdwg.mxu0
    %1450 = vmatprep.subr.bf16.mxu0 0
    %1451 = vmatpush1.bf16.xpose.msra.mxu0 %v1223
    %1452 = vmatprep.subr.bf16.mxu0 0
    %1453 = vmatpush1.bf16.xpose.msra.mxu0 0
    %1454 = vmatprep.subr.bf16.mxu0 0
    %1455 = vmatpush1.bf16.xpose.msra.mxu0 0
    %1456 = vmatprep.subr.bf16.mxu0 0
    %1457 = vmatpush1.bf16.xpose.msra.mxu0 0
    %1458 = vmatprep.subr.bf16.mxu0 0
    %1459 = vmatpush1.bf16.xpose.msra.mxu0 0
    %1460 = vmatprep.subr.bf16.mxu0 0
    %1461 = vmatpush1.bf16.xpose.msra.mxu0 0
    %1462 = vmatprep.subr.bf16.mxu0 0
    %1463 = vmatpush1.bf16.xpose.msra.mxu0 0
    %1464 = vmatprep.subr.bf16.mxu0 0
    %1465 = vmatpush1.bf16.xpose.msra.mxu0 0
    %1466 = vmatprep.subr.bf16.mxu0 0
    %1467 = vmatpush1.bf16.xpose.msra.mxu0 0
    %1468 = vmatprep.subr.bf16.mxu0 0
    %1469 = vmatpush1.bf16.xpose.msra.mxu0 0
    %1470 = vmatprep.subr.bf16.mxu0 0
    %1471 = vmatpush1.bf16.xpose.msra.mxu0 0
    %1472 = vmatprep.subr.bf16.mxu0 0
    %1473 = vmatpush1.bf16.xpose.msra.mxu0 0
    %1474 = vmatprep.subr.bf16.mxu0 0
    %1475 = vmatpush1.bf16.xpose.msra.mxu0 0
    %1476 = vmatprep.subr.bf16.mxu0 0
    %1477 = vmatpush1.bf16.xpose.msra.mxu0 0
    %1478 = vmatprep.subr.bf16.mxu0 0
    %1479 = vmatpush1.bf16.xpose.msra.mxu0 0
    %1480 = vmatprep.subr.bf16.mxu0 0
    %1481 = vmatpush1.bf16.xpose.msra.mxu0 0
    %1482 = vmatprep.mubr.bf16.mxu0 0
    %1483 = vmatmul.mubr.bf16.gmra.mrb[0].mxu0 %v1191
    %v1484 = vpop.f32.mrb[0].mxu0
    %v1485 = vadd.f32 0.0, %v1484
    %v1486 = vpop.f32.mrb[0].mxu0
    %v1487 = vpop.f32.mrb[0].mxu0
    %v1488 = vpop.f32.mrb[0].mxu0
    %1489 = vdwg.mxu0
    %1490 = vmatprep.subr.bf16.mxu0 0
    %1491 = vmatpush1.bf16.xpose.msra.mxu0 %v1224
    %1492 = vmatprep.subr.bf16.mxu0 0
    %1493 = vmatpush1.bf16.xpose.msra.mxu0 0
    %1494 = vmatprep.subr.bf16.mxu0 0
    %1495 = vmatpush1.bf16.xpose.msra.mxu0 0
    %1496 = vmatprep.subr.bf16.mxu0 0
    %1497 = vmatpush1.bf16.xpose.msra.mxu0 0
    %1498 = vmatprep.subr.bf16.mxu0 0
    %1499 = vmatpush1.bf16.xpose.msra.mxu0 0
    %1500 = vmatprep.subr.bf16.mxu0 0
    %1501 = vmatpush1.bf16.xpose.msra.mxu0 0
    %1502 = vmatprep.subr.bf16.mxu0 0
    %1503 = vmatpush1.bf16.xpose.msra.mxu0 0
    %1504 = vmatprep.subr.bf16.mxu0 0
    %1505 = vmatpush1.bf16.xpose.msra.mxu0 0
    %1506 = vmatprep.subr.bf16.mxu0 0
    %1507 = vmatpush1.bf16.xpose.msra.mxu0 0
    %1508 = vmatprep.subr.bf16.mxu0 0
    %1509 = vmatpush1.bf16.xpose.msra.mxu0 0
    %1510 = vmatprep.subr.bf16.mxu0 0
    %1511 = vmatpush1.bf16.xpose.msra.mxu0 0
    %1512 = vmatprep.subr.bf16.mxu0 0
    %1513 = vmatpush1.bf16.xpose.msra.mxu0 0
    %1514 = vmatprep.subr.bf16.mxu0 0
    %1515 = vmatpush1.bf16.xpose.msra.mxu0 0
    %1516 = vmatprep.subr.bf16.mxu0 0
    %1517 = vmatpush1.bf16.xpose.msra.mxu0 0
    %1518 = vmatprep.subr.bf16.mxu0 0
    %1519 = vmatpush1.bf16.xpose.msra.mxu0 0
    %1520 = vmatprep.subr.bf16.mxu0 0
    %1521 = vmatpush1.bf16.xpose.msra.mxu0 0
    %1522 = vmatprep.mubr.bf16.mxu0 0
    %1523 = vmatmul.mubr.bf16.gmra.mrb[0].mxu0 %v1192
    %v1524 = vpop.f32.mrb[0].mxu0
    %v1525 = vadd.f32 0.0, %v1524
    %v1526 = vpop.f32.mrb[0].mxu0
    %v1527 = vpop.f32.mrb[0].mxu0
    %v1528 = vpop.f32.mrb[0].mxu0
    %1529 = vdwg.mxu0
    %1530 = vmatprep.subr.bf16.mxu0 0
    %1531 = vmatpush1.bf16.xpose.msra.mxu0 %v1225
    %1532 = vmatprep.subr.bf16.mxu0 0
    %1533 = vmatpush1.bf16.xpose.msra.mxu0 0
    %1534 = vmatprep.subr.bf16.mxu0 0
    %1535 = vmatpush1.bf16.xpose.msra.mxu0 0
    %1536 = vmatprep.subr.bf16.mxu0 0
    %1537 = vmatpush1.bf16.xpose.msra.mxu0 0
    %1538 = vmatprep.subr.bf16.mxu0 0
    %1539 = vmatpush1.bf16.xpose.msra.mxu0 0
    %1540 = vmatprep.subr.bf16.mxu0 0
    %1541 = vmatpush1.bf16.xpose.msra.mxu0 0
    %1542 = vmatprep.subr.bf16.mxu0 0
    %1543 = vmatpush1.bf16.xpose.msra.mxu0 0
    %1544 = vmatprep.subr.bf16.mxu0 0
    %1545 = vmatpush1.bf16.xpose.msra.mxu0 0
    %1546 = vmatprep.subr.bf16.mxu0 0
    %1547 = vmatpush1.bf16.xpose.msra.mxu0 0
    %1548 = vmatprep.subr.bf16.mxu0 0
    %1549 = vmatpush1.bf16.xpose.msra.mxu0 0
    %1550 = vmatprep.subr.bf16.mxu0 0
    %1551 = vmatpush1.bf16.xpose.msra.mxu0 0
    %1552 = vmatprep.subr.bf16.mxu0 0
    %1553 = vmatpush1.bf16.xpose.msra.mxu0 0
    %1554 = vmatprep.subr.bf16.mxu0 0
    %1555 = vmatpush1.bf16.xpose.msra.mxu0 0
    %1556 = vmatprep.subr.bf16.mxu0 0
    %1557 = vmatpush1.bf16.xpose.msra.mxu0 0
    %1558 = vmatprep.subr.bf16.mxu0 0
    %1559 = vmatpush1.bf16.xpose.msra.mxu0 0
    %1560 = vmatprep.subr.bf16.mxu0 0
    %1561 = vmatpush1.bf16.xpose.msra.mxu0 0
    %1562 = vmatprep.mubr.bf16.mxu0 0
    %1563 = vmatmul.mubr.bf16.gmra.mrb[0].mxu0 %v1193
    %v1564 = vpop.f32.mrb[0].mxu0
    %v1565 = vadd.f32 0.0, %v1564
    %v1566 = vpop.f32.mrb[0].mxu0
    %v1567 = vpop.f32.mrb[0].mxu0
    %v1568 = vpop.f32.mrb[0].mxu0
    %1569 = vdwg.mxu0
    %1570 = vmatprep.subr.bf16.mxu0 0
    %1571 = vmatpush1.bf16.xpose.msra.mxu0 %v1226
    %1572 = vmatprep.subr.bf16.mxu0 0
    %1573 = vmatpush1.bf16.xpose.msra.mxu0 0
    %1574 = vmatprep.subr.bf16.mxu0 0
    %1575 = vmatpush1.bf16.xpose.msra.mxu0 0
    %1576 = vmatprep.subr.bf16.mxu0 0
    %1577 = vmatpush1.bf16.xpose.msra.mxu0 0
    %1578 = vmatprep.subr.bf16.mxu0 0
    %1579 = vmatpush1.bf16.xpose.msra.mxu0 0
    %1580 = vmatprep.subr.bf16.mxu0 0
    %1581 = vmatpush1.bf16.xpose.msra.mxu0 0
    %1582 = vmatprep.subr.bf16.mxu0 0
    %1583 = vmatpush1.bf16.xpose.msra.mxu0 0
    %1584 = vmatprep.subr.bf16.mxu0 0
    %1585 = vmatpush1.bf16.xpose.msra.mxu0 0
    %1586 = vmatprep.subr.bf16.mxu0 0
    %1587 = vmatpush1.bf16.xpose.msra.mxu0 0
    %1588 = vmatprep.subr.bf16.mxu0 0
    %1589 = vmatpush1.bf16.xpose.msra.mxu0 0
    %1590 = vmatprep.subr.bf16.mxu0 0
    %1591 = vmatpush1.bf16.xpose.msra.mxu0 0
    %1592 = vmatprep.subr.bf16.mxu0 0
    %1593 = vmatpush1.bf16.xpose.msra.mxu0 0
    %1594 = vmatprep.subr.bf16.mxu0 0
    %1595 = vmatpush1.bf16.xpose.msra.mxu0 0
    %1596 = vmatprep.subr.bf16.mxu0 0
    %1597 = vmatpush1.bf16.xpose.msra.mxu0 0
    %1598 = vmatprep.subr.bf16.mxu0 0
    %1599 = vmatpush1.bf16.xpose.msra.mxu0 0
    %1600 = vmatprep.subr.bf16.mxu0 0
    %1601 = vmatpush1.bf16.xpose.msra.mxu0 0
    %1602 = vmatprep.mubr.bf16.mxu0 0
    %1603 = vmatmul.mubr.bf16.gmra.mrb[0].mxu0 %v1194
    %v1604 = vpop.f32.mrb[0].mxu0
    %v1605 = vadd.f32 0.0, %v1604
    %v1606 = vpop.f32.mrb[0].mxu0
    %v1607 = vpop.f32.mrb[0].mxu0
    %v1608 = vpop.f32.mrb[0].mxu0
    %1609 = vdwg.mxu0
    %1610 = vmatprep.subr.bf16.mxu0 0
    %1611 = vmatpush1.bf16.xpose.msra.mxu0 %v1227
    %1612 = vmatprep.subr.bf16.mxu0 0
    %1613 = vmatpush1.bf16.xpose.msra.mxu0 0
    %1614 = vmatprep.subr.bf16.mxu0 0
    %1615 = vmatpush1.bf16.xpose.msra.mxu0 0
    %1616 = vmatprep.subr.bf16.mxu0 0
    %1617 = vmatpush1.bf16.xpose.msra.mxu0 0
    %1618 = vmatprep.subr.bf16.mxu0 0
    %1619 = vmatpush1.bf16.xpose.msra.mxu0 0
    %1620 = vmatprep.subr.bf16.mxu0 0
    %1621 = vmatpush1.bf16.xpose.msra.mxu0 0
    %1622 = vmatprep.subr.bf16.mxu0 0
    %1623 = vmatpush1.bf16.xpose.msra.mxu0 0
    %1624 = vmatprep.subr.bf16.mxu0 0
    %1625 = vmatpush1.bf16.xpose.msra.mxu0 0
    %1626 = vmatprep.subr.bf16.mxu0 0
    %1627 = vmatpush1.bf16.xpose.msra.mxu0 0
    %1628 = vmatprep.subr.bf16.mxu0 0
    %1629 = vmatpush1.bf16.xpose.msra.mxu0 0
    %1630 = vmatprep.subr.bf16.mxu0 0
    %1631 = vmatpush1.bf16.xpose.msra.mxu0 0
    %1632 = vmatprep.subr.bf16.mxu0 0
    %1633 = vmatpush1.bf16.xpose.msra.mxu0 0
    %1634 = vmatprep.subr.bf16.mxu0 0
    %1635 = vmatpush1.bf16.xpose.msra.mxu0 0
    %1636 = vmatprep.subr.bf16.mxu0 0
    %1637 = vmatpush1.bf16.xpose.msra.mxu0 0
    %1638 = vmatprep.subr.bf16.mxu0 0
    %1639 = vmatpush1.bf16.xpose.msra.mxu0 0
    %1640 = vmatprep.subr.bf16.mxu0 0
    %1641 = vmatpush1.bf16.xpose.msra.mxu0 0
    %1642 = vmatprep.mubr.bf16.mxu0 0
    %1643 = vmatmul.mubr.bf16.gmra.mrb[0].mxu0 %v1195
    %v1644 = vpop.f32.mrb[0].mxu0
    %v1645 = vadd.f32 0.0, %v1644
    %v1646 = vpop.f32.mrb[0].mxu0
    %v1647 = vpop.f32.mrb[0].mxu0
    %v1648 = vpop.f32.mrb[0].mxu0
    %1649 = vdwg.mxu0
    %1650 = vmatprep.subr.bf16.mxu0 0
    %1651 = vmatpush1.bf16.xpose.msra.mxu0 %v1228
    %1652 = vmatprep.subr.bf16.mxu0 0
    %1653 = vmatpush1.bf16.xpose.msra.mxu0 0
    %1654 = vmatprep.subr.bf16.mxu0 0
    %1655 = vmatpush1.bf16.xpose.msra.mxu0 0
    %1656 = vmatprep.subr.bf16.mxu0 0
    %1657 = vmatpush1.bf16.xpose.msra.mxu0 0
    %1658 = vmatprep.subr.bf16.mxu0 0
    %1659 = vmatpush1.bf16.xpose.msra.mxu0 0
    %1660 = vmatprep.subr.bf16.mxu0 0
    %1661 = vmatpush1.bf16.xpose.msra.mxu0 0
    %1662 = vmatprep.subr.bf16.mxu0 0
    %1663 = vmatpush1.bf16.xpose.msra.mxu0 0
    %1664 = vmatprep.subr.bf16.mxu0 0
    %1665 = vmatpush1.bf16.xpose.msra.mxu0 0
    %1666 = vmatprep.subr.bf16.mxu0 0
    %1667 = vmatpush1.bf16.xpose.msra.mxu0 0
    %1668 = vmatprep.subr.bf16.mxu0 0
    %1669 = vmatpush1.bf16.xpose.msra.mxu0 0
    %1670 = vmatprep.subr.bf16.mxu0 0
    %1671 = vmatpush1.bf16.xpose.msra.mxu0 0
    %1672 = vmatprep.subr.bf16.mxu0 0
    %1673 = vmatpush1.bf16.xpose.msra.mxu0 0
    %1674 = vmatprep.subr.bf16.mxu0 0
    %1675 = vmatpush1.bf16.xpose.msra.mxu0 0
    %1676 = vmatprep.subr.bf16.mxu0 0
    %1677 = vmatpush1.bf16.xpose.msra.mxu0 0
    %1678 = vmatprep.subr.bf16.mxu0 0
    %1679 = vmatpush1.bf16.xpose.msra.mxu0 0
    %1680 = vmatprep.subr.bf16.mxu0 0
    %1681 = vmatpush1.bf16.xpose.msra.mxu0 0
    %1682 = vmatprep.mubr.bf16.mxu0 0
    %1683 = vmatmul.mubr.bf16.gmra.mrb[0].mxu0 %v1196
    %v1684 = vpop.f32.mrb[0].mxu0
    %v1685 = vadd.f32 0.0, %v1684
    %v1686 = vpop.f32.mrb[0].mxu0
    %v1687 = vpop.f32.mrb[0].mxu0
    %v1688 = vpop.f32.mrb[0].mxu0
    %1689 = vdwg.mxu0
    %1690 = vmatprep.subr.bf16.mxu0 0
    %1691 = vmatpush1.bf16.xpose.msra.mxu0 %v1229
    %1692 = vmatprep.subr.bf16.mxu0 0
    %1693 = vmatpush1.bf16.xpose.msra.mxu0 0
    %1694 = vmatprep.subr.bf16.mxu0 0
    %1695 = vmatpush1.bf16.xpose.msra.mxu0 0
    %1696 = vmatprep.subr.bf16.mxu0 0
    %1697 = vmatpush1.bf16.xpose.msra.mxu0 0
    %1698 = vmatprep.subr.bf16.mxu0 0
    %1699 = vmatpush1.bf16.xpose.msra.mxu0 0
    %1700 = vmatprep.subr.bf16.mxu0 0
    %1701 = vmatpush1.bf16.xpose.msra.mxu0 0
    %1702 = vmatprep.subr.bf16.mxu0 0
    %1703 = vmatpush1.bf16.xpose.msra.mxu0 0
    %1704 = vmatprep.subr.bf16.mxu0 0
    %1705 = vmatpush1.bf16.xpose.msra.mxu0 0
    %1706 = vmatprep.subr.bf16.mxu0 0
    %1707 = vmatpush1.bf16.xpose.msra.mxu0 0
    %1708 = vmatprep.subr.bf16.mxu0 0
    %1709 = vmatpush1.bf16.xpose.msra.mxu0 0
    %1710 = vmatprep.subr.bf16.mxu0 0
    %1711 = vmatpush1.bf16.xpose.msra.mxu0 0
    %1712 = vmatprep.subr.bf16.mxu0 0
    %1713 = vmatpush1.bf16.xpose.msra.mxu0 0
    %1714 = vmatprep.subr.bf16.mxu0 0
    %1715 = vmatpush1.bf16.xpose.msra.mxu0 0
    %1716 = vmatprep.subr.bf16.mxu0 0
    %1717 = vmatpush1.bf16.xpose.msra.mxu0 0
    %1718 = vmatprep.subr.bf16.mxu0 0
    %1719 = vmatpush1.bf16.xpose.msra.mxu0 0
    %1720 = vmatprep.subr.bf16.mxu0 0
    %1721 = vmatpush1.bf16.xpose.msra.mxu0 0
    %1722 = vmatprep.mubr.bf16.mxu0 0
    %1723 = vmatmul.mubr.bf16.gmra.mrb[0].mxu0 %v1197
    %v1724 = vpop.f32.mrb[0].mxu0
    %v1725 = vadd.f32 0.0, %v1724
    %v1726 = vpop.f32.mrb[0].mxu0
    %v1727 = vpop.f32.mrb[0].mxu0
    %v1728 = vpop.f32.mrb[0].mxu0
    %1729 = vdwg.mxu0
    %1730 = vmatprep.subr.bf16.mxu0 0
    %1731 = vmatpush1.bf16.xpose.msra.mxu0 %v1230
    %1732 = vmatprep.subr.bf16.mxu0 0
    %1733 = vmatpush1.bf16.xpose.msra.mxu0 0
    %1734 = vmatprep.subr.bf16.mxu0 0
    %1735 = vmatpush1.bf16.xpose.msra.mxu0 0
    %1736 = vmatprep.subr.bf16.mxu0 0
    %1737 = vmatpush1.bf16.xpose.msra.mxu0 0
    %1738 = vmatprep.subr.bf16.mxu0 0
    %1739 = vmatpush1.bf16.xpose.msra.mxu0 0
    %1740 = vmatprep.subr.bf16.mxu0 0
    %1741 = vmatpush1.bf16.xpose.msra.mxu0 0
    %1742 = vmatprep.subr.bf16.mxu0 0
    %1743 = vmatpush1.bf16.xpose.msra.mxu0 0
    %1744 = vmatprep.subr.bf16.mxu0 0
    %1745 = vmatpush1.bf16.xpose.msra.mxu0 0
    %1746 = vmatprep.subr.bf16.mxu0 0
    %1747 = vmatpush1.bf16.xpose.msra.mxu0 0
    %1748 = vmatprep.subr.bf16.mxu0 0
    %1749 = vmatpush1.bf16.xpose.msra.mxu0 0
    %1750 = vmatprep.subr.bf16.mxu0 0
    %1751 = vmatpush1.bf16.xpose.msra.mxu0 0
    %1752 = vmatprep.subr.bf16.mxu0 0
    %1753 = vmatpush1.bf16.xpose.msra.mxu0 0
    %1754 = vmatprep.subr.bf16.mxu0 0
    %1755 = vmatpush1.bf16.xpose.msra.mxu0 0
    %1756 = vmatprep.subr.bf16.mxu0 0
    %1757 = vmatpush1.bf16.xpose.msra.mxu0 0
    %1758 = vmatprep.subr.bf16.mxu0 0
    %1759 = vmatpush1.bf16.xpose.msra.mxu0 0
    %1760 = vmatprep.subr.bf16.mxu0 0
    %1761 = vmatpush1.bf16.xpose.msra.mxu0 0
    %1762 = vmatprep.mubr.bf16.mxu0 0
    %1763 = vmatmul.mubr.bf16.gmra.mrb[0].mxu0 %v1198
    %v1764 = vpop.f32.mrb[0].mxu0
    %v1765 = vadd.f32 0.0, %v1764
    %v1766 = vpop.f32.mrb[0].mxu0
    %v1767 = vpop.f32.mrb[0].mxu0
    %v1768 = vpop.f32.mrb[0].mxu0
    %1769 = vdwg.mxu0
    %1770 = vmatprep.subr.bf16.mxu0 0
    %1771 = vmatpush1.bf16.xpose.msra.mxu0 %v1231
    %1772 = vmatprep.subr.bf16.mxu0 0
    %1773 = vmatpush1.bf16.xpose.msra.mxu0 0
    %1774 = vmatprep.subr.bf16.mxu0 0
    %1775 = vmatpush1.bf16.xpose.msra.mxu0 0
    %1776 = vmatprep.subr.bf16.mxu0 0
    %1777 = vmatpush1.bf16.xpose.msra.mxu0 0
    %1778 = vmatprep.subr.bf16.mxu0 0
    %1779 = vmatpush1.bf16.xpose.msra.mxu0 0
    %1780 = vmatprep.subr.bf16.mxu0 0
    %1781 = vmatpush1.bf16.xpose.msra.mxu0 0
    %1782 = vmatprep.subr.bf16.mxu0 0
    %1783 = vmatpush1.bf16.xpose.msra.mxu0 0
    %1784 = vmatprep.subr.bf16.mxu0 0
    %1785 = vmatpush1.bf16.xpose.msra.mxu0 0
    %1786 = vmatprep.subr.bf16.mxu0 0
    %1787 = vmatpush1.bf16.xpose.msra.mxu0 0
    %1788 = vmatprep.subr.bf16.mxu0 0
    %1789 = vmatpush1.bf16.xpose.msra.mxu0 0
    %1790 = vmatprep.subr.bf16.mxu0 0
    %1791 = vmatpush1.bf16.xpose.msra.mxu0 0
    %1792 = vmatprep.subr.bf16.mxu0 0
    %1793 = vmatpush1.bf16.xpose.msra.mxu0 0
    %1794 = vmatprep.subr.bf16.mxu0 0
    %1795 = vmatpush1.bf16.xpose.msra.mxu0 0
    %1796 = vmatprep.subr.bf16.mxu0 0
    %1797 = vmatpush1.bf16.xpose.msra.mxu0 0
    %1798 = vmatprep.subr.bf16.mxu0 0
    %1799 = vmatpush1.bf16.xpose.msra.mxu0 0
    %1800 = vmatprep.subr.bf16.mxu0 0
    %1801 = vmatpush1.bf16.xpose.msra.mxu0 0
    %1802 = vmatprep.mubr.bf16.mxu0 0
    %1803 = vmatmul.mubr.bf16.gmra.mrb[0].mxu0 %v1199
    %v1804 = vpop.f32.mrb[0].mxu0
    %v1805 = vadd.f32 0.0, %v1804
    %v1806 = vpop.f32.mrb[0].mxu0
    %v1807 = vpop.f32.mrb[0].mxu0
    %v1808 = vpop.f32.mrb[0].mxu0
    %1809 = vdwg.mxu0
    %1810 = vmatprep.subr.bf16.mxu0 0
    %1811 = vmatpush1.bf16.xpose.msra.mxu0 %v1232
    %1812 = vmatprep.subr.bf16.mxu0 0
    %1813 = vmatpush1.bf16.xpose.msra.mxu0 0
    %1814 = vmatprep.subr.bf16.mxu0 0
    %1815 = vmatpush1.bf16.xpose.msra.mxu0 0
    %1816 = vmatprep.subr.bf16.mxu0 0
    %1817 = vmatpush1.bf16.xpose.msra.mxu0 0
    %1818 = vmatprep.subr.bf16.mxu0 0
    %1819 = vmatpush1.bf16.xpose.msra.mxu0 0
    %1820 = vmatprep.subr.bf16.mxu0 0
    %1821 = vmatpush1.bf16.xpose.msra.mxu0 0
    %1822 = vmatprep.subr.bf16.mxu0 0
    %1823 = vmatpush1.bf16.xpose.msra.mxu0 0
    %1824 = vmatprep.subr.bf16.mxu0 0
    %1825 = vmatpush1.bf16.xpose.msra.mxu0 0
    %1826 = vmatprep.subr.bf16.mxu0 0
    %1827 = vmatpush1.bf16.xpose.msra.mxu0 0
    %1828 = vmatprep.subr.bf16.mxu0 0
    %1829 = vmatpush1.bf16.xpose.msra.mxu0 0
    %1830 = vmatprep.subr.bf16.mxu0 0
    %1831 = vmatpush1.bf16.xpose.msra.mxu0 0
    %1832 = vmatprep.subr.bf16.mxu0 0
    %1833 = vmatpush1.bf16.xpose.msra.mxu0 0
    %1834 = vmatprep.subr.bf16.mxu0 0
    %1835 = vmatpush1.bf16.xpose.msra.mxu0 0
    %1836 = vmatprep.subr.bf16.mxu0 0
    %1837 = vmatpush1.bf16.xpose.msra.mxu0 0
    %1838 = vmatprep.subr.bf16.mxu0 0
    %1839 = vmatpush1.bf16.xpose.msra.mxu0 0
    %1840 = vmatprep.subr.bf16.mxu0 0
    %1841 = vmatpush1.bf16.xpose.msra.mxu0 0
    %1842 = vmatprep.mubr.bf16.mxu0 0
    %1843 = vmatmul.mubr.bf16.gmra.mrb[0].mxu0 %v1200
    %v1844 = vpop.f32.mrb[0].mxu0
    %v1845 = vadd.f32 0.0, %v1844
    %v1846 = vpop.f32.mrb[0].mxu0
    %v1847 = vpop.f32.mrb[0].mxu0
    %v1848 = vpop.f32.mrb[0].mxu0
    %1849 = vdwg.mxu0
    %1850 = vmatprep.subr.bf16.mxu0 0
    %1851 = vmatpush1.bf16.xpose.msra.mxu0 %v1233
    %1852 = vmatprep.subr.bf16.mxu0 0
    %1853 = vmatpush1.bf16.xpose.msra.mxu0 0
    %1854 = vmatprep.subr.bf16.mxu0 0
    %1855 = vmatpush1.bf16.xpose.msra.mxu0 0
    %1856 = vmatprep.subr.bf16.mxu0 0
    %1857 = vmatpush1.bf16.xpose.msra.mxu0 0
    %1858 = vmatprep.subr.bf16.mxu0 0
    %1859 = vmatpush1.bf16.xpose.msra.mxu0 0
    %1860 = vmatprep.subr.bf16.mxu0 0
    %1861 = vmatpush1.bf16.xpose.msra.mxu0 0
    %1862 = vmatprep.subr.bf16.mxu0 0
    %1863 = vmatpush1.bf16.xpose.msra.mxu0 0
    %1864 = vmatprep.subr.bf16.mxu0 0
    %1865 = vmatpush1.bf16.xpose.msra.mxu0 0
    %1866 = vmatprep.subr.bf16.mxu0 0
    %1867 = vmatpush1.bf16.xpose.msra.mxu0 0
    %1868 = vmatprep.subr.bf16.mxu0 0
    %1869 = vmatpush1.bf16.xpose.msra.mxu0 0
    %1870 = vmatprep.subr.bf16.mxu0 0
    %1871 = vmatpush1.bf16.xpose.msra.mxu0 0
    %1872 = vmatprep.subr.bf16.mxu0 0
    %1873 = vmatpush1.bf16.xpose.msra.mxu0 0
    %1874 = vmatprep.subr.bf16.mxu0 0
    %1875 = vmatpush1.bf16.xpose.msra.mxu0 0
    %1876 = vmatprep.subr.bf16.mxu0 0
    %1877 = vmatpush1.bf16.xpose.msra.mxu0 0
    %1878 = vmatprep.subr.bf16.mxu0 0
    %1879 = vmatpush1.bf16.xpose.msra.mxu0 0
    %1880 = vmatprep.subr.bf16.mxu0 0
    %1881 = vmatpush1.bf16.xpose.msra.mxu0 0
    %1882 = vmatprep.mubr.bf16.mxu0 0
    %1883 = vmatmul.mubr.bf16.gmra.mrb[0].mxu0 %v1201
    %v1884 = vpop.f32.mrb[0].mxu0
    %v1885 = vadd.f32 0.0, %v1884
    %v1886 = vpop.f32.mrb[0].mxu0
    %v1887 = vpop.f32.mrb[0].mxu0
    %v1888 = vpop.f32.mrb[0].mxu0
    %1889 = vdwg.mxu0
    %1890 = vmatprep.subr.bf16.mxu0 0
    %1891 = vmatpush1.bf16.xpose.msra.mxu0 %v1234
    %1892 = vmatprep.subr.bf16.mxu0 0
    %1893 = vmatpush1.bf16.xpose.msra.mxu0 0
    %1894 = vmatprep.subr.bf16.mxu0 0
    %1895 = vmatpush1.bf16.xpose.msra.mxu0 0
    %1896 = vmatprep.subr.bf16.mxu0 0
    %1897 = vmatpush1.bf16.xpose.msra.mxu0 0
    %1898 = vmatprep.subr.bf16.mxu0 0
    %1899 = vmatpush1.bf16.xpose.msra.mxu0 0
    %1900 = vmatprep.subr.bf16.mxu0 0
    %1901 = vmatpush1.bf16.xpose.msra.mxu0 0
    %1902 = vmatprep.subr.bf16.mxu0 0
    %1903 = vmatpush1.bf16.xpose.msra.mxu0 0
    %1904 = vmatprep.subr.bf16.mxu0 0
    %1905 = vmatpush1.bf16.xpose.msra.mxu0 0
    %1906 = vmatprep.subr.bf16.mxu0 0
    %1907 = vmatpush1.bf16.xpose.msra.mxu0 0
    %1908 = vmatprep.subr.bf16.mxu0 0
    %1909 = vmatpush1.bf16.xpose.msra.mxu0 0
    %1910 = vmatprep.subr.bf16.mxu0 0
    %1911 = vmatpush1.bf16.xpose.msra.mxu0 0
    %1912 = vmatprep.subr.bf16.mxu0 0
    %1913 = vmatpush1.bf16.xpose.msra.mxu0 0
    %1914 = vmatprep.subr.bf16.mxu0 0
    %1915 = vmatpush1.bf16.xpose.msra.mxu0 0
    %1916 = vmatprep.subr.bf16.mxu0 0
    %1917 = vmatpush1.bf16.xpose.msra.mxu0 0
    %1918 = vmatprep.subr.bf16.mxu0 0
    %1919 = vmatpush1.bf16.xpose.msra.mxu0 0
    %1920 = vmatprep.subr.bf16.mxu0 0
    %1921 = vmatpush1.bf16.xpose.msra.mxu0 0
    %1922 = vmatprep.mubr.bf16.mxu0 0
    %1923 = vmatmul.mubr.bf16.gmra.mrb[0].mxu0 %v1202
    %v1924 = vpop.f32.mrb[0].mxu0
    %v1925 = vadd.f32 0.0, %v1924
    %v1926 = vpop.f32.mrb[0].mxu0
    %v1927 = vpop.f32.mrb[0].mxu0
    %v1928 = vpop.f32.mrb[0].mxu0
    %1929 = vdwg.mxu0
    %1930 = vmatprep.subr.bf16.mxu0 0
    %1931 = vmatpush1.bf16.xpose.msra.mxu0 %v1235
    %1932 = vmatprep.subr.bf16.mxu0 0
    %1933 = vmatpush1.bf16.xpose.msra.mxu0 0
    %1934 = vmatprep.subr.bf16.mxu0 0
    %1935 = vmatpush1.bf16.xpose.msra.mxu0 0
    %1936 = vmatprep.subr.bf16.mxu0 0
    %1937 = vmatpush1.bf16.xpose.msra.mxu0 0
    %1938 = vmatprep.subr.bf16.mxu0 0
    %1939 = vmatpush1.bf16.xpose.msra.mxu0 0
    %1940 = vmatprep.subr.bf16.mxu0 0
    %1941 = vmatpush1.bf16.xpose.msra.mxu0 0
    %1942 = vmatprep.subr.bf16.mxu0 0
    %1943 = vmatpush1.bf16.xpose.msra.mxu0 0
    %1944 = vmatprep.subr.bf16.mxu0 0
    %1945 = vmatpush1.bf16.xpose.msra.mxu0 0
    %1946 = vmatprep.subr.bf16.mxu0 0
    %1947 = vmatpush1.bf16.xpose.msra.mxu0 0
    %1948 = vmatprep.subr.bf16.mxu0 0
    %1949 = vmatpush1.bf16.xpose.msra.mxu0 0
    %1950 = vmatprep.subr.bf16.mxu0 0
    %1951 = vmatpush1.bf16.xpose.msra.mxu0 0
    %1952 = vmatprep.subr.bf16.mxu0 0
    %1953 = vmatpush1.bf16.xpose.msra.mxu0 0
    %1954 = vmatprep.subr.bf16.mxu0 0
    %1955 = vmatpush1.bf16.xpose.msra.mxu0 0
    %1956 = vmatprep.subr.bf16.mxu0 0
    %1957 = vmatpush1.bf16.xpose.msra.mxu0 0
    %1958 = vmatprep.subr.bf16.mxu0 0
    %1959 = vmatpush1.bf16.xpose.msra.mxu0 0
    %1960 = vmatprep.subr.bf16.mxu0 0
    %1961 = vmatpush1.bf16.xpose.msra.mxu0 0
    %1962 = vmatprep.mubr.bf16.mxu0 0
    %1963 = vmatmul.mubr.bf16.gmra.mrb[0].mxu0 %v1203
    %v1964 = vpop.f32.mrb[0].mxu0
    %v1965 = vadd.f32 0.0, %v1964
    %v1966 = vpop.f32.mrb[0].mxu0
    %v1967 = vpop.f32.mrb[0].mxu0
    %v1968 = vpop.f32.mrb[0].mxu0
    %1969 = vdwg.mxu0
    %1970 = vmatprep.subr.bf16.mxu0 0
    %1971 = vmatpush1.bf16.xpose.msra.mxu0 %v1236
    %1972 = vmatprep.subr.bf16.mxu0 0
    %1973 = vmatpush1.bf16.xpose.msra.mxu0 0
    %1974 = vmatprep.subr.bf16.mxu0 0
    %1975 = vmatpush1.bf16.xpose.msra.mxu0 0
    %1976 = vmatprep.subr.bf16.mxu0 0
    %1977 = vmatpush1.bf16.xpose.msra.mxu0 0
    %1978 = vmatprep.subr.bf16.mxu0 0
    %1979 = vmatpush1.bf16.xpose.msra.mxu0 0
    %1980 = vmatprep.subr.bf16.mxu0 0
    %1981 = vmatpush1.bf16.xpose.msra.mxu0 0
    %1982 = vmatprep.subr.bf16.mxu0 0
    %1983 = vmatpush1.bf16.xpose.msra.mxu0 0
    %1984 = vmatprep.subr.bf16.mxu0 0
    %1985 = vmatpush1.bf16.xpose.msra.mxu0 0
    %1986 = vmatprep.subr.bf16.mxu0 0
    %1987 = vmatpush1.bf16.xpose.msra.mxu0 0
    %1988 = vmatprep.subr.bf16.mxu0 0
    %1989 = vmatpush1.bf16.xpose.msra.mxu0 0
    %1990 = vmatprep.subr.bf16.mxu0 0
    %1991 = vmatpush1.bf16.xpose.msra.mxu0 0
    %1992 = vmatprep.subr.bf16.mxu0 0
    %1993 = vmatpush1.bf16.xpose.msra.mxu0 0
    %1994 = vmatprep.subr.bf16.mxu0 0
    %1995 = vmatpush1.bf16.xpose.msra.mxu0 0
    %1996 = vmatprep.subr.bf16.mxu0 0
    %1997 = vmatpush1.bf16.xpose.msra.mxu0 0
    %1998 = vmatprep.subr.bf16.mxu0 0
    %1999 = vmatpush1.bf16.xpose.msra.mxu0 0
    %2000 = vmatprep.subr.bf16.mxu0 0
    %2001 = vmatpush1.bf16.xpose.msra.mxu0 0
    %2002 = vmatprep.mubr.bf16.mxu0 0
    %2003 = vmatmul.mubr.bf16.gmra.mrb[0].mxu0 %v1204
    %v2004 = vpop.f32.mrb[0].mxu0
    %v2005 = vadd.f32 0.0, %v2004
    %v2006 = vpop.f32.mrb[0].mxu0
    %v2007 = vpop.f32.mrb[0].mxu0
    %v2008 = vpop.f32.mrb[0].mxu0
    %2009 = vdwg.mxu0
    %2010 = vmatprep.subr.bf16.mxu0 0
    %2011 = vmatpush1.bf16.xpose.msra.mxu0 %v1237
    %2012 = vmatprep.subr.bf16.mxu0 0
    %2013 = vmatpush1.bf16.xpose.msra.mxu0 0
    %2014 = vmatprep.subr.bf16.mxu0 0
    %2015 = vmatpush1.bf16.xpose.msra.mxu0 0
    %2016 = vmatprep.subr.bf16.mxu0 0
    %2017 = vmatpush1.bf16.xpose.msra.mxu0 0
    %2018 = vmatprep.subr.bf16.mxu0 0
    %2019 = vmatpush1.bf16.xpose.msra.mxu0 0
    %2020 = vmatprep.subr.bf16.mxu0 0
    %2021 = vmatpush1.bf16.xpose.msra.mxu0 0
    %2022 = vmatprep.subr.bf16.mxu0 0
    %2023 = vmatpush1.bf16.xpose.msra.mxu0 0
    %2024 = vmatprep.subr.bf16.mxu0 0
    %2025 = vmatpush1.bf16.xpose.msra.mxu0 0
    %2026 = vmatprep.subr.bf16.mxu0 0
    %2027 = vmatpush1.bf16.xpose.msra.mxu0 0
    %2028 = vmatprep.subr.bf16.mxu0 0
    %2029 = vmatpush1.bf16.xpose.msra.mxu0 0
    %2030 = vmatprep.subr.bf16.mxu0 0
    %2031 = vmatpush1.bf16.xpose.msra.mxu0 0
    %2032 = vmatprep.subr.bf16.mxu0 0
    %2033 = vmatpush1.bf16.xpose.msra.mxu0 0
    %2034 = vmatprep.subr.bf16.mxu0 0
    %2035 = vmatpush1.bf16.xpose.msra.mxu0 0
    %2036 = vmatprep.subr.bf16.mxu0 0
    %2037 = vmatpush1.bf16.xpose.msra.mxu0 0
    %2038 = vmatprep.subr.bf16.mxu0 0
    %2039 = vmatpush1.bf16.xpose.msra.mxu0 0
    %2040 = vmatprep.subr.bf16.mxu0 0
    %2041 = vmatpush1.bf16.xpose.msra.mxu0 0
    %2042 = vmatprep.mubr.bf16.mxu0 0
    %2043 = vmatmul.mubr.bf16.gmra.mrb[0].mxu0 %v1205
    %v2044 = vpop.f32.mrb[0].mxu0
    %v2045 = vadd.f32 0.0, %v2044
    %v2046 = vpop.f32.mrb[0].mxu0
    %v2047 = vpop.f32.mrb[0].mxu0
    %v2048 = vpop.f32.mrb[0].mxu0
    %2049 = vdwg.mxu0
    %2050 = vmatprep.subr.bf16.mxu0 0
    %2051 = vmatpush1.bf16.xpose.msra.mxu0 %v1238
    %2052 = vmatprep.subr.bf16.mxu0 0
    %2053 = vmatpush1.bf16.xpose.msra.mxu0 0
    %2054 = vmatprep.subr.bf16.mxu0 0
    %2055 = vmatpush1.bf16.xpose.msra.mxu0 0
    %2056 = vmatprep.subr.bf16.mxu0 0
    %2057 = vmatpush1.bf16.xpose.msra.mxu0 0
    %2058 = vmatprep.subr.bf16.mxu0 0
    %2059 = vmatpush1.bf16.xpose.msra.mxu0 0
    %2060 = vmatprep.subr.bf16.mxu0 0
    %2061 = vmatpush1.bf16.xpose.msra.mxu0 0
    %2062 = vmatprep.subr.bf16.mxu0 0
    %2063 = vmatpush1.bf16.xpose.msra.mxu0 0
    %2064 = vmatprep.subr.bf16.mxu0 0
    %2065 = vmatpush1.bf16.xpose.msra.mxu0 0
    %2066 = vmatprep.subr.bf16.mxu0 0
    %2067 = vmatpush1.bf16.xpose.msra.mxu0 0
    %2068 = vmatprep.subr.bf16.mxu0 0
    %2069 = vmatpush1.bf16.xpose.msra.mxu0 0
    %2070 = vmatprep.subr.bf16.mxu0 0
    %2071 = vmatpush1.bf16.xpose.msra.mxu0 0
    %2072 = vmatprep.subr.bf16.mxu0 0
    %2073 = vmatpush1.bf16.xpose.msra.mxu0 0
    %2074 = vmatprep.subr.bf16.mxu0 0
    %2075 = vmatpush1.bf16.xpose.msra.mxu0 0
    %2076 = vmatprep.subr.bf16.mxu0 0
    %2077 = vmatpush1.bf16.xpose.msra.mxu0 0
    %2078 = vmatprep.subr.bf16.mxu0 0
    %2079 = vmatpush1.bf16.xpose.msra.mxu0 0
    %2080 = vmatprep.subr.bf16.mxu0 0
    %2081 = vmatpush1.bf16.xpose.msra.mxu0 0
    %2082 = vmatprep.mubr.bf16.mxu0 0
    %2083 = vmatmul.mubr.bf16.gmra.mrb[0].mxu0 %v1206
    %v2084 = vpop.f32.mrb[0].mxu0
    %v2085 = vadd.f32 0.0, %v2084
    %v2086 = vpop.f32.mrb[0].mxu0
    %v2087 = vpop.f32.mrb[0].mxu0
    %v2088 = vpop.f32.mrb[0].mxu0
    %2089 = vdwg.mxu0
    %2090 = vmatprep.subr.bf16.mxu0 0
    %2091 = vmatpush1.bf16.xpose.msra.mxu0 %v1239
    %2092 = vmatprep.subr.bf16.mxu0 0
    %2093 = vmatpush1.bf16.xpose.msra.mxu0 0
    %2094 = vmatprep.subr.bf16.mxu0 0
    %2095 = vmatpush1.bf16.xpose.msra.mxu0 0
    %2096 = vmatprep.subr.bf16.mxu0 0
    %2097 = vmatpush1.bf16.xpose.msra.mxu0 0
    %2098 = vmatprep.subr.bf16.mxu0 0
    %2099 = vmatpush1.bf16.xpose.msra.mxu0 0
    %2100 = vmatprep.subr.bf16.mxu0 0
    %2101 = vmatpush1.bf16.xpose.msra.mxu0 0
    %2102 = vmatprep.subr.bf16.mxu0 0
    %2103 = vmatpush1.bf16.xpose.msra.mxu0 0
    %2104 = vmatprep.subr.bf16.mxu0 0
    %2105 = vmatpush1.bf16.xpose.msra.mxu0 0
    %2106 = vmatprep.subr.bf16.mxu0 0
    %2107 = vmatpush1.bf16.xpose.msra.mxu0 0
    %2108 = vmatprep.subr.bf16.mxu0 0
    %2109 = vmatpush1.bf16.xpose.msra.mxu0 0
    %2110 = vmatprep.subr.bf16.mxu0 0
    %2111 = vmatpush1.bf16.xpose.msra.mxu0 0
    %2112 = vmatprep.subr.bf16.mxu0 0
    %2113 = vmatpush1.bf16.xpose.msra.mxu0 0
    %2114 = vmatprep.subr.bf16.mxu0 0
    %2115 = vmatpush1.bf16.xpose.msra.mxu0 0
    %2116 = vmatprep.subr.bf16.mxu0 0
    %2117 = vmatpush1.bf16.xpose.msra.mxu0 0
    %2118 = vmatprep.subr.bf16.mxu0 0
    %2119 = vmatpush1.bf16.xpose.msra.mxu0 0
    %2120 = vmatprep.subr.bf16.mxu0 0
    %2121 = vmatpush1.bf16.xpose.msra.mxu0 0
    %2122 = vmatprep.mubr.bf16.mxu0 0
    %2123 = vmatmul.mubr.bf16.gmra.mrb[0].mxu0 %v1207
    %v2124 = vpop.f32.mrb[0].mxu0
    %v2125 = vadd.f32 0.0, %v2124
    %v2126 = vpop.f32.mrb[0].mxu0
    %v2127 = vpop.f32.mrb[0].mxu0
    %v2128 = vpop.f32.mrb[0].mxu0
    %2129 = vdwg.mxu0
    %2130 = vmatprep.subr.bf16.mxu0 0
    %2131 = vmatpush1.bf16.xpose.msra.mxu0 %v1240
    %2132 = vmatprep.subr.bf16.mxu0 0
    %2133 = vmatpush1.bf16.xpose.msra.mxu0 0
    %2134 = vmatprep.subr.bf16.mxu0 0
    %2135 = vmatpush1.bf16.xpose.msra.mxu0 0
    %2136 = vmatprep.subr.bf16.mxu0 0
    %2137 = vmatpush1.bf16.xpose.msra.mxu0 0
    %2138 = vmatprep.subr.bf16.mxu0 0
    %2139 = vmatpush1.bf16.xpose.msra.mxu0 0
    %2140 = vmatprep.subr.bf16.mxu0 0
    %2141 = vmatpush1.bf16.xpose.msra.mxu0 0
    %2142 = vmatprep.subr.bf16.mxu0 0
    %2143 = vmatpush1.bf16.xpose.msra.mxu0 0
    %2144 = vmatprep.subr.bf16.mxu0 0
    %2145 = vmatpush1.bf16.xpose.msra.mxu0 0
    %2146 = vmatprep.subr.bf16.mxu0 0
    %2147 = vmatpush1.bf16.xpose.msra.mxu0 0
    %2148 = vmatprep.subr.bf16.mxu0 0
    %2149 = vmatpush1.bf16.xpose.msra.mxu0 0
    %2150 = vmatprep.subr.bf16.mxu0 0
    %2151 = vmatpush1.bf16.xpose.msra.mxu0 0
    %2152 = vmatprep.subr.bf16.mxu0 0
    %2153 = vmatpush1.bf16.xpose.msra.mxu0 0
    %2154 = vmatprep.subr.bf16.mxu0 0
    %2155 = vmatpush1.bf16.xpose.msra.mxu0 0
    %2156 = vmatprep.subr.bf16.mxu0 0
    %2157 = vmatpush1.bf16.xpose.msra.mxu0 0
    %2158 = vmatprep.subr.bf16.mxu0 0
    %2159 = vmatpush1.bf16.xpose.msra.mxu0 0
    %2160 = vmatprep.subr.bf16.mxu0 0
    %2161 = vmatpush1.bf16.xpose.msra.mxu0 0
    %2162 = vmatprep.mubr.bf16.mxu0 0
    %2163 = vmatmul.mubr.bf16.gmra.mrb[0].mxu0 %v1208
    %v2164 = vpop.f32.mrb[0].mxu0
    %v2165 = vadd.f32 0.0, %v2164
    %v2166 = vpop.f32.mrb[0].mxu0
    %v2167 = vpop.f32.mrb[0].mxu0
    %v2168 = vpop.f32.mrb[0].mxu0
    %2169 = vdwg.mxu0
    %2170 = vmatprep.subr.bf16.mxu0 0
    %2171 = vmatpush1.bf16.xpose.msra.mxu0 %v1241
    %2172 = vmatprep.subr.bf16.mxu0 0
    %2173 = vmatpush1.bf16.xpose.msra.mxu0 0
    %2174 = vmatprep.subr.bf16.mxu0 0
    %2175 = vmatpush1.bf16.xpose.msra.mxu0 0
    %2176 = vmatprep.subr.bf16.mxu0 0
    %2177 = vmatpush1.bf16.xpose.msra.mxu0 0
    %2178 = vmatprep.subr.bf16.mxu0 0
    %2179 = vmatpush1.bf16.xpose.msra.mxu0 0
    %2180 = vmatprep.subr.bf16.mxu0 0
    %2181 = vmatpush1.bf16.xpose.msra.mxu0 0
    %2182 = vmatprep.subr.bf16.mxu0 0
    %2183 = vmatpush1.bf16.xpose.msra.mxu0 0
    %2184 = vmatprep.subr.bf16.mxu0 0
    %2185 = vmatpush1.bf16.xpose.msra.mxu0 0
    %2186 = vmatprep.subr.bf16.mxu0 0
    %2187 = vmatpush1.bf16.xpose.msra.mxu0 0
    %2188 = vmatprep.subr.bf16.mxu0 0
    %2189 = vmatpush1.bf16.xpose.msra.mxu0 0
    %2190 = vmatprep.subr.bf16.mxu0 0
    %2191 = vmatpush1.bf16.xpose.msra.mxu0 0
    %2192 = vmatprep.subr.bf16.mxu0 0
    %2193 = vmatpush1.bf16.xpose.msra.mxu0 0
    %2194 = vmatprep.subr.bf16.mxu0 0
    %2195 = vmatpush1.bf16.xpose.msra.mxu0 0
    %2196 = vmatprep.subr.bf16.mxu0 0
    %2197 = vmatpush1.bf16.xpose.msra.mxu0 0
    %2198 = vmatprep.subr.bf16.mxu0 0
    %2199 = vmatpush1.bf16.xpose.msra.mxu0 0
    %2200 = vmatprep.subr.bf16.mxu0 0
    %2201 = vmatpush1.bf16.xpose.msra.mxu0 0
    %2202 = vmatprep.mubr.bf16.mxu0 0
    %2203 = vmatmul.mubr.bf16.gmra.mrb[0].mxu0 %v1209
    %v2204 = vpop.f32.mrb[0].mxu0
    %v2205 = vadd.f32 0.0, %v2204
    %v2206 = vpop.f32.mrb[0].mxu0
    %v2207 = vpop.f32.mrb[0].mxu0
    %v2208 = vpop.f32.mrb[0].mxu0
    %2209 = vdwg.mxu0
    %2210 = vmatprep.subr.bf16.mxu0 0
    %2211 = vmatpush1.bf16.xpose.msra.mxu0 %v1242
    %2212 = vmatprep.subr.bf16.mxu0 0
    %2213 = vmatpush1.bf16.xpose.msra.mxu0 0
    %2214 = vmatprep.subr.bf16.mxu0 0
    %2215 = vmatpush1.bf16.xpose.msra.mxu0 0
    %2216 = vmatprep.subr.bf16.mxu0 0
    %2217 = vmatpush1.bf16.xpose.msra.mxu0 0
    %2218 = vmatprep.subr.bf16.mxu0 0
    %2219 = vmatpush1.bf16.xpose.msra.mxu0 0
    %2220 = vmatprep.subr.bf16.mxu0 0
    %2221 = vmatpush1.bf16.xpose.msra.mxu0 0
    %2222 = vmatprep.subr.bf16.mxu0 0
    %2223 = vmatpush1.bf16.xpose.msra.mxu0 0
    %2224 = vmatprep.subr.bf16.mxu0 0
    %2225 = vmatpush1.bf16.xpose.msra.mxu0 0
    %2226 = vmatprep.subr.bf16.mxu0 0
    %2227 = vmatpush1.bf16.xpose.msra.mxu0 0
    %2228 = vmatprep.subr.bf16.mxu0 0
    %2229 = vmatpush1.bf16.xpose.msra.mxu0 0
    %2230 = vmatprep.subr.bf16.mxu0 0
    %2231 = vmatpush1.bf16.xpose.msra.mxu0 0
    %2232 = vmatprep.subr.bf16.mxu0 0
    %2233 = vmatpush1.bf16.xpose.msra.mxu0 0
    %2234 = vmatprep.subr.bf16.mxu0 0
    %2235 = vmatpush1.bf16.xpose.msra.mxu0 0
    %2236 = vmatprep.subr.bf16.mxu0 0
    %2237 = vmatpush1.bf16.xpose.msra.mxu0 0
    %2238 = vmatprep.subr.bf16.mxu0 0
    %2239 = vmatpush1.bf16.xpose.msra.mxu0 0
    %2240 = vmatprep.subr.bf16.mxu0 0
    %2241 = vmatpush1.bf16.xpose.msra.mxu0 0
    %2242 = vmatprep.mubr.bf16.mxu0 0
    %2243 = vmatmul.mubr.bf16.gmra.mrb[0].mxu0 %v1210
    %v2244 = vpop.f32.mrb[0].mxu0
    %v2245 = vadd.f32 0.0, %v2244
    %v2246 = vpop.f32.mrb[0].mxu0
    %v2247 = vpop.f32.mrb[0].mxu0
    %v2248 = vpop.f32.mrb[0].mxu0
    %2249 = vdwg.mxu0
    %2250 = vmatprep.subr.bf16.mxu0 0
    %2251 = vmatpush1.bf16.xpose.msra.mxu0 %v1243
    %2252 = vmatprep.subr.bf16.mxu0 0
    %2253 = vmatpush1.bf16.xpose.msra.mxu0 0
    %2254 = vmatprep.subr.bf16.mxu0 0
    %2255 = vmatpush1.bf16.xpose.msra.mxu0 0
    %2256 = vmatprep.subr.bf16.mxu0 0
    %2257 = vmatpush1.bf16.xpose.msra.mxu0 0
    %2258 = vmatprep.subr.bf16.mxu0 0
    %2259 = vmatpush1.bf16.xpose.msra.mxu0 0
    %2260 = vmatprep.subr.bf16.mxu0 0
    %2261 = vmatpush1.bf16.xpose.msra.mxu0 0
    %2262 = vmatprep.subr.bf16.mxu0 0
    %2263 = vmatpush1.bf16.xpose.msra.mxu0 0
    %2264 = vmatprep.subr.bf16.mxu0 0
    %2265 = vmatpush1.bf16.xpose.msra.mxu0 0
    %2266 = vmatprep.subr.bf16.mxu0 0
    %2267 = vmatpush1.bf16.xpose.msra.mxu0 0
    %2268 = vmatprep.subr.bf16.mxu0 0
    %2269 = vmatpush1.bf16.xpose.msra.mxu0 0
    %2270 = vmatprep.subr.bf16.mxu0 0
    %2271 = vmatpush1.bf16.xpose.msra.mxu0 0
    %2272 = vmatprep.subr.bf16.mxu0 0
    %2273 = vmatpush1.bf16.xpose.msra.mxu0 0
    %2274 = vmatprep.subr.bf16.mxu0 0
    %2275 = vmatpush1.bf16.xpose.msra.mxu0 0
    %2276 = vmatprep.subr.bf16.mxu0 0
    %2277 = vmatpush1.bf16.xpose.msra.mxu0 0
    %2278 = vmatprep.subr.bf16.mxu0 0
    %2279 = vmatpush1.bf16.xpose.msra.mxu0 0
    %2280 = vmatprep.subr.bf16.mxu0 0
    %2281 = vmatpush1.bf16.xpose.msra.mxu0 0
    %2282 = vmatprep.mubr.bf16.mxu0 0
    %2283 = vmatmul.mubr.bf16.gmra.mrb[0].mxu0 %v1211
    %v2284 = vpop.f32.mrb[0].mxu0
    %v2285 = vadd.f32 0.0, %v2284
    %v2286 = vpop.f32.mrb[0].mxu0
    %v2287 = vpop.f32.mrb[0].mxu0
    %v2288 = vpop.f32.mrb[0].mxu0
    %2289 = vdwg.mxu0
    %2290 = vmatprep.subr.bf16.mxu0 0
    %2291 = vmatpush1.bf16.xpose.msra.mxu0 %v1244
    %2292 = vmatprep.subr.bf16.mxu0 0
    %2293 = vmatpush1.bf16.xpose.msra.mxu0 0
    %2294 = vmatprep.subr.bf16.mxu0 0
    %2295 = vmatpush1.bf16.xpose.msra.mxu0 0
    %2296 = vmatprep.subr.bf16.mxu0 0
    %2297 = vmatpush1.bf16.xpose.msra.mxu0 0
    %2298 = vmatprep.subr.bf16.mxu0 0
    %2299 = vmatpush1.bf16.xpose.msra.mxu0 0
    %2300 = vmatprep.subr.bf16.mxu0 0
    %2301 = vmatpush1.bf16.xpose.msra.mxu0 0
    %2302 = vmatprep.subr.bf16.mxu0 0
    %2303 = vmatpush1.bf16.xpose.msra.mxu0 0
    %2304 = vmatprep.subr.bf16.mxu0 0
    %2305 = vmatpush1.bf16.xpose.msra.mxu0 0
    %2306 = vmatprep.subr.bf16.mxu0 0
    %2307 = vmatpush1.bf16.xpose.msra.mxu0 0
    %2308 = vmatprep.subr.bf16.mxu0 0
    %2309 = vmatpush1.bf16.xpose.msra.mxu0 0
    %2310 = vmatprep.subr.bf16.mxu0 0
    %2311 = vmatpush1.bf16.xpose.msra.mxu0 0
    %2312 = vmatprep.subr.bf16.mxu0 0
    %2313 = vmatpush1.bf16.xpose.msra.mxu0 0
    %2314 = vmatprep.subr.bf16.mxu0 0
    %2315 = vmatpush1.bf16.xpose.msra.mxu0 0
    %2316 = vmatprep.subr.bf16.mxu0 0
    %2317 = vmatpush1.bf16.xpose.msra.mxu0 0
    %2318 = vmatprep.subr.bf16.mxu0 0
    %2319 = vmatpush1.bf16.xpose.msra.mxu0 0
    %2320 = vmatprep.subr.bf16.mxu0 0
    %2321 = vmatpush1.bf16.xpose.msra.mxu0 0
    %2322 = vmatprep.mubr.bf16.mxu0 0
    %2323 = vmatmul.mubr.bf16.gmra.mrb[0].mxu0 %v1212
    %v2324 = vpop.f32.mrb[0].mxu0
    %v2325 = vadd.f32 0.0, %v2324
    %v2326 = vpop.f32.mrb[0].mxu0
    %v2327 = vpop.f32.mrb[0].mxu0
    %v2328 = vpop.f32.mrb[0].mxu0
    %2329 = vdwg.mxu0
    %2330 = vmatprep.subr.bf16.mxu0 0
    %2331 = vmatpush1.bf16.xpose.msra.mxu0 %v1245
    %2332 = vmatprep.subr.bf16.mxu0 0
    %2333 = vmatpush1.bf16.xpose.msra.mxu0 0
    %2334 = vmatprep.subr.bf16.mxu0 0
    %2335 = vmatpush1.bf16.xpose.msra.mxu0 0
    %2336 = vmatprep.subr.bf16.mxu0 0
    %2337 = vmatpush1.bf16.xpose.msra.mxu0 0
    %2338 = vmatprep.subr.bf16.mxu0 0
    %2339 = vmatpush1.bf16.xpose.msra.mxu0 0
    %2340 = vmatprep.subr.bf16.mxu0 0
    %2341 = vmatpush1.bf16.xpose.msra.mxu0 0
    %2342 = vmatprep.subr.bf16.mxu0 0
    %2343 = vmatpush1.bf16.xpose.msra.mxu0 0
    %2344 = vmatprep.subr.bf16.mxu0 0
    %2345 = vmatpush1.bf16.xpose.msra.mxu0 0
    %2346 = vmatprep.subr.bf16.mxu0 0
    %2347 = vmatpush1.bf16.xpose.msra.mxu0 0
    %2348 = vmatprep.subr.bf16.mxu0 0
    %2349 = vmatpush1.bf16.xpose.msra.mxu0 0
    %2350 = vmatprep.subr.bf16.mxu0 0
    %2351 = vmatpush1.bf16.xpose.msra.mxu0 0
    %2352 = vmatprep.subr.bf16.mxu0 0
    %2353 = vmatpush1.bf16.xpose.msra.mxu0 0
    %2354 = vmatprep.subr.bf16.mxu0 0
    %2355 = vmatpush1.bf16.xpose.msra.mxu0 0
    %2356 = vmatprep.subr.bf16.mxu0 0
    %2357 = vmatpush1.bf16.xpose.msra.mxu0 0
    %2358 = vmatprep.subr.bf16.mxu0 0
    %2359 = vmatpush1.bf16.xpose.msra.mxu0 0
    %2360 = vmatprep.subr.bf16.mxu0 0
    %2361 = vmatpush1.bf16.xpose.msra.mxu0 0
    %2362 = vmatprep.mubr.bf16.mxu0 0
    %2363 = vmatmul.mubr.bf16.gmra.mrb[0].mxu0 %v1213
    %v2364 = vpop.f32.mrb[0].mxu0
    %v2365 = vadd.f32 0.0, %v2364
    %v2366 = vpop.f32.mrb[0].mxu0
    %v2367 = vpop.f32.mrb[0].mxu0
    %v2368 = vpop.f32.mrb[0].mxu0
    %2369 = vdwg.mxu0
    %2370 = vmatprep.subr.bf16.mxu0 0
    %2371 = vmatpush1.bf16.xpose.msra.mxu0 %v1246
    %2372 = vmatprep.subr.bf16.mxu0 0
    %2373 = vmatpush1.bf16.xpose.msra.mxu0 0
    %2374 = vmatprep.subr.bf16.mxu0 0
    %2375 = vmatpush1.bf16.xpose.msra.mxu0 0
    %2376 = vmatprep.subr.bf16.mxu0 0
    %2377 = vmatpush1.bf16.xpose.msra.mxu0 0
    %2378 = vmatprep.subr.bf16.mxu0 0
    %2379 = vmatpush1.bf16.xpose.msra.mxu0 0
    %2380 = vmatprep.subr.bf16.mxu0 0
    %2381 = vmatpush1.bf16.xpose.msra.mxu0 0
    %2382 = vmatprep.subr.bf16.mxu0 0
    %2383 = vmatpush1.bf16.xpose.msra.mxu0 0
    %2384 = vmatprep.subr.bf16.mxu0 0
    %2385 = vmatpush1.bf16.xpose.msra.mxu0 0
    %2386 = vmatprep.subr.bf16.mxu0 0
    %2387 = vmatpush1.bf16.xpose.msra.mxu0 0
    %2388 = vmatprep.subr.bf16.mxu0 0
    %2389 = vmatpush1.bf16.xpose.msra.mxu0 0
    %2390 = vmatprep.subr.bf16.mxu0 0
    %2391 = vmatpush1.bf16.xpose.msra.mxu0 0
    %2392 = vmatprep.subr.bf16.mxu0 0
    %2393 = vmatpush1.bf16.xpose.msra.mxu0 0
    %2394 = vmatprep.subr.bf16.mxu0 0
    %2395 = vmatpush1.bf16.xpose.msra.mxu0 0
    %2396 = vmatprep.subr.bf16.mxu0 0
    %2397 = vmatpush1.bf16.xpose.msra.mxu0 0
    %2398 = vmatprep.subr.bf16.mxu0 0
    %2399 = vmatpush1.bf16.xpose.msra.mxu0 0
    %2400 = vmatprep.subr.bf16.mxu0 0
    %2401 = vmatpush1.bf16.xpose.msra.mxu0 0
    %2402 = vmatprep.mubr.bf16.mxu0 0
    %2403 = vmatmul.mubr.bf16.gmra.mrb[0].mxu0 %v1214
    %v2404 = vpop.f32.mrb[0].mxu0
    %v2405 = vadd.f32 0.0, %v2404
    %v2406 = vpop.f32.mrb[0].mxu0
    %v2407 = vpop.f32.mrb[0].mxu0
    %v2408 = vpop.f32.mrb[0].mxu0
    %2409 = vdwg.mxu0
    %2410 = vmatprep.subr.bf16.mxu0 0
    %2411 = vmatpush1.bf16.xpose.msra.mxu0 %v1247
    %2412 = vmatprep.subr.bf16.mxu0 0
    %2413 = vmatpush1.bf16.xpose.msra.mxu0 0
    %2414 = vmatprep.subr.bf16.mxu0 0
    %2415 = vmatpush1.bf16.xpose.msra.mxu0 0
    %2416 = vmatprep.subr.bf16.mxu0 0
    %2417 = vmatpush1.bf16.xpose.msra.mxu0 0
    %2418 = vmatprep.subr.bf16.mxu0 0
    %2419 = vmatpush1.bf16.xpose.msra.mxu0 0
    %2420 = vmatprep.subr.bf16.mxu0 0
    %2421 = vmatpush1.bf16.xpose.msra.mxu0 0
    %2422 = vmatprep.subr.bf16.mxu0 0
    %2423 = vmatpush1.bf16.xpose.msra.mxu0 0
    %2424 = vmatprep.subr.bf16.mxu0 0
    %2425 = vmatpush1.bf16.xpose.msra.mxu0 0
    %2426 = vmatprep.subr.bf16.mxu0 0
    %2427 = vmatpush1.bf16.xpose.msra.mxu0 0
    %2428 = vmatprep.subr.bf16.mxu0 0
    %2429 = vmatpush1.bf16.xpose.msra.mxu0 0
    %2430 = vmatprep.subr.bf16.mxu0 0
    %2431 = vmatpush1.bf16.xpose.msra.mxu0 0
    %2432 = vmatprep.subr.bf16.mxu0 0
    %2433 = vmatpush1.bf16.xpose.msra.mxu0 0
    %2434 = vmatprep.subr.bf16.mxu0 0
    %2435 = vmatpush1.bf16.xpose.msra.mxu0 0
    %2436 = vmatprep.subr.bf16.mxu0 0
    %2437 = vmatpush1.bf16.xpose.msra.mxu0 0
    %2438 = vmatprep.subr.bf16.mxu0 0
    %2439 = vmatpush1.bf16.xpose.msra.mxu0 0
    %2440 = vmatprep.subr.bf16.mxu0 0
    %2441 = vmatpush1.bf16.xpose.msra.mxu0 0
    %2442 = vmatprep.mubr.bf16.mxu0 0
    %2443 = vmatmul.mubr.bf16.gmra.mrb[0].mxu0 %v1215
    %v2444 = vpop.f32.mrb[0].mxu0
    %v2445 = vadd.f32 0.0, %v2444
    %v2446 = vpop.f32.mrb[0].mxu0
    %v2447 = vpop.f32.mrb[0].mxu0
    %v2448 = vpop.f32.mrb[0].mxu0
    %2449 = vdwg.mxu0
    %2450 = vmatprep.subr.bf16.mxu0 0
    %2451 = vmatpush1.bf16.xpose.msra.mxu0 %v1248
    %2452 = vmatprep.subr.bf16.mxu0 0
    %2453 = vmatpush1.bf16.xpose.msra.mxu0 0
    %2454 = vmatprep.subr.bf16.mxu0 0
    %2455 = vmatpush1.bf16.xpose.msra.mxu0 0
    %2456 = vmatprep.subr.bf16.mxu0 0
    %2457 = vmatpush1.bf16.xpose.msra.mxu0 0
    %2458 = vmatprep.subr.bf16.mxu0 0
    %2459 = vmatpush1.bf16.xpose.msra.mxu0 0
    %2460 = vmatprep.subr.bf16.mxu0 0
    %2461 = vmatpush1.bf16.xpose.msra.mxu0 0
    %2462 = vmatprep.subr.bf16.mxu0 0
    %2463 = vmatpush1.bf16.xpose.msra.mxu0 0
    %2464 = vmatprep.subr.bf16.mxu0 0
    %2465 = vmatpush1.bf16.xpose.msra.mxu0 0
    %2466 = vmatprep.subr.bf16.mxu0 0
    %2467 = vmatpush1.bf16.xpose.msra.mxu0 0
    %2468 = vmatprep.subr.bf16.mxu0 0
    %2469 = vmatpush1.bf16.xpose.msra.mxu0 0
    %2470 = vmatprep.subr.bf16.mxu0 0
    %2471 = vmatpush1.bf16.xpose.msra.mxu0 0
    %2472 = vmatprep.subr.bf16.mxu0 0
    %2473 = vmatpush1.bf16.xpose.msra.mxu0 0
    %2474 = vmatprep.subr.bf16.mxu0 0
    %2475 = vmatpush1.bf16.xpose.msra.mxu0 0
    %2476 = vmatprep.subr.bf16.mxu0 0
    %2477 = vmatpush1.bf16.xpose.msra.mxu0 0
    %2478 = vmatprep.subr.bf16.mxu0 0
    %2479 = vmatpush1.bf16.xpose.msra.mxu0 0
    %2480 = vmatprep.subr.bf16.mxu0 0
    %2481 = vmatpush1.bf16.xpose.msra.mxu0 0
    %2482 = vmatprep.mubr.bf16.mxu0 0
    %2483 = vmatmul.mubr.bf16.gmra.mrb[0].mxu0 %v1216
    %v2484 = vpop.f32.mrb[0].mxu0
    %v2485 = vadd.f32 0.0, %v2484
    %v2486 = vpop.f32.mrb[0].mxu0
    %v2487 = vpop.f32.mrb[0].mxu0
    %v2488 = vpop.f32.mrb[0].mxu0
    %2489 = vdwg.mxu0
    %2490 = vmatprep.subr.bf16.mxu0 0
    %2491 = vmatpush1.bf16.xpose.msra.mxu0 %v1249
    %2492 = vmatprep.subr.bf16.mxu0 0
    %2493 = vmatpush1.bf16.xpose.msra.mxu0 0
    %2494 = vmatprep.subr.bf16.mxu0 0
    %2495 = vmatpush1.bf16.xpose.msra.mxu0 0
    %2496 = vmatprep.subr.bf16.mxu0 0
    %2497 = vmatpush1.bf16.xpose.msra.mxu0 0
    %2498 = vmatprep.subr.bf16.mxu0 0
    %2499 = vmatpush1.bf16.xpose.msra.mxu0 0
    %2500 = vmatprep.subr.bf16.mxu0 0
    %2501 = vmatpush1.bf16.xpose.msra.mxu0 0
    %2502 = vmatprep.subr.bf16.mxu0 0
    %2503 = vmatpush1.bf16.xpose.msra.mxu0 0
    %2504 = vmatprep.subr.bf16.mxu0 0
    %2505 = vmatpush1.bf16.xpose.msra.mxu0 0
    %2506 = vmatprep.subr.bf16.mxu0 0
    %2507 = vmatpush1.bf16.xpose.msra.mxu0 0
    %2508 = vmatprep.subr.bf16.mxu0 0
    %2509 = vmatpush1.bf16.xpose.msra.mxu0 0
    %2510 = vmatprep.subr.bf16.mxu0 0
    %2511 = vmatpush1.bf16.xpose.msra.mxu0 0
    %2512 = vmatprep.subr.bf16.mxu0 0
    %2513 = vmatpush1.bf16.xpose.msra.mxu0 0
    %2514 = vmatprep.subr.bf16.mxu0 0
    %2515 = vmatpush1.bf16.xpose.msra.mxu0 0
    %2516 = vmatprep.subr.bf16.mxu0 0
    %2517 = vmatpush1.bf16.xpose.msra.mxu0 0
    %2518 = vmatprep.subr.bf16.mxu0 0
    %2519 = vmatpush1.bf16.xpose.msra.mxu0 0
    %2520 = vmatprep.subr.bf16.mxu0 0
    %2521 = vmatpush1.bf16.xpose.msra.mxu0 0
    %2522 = vmatprep.mubr.bf16.mxu0 0
    %2523 = vmatmul.mubr.bf16.gmra.mrb[0].mxu0 %v1217
    %v2524 = vpop.f32.mrb[0].mxu0
    %v2525 = vadd.f32 0.0, %v2524
    %v2526 = vpop.f32.mrb[0].mxu0
    %v2527 = vpop.f32.mrb[0].mxu0
    %v2528 = vpop.f32.mrb[0].mxu0
    %2529 = vdwg.mxu0
    %v2530 = vlaneseq
    %v2531 = vshrl.u32 %v2530, 7
    %v2532 = vlaneseq
    %v2533 = vand.u32 %v2532, 127
    %vm2534 = vcmp.le.s32.totalorder %v2533, %v2531
    %v2535 = vsel %vm2534, 1, 0
    %vm2536 = vcmp.eq.s32.totalorder %v2535, 1
    %v2537 = vsel %vm2536, %v1285, -1e+30
    %v2538 = vsel %vm2536, %v1325, -1e+30
    %v2539 = vsel %vm2536, %v1365, -1e+30
    %v2540 = vsel %vm2536, %v1405, -1e+30
    %v2541 = vsel %vm2536, %v1445, -1e+30
    %v2542 = vsel %vm2536, %v1485, -1e+30
    %v2543 = vsel %vm2536, %v1525, -1e+30
    %v2544 = vsel %vm2536, %v1565, -1e+30
    %v2545 = vsel %vm2536, %v1605, -1e+30
    %v2546 = vsel %vm2536, %v1645, -1e+30
    %v2547 = vsel %vm2536, %v1685, -1e+30
    %v2548 = vsel %vm2536, %v1725, -1e+30
    %v2549 = vsel %vm2536, %v1765, -1e+30
    %v2550 = vsel %vm2536, %v1805, -1e+30
    %v2551 = vsel %vm2536, %v1845, -1e+30
    %v2552 = vsel %vm2536, %v1885, -1e+30
    %v2553 = vsel %vm2536, %v1925, -1e+30
    %v2554 = vsel %vm2536, %v1965, -1e+30
    %v2555 = vsel %vm2536, %v2005, -1e+30
    %v2556 = vsel %vm2536, %v2045, -1e+30
    %v2557 = vsel %vm2536, %v2085, -1e+30
    %v2558 = vsel %vm2536, %v2125, -1e+30
    %v2559 = vsel %vm2536, %v2165, -1e+30
    %v2560 = vsel %vm2536, %v2205, -1e+30
    %v2561 = vsel %vm2536, %v2245, -1e+30
    %v2562 = vsel %vm2536, %v2285, -1e+30
    %v2563 = vsel %vm2536, %v2325, -1e+30
    %v2564 = vsel %vm2536, %v2365, -1e+30
    %v2565 = vsel %vm2536, %v2405, -1e+30
    %v2566 = vsel %vm2536, %v2445, -1e+30
    %v2567 = vsel %vm2536, %v2485, -1e+30
    %v2568 = vsel %vm2536, %v2525, -1e+30
    %vm2569 = vcmask 64512
    %v2570 = vsel %vm2569, %v2537, -inf
    %2571 = vmax.xlane.f32.xlu0 %v2570
    %v2572 = vpop.xlane.xlu0 %2571
    %v2573 = vsel %vm2569, %v2538, -inf
    %2574 = vmax.xlane.f32.xlu0 %v2573
    %v2575 = vpop.xlane.xlu0 %2574
    %v2576 = vsel %vm2569, %v2539, -inf
    %2577 = vmax.xlane.f32.xlu0 %v2576
    %v2578 = vpop.xlane.xlu0 %2577
    %v2579 = vsel %vm2569, %v2540, -inf
    %2580 = vmax.xlane.f32.xlu0 %v2579
    %v2581 = vpop.xlane.xlu0 %2580
    %v2582 = vsel %vm2569, %v2541, -inf
    %2583 = vmax.xlane.f32.xlu0 %v2582
    %v2584 = vpop.xlane.xlu0 %2583
    %v2585 = vsel %vm2569, %v2542, -inf
    %2586 = vmax.xlane.f32.xlu0 %v2585
    %v2587 = vpop.xlane.xlu0 %2586
    %v2588 = vsel %vm2569, %v2543, -inf
    %2589 = vmax.xlane.f32.xlu0 %v2588
    %v2590 = vpop.xlane.xlu0 %2589
    %v2591 = vsel %vm2569, %v2544, -inf
    %2592 = vmax.xlane.f32.xlu0 %v2591
    %v2593 = vpop.xlane.xlu0 %2592
    %v2594 = vsel %vm2569, %v2545, -inf
    %2595 = vmax.xlane.f32.xlu0 %v2594
    %v2596 = vpop.xlane.xlu0 %2595
    %v2597 = vsel %vm2569, %v2546, -inf
    %2598 = vmax.xlane.f32.xlu0 %v2597
    %v2599 = vpop.xlane.xlu0 %2598
    %v2600 = vsel %vm2569, %v2547, -inf
    %2601 = vmax.xlane.f32.xlu0 %v2600
    %v2602 = vpop.xlane.xlu0 %2601
    %v2603 = vsel %vm2569, %v2548, -inf
    %2604 = vmax.xlane.f32.xlu0 %v2603
    %v2605 = vpop.xlane.xlu0 %2604
    %v2606 = vsel %vm2569, %v2549, -inf
    %2607 = vmax.xlane.f32.xlu0 %v2606
    %v2608 = vpop.xlane.xlu0 %2607
    %v2609 = vsel %vm2569, %v2550, -inf
    %2610 = vmax.xlane.f32.xlu0 %v2609
    %v2611 = vpop.xlane.xlu0 %2610
    %v2612 = vsel %vm2569, %v2551, -inf
    %2613 = vmax.xlane.f32.xlu0 %v2612
    %v2614 = vpop.xlane.xlu0 %2613
    %v2615 = vsel %vm2569, %v2552, -inf
    %2616 = vmax.xlane.f32.xlu0 %v2615
    %v2617 = vpop.xlane.xlu0 %2616
    %v2618 = vsel %vm2569, %v2553, -inf
    %2619 = vmax.xlane.f32.xlu0 %v2618
    %v2620 = vpop.xlane.xlu0 %2619
    %v2621 = vsel %vm2569, %v2554, -inf
    %2622 = vmax.xlane.f32.xlu0 %v2621
    %v2623 = vpop.xlane.xlu0 %2622
    %v2624 = vsel %vm2569, %v2555, -inf
    %2625 = vmax.xlane.f32.xlu0 %v2624
    %v2626 = vpop.xlane.xlu0 %2625
    %v2627 = vsel %vm2569, %v2556, -inf
    %2628 = vmax.xlane.f32.xlu0 %v2627
    %v2629 = vpop.xlane.xlu0 %2628
    %v2630 = vsel %vm2569, %v2557, -inf
    %2631 = vmax.xlane.f32.xlu0 %v2630
    %v2632 = vpop.xlane.xlu0 %2631
    %v2633 = vsel %vm2569, %v2558, -inf
    %2634 = vmax.xlane.f32.xlu0 %v2633
    %v2635 = vpop.xlane.xlu0 %2634
    %v2636 = vsel %vm2569, %v2559, -inf
    %2637 = vmax.xlane.f32.xlu0 %v2636
    %v2638 = vpop.xlane.xlu0 %2637
    %v2639 = vsel %vm2569, %v2560, -inf
    %2640 = vmax.xlane.f32.xlu0 %v2639
    %v2641 = vpop.xlane.xlu0 %2640
    %v2642 = vsel %vm2569, %v2561, -inf
    %2643 = vmax.xlane.f32.xlu0 %v2642
    %v2644 = vpop.xlane.xlu0 %2643
    %v2645 = vsel %vm2569, %v2562, -inf
    %2646 = vmax.xlane.f32.xlu0 %v2645
    %v2647 = vpop.xlane.xlu0 %2646
    %v2648 = vsel %vm2569, %v2563, -inf
    %2649 = vmax.xlane.f32.xlu0 %v2648
    %v2650 = vpop.xlane.xlu0 %2649
    %v2651 = vsel %vm2569, %v2564, -inf
    %2652 = vmax.xlane.f32.xlu0 %v2651
    %v2653 = vpop.xlane.xlu0 %2652
    %v2654 = vsel %vm2569, %v2565, -inf
    %2655 = vmax.xlane.f32.xlu0 %v2654
    %v2656 = vpop.xlane.xlu0 %2655
    %v2657 = vsel %vm2569, %v2566, -inf
    %2658 = vmax.xlane.f32.xlu0 %v2657
    %v2659 = vpop.xlane.xlu0 %2658
    %v2660 = vsel %vm2569, %v2567, -inf
    %2661 = vmax.xlane.f32.xlu0 %v2660
    %v2662 = vpop.xlane.xlu0 %2661
    %v2663 = vsel %vm2569, %v2568, -inf
    %2664 = vmax.xlane.f32.xlu0 %v2663
    %v2665 = vpop.xlane.xlu0 %2664
    %v2666 = vsub.f32 %v2537, %v2572
    %v2667 = vsub.f32 %v2538, %v2575
    %v2668 = vsub.f32 %v2539, %v2578
    %v2669 = vsub.f32 %v2540, %v2581
    %v2670 = vsub.f32 %v2541, %v2584
    %v2671 = vsub.f32 %v2542, %v2587
    %v2672 = vsub.f32 %v2543, %v2590
    %v2673 = vsub.f32 %v2544, %v2593
    %v2674 = vsub.f32 %v2545, %v2596
    %v2675 = vsub.f32 %v2546, %v2599
    %v2676 = vsub.f32 %v2547, %v2602
    %v2677 = vsub.f32 %v2548, %v2605
    %v2678 = vsub.f32 %v2549, %v2608
    %v2679 = vsub.f32 %v2550, %v2611
    %v2680 = vsub.f32 %v2551, %v2614
    %v2681 = vsub.f32 %v2552, %v2617
    %v2682 = vsub.f32 %v2553, %v2620
    %v2683 = vsub.f32 %v2554, %v2623
    %v2684 = vsub.f32 %v2555, %v2626
    %v2685 = vsub.f32 %v2556, %v2629
    %v2686 = vsub.f32 %v2557, %v2632
    %v2687 = vsub.f32 %v2558, %v2635
    %v2688 = vsub.f32 %v2559, %v2638
    %v2689 = vsub.f32 %v2560, %v2641
    %v2690 = vsub.f32 %v2561, %v2644
    %v2691 = vsub.f32 %v2562, %v2647
    %v2692 = vsub.f32 %v2563, %v2650
    %v2693 = vsub.f32 %v2564, %v2653
    %v2694 = vsub.f32 %v2565, %v2656
    %v2695 = vsub.f32 %v2566, %v2659
    %v2696 = vsub.f32 %v2567, %v2662
    %v2697 = vsub.f32 %v2568, %v2665
    %v2698 = vmul.f32 %v2666, 1.442695
    %v2699 = vpow.pop %v2698
    %v2700 = vmul.f32 %v2667, 1.442695
    %v2701 = vpow.pop %v2700
    %v2702 = vmul.f32 %v2668, 1.442695
    %v2703 = vpow.pop %v2702
    %v2704 = vmul.f32 %v2669, 1.442695
    %v2705 = vpow.pop %v2704
    %v2706 = vmul.f32 %v2670, 1.442695
    %v2707 = vpow.pop %v2706
    %v2708 = vmul.f32 %v2671, 1.442695
    %v2709 = vpow.pop %v2708
    %v2710 = vmul.f32 %v2672, 1.442695
    %v2711 = vpow.pop %v2710
    %v2712 = vmul.f32 %v2673, 1.442695
    %v2713 = vpow.pop %v2712
    %v2714 = vmul.f32 %v2674, 1.442695
    %v2715 = vpow.pop %v2714
    %v2716 = vmul.f32 %v2675, 1.442695
    %v2717 = vpow.pop %v2716
    %v2718 = vmul.f32 %v2676, 1.442695
    %v2719 = vpow.pop %v2718
    %v2720 = vmul.f32 %v2677, 1.442695
    %v2721 = vpow.pop %v2720
    %v2722 = vmul.f32 %v2678, 1.442695
    %v2723 = vpow.pop %v2722
    %v2724 = vmul.f32 %v2679, 1.442695
    %v2725 = vpow.pop %v2724
    %v2726 = vmul.f32 %v2680, 1.442695
    %v2727 = vpow.pop %v2726
    %v2728 = vmul.f32 %v2681, 1.442695
    %v2729 = vpow.pop %v2728
    %v2730 = vmul.f32 %v2682, 1.442695
    %v2731 = vpow.pop %v2730
    %v2732 = vmul.f32 %v2683, 1.442695
    %v2733 = vpow.pop %v2732
    %v2734 = vmul.f32 %v2684, 1.442695
    %v2735 = vpow.pop %v2734
    %v2736 = vmul.f32 %v2685, 1.442695
    %v2737 = vpow.pop %v2736
    %v2738 = vmul.f32 %v2686, 1.442695
    %v2739 = vpow.pop %v2738
    %v2740 = vmul.f32 %v2687, 1.442695
    %v2741 = vpow.pop %v2740
    %v2742 = vmul.f32 %v2688, 1.442695
    %v2743 = vpow.pop %v2742
    %v2744 = vmul.f32 %v2689, 1.442695
    %v2745 = vpow.pop %v2744
    %v2746 = vmul.f32 %v2690, 1.442695
    %v2747 = vpow.pop %v2746
    %v2748 = vmul.f32 %v2691, 1.442695
    %v2749 = vpow.pop %v2748
    %v2750 = vmul.f32 %v2692, 1.442695
    %v2751 = vpow.pop %v2750
    %v2752 = vmul.f32 %v2693, 1.442695
    %v2753 = vpow.pop %v2752
    %v2754 = vmul.f32 %v2694, 1.442695
    %v2755 = vpow.pop %v2754
    %v2756 = vmul.f32 %v2695, 1.442695
    %v2757 = vpow.pop %v2756
    %v2758 = vmul.f32 %v2696, 1.442695
    %v2759 = vpow.pop %v2758
    %v2760 = vmul.f32 %v2697, 1.442695
    %v2761 = vpow.pop %v2760
    %v2762 = vsel %vm2569, %v2699, 0.0
    %2763 = vadd.xlane.f32.xlu0 %v2762
    %v2764 = vpop.xlane.xlu0 %2763
    %v2765 = vsel %vm2569, %v2701, 0.0
    %2766 = vadd.xlane.f32.xlu0 %v2765
    %v2767 = vpop.xlane.xlu0 %2766
    %v2768 = vsel %vm2569, %v2703, 0.0
    %2769 = vadd.xlane.f32.xlu0 %v2768
    %v2770 = vpop.xlane.xlu0 %2769
    %v2771 = vsel %vm2569, %v2705, 0.0
    %2772 = vadd.xlane.f32.xlu0 %v2771
    %v2773 = vpop.xlane.xlu0 %2772
    %v2774 = vsel %vm2569, %v2707, 0.0
    %2775 = vadd.xlane.f32.xlu0 %v2774
    %v2776 = vpop.xlane.xlu0 %2775
    %v2777 = vsel %vm2569, %v2709, 0.0
    %2778 = vadd.xlane.f32.xlu0 %v2777
    %v2779 = vpop.xlane.xlu0 %2778
    %v2780 = vsel %vm2569, %v2711, 0.0
    %2781 = vadd.xlane.f32.xlu0 %v2780
    %v2782 = vpop.xlane.xlu0 %2781
    %v2783 = vsel %vm2569, %v2713, 0.0
    %2784 = vadd.xlane.f32.xlu0 %v2783
    %v2785 = vpop.xlane.xlu0 %2784
    %v2786 = vsel %vm2569, %v2715, 0.0
    %2787 = vadd.xlane.f32.xlu0 %v2786
    %v2788 = vpop.xlane.xlu0 %2787
    %v2789 = vsel %vm2569, %v2717, 0.0
    %2790 = vadd.xlane.f32.xlu0 %v2789
    %v2791 = vpop.xlane.xlu0 %2790
    %v2792 = vsel %vm2569, %v2719, 0.0
    %2793 = vadd.xlane.f32.xlu0 %v2792
    %v2794 = vpop.xlane.xlu0 %2793
    %v2795 = vsel %vm2569, %v2721, 0.0
    %2796 = vadd.xlane.f32.xlu0 %v2795
    %v2797 = vpop.xlane.xlu0 %2796
    %v2798 = vsel %vm2569, %v2723, 0.0
    %2799 = vadd.xlane.f32.xlu0 %v2798
    %v2800 = vpop.xlane.xlu0 %2799
    %v2801 = vsel %vm2569, %v2725, 0.0
    %2802 = vadd.xlane.f32.xlu0 %v2801
    %v2803 = vpop.xlane.xlu0 %2802
    %v2804 = vsel %vm2569, %v2727, 0.0
    %2805 = vadd.xlane.f32.xlu0 %v2804
    %v2806 = vpop.xlane.xlu0 %2805
    %v2807 = vsel %vm2569, %v2729, 0.0
    %2808 = vadd.xlane.f32.xlu0 %v2807
    %v2809 = vpop.xlane.xlu0 %2808
    %v2810 = vsel %vm2569, %v2731, 0.0
    %2811 = vadd.xlane.f32.xlu0 %v2810
    %v2812 = vpop.xlane.xlu0 %2811
    %v2813 = vsel %vm2569, %v2733, 0.0
    %2814 = vadd.xlane.f32.xlu0 %v2813
    %v2815 = vpop.xlane.xlu0 %2814
    %v2816 = vsel %vm2569, %v2735, 0.0
    %2817 = vadd.xlane.f32.xlu0 %v2816
    %v2818 = vpop.xlane.xlu0 %2817
    %v2819 = vsel %vm2569, %v2737, 0.0
    %2820 = vadd.xlane.f32.xlu0 %v2819
    %v2821 = vpop.xlane.xlu0 %2820
    %v2822 = vsel %vm2569, %v2739, 0.0
    %2823 = vadd.xlane.f32.xlu0 %v2822
    %v2824 = vpop.xlane.xlu0 %2823
    %v2825 = vsel %vm2569, %v2741, 0.0
    %2826 = vadd.xlane.f32.xlu0 %v2825
    %v2827 = vpop.xlane.xlu0 %2826
    %v2828 = vsel %vm2569, %v2743, 0.0
    %2829 = vadd.xlane.f32.xlu0 %v2828
    %v2830 = vpop.xlane.xlu0 %2829
    %v2831 = vsel %vm2569, %v2745, 0.0
    %2832 = vadd.xlane.f32.xlu0 %v2831
    %v2833 = vpop.xlane.xlu0 %2832
    %v2834 = vsel %vm2569, %v2747, 0.0
    %2835 = vadd.xlane.f32.xlu0 %v2834
    %v2836 = vpop.xlane.xlu0 %2835
    %v2837 = vsel %vm2569, %v2749, 0.0
    %2838 = vadd.xlane.f32.xlu0 %v2837
    %v2839 = vpop.xlane.xlu0 %2838
    %v2840 = vsel %vm2569, %v2751, 0.0
    %2841 = vadd.xlane.f32.xlu0 %v2840
    %v2842 = vpop.xlane.xlu0 %2841
    %v2843 = vsel %vm2569, %v2753, 0.0
    %2844 = vadd.xlane.f32.xlu0 %v2843
    %v2845 = vpop.xlane.xlu0 %2844
    %v2846 = vsel %vm2569, %v2755, 0.0
    %2847 = vadd.xlane.f32.xlu0 %v2846
    %v2848 = vpop.xlane.xlu0 %2847
    %v2849 = vsel %vm2569, %v2757, 0.0
    %2850 = vadd.xlane.f32.xlu0 %v2849
    %v2851 = vpop.xlane.xlu0 %2850
    %v2852 = vsel %vm2569, %v2759, 0.0
    %2853 = vadd.xlane.f32.xlu0 %v2852
    %v2854 = vpop.xlane.xlu0 %2853
    %v2855 = vsel %vm2569, %v2761, 0.0
    %2856 = vadd.xlane.f32.xlu0 %v2855
    %v2857 = vpop.xlane.xlu0 %2856
    %v2858 = vrcp.pop %v2764
    %v2859 = vrcp.pop %v2767
    %v2860 = vrcp.pop %v2770
    %v2861 = vrcp.pop %v2773
    %v2862 = vrcp.pop %v2776
    %v2863 = vrcp.pop %v2779
    %v2864 = vrcp.pop %v2782
    %v2865 = vrcp.pop %v2785
    %v2866 = vrcp.pop %v2788
    %v2867 = vrcp.pop %v2791
    %v2868 = vrcp.pop %v2794
    %v2869 = vrcp.pop %v2797
    %v2870 = vrcp.pop %v2800
    %v2871 = vrcp.pop %v2803
    %v2872 = vrcp.pop %v2806
    %v2873 = vrcp.pop %v2809
    %v2874 = vrcp.pop %v2812
    %v2875 = vrcp.pop %v2815
    %v2876 = vrcp.pop %v2818
    %v2877 = vrcp.pop %v2821
    %v2878 = vrcp.pop %v2824
    %v2879 = vrcp.pop %v2827
    %v2880 = vrcp.pop %v2830
    %v2881 = vrcp.pop %v2833
    %v2882 = vrcp.pop %v2836
    %v2883 = vrcp.pop %v2839
    %v2884 = vrcp.pop %v2842
    %v2885 = vrcp.pop %v2845
    %v2886 = vrcp.pop %v2848
    %v2887 = vrcp.pop %v2851
    %v2888 = vrcp.pop %v2854
    %v2889 = vrcp.pop %v2857
    %v2890 = vmul.f32 %v2699, %v2858
    %v2891 = vmul.f32 %v2701, %v2859
    %v2892 = vmul.f32 %v2703, %v2860
    %v2893 = vmul.f32 %v2705, %v2861
    %v2894 = vmul.f32 %v2707, %v2862
    %v2895 = vmul.f32 %v2709, %v2863
    %v2896 = vmul.f32 %v2711, %v2864
    %v2897 = vmul.f32 %v2713, %v2865
    %v2898 = vmul.f32 %v2715, %v2866
    %v2899 = vmul.f32 %v2717, %v2867
    %v2900 = vmul.f32 %v2719, %v2868
    %v2901 = vmul.f32 %v2721, %v2869
    %v2902 = vmul.f32 %v2723, %v2870
    %v2903 = vmul.f32 %v2725, %v2871
    %v2904 = vmul.f32 %v2727, %v2872
    %v2905 = vmul.f32 %v2729, %v2873
    %v2906 = vmul.f32 %v2731, %v2874
    %v2907 = vmul.f32 %v2733, %v2875
    %v2908 = vmul.f32 %v2735, %v2876
    %v2909 = vmul.f32 %v2737, %v2877
    %v2910 = vmul.f32 %v2739, %v2878
    %v2911 = vmul.f32 %v2741, %v2879
    %v2912 = vmul.f32 %v2743, %v2880
    %v2913 = vmul.f32 %v2745, %v2881
    %v2914 = vmul.f32 %v2747, %v2882
    %v2915 = vmul.f32 %v2749, %v2883
    %v2916 = vmul.f32 %v2751, %v2884
    %v2917 = vmul.f32 %v2753, %v2885
    %v2918 = vmul.f32 %v2755, %v2886
    %v2919 = vmul.f32 %v2757, %v2887
    %v2920 = vmul.f32 %v2759, %v2888
    %v2921 = vmul.f32 %v2761, %v2889
    %v2922 = vpack.c.bf16 %v2890, %v2890
    %v2923 = vpack.c.bf16 %v2891, %v2891
    %v2924 = vpack.c.bf16 %v2892, %v2892
    %v2925 = vpack.c.bf16 %v2893, %v2893
    %v2926 = vpack.c.bf16 %v2894, %v2894
    %v2927 = vpack.c.bf16 %v2895, %v2895
    %v2928 = vpack.c.bf16 %v2896, %v2896
    %v2929 = vpack.c.bf16 %v2897, %v2897
    %v2930 = vpack.c.bf16 %v2898, %v2898
    %v2931 = vpack.c.bf16 %v2899, %v2899
    %v2932 = vpack.c.bf16 %v2900, %v2900
    %v2933 = vpack.c.bf16 %v2901, %v2901
    %v2934 = vpack.c.bf16 %v2902, %v2902
    %v2935 = vpack.c.bf16 %v2903, %v2903
    %v2936 = vpack.c.bf16 %v2904, %v2904
    %v2937 = vpack.c.bf16 %v2905, %v2905
    %v2938 = vpack.c.bf16 %v2906, %v2906
    %v2939 = vpack.c.bf16 %v2907, %v2907
    %v2940 = vpack.c.bf16 %v2908, %v2908
    %v2941 = vpack.c.bf16 %v2909, %v2909
    %v2942 = vpack.c.bf16 %v2910, %v2910
    %v2943 = vpack.c.bf16 %v2911, %v2911
    %v2944 = vpack.c.bf16 %v2912, %v2912
    %v2945 = vpack.c.bf16 %v2913, %v2913
    %v2946 = vpack.c.bf16 %v2914, %v2914
    %v2947 = vpack.c.bf16 %v2915, %v2915
    %v2948 = vpack.c.bf16 %v2916, %v2916
    %v2949 = vpack.c.bf16 %v2917, %v2917
    %v2950 = vpack.c.bf16 %v2918, %v2918
    %v2951 = vpack.c.bf16 %v2919, %v2919
    %v2952 = vpack.c.bf16 %v2920, %v2920
    %v2953 = vpack.c.bf16 %v2921, %v2921
    %v2954 = vpack.c.bf16 %v1060, %v1060
    %v2955 = vpack.c.bf16 %v1063, %v1063
    %v2956 = vpack.c.bf16 %v1068, %v1068
    %v2957 = vpack.c.bf16 %v1071, %v1071
    %v2958 = vpack.c.bf16 %v1076, %v1076
    %v2959 = vpack.c.bf16 %v1079, %v1079
    %v2960 = vpack.c.bf16 %v1084, %v1084
    %v2961 = vpack.c.bf16 %v1087, %v1087
    %v2962 = vpack.c.bf16 %v1092, %v1092
    %v2963 = vpack.c.bf16 %v1095, %v1095
    %v2964 = vpack.c.bf16 %v1100, %v1100
    %v2965 = vpack.c.bf16 %v1103, %v1103
    %v2966 = vpack.c.bf16 %v1108, %v1108
    %v2967 = vpack.c.bf16 %v1111, %v1111
    %v2968 = vpack.c.bf16 %v1116, %v1116
    %v2969 = vpack.c.bf16 %v1119, %v1119
    %v2970 = vpack.c.bf16 %v1124, %v1124
    %v2971 = vpack.c.bf16 %v1127, %v1127
    %v2972 = vpack.c.bf16 %v1132, %v1132
    %v2973 = vpack.c.bf16 %v1135, %v1135
    %v2974 = vpack.c.bf16 %v1140, %v1140
    %v2975 = vpack.c.bf16 %v1143, %v1143
    %v2976 = vpack.c.bf16 %v1148, %v1148
    %v2977 = vpack.c.bf16 %v1151, %v1151
    %v2978 = vpack.c.bf16 %v1156, %v1156
    %v2979 = vpack.c.bf16 %v1159, %v1159
    %v2980 = vpack.c.bf16 %v1164, %v1164
    %v2981 = vpack.c.bf16 %v1167, %v1167
    %v2982 = vpack.c.bf16 %v1172, %v1172
    %v2983 = vpack.c.bf16 %v1175, %v1175
    %v2984 = vpack.c.bf16 %v1180, %v1180
    %v2985 = vpack.c.bf16 %v1183, %v1183
    %v2987 = vsel %vm2569, %v2922, 0
    %vm2989 = vcmask 1043456
    %v2991 = vsel %vm2989, %v2954, 0
    %2993 = vmatprep.subr.bf16.mxu0 0
    %2994 = vmatpush1.bf16.msra.mxu0 %v2991
    %2995 = vmatprep.subr.bf16.mxu0 0
    %2996 = vmatpush1.bf16.msra.mxu0 0
    %2997 = vmatprep.subr.bf16.mxu0 0
    %2998 = vmatpush1.bf16.msra.mxu0 0
    %2999 = vmatprep.subr.bf16.mxu0 0
    %3000 = vmatpush1.bf16.msra.mxu0 0
    %3001 = vmatprep.subr.bf16.mxu0 0
    %3002 = vmatpush1.bf16.msra.mxu0 0
    %3003 = vmatprep.subr.bf16.mxu0 0
    %3004 = vmatpush1.bf16.msra.mxu0 0
    %3005 = vmatprep.subr.bf16.mxu0 0
    %3006 = vmatpush1.bf16.msra.mxu0 0
    %3007 = vmatprep.subr.bf16.mxu0 0
    %3008 = vmatpush1.bf16.msra.mxu0 0
    %3009 = vmatprep.subr.bf16.mxu0 0
    %3010 = vmatpush1.bf16.msra.mxu0 0
    %3011 = vmatprep.subr.bf16.mxu0 0
    %3012 = vmatpush1.bf16.msra.mxu0 0
    %3013 = vmatprep.subr.bf16.mxu0 0
    %3014 = vmatpush1.bf16.msra.mxu0 0
    %3015 = vmatprep.subr.bf16.mxu0 0
    %3016 = vmatpush1.bf16.msra.mxu0 0
    %3017 = vmatprep.subr.bf16.mxu0 0
    %3018 = vmatpush1.bf16.msra.mxu0 0
    %3019 = vmatprep.subr.bf16.mxu0 0
    %3020 = vmatpush1.bf16.msra.mxu0 0
    %3021 = vmatprep.subr.bf16.mxu0 0
    %3022 = vmatpush1.bf16.msra.mxu0 0
    %3023 = vmatprep.subr.bf16.mxu0 0
    %3024 = vmatpush1.bf16.msra.mxu0 0
    %3025 = vmatprep.mubr.bf16.mxu0 0
    %3026 = vmatmul.mubr.bf16.gmra.mrb[0].mxu0 %v2987
    %v3027 = vpop.f32.mrb[0].mxu0
    %v3028 = vadd.f32 0.0, %v3027
    %v3029 = vpop.f32.mrb[0].mxu0
    %v3030 = vpop.f32.mrb[0].mxu0
    %v3031 = vpop.f32.mrb[0].mxu0
    %3032 = vdwg.mxu0
    %v3034 = vsel %vm2569, %v2923, 0
    %v3037 = vsel %vm2989, %v2955, 0
    %3039 = vmatprep.subr.bf16.mxu0 0
    %3040 = vmatpush1.bf16.msra.mxu0 %v3037
    %3041 = vmatprep.subr.bf16.mxu0 0
    %3042 = vmatpush1.bf16.msra.mxu0 0
    %3043 = vmatprep.subr.bf16.mxu0 0
    %3044 = vmatpush1.bf16.msra.mxu0 0
    %3045 = vmatprep.subr.bf16.mxu0 0
    %3046 = vmatpush1.bf16.msra.mxu0 0
    %3047 = vmatprep.subr.bf16.mxu0 0
    %3048 = vmatpush1.bf16.msra.mxu0 0
    %3049 = vmatprep.subr.bf16.mxu0 0
    %3050 = vmatpush1.bf16.msra.mxu0 0
    %3051 = vmatprep.subr.bf16.mxu0 0
    %3052 = vmatpush1.bf16.msra.mxu0 0
    %3053 = vmatprep.subr.bf16.mxu0 0
    %3054 = vmatpush1.bf16.msra.mxu0 0
    %3055 = vmatprep.subr.bf16.mxu0 0
    %3056 = vmatpush1.bf16.msra.mxu0 0
    %3057 = vmatprep.subr.bf16.mxu0 0
    %3058 = vmatpush1.bf16.msra.mxu0 0
    %3059 = vmatprep.subr.bf16.mxu0 0
    %3060 = vmatpush1.bf16.msra.mxu0 0
    %3061 = vmatprep.subr.bf16.mxu0 0
    %3062 = vmatpush1.bf16.msra.mxu0 0
    %3063 = vmatprep.subr.bf16.mxu0 0
    %3064 = vmatpush1.bf16.msra.mxu0 0
    %3065 = vmatprep.subr.bf16.mxu0 0
    %3066 = vmatpush1.bf16.msra.mxu0 0
    %3067 = vmatprep.subr.bf16.mxu0 0
    %3068 = vmatpush1.bf16.msra.mxu0 0
    %3069 = vmatprep.subr.bf16.mxu0 0
    %3070 = vmatpush1.bf16.msra.mxu0 0
    %3071 = vmatprep.mubr.bf16.mxu0 0
    %3072 = vmatmul.mubr.bf16.gmra.mrb[0].mxu0 %v3034
    %v3073 = vpop.f32.mrb[0].mxu0
    %v3074 = vadd.f32 0.0, %v3073
    %v3075 = vpop.f32.mrb[0].mxu0
    %v3076 = vpop.f32.mrb[0].mxu0
    %v3077 = vpop.f32.mrb[0].mxu0
    %3078 = vdwg.mxu0
    %v3080 = vsel %vm2569, %v2924, 0
    %v3083 = vsel %vm2989, %v2956, 0
    %3085 = vmatprep.subr.bf16.mxu0 0
    %3086 = vmatpush1.bf16.msra.mxu0 %v3083
    %3087 = vmatprep.subr.bf16.mxu0 0
    %3088 = vmatpush1.bf16.msra.mxu0 0
    %3089 = vmatprep.subr.bf16.mxu0 0
    %3090 = vmatpush1.bf16.msra.mxu0 0
    %3091 = vmatprep.subr.bf16.mxu0 0
    %3092 = vmatpush1.bf16.msra.mxu0 0
    %3093 = vmatprep.subr.bf16.mxu0 0
    %3094 = vmatpush1.bf16.msra.mxu0 0
    %3095 = vmatprep.subr.bf16.mxu0 0
    %3096 = vmatpush1.bf16.msra.mxu0 0
    %3097 = vmatprep.subr.bf16.mxu0 0
    %3098 = vmatpush1.bf16.msra.mxu0 0
    %3099 = vmatprep.subr.bf16.mxu0 0
    %3100 = vmatpush1.bf16.msra.mxu0 0
    %3101 = vmatprep.subr.bf16.mxu0 0
    %3102 = vmatpush1.bf16.msra.mxu0 0
    %3103 = vmatprep.subr.bf16.mxu0 0
    %3104 = vmatpush1.bf16.msra.mxu0 0
    %3105 = vmatprep.subr.bf16.mxu0 0
    %3106 = vmatpush1.bf16.msra.mxu0 0
    %3107 = vmatprep.subr.bf16.mxu0 0
    %3108 = vmatpush1.bf16.msra.mxu0 0
    %3109 = vmatprep.subr.bf16.mxu0 0
    %3110 = vmatpush1.bf16.msra.mxu0 0
    %3111 = vmatprep.subr.bf16.mxu0 0
    %3112 = vmatpush1.bf16.msra.mxu0 0
    %3113 = vmatprep.subr.bf16.mxu0 0
    %3114 = vmatpush1.bf16.msra.mxu0 0
    %3115 = vmatprep.subr.bf16.mxu0 0
    %3116 = vmatpush1.bf16.msra.mxu0 0
    %3117 = vmatprep.mubr.bf16.mxu0 0
    %3118 = vmatmul.mubr.bf16.gmra.mrb[0].mxu0 %v3080
    %v3119 = vpop.f32.mrb[0].mxu0
    %v3120 = vadd.f32 0.0, %v3119
    %v3121 = vpop.f32.mrb[0].mxu0
    %v3122 = vpop.f32.mrb[0].mxu0
    %v3123 = vpop.f32.mrb[0].mxu0
    %3124 = vdwg.mxu0
    %v3126 = vsel %vm2569, %v2925, 0
    %v3129 = vsel %vm2989, %v2957, 0
    %3131 = vmatprep.subr.bf16.mxu0 0
    %3132 = vmatpush1.bf16.msra.mxu0 %v3129
    %3133 = vmatprep.subr.bf16.mxu0 0
    %3134 = vmatpush1.bf16.msra.mxu0 0
    %3135 = vmatprep.subr.bf16.mxu0 0
    %3136 = vmatpush1.bf16.msra.mxu0 0
    %3137 = vmatprep.subr.bf16.mxu0 0
    %3138 = vmatpush1.bf16.msra.mxu0 0
    %3139 = vmatprep.subr.bf16.mxu0 0
    %3140 = vmatpush1.bf16.msra.mxu0 0
    %3141 = vmatprep.subr.bf16.mxu0 0
    %3142 = vmatpush1.bf16.msra.mxu0 0
    %3143 = vmatprep.subr.bf16.mxu0 0
    %3144 = vmatpush1.bf16.msra.mxu0 0
    %3145 = vmatprep.subr.bf16.mxu0 0
    %3146 = vmatpush1.bf16.msra.mxu0 0
    %3147 = vmatprep.subr.bf16.mxu0 0
    %3148 = vmatpush1.bf16.msra.mxu0 0
    %3149 = vmatprep.subr.bf16.mxu0 0
    %3150 = vmatpush1.bf16.msra.mxu0 0
    %3151 = vmatprep.subr.bf16.mxu0 0
    %3152 = vmatpush1.bf16.msra.mxu0 0
    %3153 = vmatprep.subr.bf16.mxu0 0
    %3154 = vmatpush1.bf16.msra.mxu0 0
    %3155 = vmatprep.subr.bf16.mxu0 0
    %3156 = vmatpush1.bf16.msra.mxu0 0
    %3157 = vmatprep.subr.bf16.mxu0 0
    %3158 = vmatpush1.bf16.msra.mxu0 0
    %3159 = vmatprep.subr.bf16.mxu0 0
    %3160 = vmatpush1.bf16.msra.mxu0 0
    %3161 = vmatprep.subr.bf16.mxu0 0
    %3162 = vmatpush1.bf16.msra.mxu0 0
    %3163 = vmatprep.mubr.bf16.mxu0 0
    %3164 = vmatmul.mubr.bf16.gmra.mrb[0].mxu0 %v3126
    %v3165 = vpop.f32.mrb[0].mxu0
    %v3166 = vadd.f32 0.0, %v3165
    %v3167 = vpop.f32.mrb[0].mxu0
    %v3168 = vpop.f32.mrb[0].mxu0
    %v3169 = vpop.f32.mrb[0].mxu0
    %3170 = vdwg.mxu0
    %v3172 = vsel %vm2569, %v2926, 0
    %v3175 = vsel %vm2989, %v2958, 0
    %3177 = vmatprep.subr.bf16.mxu0 0
    %3178 = vmatpush1.bf16.msra.mxu0 %v3175
    %3179 = vmatprep.subr.bf16.mxu0 0
    %3180 = vmatpush1.bf16.msra.mxu0 0
    %3181 = vmatprep.subr.bf16.mxu0 0
    %3182 = vmatpush1.bf16.msra.mxu0 0
    %3183 = vmatprep.subr.bf16.mxu0 0
    %3184 = vmatpush1.bf16.msra.mxu0 0
    %3185 = vmatprep.subr.bf16.mxu0 0
    %3186 = vmatpush1.bf16.msra.mxu0 0
    %3187 = vmatprep.subr.bf16.mxu0 0
    %3188 = vmatpush1.bf16.msra.mxu0 0
    %3189 = vmatprep.subr.bf16.mxu0 0
    %3190 = vmatpush1.bf16.msra.mxu0 0
    %3191 = vmatprep.subr.bf16.mxu0 0
    %3192 = vmatpush1.bf16.msra.mxu0 0
    %3193 = vmatprep.subr.bf16.mxu0 0
    %3194 = vmatpush1.bf16.msra.mxu0 0
    %3195 = vmatprep.subr.bf16.mxu0 0
    %3196 = vmatpush1.bf16.msra.mxu0 0
    %3197 = vmatprep.subr.bf16.mxu0 0
    %3198 = vmatpush1.bf16.msra.mxu0 0
    %3199 = vmatprep.subr.bf16.mxu0 0
    %3200 = vmatpush1.bf16.msra.mxu0 0
    %3201 = vmatprep.subr.bf16.mxu0 0
    %3202 = vmatpush1.bf16.msra.mxu0 0
    %3203 = vmatprep.subr.bf16.mxu0 0
    %3204 = vmatpush1.bf16.msra.mxu0 0
    %3205 = vmatprep.subr.bf16.mxu0 0
    %3206 = vmatpush1.bf16.msra.mxu0 0
    %3207 = vmatprep.subr.bf16.mxu0 0
    %3208 = vmatpush1.bf16.msra.mxu0 0
    %3209 = vmatprep.mubr.bf16.mxu0 0
    %3210 = vmatmul.mubr.bf16.gmra.mrb[0].mxu0 %v3172
    %v3211 = vpop.f32.mrb[0].mxu0
    %v3212 = vadd.f32 0.0, %v3211
    %v3213 = vpop.f32.mrb[0].mxu0
    %v3214 = vpop.f32.mrb[0].mxu0
    %v3215 = vpop.f32.mrb[0].mxu0
    %3216 = vdwg.mxu0
    %v3218 = vsel %vm2569, %v2927, 0
    %v3221 = vsel %vm2989, %v2959, 0
    %3223 = vmatprep.subr.bf16.mxu0 0
    %3224 = vmatpush1.bf16.msra.mxu0 %v3221
    %3225 = vmatprep.subr.bf16.mxu0 0
    %3226 = vmatpush1.bf16.msra.mxu0 0
    %3227 = vmatprep.subr.bf16.mxu0 0
    %3228 = vmatpush1.bf16.msra.mxu0 0
    %3229 = vmatprep.subr.bf16.mxu0 0
    %3230 = vmatpush1.bf16.msra.mxu0 0
    %3231 = vmatprep.subr.bf16.mxu0 0
    %3232 = vmatpush1.bf16.msra.mxu0 0
    %3233 = vmatprep.subr.bf16.mxu0 0
    %3234 = vmatpush1.bf16.msra.mxu0 0
    %3235 = vmatprep.subr.bf16.mxu0 0
    %3236 = vmatpush1.bf16.msra.mxu0 0
    %3237 = vmatprep.subr.bf16.mxu0 0
    %3238 = vmatpush1.bf16.msra.mxu0 0
    %3239 = vmatprep.subr.bf16.mxu0 0
    %3240 = vmatpush1.bf16.msra.mxu0 0
    %3241 = vmatprep.subr.bf16.mxu0 0
    %3242 = vmatpush1.bf16.msra.mxu0 0
    %3243 = vmatprep.subr.bf16.mxu0 0
    %3244 = vmatpush1.bf16.msra.mxu0 0
    %3245 = vmatprep.subr.bf16.mxu0 0
    %3246 = vmatpush1.bf16.msra.mxu0 0
    %3247 = vmatprep.subr.bf16.mxu0 0
    %3248 = vmatpush1.bf16.msra.mxu0 0
    %3249 = vmatprep.subr.bf16.mxu0 0
    %3250 = vmatpush1.bf16.msra.mxu0 0
    %3251 = vmatprep.subr.bf16.mxu0 0
    %3252 = vmatpush1.bf16.msra.mxu0 0
    %3253 = vmatprep.subr.bf16.mxu0 0
    %3254 = vmatpush1.bf16.msra.mxu0 0
    %3255 = vmatprep.mubr.bf16.mxu0 0
    %3256 = vmatmul.mubr.bf16.gmra.mrb[0].mxu0 %v3218
    %v3257 = vpop.f32.mrb[0].mxu0
    %v3258 = vadd.f32 0.0, %v3257
    %v3259 = vpop.f32.mrb[0].mxu0
    %v3260 = vpop.f32.mrb[0].mxu0
    %v3261 = vpop.f32.mrb[0].mxu0
    %3262 = vdwg.mxu0
    %v3264 = vsel %vm2569, %v2928, 0
    %v3267 = vsel %vm2989, %v2960, 0
    %3269 = vmatprep.subr.bf16.mxu0 0
    %3270 = vmatpush1.bf16.msra.mxu0 %v3267
    %3271 = vmatprep.subr.bf16.mxu0 0
    %3272 = vmatpush1.bf16.msra.mxu0 0
    %3273 = vmatprep.subr.bf16.mxu0 0
    %3274 = vmatpush1.bf16.msra.mxu0 0
    %3275 = vmatprep.subr.bf16.mxu0 0
    %3276 = vmatpush1.bf16.msra.mxu0 0
    %3277 = vmatprep.subr.bf16.mxu0 0
    %3278 = vmatpush1.bf16.msra.mxu0 0
    %3279 = vmatprep.subr.bf16.mxu0 0
    %3280 = vmatpush1.bf16.msra.mxu0 0
    %3281 = vmatprep.subr.bf16.mxu0 0
    %3282 = vmatpush1.bf16.msra.mxu0 0
    %3283 = vmatprep.subr.bf16.mxu0 0
    %3284 = vmatpush1.bf16.msra.mxu0 0
    %3285 = vmatprep.subr.bf16.mxu0 0
    %3286 = vmatpush1.bf16.msra.mxu0 0
    %3287 = vmatprep.subr.bf16.mxu0 0
    %3288 = vmatpush1.bf16.msra.mxu0 0
    %3289 = vmatprep.subr.bf16.mxu0 0
    %3290 = vmatpush1.bf16.msra.mxu0 0
    %3291 = vmatprep.subr.bf16.mxu0 0
    %3292 = vmatpush1.bf16.msra.mxu0 0
    %3293 = vmatprep.subr.bf16.mxu0 0
    %3294 = vmatpush1.bf16.msra.mxu0 0
    %3295 = vmatprep.subr.bf16.mxu0 0
    %3296 = vmatpush1.bf16.msra.mxu0 0
    %3297 = vmatprep.subr.bf16.mxu0 0
    %3298 = vmatpush1.bf16.msra.mxu0 0
    %3299 = vmatprep.subr.bf16.mxu0 0
    %3300 = vmatpush1.bf16.msra.mxu0 0
    %3301 = vmatprep.mubr.bf16.mxu0 0
    %3302 = vmatmul.mubr.bf16.gmra.mrb[0].mxu0 %v3264
    %v3303 = vpop.f32.mrb[0].mxu0
    %v3304 = vadd.f32 0.0, %v3303
    %v3305 = vpop.f32.mrb[0].mxu0
    %v3306 = vpop.f32.mrb[0].mxu0
    %v3307 = vpop.f32.mrb[0].mxu0
    %3308 = vdwg.mxu0
    %v3310 = vsel %vm2569, %v2929, 0
    %v3313 = vsel %vm2989, %v2961, 0
    %3315 = vmatprep.subr.bf16.mxu0 0
    %3316 = vmatpush1.bf16.msra.mxu0 %v3313
    %3317 = vmatprep.subr.bf16.mxu0 0
    %3318 = vmatpush1.bf16.msra.mxu0 0
    %3319 = vmatprep.subr.bf16.mxu0 0
    %3320 = vmatpush1.bf16.msra.mxu0 0
    %3321 = vmatprep.subr.bf16.mxu0 0
    %3322 = vmatpush1.bf16.msra.mxu0 0
    %3323 = vmatprep.subr.bf16.mxu0 0
    %3324 = vmatpush1.bf16.msra.mxu0 0
    %3325 = vmatprep.subr.bf16.mxu0 0
    %3326 = vmatpush1.bf16.msra.mxu0 0
    %3327 = vmatprep.subr.bf16.mxu0 0
    %3328 = vmatpush1.bf16.msra.mxu0 0
    %3329 = vmatprep.subr.bf16.mxu0 0
    %3330 = vmatpush1.bf16.msra.mxu0 0
    %3331 = vmatprep.subr.bf16.mxu0 0
    %3332 = vmatpush1.bf16.msra.mxu0 0
    %3333 = vmatprep.subr.bf16.mxu0 0
    %3334 = vmatpush1.bf16.msra.mxu0 0
    %3335 = vmatprep.subr.bf16.mxu0 0
    %3336 = vmatpush1.bf16.msra.mxu0 0
    %3337 = vmatprep.subr.bf16.mxu0 0
    %3338 = vmatpush1.bf16.msra.mxu0 0
    %3339 = vmatprep.subr.bf16.mxu0 0
    %3340 = vmatpush1.bf16.msra.mxu0 0
    %3341 = vmatprep.subr.bf16.mxu0 0
    %3342 = vmatpush1.bf16.msra.mxu0 0
    %3343 = vmatprep.subr.bf16.mxu0 0
    %3344 = vmatpush1.bf16.msra.mxu0 0
    %3345 = vmatprep.subr.bf16.mxu0 0
    %3346 = vmatpush1.bf16.msra.mxu0 0
    %3347 = vmatprep.mubr.bf16.mxu0 0
    %3348 = vmatmul.mubr.bf16.gmra.mrb[0].mxu0 %v3310
    %v3349 = vpop.f32.mrb[0].mxu0
    %v3350 = vadd.f32 0.0, %v3349
    %v3351 = vpop.f32.mrb[0].mxu0
    %v3352 = vpop.f32.mrb[0].mxu0
    %v3353 = vpop.f32.mrb[0].mxu0
    %3354 = vdwg.mxu0
    %v3356 = vsel %vm2569, %v2930, 0
    %v3359 = vsel %vm2989, %v2962, 0
    %3361 = vmatprep.subr.bf16.mxu0 0
    %3362 = vmatpush1.bf16.msra.mxu0 %v3359
    %3363 = vmatprep.subr.bf16.mxu0 0
    %3364 = vmatpush1.bf16.msra.mxu0 0
    %3365 = vmatprep.subr.bf16.mxu0 0
    %3366 = vmatpush1.bf16.msra.mxu0 0
    %3367 = vmatprep.subr.bf16.mxu0 0
    %3368 = vmatpush1.bf16.msra.mxu0 0
    %3369 = vmatprep.subr.bf16.mxu0 0
    %3370 = vmatpush1.bf16.msra.mxu0 0
    %3371 = vmatprep.subr.bf16.mxu0 0
    %3372 = vmatpush1.bf16.msra.mxu0 0
    %3373 = vmatprep.subr.bf16.mxu0 0
    %3374 = vmatpush1.bf16.msra.mxu0 0
    %3375 = vmatprep.subr.bf16.mxu0 0
    %3376 = vmatpush1.bf16.msra.mxu0 0
    %3377 = vmatprep.subr.bf16.mxu0 0
    %3378 = vmatpush1.bf16.msra.mxu0 0
    %3379 = vmatprep.subr.bf16.mxu0 0
    %3380 = vmatpush1.bf16.msra.mxu0 0
    %3381 = vmatprep.subr.bf16.mxu0 0
    %3382 = vmatpush1.bf16.msra.mxu0 0
    %3383 = vmatprep.subr.bf16.mxu0 0
    %3384 = vmatpush1.bf16.msra.mxu0 0
    %3385 = vmatprep.subr.bf16.mxu0 0
    %3386 = vmatpush1.bf16.msra.mxu0 0
    %3387 = vmatprep.subr.bf16.mxu0 0
    %3388 = vmatpush1.bf16.msra.mxu0 0
    %3389 = vmatprep.subr.bf16.mxu0 0
    %3390 = vmatpush1.bf16.msra.mxu0 0
    %3391 = vmatprep.subr.bf16.mxu0 0
    %3392 = vmatpush1.bf16.msra.mxu0 0
    %3393 = vmatprep.mubr.bf16.mxu0 0
    %3394 = vmatmul.mubr.bf16.gmra.mrb[0].mxu0 %v3356
    %v3395 = vpop.f32.mrb[0].mxu0
    %v3396 = vadd.f32 0.0, %v3395
    %v3397 = vpop.f32.mrb[0].mxu0
    %v3398 = vpop.f32.mrb[0].mxu0
    %v3399 = vpop.f32.mrb[0].mxu0
    %3400 = vdwg.mxu0
    %v3402 = vsel %vm2569, %v2931, 0
    %v3405 = vsel %vm2989, %v2963, 0
    %3407 = vmatprep.subr.bf16.mxu0 0
    %3408 = vmatpush1.bf16.msra.mxu0 %v3405
    %3409 = vmatprep.subr.bf16.mxu0 0
    %3410 = vmatpush1.bf16.msra.mxu0 0
    %3411 = vmatprep.subr.bf16.mxu0 0
    %3412 = vmatpush1.bf16.msra.mxu0 0
    %3413 = vmatprep.subr.bf16.mxu0 0
    %3414 = vmatpush1.bf16.msra.mxu0 0
    %3415 = vmatprep.subr.bf16.mxu0 0
    %3416 = vmatpush1.bf16.msra.mxu0 0
    %3417 = vmatprep.subr.bf16.mxu0 0
    %3418 = vmatpush1.bf16.msra.mxu0 0
    %3419 = vmatprep.subr.bf16.mxu0 0
    %3420 = vmatpush1.bf16.msra.mxu0 0
    %3421 = vmatprep.subr.bf16.mxu0 0
    %3422 = vmatpush1.bf16.msra.mxu0 0
    %3423 = vmatprep.subr.bf16.mxu0 0
    %3424 = vmatpush1.bf16.msra.mxu0 0
    %3425 = vmatprep.subr.bf16.mxu0 0
    %3426 = vmatpush1.bf16.msra.mxu0 0
    %3427 = vmatprep.subr.bf16.mxu0 0
    %3428 = vmatpush1.bf16.msra.mxu0 0
    %3429 = vmatprep.subr.bf16.mxu0 0
    %3430 = vmatpush1.bf16.msra.mxu0 0
    %3431 = vmatprep.subr.bf16.mxu0 0
    %3432 = vmatpush1.bf16.msra.mxu0 0
    %3433 = vmatprep.subr.bf16.mxu0 0
    %3434 = vmatpush1.bf16.msra.mxu0 0
    %3435 = vmatprep.subr.bf16.mxu0 0
    %3436 = vmatpush1.bf16.msra.mxu0 0
    %3437 = vmatprep.subr.bf16.mxu0 0
    %3438 = vmatpush1.bf16.msra.mxu0 0
    %3439 = vmatprep.mubr.bf16.mxu0 0
    %3440 = vmatmul.mubr.bf16.gmra.mrb[0].mxu0 %v3402
    %v3441 = vpop.f32.mrb[0].mxu0
    %v3442 = vadd.f32 0.0, %v3441
    %v3443 = vpop.f32.mrb[0].mxu0
    %v3444 = vpop.f32.mrb[0].mxu0
    %v3445 = vpop.f32.mrb[0].mxu0
    %3446 = vdwg.mxu0
    %v3448 = vsel %vm2569, %v2932, 0
    %v3451 = vsel %vm2989, %v2964, 0
    %3453 = vmatprep.subr.bf16.mxu0 0
    %3454 = vmatpush1.bf16.msra.mxu0 %v3451
    %3455 = vmatprep.subr.bf16.mxu0 0
    %3456 = vmatpush1.bf16.msra.mxu0 0
    %3457 = vmatprep.subr.bf16.mxu0 0
    %3458 = vmatpush1.bf16.msra.mxu0 0
    %3459 = vmatprep.subr.bf16.mxu0 0
    %3460 = vmatpush1.bf16.msra.mxu0 0
    %3461 = vmatprep.subr.bf16.mxu0 0
    %3462 = vmatpush1.bf16.msra.mxu0 0
    %3463 = vmatprep.subr.bf16.mxu0 0
    %3464 = vmatpush1.bf16.msra.mxu0 0
    %3465 = vmatprep.subr.bf16.mxu0 0
    %3466 = vmatpush1.bf16.msra.mxu0 0
    %3467 = vmatprep.subr.bf16.mxu0 0
    %3468 = vmatpush1.bf16.msra.mxu0 0
    %3469 = vmatprep.subr.bf16.mxu0 0
    %3470 = vmatpush1.bf16.msra.mxu0 0
    %3471 = vmatprep.subr.bf16.mxu0 0
    %3472 = vmatpush1.bf16.msra.mxu0 0
    %3473 = vmatprep.subr.bf16.mxu0 0
    %3474 = vmatpush1.bf16.msra.mxu0 0
    %3475 = vmatprep.subr.bf16.mxu0 0
    %3476 = vmatpush1.bf16.msra.mxu0 0
    %3477 = vmatprep.subr.bf16.mxu0 0
    %3478 = vmatpush1.bf16.msra.mxu0 0
    %3479 = vmatprep.subr.bf16.mxu0 0
    %3480 = vmatpush1.bf16.msra.mxu0 0
    %3481 = vmatprep.subr.bf16.mxu0 0
    %3482 = vmatpush1.bf16.msra.mxu0 0
    %3483 = vmatprep.subr.bf16.mxu0 0
    %3484 = vmatpush1.bf16.msra.mxu0 0
    %3485 = vmatprep.mubr.bf16.mxu0 0
    %3486 = vmatmul.mubr.bf16.gmra.mrb[0].mxu0 %v3448
    %v3487 = vpop.f32.mrb[0].mxu0
    %v3488 = vadd.f32 0.0, %v3487
    %v3489 = vpop.f32.mrb[0].mxu0
    %v3490 = vpop.f32.mrb[0].mxu0
    %v3491 = vpop.f32.mrb[0].mxu0
    %3492 = vdwg.mxu0
    %v3494 = vsel %vm2569, %v2933, 0
    %v3497 = vsel %vm2989, %v2965, 0
    %3499 = vmatprep.subr.bf16.mxu0 0
    %3500 = vmatpush1.bf16.msra.mxu0 %v3497
    %3501 = vmatprep.subr.bf16.mxu0 0
    %3502 = vmatpush1.bf16.msra.mxu0 0
    %3503 = vmatprep.subr.bf16.mxu0 0
    %3504 = vmatpush1.bf16.msra.mxu0 0
    %3505 = vmatprep.subr.bf16.mxu0 0
    %3506 = vmatpush1.bf16.msra.mxu0 0
    %3507 = vmatprep.subr.bf16.mxu0 0
    %3508 = vmatpush1.bf16.msra.mxu0 0
    %3509 = vmatprep.subr.bf16.mxu0 0
    %3510 = vmatpush1.bf16.msra.mxu0 0
    %3511 = vmatprep.subr.bf16.mxu0 0
    %3512 = vmatpush1.bf16.msra.mxu0 0
    %3513 = vmatprep.subr.bf16.mxu0 0
    %3514 = vmatpush1.bf16.msra.mxu0 0
    %3515 = vmatprep.subr.bf16.mxu0 0
    %3516 = vmatpush1.bf16.msra.mxu0 0
    %3517 = vmatprep.subr.bf16.mxu0 0
    %3518 = vmatpush1.bf16.msra.mxu0 0
    %3519 = vmatprep.subr.bf16.mxu0 0
    %3520 = vmatpush1.bf16.msra.mxu0 0
    %3521 = vmatprep.subr.bf16.mxu0 0
    %3522 = vmatpush1.bf16.msra.mxu0 0
    %3523 = vmatprep.subr.bf16.mxu0 0
    %3524 = vmatpush1.bf16.msra.mxu0 0
    %3525 = vmatprep.subr.bf16.mxu0 0
    %3526 = vmatpush1.bf16.msra.mxu0 0
    %3527 = vmatprep.subr.bf16.mxu0 0
    %3528 = vmatpush1.bf16.msra.mxu0 0
    %3529 = vmatprep.subr.bf16.mxu0 0
    %3530 = vmatpush1.bf16.msra.mxu0 0
    %3531 = vmatprep.mubr.bf16.mxu0 0
    %3532 = vmatmul.mubr.bf16.gmra.mrb[0].mxu0 %v3494
    %v3533 = vpop.f32.mrb[0].mxu0
    %v3534 = vadd.f32 0.0, %v3533
    %v3535 = vpop.f32.mrb[0].mxu0
    %v3536 = vpop.f32.mrb[0].mxu0
    %v3537 = vpop.f32.mrb[0].mxu0
    %3538 = vdwg.mxu0
    %v3540 = vsel %vm2569, %v2934, 0
    %v3543 = vsel %vm2989, %v2966, 0
    %3545 = vmatprep.subr.bf16.mxu0 0
    %3546 = vmatpush1.bf16.msra.mxu0 %v3543
    %3547 = vmatprep.subr.bf16.mxu0 0
    %3548 = vmatpush1.bf16.msra.mxu0 0
    %3549 = vmatprep.subr.bf16.mxu0 0
    %3550 = vmatpush1.bf16.msra.mxu0 0
    %3551 = vmatprep.subr.bf16.mxu0 0
    %3552 = vmatpush1.bf16.msra.mxu0 0
    %3553 = vmatprep.subr.bf16.mxu0 0
    %3554 = vmatpush1.bf16.msra.mxu0 0
    %3555 = vmatprep.subr.bf16.mxu0 0
    %3556 = vmatpush1.bf16.msra.mxu0 0
    %3557 = vmatprep.subr.bf16.mxu0 0
    %3558 = vmatpush1.bf16.msra.mxu0 0
    %3559 = vmatprep.subr.bf16.mxu0 0
    %3560 = vmatpush1.bf16.msra.mxu0 0
    %3561 = vmatprep.subr.bf16.mxu0 0
    %3562 = vmatpush1.bf16.msra.mxu0 0
    %3563 = vmatprep.subr.bf16.mxu0 0
    %3564 = vmatpush1.bf16.msra.mxu0 0
    %3565 = vmatprep.subr.bf16.mxu0 0
    %3566 = vmatpush1.bf16.msra.mxu0 0
    %3567 = vmatprep.subr.bf16.mxu0 0
    %3568 = vmatpush1.bf16.msra.mxu0 0
    %3569 = vmatprep.subr.bf16.mxu0 0
    %3570 = vmatpush1.bf16.msra.mxu0 0
    %3571 = vmatprep.subr.bf16.mxu0 0
    %3572 = vmatpush1.bf16.msra.mxu0 0
    %3573 = vmatprep.subr.bf16.mxu0 0
    %3574 = vmatpush1.bf16.msra.mxu0 0
    %3575 = vmatprep.subr.bf16.mxu0 0
    %3576 = vmatpush1.bf16.msra.mxu0 0
    %3577 = vmatprep.mubr.bf16.mxu0 0
    %3578 = vmatmul.mubr.bf16.gmra.mrb[0].mxu0 %v3540
    %v3579 = vpop.f32.mrb[0].mxu0
    %v3580 = vadd.f32 0.0, %v3579
    %v3581 = vpop.f32.mrb[0].mxu0
    %v3582 = vpop.f32.mrb[0].mxu0
    %v3583 = vpop.f32.mrb[0].mxu0
    %3584 = vdwg.mxu0
    %v3586 = vsel %vm2569, %v2935, 0
    %v3589 = vsel %vm2989, %v2967, 0
    %3591 = vmatprep.subr.bf16.mxu0 0
    %3592 = vmatpush1.bf16.msra.mxu0 %v3589
    %3593 = vmatprep.subr.bf16.mxu0 0
    %3594 = vmatpush1.bf16.msra.mxu0 0
    %3595 = vmatprep.subr.bf16.mxu0 0
    %3596 = vmatpush1.bf16.msra.mxu0 0
    %3597 = vmatprep.subr.bf16.mxu0 0
    %3598 = vmatpush1.bf16.msra.mxu0 0
    %3599 = vmatprep.subr.bf16.mxu0 0
    %3600 = vmatpush1.bf16.msra.mxu0 0
    %3601 = vmatprep.subr.bf16.mxu0 0
    %3602 = vmatpush1.bf16.msra.mxu0 0
    %3603 = vmatprep.subr.bf16.mxu0 0
    %3604 = vmatpush1.bf16.msra.mxu0 0
    %3605 = vmatprep.subr.bf16.mxu0 0
    %3606 = vmatpush1.bf16.msra.mxu0 0
    %3607 = vmatprep.subr.bf16.mxu0 0
    %3608 = vmatpush1.bf16.msra.mxu0 0
    %3609 = vmatprep.subr.bf16.mxu0 0
    %3610 = vmatpush1.bf16.msra.mxu0 0
    %3611 = vmatprep.subr.bf16.mxu0 0
    %3612 = vmatpush1.bf16.msra.mxu0 0
    %3613 = vmatprep.subr.bf16.mxu0 0
    %3614 = vmatpush1.bf16.msra.mxu0 0
    %3615 = vmatprep.subr.bf16.mxu0 0
    %3616 = vmatpush1.bf16.msra.mxu0 0
    %3617 = vmatprep.subr.bf16.mxu0 0
    %3618 = vmatpush1.bf16.msra.mxu0 0
    %3619 = vmatprep.subr.bf16.mxu0 0
    %3620 = vmatpush1.bf16.msra.mxu0 0
    %3621 = vmatprep.subr.bf16.mxu0 0
    %3622 = vmatpush1.bf16.msra.mxu0 0
    %3623 = vmatprep.mubr.bf16.mxu0 0
    %3624 = vmatmul.mubr.bf16.gmra.mrb[0].mxu0 %v3586
    %v3625 = vpop.f32.mrb[0].mxu0
    %v3626 = vadd.f32 0.0, %v3625
    %v3627 = vpop.f32.mrb[0].mxu0
    %v3628 = vpop.f32.mrb[0].mxu0
    %v3629 = vpop.f32.mrb[0].mxu0
    %3630 = vdwg.mxu0
    %v3632 = vsel %vm2569, %v2936, 0
    %v3635 = vsel %vm2989, %v2968, 0
    %3637 = vmatprep.subr.bf16.mxu0 0
    %3638 = vmatpush1.bf16.msra.mxu0 %v3635
    %3639 = vmatprep.subr.bf16.mxu0 0
    %3640 = vmatpush1.bf16.msra.mxu0 0
    %3641 = vmatprep.subr.bf16.mxu0 0
    %3642 = vmatpush1.bf16.msra.mxu0 0
    %3643 = vmatprep.subr.bf16.mxu0 0
    %3644 = vmatpush1.bf16.msra.mxu0 0
    %3645 = vmatprep.subr.bf16.mxu0 0
    %3646 = vmatpush1.bf16.msra.mxu0 0
    %3647 = vmatprep.subr.bf16.mxu0 0
    %3648 = vmatpush1.bf16.msra.mxu0 0
    %3649 = vmatprep.subr.bf16.mxu0 0
    %3650 = vmatpush1.bf16.msra.mxu0 0
    %3651 = vmatprep.subr.bf16.mxu0 0
    %3652 = vmatpush1.bf16.msra.mxu0 0
    %3653 = vmatprep.subr.bf16.mxu0 0
    %3654 = vmatpush1.bf16.msra.mxu0 0
    %3655 = vmatprep.subr.bf16.mxu0 0
    %3656 = vmatpush1.bf16.msra.mxu0 0
    %3657 = vmatprep.subr.bf16.mxu0 0
    %3658 = vmatpush1.bf16.msra.mxu0 0
    %3659 = vmatprep.subr.bf16.mxu0 0
    %3660 = vmatpush1.bf16.msra.mxu0 0
    %3661 = vmatprep.subr.bf16.mxu0 0
    %3662 = vmatpush1.bf16.msra.mxu0 0
    %3663 = vmatprep.subr.bf16.mxu0 0
    %3664 = vmatpush1.bf16.msra.mxu0 0
    %3665 = vmatprep.subr.bf16.mxu0 0
    %3666 = vmatpush1.bf16.msra.mxu0 0
    %3667 = vmatprep.subr.bf16.mxu0 0
    %3668 = vmatpush1.bf16.msra.mxu0 0
    %3669 = vmatprep.mubr.bf16.mxu0 0
    %3670 = vmatmul.mubr.bf16.gmra.mrb[0].mxu0 %v3632
    %v3671 = vpop.f32.mrb[0].mxu0
    %v3672 = vadd.f32 0.0, %v3671
    %v3673 = vpop.f32.mrb[0].mxu0
    %v3674 = vpop.f32.mrb[0].mxu0
    %v3675 = vpop.f32.mrb[0].mxu0
    %3676 = vdwg.mxu0
    %v3678 = vsel %vm2569, %v2937, 0
    %v3681 = vsel %vm2989, %v2969, 0
    %3683 = vmatprep.subr.bf16.mxu0 0
    %3684 = vmatpush1.bf16.msra.mxu0 %v3681
    %3685 = vmatprep.subr.bf16.mxu0 0
    %3686 = vmatpush1.bf16.msra.mxu0 0
    %3687 = vmatprep.subr.bf16.mxu0 0
    %3688 = vmatpush1.bf16.msra.mxu0 0
    %3689 = vmatprep.subr.bf16.mxu0 0
    %3690 = vmatpush1.bf16.msra.mxu0 0
    %3691 = vmatprep.subr.bf16.mxu0 0
    %3692 = vmatpush1.bf16.msra.mxu0 0
    %3693 = vmatprep.subr.bf16.mxu0 0
    %3694 = vmatpush1.bf16.msra.mxu0 0
    %3695 = vmatprep.subr.bf16.mxu0 0
    %3696 = vmatpush1.bf16.msra.mxu0 0
    %3697 = vmatprep.subr.bf16.mxu0 0
    %3698 = vmatpush1.bf16.msra.mxu0 0
    %3699 = vmatprep.subr.bf16.mxu0 0
    %3700 = vmatpush1.bf16.msra.mxu0 0
    %3701 = vmatprep.subr.bf16.mxu0 0
    %3702 = vmatpush1.bf16.msra.mxu0 0
    %3703 = vmatprep.subr.bf16.mxu0 0
    %3704 = vmatpush1.bf16.msra.mxu0 0
    %3705 = vmatprep.subr.bf16.mxu0 0
    %3706 = vmatpush1.bf16.msra.mxu0 0
    %3707 = vmatprep.subr.bf16.mxu0 0
    %3708 = vmatpush1.bf16.msra.mxu0 0
    %3709 = vmatprep.subr.bf16.mxu0 0
    %3710 = vmatpush1.bf16.msra.mxu0 0
    %3711 = vmatprep.subr.bf16.mxu0 0
    %3712 = vmatpush1.bf16.msra.mxu0 0
    %3713 = vmatprep.subr.bf16.mxu0 0
    %3714 = vmatpush1.bf16.msra.mxu0 0
    %3715 = vmatprep.mubr.bf16.mxu0 0
    %3716 = vmatmul.mubr.bf16.gmra.mrb[0].mxu0 %v3678
    %v3717 = vpop.f32.mrb[0].mxu0
    %v3718 = vadd.f32 0.0, %v3717
    %v3719 = vpop.f32.mrb[0].mxu0
    %v3720 = vpop.f32.mrb[0].mxu0
    %v3721 = vpop.f32.mrb[0].mxu0
    %3722 = vdwg.mxu0
    %v3724 = vsel %vm2569, %v2938, 0
    %v3727 = vsel %vm2989, %v2970, 0
    %3729 = vmatprep.subr.bf16.mxu0 0
    %3730 = vmatpush1.bf16.msra.mxu0 %v3727
    %3731 = vmatprep.subr.bf16.mxu0 0
    %3732 = vmatpush1.bf16.msra.mxu0 0
    %3733 = vmatprep.subr.bf16.mxu0 0
    %3734 = vmatpush1.bf16.msra.mxu0 0
    %3735 = vmatprep.subr.bf16.mxu0 0
    %3736 = vmatpush1.bf16.msra.mxu0 0
    %3737 = vmatprep.subr.bf16.mxu0 0
    %3738 = vmatpush1.bf16.msra.mxu0 0
    %3739 = vmatprep.subr.bf16.mxu0 0
    %3740 = vmatpush1.bf16.msra.mxu0 0
    %3741 = vmatprep.subr.bf16.mxu0 0
    %3742 = vmatpush1.bf16.msra.mxu0 0
    %3743 = vmatprep.subr.bf16.mxu0 0
    %3744 = vmatpush1.bf16.msra.mxu0 0
    %3745 = vmatprep.subr.bf16.mxu0 0
    %3746 = vmatpush1.bf16.msra.mxu0 0
    %3747 = vmatprep.subr.bf16.mxu0 0
    %3748 = vmatpush1.bf16.msra.mxu0 0
    %3749 = vmatprep.subr.bf16.mxu0 0
    %3750 = vmatpush1.bf16.msra.mxu0 0
    %3751 = vmatprep.subr.bf16.mxu0 0
    %3752 = vmatpush1.bf16.msra.mxu0 0
    %3753 = vmatprep.subr.bf16.mxu0 0
    %3754 = vmatpush1.bf16.msra.mxu0 0
    %3755 = vmatprep.subr.bf16.mxu0 0
    %3756 = vmatpush1.bf16.msra.mxu0 0
    %3757 = vmatprep.subr.bf16.mxu0 0
    %3758 = vmatpush1.bf16.msra.mxu0 0
    %3759 = vmatprep.subr.bf16.mxu0 0
    %3760 = vmatpush1.bf16.msra.mxu0 0
    %3761 = vmatprep.mubr.bf16.mxu0 0
    %3762 = vmatmul.mubr.bf16.gmra.mrb[0].mxu0 %v3724
    %v3763 = vpop.f32.mrb[0].mxu0
    %v3764 = vadd.f32 0.0, %v3763
    %v3765 = vpop.f32.mrb[0].mxu0
    %v3766 = vpop.f32.mrb[0].mxu0
    %v3767 = vpop.f32.mrb[0].mxu0
    %3768 = vdwg.mxu0
    %v3770 = vsel %vm2569, %v2939, 0
    %v3773 = vsel %vm2989, %v2971, 0
    %3775 = vmatprep.subr.bf16.mxu0 0
    %3776 = vmatpush1.bf16.msra.mxu0 %v3773
    %3777 = vmatprep.subr.bf16.mxu0 0
    %3778 = vmatpush1.bf16.msra.mxu0 0
    %3779 = vmatprep.subr.bf16.mxu0 0
    %3780 = vmatpush1.bf16.msra.mxu0 0
    %3781 = vmatprep.subr.bf16.mxu0 0
    %3782 = vmatpush1.bf16.msra.mxu0 0
    %3783 = vmatprep.subr.bf16.mxu0 0
    %3784 = vmatpush1.bf16.msra.mxu0 0
    %3785 = vmatprep.subr.bf16.mxu0 0
    %3786 = vmatpush1.bf16.msra.mxu0 0
    %3787 = vmatprep.subr.bf16.mxu0 0
    %3788 = vmatpush1.bf16.msra.mxu0 0
    %3789 = vmatprep.subr.bf16.mxu0 0
    %3790 = vmatpush1.bf16.msra.mxu0 0
    %3791 = vmatprep.subr.bf16.mxu0 0
    %3792 = vmatpush1.bf16.msra.mxu0 0
    %3793 = vmatprep.subr.bf16.mxu0 0
    %3794 = vmatpush1.bf16.msra.mxu0 0
    %3795 = vmatprep.subr.bf16.mxu0 0
    %3796 = vmatpush1.bf16.msra.mxu0 0
    %3797 = vmatprep.subr.bf16.mxu0 0
    %3798 = vmatpush1.bf16.msra.mxu0 0
    %3799 = vmatprep.subr.bf16.mxu0 0
    %3800 = vmatpush1.bf16.msra.mxu0 0
    %3801 = vmatprep.subr.bf16.mxu0 0
    %3802 = vmatpush1.bf16.msra.mxu0 0
    %3803 = vmatprep.subr.bf16.mxu0 0
    %3804 = vmatpush1.bf16.msra.mxu0 0
    %3805 = vmatprep.subr.bf16.mxu0 0
    %3806 = vmatpush1.bf16.msra.mxu0 0
    %3807 = vmatprep.mubr.bf16.mxu0 0
    %3808 = vmatmul.mubr.bf16.gmra.mrb[0].mxu0 %v3770
    %v3809 = vpop.f32.mrb[0].mxu0
    %v3810 = vadd.f32 0.0, %v3809
    %v3811 = vpop.f32.mrb[0].mxu0
    %v3812 = vpop.f32.mrb[0].mxu0
    %v3813 = vpop.f32.mrb[0].mxu0
    %3814 = vdwg.mxu0
    %v3816 = vsel %vm2569, %v2940, 0
    %v3819 = vsel %vm2989, %v2972, 0
    %3821 = vmatprep.subr.bf16.mxu0 0
    %3822 = vmatpush1.bf16.msra.mxu0 %v3819
    %3823 = vmatprep.subr.bf16.mxu0 0
    %3824 = vmatpush1.bf16.msra.mxu0 0
    %3825 = vmatprep.subr.bf16.mxu0 0
    %3826 = vmatpush1.bf16.msra.mxu0 0
    %3827 = vmatprep.subr.bf16.mxu0 0
    %3828 = vmatpush1.bf16.msra.mxu0 0
    %3829 = vmatprep.subr.bf16.mxu0 0
    %3830 = vmatpush1.bf16.msra.mxu0 0
    %3831 = vmatprep.subr.bf16.mxu0 0
    %3832 = vmatpush1.bf16.msra.mxu0 0
    %3833 = vmatprep.subr.bf16.mxu0 0
    %3834 = vmatpush1.bf16.msra.mxu0 0
    %3835 = vmatprep.subr.bf16.mxu0 0
    %3836 = vmatpush1.bf16.msra.mxu0 0
    %3837 = vmatprep.subr.bf16.mxu0 0
    %3838 = vmatpush1.bf16.msra.mxu0 0
    %3839 = vmatprep.subr.bf16.mxu0 0
    %3840 = vmatpush1.bf16.msra.mxu0 0
    %3841 = vmatprep.subr.bf16.mxu0 0
    %3842 = vmatpush1.bf16.msra.mxu0 0
    %3843 = vmatprep.subr.bf16.mxu0 0
    %3844 = vmatpush1.bf16.msra.mxu0 0
    %3845 = vmatprep.subr.bf16.mxu0 0
    %3846 = vmatpush1.bf16.msra.mxu0 0
    %3847 = vmatprep.subr.bf16.mxu0 0
    %3848 = vmatpush1.bf16.msra.mxu0 0
    %3849 = vmatprep.subr.bf16.mxu0 0
    %3850 = vmatpush1.bf16.msra.mxu0 0
    %3851 = vmatprep.subr.bf16.mxu0 0
    %3852 = vmatpush1.bf16.msra.mxu0 0
    %3853 = vmatprep.mubr.bf16.mxu0 0
    %3854 = vmatmul.mubr.bf16.gmra.mrb[0].mxu0 %v3816
    %v3855 = vpop.f32.mrb[0].mxu0
    %v3856 = vadd.f32 0.0, %v3855
    %v3857 = vpop.f32.mrb[0].mxu0
    %v3858 = vpop.f32.mrb[0].mxu0
    %v3859 = vpop.f32.mrb[0].mxu0
    %3860 = vdwg.mxu0
    %v3862 = vsel %vm2569, %v2941, 0
    %v3865 = vsel %vm2989, %v2973, 0
    %3867 = vmatprep.subr.bf16.mxu0 0
    %3868 = vmatpush1.bf16.msra.mxu0 %v3865
    %3869 = vmatprep.subr.bf16.mxu0 0
    %3870 = vmatpush1.bf16.msra.mxu0 0
    %3871 = vmatprep.subr.bf16.mxu0 0
    %3872 = vmatpush1.bf16.msra.mxu0 0
    %3873 = vmatprep.subr.bf16.mxu0 0
    %3874 = vmatpush1.bf16.msra.mxu0 0
    %3875 = vmatprep.subr.bf16.mxu0 0
    %3876 = vmatpush1.bf16.msra.mxu0 0
    %3877 = vmatprep.subr.bf16.mxu0 0
    %3878 = vmatpush1.bf16.msra.mxu0 0
    %3879 = vmatprep.subr.bf16.mxu0 0
    %3880 = vmatpush1.bf16.msra.mxu0 0
    %3881 = vmatprep.subr.bf16.mxu0 0
    %3882 = vmatpush1.bf16.msra.mxu0 0
    %3883 = vmatprep.subr.bf16.mxu0 0
    %3884 = vmatpush1.bf16.msra.mxu0 0
    %3885 = vmatprep.subr.bf16.mxu0 0
    %3886 = vmatpush1.bf16.msra.mxu0 0
    %3887 = vmatprep.subr.bf16.mxu0 0
    %3888 = vmatpush1.bf16.msra.mxu0 0
    %3889 = vmatprep.subr.bf16.mxu0 0
    %3890 = vmatpush1.bf16.msra.mxu0 0
    %3891 = vmatprep.subr.bf16.mxu0 0
    %3892 = vmatpush1.bf16.msra.mxu0 0
    %3893 = vmatprep.subr.bf16.mxu0 0
    %3894 = vmatpush1.bf16.msra.mxu0 0
    %3895 = vmatprep.subr.bf16.mxu0 0
    %3896 = vmatpush1.bf16.msra.mxu0 0
    %3897 = vmatprep.subr.bf16.mxu0 0
    %3898 = vmatpush1.bf16.msra.mxu0 0
    %3899 = vmatprep.mubr.bf16.mxu0 0
    %3900 = vmatmul.mubr.bf16.gmra.mrb[0].mxu0 %v3862
    %v3901 = vpop.f32.mrb[0].mxu0
    %v3902 = vadd.f32 0.0, %v3901
    %v3903 = vpop.f32.mrb[0].mxu0
    %v3904 = vpop.f32.mrb[0].mxu0
    %v3905 = vpop.f32.mrb[0].mxu0
    %3906 = vdwg.mxu0
    %v3908 = vsel %vm2569, %v2942, 0
    %v3911 = vsel %vm2989, %v2974, 0
    %3913 = vmatprep.subr.bf16.mxu0 0
    %3914 = vmatpush1.bf16.msra.mxu0 %v3911
    %3915 = vmatprep.subr.bf16.mxu0 0
    %3916 = vmatpush1.bf16.msra.mxu0 0
    %3917 = vmatprep.subr.bf16.mxu0 0
    %3918 = vmatpush1.bf16.msra.mxu0 0
    %3919 = vmatprep.subr.bf16.mxu0 0
    %3920 = vmatpush1.bf16.msra.mxu0 0
    %3921 = vmatprep.subr.bf16.mxu0 0
    %3922 = vmatpush1.bf16.msra.mxu0 0
    %3923 = vmatprep.subr.bf16.mxu0 0
    %3924 = vmatpush1.bf16.msra.mxu0 0
    %3925 = vmatprep.subr.bf16.mxu0 0
    %3926 = vmatpush1.bf16.msra.mxu0 0
    %3927 = vmatprep.subr.bf16.mxu0 0
    %3928 = vmatpush1.bf16.msra.mxu0 0
    %3929 = vmatprep.subr.bf16.mxu0 0
    %3930 = vmatpush1.bf16.msra.mxu0 0
    %3931 = vmatprep.subr.bf16.mxu0 0
    %3932 = vmatpush1.bf16.msra.mxu0 0
    %3933 = vmatprep.subr.bf16.mxu0 0
    %3934 = vmatpush1.bf16.msra.mxu0 0
    %3935 = vmatprep.subr.bf16.mxu0 0
    %3936 = vmatpush1.bf16.msra.mxu0 0
    %3937 = vmatprep.subr.bf16.mxu0 0
    %3938 = vmatpush1.bf16.msra.mxu0 0
    %3939 = vmatprep.subr.bf16.mxu0 0
    %3940 = vmatpush1.bf16.msra.mxu0 0
    %3941 = vmatprep.subr.bf16.mxu0 0
    %3942 = vmatpush1.bf16.msra.mxu0 0
    %3943 = vmatprep.subr.bf16.mxu0 0
    %3944 = vmatpush1.bf16.msra.mxu0 0
    %3945 = vmatprep.mubr.bf16.mxu0 0
    %3946 = vmatmul.mubr.bf16.gmra.mrb[0].mxu0 %v3908
    %v3947 = vpop.f32.mrb[0].mxu0
    %v3948 = vadd.f32 0.0, %v3947
    %v3949 = vpop.f32.mrb[0].mxu0
    %v3950 = vpop.f32.mrb[0].mxu0
    %v3951 = vpop.f32.mrb[0].mxu0
    %3952 = vdwg.mxu0
    %v3954 = vsel %vm2569, %v2943, 0
    %v3957 = vsel %vm2989, %v2975, 0
    %3959 = vmatprep.subr.bf16.mxu0 0
    %3960 = vmatpush1.bf16.msra.mxu0 %v3957
    %3961 = vmatprep.subr.bf16.mxu0 0
    %3962 = vmatpush1.bf16.msra.mxu0 0
    %3963 = vmatprep.subr.bf16.mxu0 0
    %3964 = vmatpush1.bf16.msra.mxu0 0
    %3965 = vmatprep.subr.bf16.mxu0 0
    %3966 = vmatpush1.bf16.msra.mxu0 0
    %3967 = vmatprep.subr.bf16.mxu0 0
    %3968 = vmatpush1.bf16.msra.mxu0 0
    %3969 = vmatprep.subr.bf16.mxu0 0
    %3970 = vmatpush1.bf16.msra.mxu0 0
    %3971 = vmatprep.subr.bf16.mxu0 0
    %3972 = vmatpush1.bf16.msra.mxu0 0
    %3973 = vmatprep.subr.bf16.mxu0 0
    %3974 = vmatpush1.bf16.msra.mxu0 0
    %3975 = vmatprep.subr.bf16.mxu0 0
    %3976 = vmatpush1.bf16.msra.mxu0 0
    %3977 = vmatprep.subr.bf16.mxu0 0
    %3978 = vmatpush1.bf16.msra.mxu0 0
    %3979 = vmatprep.subr.bf16.mxu0 0
    %3980 = vmatpush1.bf16.msra.mxu0 0
    %3981 = vmatprep.subr.bf16.mxu0 0
    %3982 = vmatpush1.bf16.msra.mxu0 0
    %3983 = vmatprep.subr.bf16.mxu0 0
    %3984 = vmatpush1.bf16.msra.mxu0 0
    %3985 = vmatprep.subr.bf16.mxu0 0
    %3986 = vmatpush1.bf16.msra.mxu0 0
    %3987 = vmatprep.subr.bf16.mxu0 0
    %3988 = vmatpush1.bf16.msra.mxu0 0
    %3989 = vmatprep.subr.bf16.mxu0 0
    %3990 = vmatpush1.bf16.msra.mxu0 0
    %3991 = vmatprep.mubr.bf16.mxu0 0
    %3992 = vmatmul.mubr.bf16.gmra.mrb[0].mxu0 %v3954
    %v3993 = vpop.f32.mrb[0].mxu0
    %v3994 = vadd.f32 0.0, %v3993
    %v3995 = vpop.f32.mrb[0].mxu0
    %v3996 = vpop.f32.mrb[0].mxu0
    %v3997 = vpop.f32.mrb[0].mxu0
    %3998 = vdwg.mxu0
    %v4000 = vsel %vm2569, %v2944, 0
    %v4003 = vsel %vm2989, %v2976, 0
    %4005 = vmatprep.subr.bf16.mxu0 0
    %4006 = vmatpush1.bf16.msra.mxu0 %v4003
    %4007 = vmatprep.subr.bf16.mxu0 0
    %4008 = vmatpush1.bf16.msra.mxu0 0
    %4009 = vmatprep.subr.bf16.mxu0 0
    %4010 = vmatpush1.bf16.msra.mxu0 0
    %4011 = vmatprep.subr.bf16.mxu0 0
    %4012 = vmatpush1.bf16.msra.mxu0 0
    %4013 = vmatprep.subr.bf16.mxu0 0
    %4014 = vmatpush1.bf16.msra.mxu0 0
    %4015 = vmatprep.subr.bf16.mxu0 0
    %4016 = vmatpush1.bf16.msra.mxu0 0
    %4017 = vmatprep.subr.bf16.mxu0 0
    %4018 = vmatpush1.bf16.msra.mxu0 0
    %4019 = vmatprep.subr.bf16.mxu0 0
    %4020 = vmatpush1.bf16.msra.mxu0 0
    %4021 = vmatprep.subr.bf16.mxu0 0
    %4022 = vmatpush1.bf16.msra.mxu0 0
    %4023 = vmatprep.subr.bf16.mxu0 0
    %4024 = vmatpush1.bf16.msra.mxu0 0
    %4025 = vmatprep.subr.bf16.mxu0 0
    %4026 = vmatpush1.bf16.msra.mxu0 0
    %4027 = vmatprep.subr.bf16.mxu0 0
    %4028 = vmatpush1.bf16.msra.mxu0 0
    %4029 = vmatprep.subr.bf16.mxu0 0
    %4030 = vmatpush1.bf16.msra.mxu0 0
    %4031 = vmatprep.subr.bf16.mxu0 0
    %4032 = vmatpush1.bf16.msra.mxu0 0
    %4033 = vmatprep.subr.bf16.mxu0 0
    %4034 = vmatpush1.bf16.msra.mxu0 0
    %4035 = vmatprep.subr.bf16.mxu0 0
    %4036 = vmatpush1.bf16.msra.mxu0 0
    %4037 = vmatprep.mubr.bf16.mxu0 0
    %4038 = vmatmul.mubr.bf16.gmra.mrb[0].mxu0 %v4000
    %v4039 = vpop.f32.mrb[0].mxu0
    %v4040 = vadd.f32 0.0, %v4039
    %v4041 = vpop.f32.mrb[0].mxu0
    %v4042 = vpop.f32.mrb[0].mxu0
    %v4043 = vpop.f32.mrb[0].mxu0
    %4044 = vdwg.mxu0
    %v4046 = vsel %vm2569, %v2945, 0
    %v4049 = vsel %vm2989, %v2977, 0
    %4051 = vmatprep.subr.bf16.mxu0 0
    %4052 = vmatpush1.bf16.msra.mxu0 %v4049
    %4053 = vmatprep.subr.bf16.mxu0 0
    %4054 = vmatpush1.bf16.msra.mxu0 0
    %4055 = vmatprep.subr.bf16.mxu0 0
    %4056 = vmatpush1.bf16.msra.mxu0 0
    %4057 = vmatprep.subr.bf16.mxu0 0
    %4058 = vmatpush1.bf16.msra.mxu0 0
    %4059 = vmatprep.subr.bf16.mxu0 0
    %4060 = vmatpush1.bf16.msra.mxu0 0
    %4061 = vmatprep.subr.bf16.mxu0 0
    %4062 = vmatpush1.bf16.msra.mxu0 0
    %4063 = vmatprep.subr.bf16.mxu0 0
    %4064 = vmatpush1.bf16.msra.mxu0 0
    %4065 = vmatprep.subr.bf16.mxu0 0
    %4066 = vmatpush1.bf16.msra.mxu0 0
    %4067 = vmatprep.subr.bf16.mxu0 0
    %4068 = vmatpush1.bf16.msra.mxu0 0
    %4069 = vmatprep.subr.bf16.mxu0 0
    %4070 = vmatpush1.bf16.msra.mxu0 0
    %4071 = vmatprep.subr.bf16.mxu0 0
    %4072 = vmatpush1.bf16.msra.mxu0 0
    %4073 = vmatprep.subr.bf16.mxu0 0
    %4074 = vmatpush1.bf16.msra.mxu0 0
    %4075 = vmatprep.subr.bf16.mxu0 0
    %4076 = vmatpush1.bf16.msra.mxu0 0
    %4077 = vmatprep.subr.bf16.mxu0 0
    %4078 = vmatpush1.bf16.msra.mxu0 0
    %4079 = vmatprep.subr.bf16.mxu0 0
    %4080 = vmatpush1.bf16.msra.mxu0 0
    %4081 = vmatprep.subr.bf16.mxu0 0
    %4082 = vmatpush1.bf16.msra.mxu0 0
    %4083 = vmatprep.mubr.bf16.mxu0 0
    %4084 = vmatmul.mubr.bf16.gmra.mrb[0].mxu0 %v4046
    %v4085 = vpop.f32.mrb[0].mxu0
    %v4086 = vadd.f32 0.0, %v4085
    %v4087 = vpop.f32.mrb[0].mxu0
    %v4088 = vpop.f32.mrb[0].mxu0
    %v4089 = vpop.f32.mrb[0].mxu0
    %4090 = vdwg.mxu0
    %v4092 = vsel %vm2569, %v2946, 0
    %v4095 = vsel %vm2989, %v2978, 0
    %4097 = vmatprep.subr.bf16.mxu0 0
    %4098 = vmatpush1.bf16.msra.mxu0 %v4095
    %4099 = vmatprep.subr.bf16.mxu0 0
    %4100 = vmatpush1.bf16.msra.mxu0 0
    %4101 = vmatprep.subr.bf16.mxu0 0
    %4102 = vmatpush1.bf16.msra.mxu0 0
    %4103 = vmatprep.subr.bf16.mxu0 0
    %4104 = vmatpush1.bf16.msra.mxu0 0
    %4105 = vmatprep.subr.bf16.mxu0 0
    %4106 = vmatpush1.bf16.msra.mxu0 0
    %4107 = vmatprep.subr.bf16.mxu0 0
    %4108 = vmatpush1.bf16.msra.mxu0 0
    %4109 = vmatprep.subr.bf16.mxu0 0
    %4110 = vmatpush1.bf16.msra.mxu0 0
    %4111 = vmatprep.subr.bf16.mxu0 0
    %4112 = vmatpush1.bf16.msra.mxu0 0
    %4113 = vmatprep.subr.bf16.mxu0 0
    %4114 = vmatpush1.bf16.msra.mxu0 0
    %4115 = vmatprep.subr.bf16.mxu0 0
    %4116 = vmatpush1.bf16.msra.mxu0 0
    %4117 = vmatprep.subr.bf16.mxu0 0
    %4118 = vmatpush1.bf16.msra.mxu0 0
    %4119 = vmatprep.subr.bf16.mxu0 0
    %4120 = vmatpush1.bf16.msra.mxu0 0
    %4121 = vmatprep.subr.bf16.mxu0 0
    %4122 = vmatpush1.bf16.msra.mxu0 0
    %4123 = vmatprep.subr.bf16.mxu0 0
    %4124 = vmatpush1.bf16.msra.mxu0 0
    %4125 = vmatprep.subr.bf16.mxu0 0
    %4126 = vmatpush1.bf16.msra.mxu0 0
    %4127 = vmatprep.subr.bf16.mxu0 0
    %4128 = vmatpush1.bf16.msra.mxu0 0
    %4129 = vmatprep.mubr.bf16.mxu0 0
    %4130 = vmatmul.mubr.bf16.gmra.mrb[0].mxu0 %v4092
    %v4131 = vpop.f32.mrb[0].mxu0
    %v4132 = vadd.f32 0.0, %v4131
    %v4133 = vpop.f32.mrb[0].mxu0
    %v4134 = vpop.f32.mrb[0].mxu0
    %v4135 = vpop.f32.mrb[0].mxu0
    %4136 = vdwg.mxu0
    %v4138 = vsel %vm2569, %v2947, 0
    %v4141 = vsel %vm2989, %v2979, 0
    %4143 = vmatprep.subr.bf16.mxu0 0
    %4144 = vmatpush1.bf16.msra.mxu0 %v4141
    %4145 = vmatprep.subr.bf16.mxu0 0
    %4146 = vmatpush1.bf16.msra.mxu0 0
    %4147 = vmatprep.subr.bf16.mxu0 0
    %4148 = vmatpush1.bf16.msra.mxu0 0
    %4149 = vmatprep.subr.bf16.mxu0 0
    %4150 = vmatpush1.bf16.msra.mxu0 0
    %4151 = vmatprep.subr.bf16.mxu0 0
    %4152 = vmatpush1.bf16.msra.mxu0 0
    %4153 = vmatprep.subr.bf16.mxu0 0
    %4154 = vmatpush1.bf16.msra.mxu0 0
    %4155 = vmatprep.subr.bf16.mxu0 0
    %4156 = vmatpush1.bf16.msra.mxu0 0
    %4157 = vmatprep.subr.bf16.mxu0 0
    %4158 = vmatpush1.bf16.msra.mxu0 0
    %4159 = vmatprep.subr.bf16.mxu0 0
    %4160 = vmatpush1.bf16.msra.mxu0 0
    %4161 = vmatprep.subr.bf16.mxu0 0
    %4162 = vmatpush1.bf16.msra.mxu0 0
    %4163 = vmatprep.subr.bf16.mxu0 0
    %4164 = vmatpush1.bf16.msra.mxu0 0
    %4165 = vmatprep.subr.bf16.mxu0 0
    %4166 = vmatpush1.bf16.msra.mxu0 0
    %4167 = vmatprep.subr.bf16.mxu0 0
    %4168 = vmatpush1.bf16.msra.mxu0 0
    %4169 = vmatprep.subr.bf16.mxu0 0
    %4170 = vmatpush1.bf16.msra.mxu0 0
    %4171 = vmatprep.subr.bf16.mxu0 0
    %4172 = vmatpush1.bf16.msra.mxu0 0
    %4173 = vmatprep.subr.bf16.mxu0 0
    %4174 = vmatpush1.bf16.msra.mxu0 0
    %4175 = vmatprep.mubr.bf16.mxu0 0
    %4176 = vmatmul.mubr.bf16.gmra.mrb[0].mxu0 %v4138
    %v4177 = vpop.f32.mrb[0].mxu0
    %v4178 = vadd.f32 0.0, %v4177
    %v4179 = vpop.f32.mrb[0].mxu0
    %v4180 = vpop.f32.mrb[0].mxu0
    %v4181 = vpop.f32.mrb[0].mxu0
    %4182 = vdwg.mxu0
    %v4184 = vsel %vm2569, %v2948, 0
    %v4187 = vsel %vm2989, %v2980, 0
    %4189 = vmatprep.subr.bf16.mxu0 0
    %4190 = vmatpush1.bf16.msra.mxu0 %v4187
    %4191 = vmatprep.subr.bf16.mxu0 0
    %4192 = vmatpush1.bf16.msra.mxu0 0
    %4193 = vmatprep.subr.bf16.mxu0 0
    %4194 = vmatpush1.bf16.msra.mxu0 0
    %4195 = vmatprep.subr.bf16.mxu0 0
    %4196 = vmatpush1.bf16.msra.mxu0 0
    %4197 = vmatprep.subr.bf16.mxu0 0
    %4198 = vmatpush1.bf16.msra.mxu0 0
    %4199 = vmatprep.subr.bf16.mxu0 0
    %4200 = vmatpush1.bf16.msra.mxu0 0
    %4201 = vmatprep.subr.bf16.mxu0 0
    %4202 = vmatpush1.bf16.msra.mxu0 0
    %4203 = vmatprep.subr.bf16.mxu0 0
    %4204 = vmatpush1.bf16.msra.mxu0 0
    %4205 = vmatprep.subr.bf16.mxu0 0
    %4206 = vmatpush1.bf16.msra.mxu0 0
    %4207 = vmatprep.subr.bf16.mxu0 0
    %4208 = vmatpush1.bf16.msra.mxu0 0
    %4209 = vmatprep.subr.bf16.mxu0 0
    %4210 = vmatpush1.bf16.msra.mxu0 0
    %4211 = vmatprep.subr.bf16.mxu0 0
    %4212 = vmatpush1.bf16.msra.mxu0 0
    %4213 = vmatprep.subr.bf16.mxu0 0
    %4214 = vmatpush1.bf16.msra.mxu0 0
    %4215 = vmatprep.subr.bf16.mxu0 0
    %4216 = vmatpush1.bf16.msra.mxu0 0
    %4217 = vmatprep.subr.bf16.mxu0 0
    %4218 = vmatpush1.bf16.msra.mxu0 0
    %4219 = vmatprep.subr.bf16.mxu0 0
    %4220 = vmatpush1.bf16.msra.mxu0 0
    %4221 = vmatprep.mubr.bf16.mxu0 0
    %4222 = vmatmul.mubr.bf16.gmra.mrb[0].mxu0 %v4184
    %v4223 = vpop.f32.mrb[0].mxu0
    %v4224 = vadd.f32 0.0, %v4223
    %v4225 = vpop.f32.mrb[0].mxu0
    %v4226 = vpop.f32.mrb[0].mxu0
    %v4227 = vpop.f32.mrb[0].mxu0
    %4228 = vdwg.mxu0
    %v4230 = vsel %vm2569, %v2949, 0
    %v4233 = vsel %vm2989, %v2981, 0
    %4235 = vmatprep.subr.bf16.mxu0 0
    %4236 = vmatpush1.bf16.msra.mxu0 %v4233
    %4237 = vmatprep.subr.bf16.mxu0 0
    %4238 = vmatpush1.bf16.msra.mxu0 0
    %4239 = vmatprep.subr.bf16.mxu0 0
    %4240 = vmatpush1.bf16.msra.mxu0 0
    %4241 = vmatprep.subr.bf16.mxu0 0
    %4242 = vmatpush1.bf16.msra.mxu0 0
    %4243 = vmatprep.subr.bf16.mxu0 0
    %4244 = vmatpush1.bf16.msra.mxu0 0
    %4245 = vmatprep.subr.bf16.mxu0 0
    %4246 = vmatpush1.bf16.msra.mxu0 0
    %4247 = vmatprep.subr.bf16.mxu0 0
    %4248 = vmatpush1.bf16.msra.mxu0 0
    %4249 = vmatprep.subr.bf16.mxu0 0
    %4250 = vmatpush1.bf16.msra.mxu0 0
    %4251 = vmatprep.subr.bf16.mxu0 0
    %4252 = vmatpush1.bf16.msra.mxu0 0
    %4253 = vmatprep.subr.bf16.mxu0 0
    %4254 = vmatpush1.bf16.msra.mxu0 0
    %4255 = vmatprep.subr.bf16.mxu0 0
    %4256 = vmatpush1.bf16.msra.mxu0 0
    %4257 = vmatprep.subr.bf16.mxu0 0
    %4258 = vmatpush1.bf16.msra.mxu0 0
    %4259 = vmatprep.subr.bf16.mxu0 0
    %4260 = vmatpush1.bf16.msra.mxu0 0
    %4261 = vmatprep.subr.bf16.mxu0 0
    %4262 = vmatpush1.bf16.msra.mxu0 0
    %4263 = vmatprep.subr.bf16.mxu0 0
    %4264 = vmatpush1.bf16.msra.mxu0 0
    %4265 = vmatprep.subr.bf16.mxu0 0
    %4266 = vmatpush1.bf16.msra.mxu0 0
    %4267 = vmatprep.mubr.bf16.mxu0 0
    %4268 = vmatmul.mubr.bf16.gmra.mrb[0].mxu0 %v4230
    %v4269 = vpop.f32.mrb[0].mxu0
    %v4270 = vadd.f32 0.0, %v4269
    %v4271 = vpop.f32.mrb[0].mxu0
    %v4272 = vpop.f32.mrb[0].mxu0
    %v4273 = vpop.f32.mrb[0].mxu0
    %4274 = vdwg.mxu0
    %v4276 = vsel %vm2569, %v2950, 0
    %v4279 = vsel %vm2989, %v2982, 0
    %4281 = vmatprep.subr.bf16.mxu0 0
    %4282 = vmatpush1.bf16.msra.mxu0 %v4279
    %4283 = vmatprep.subr.bf16.mxu0 0
    %4284 = vmatpush1.bf16.msra.mxu0 0
    %4285 = vmatprep.subr.bf16.mxu0 0
    %4286 = vmatpush1.bf16.msra.mxu0 0
    %4287 = vmatprep.subr.bf16.mxu0 0
    %4288 = vmatpush1.bf16.msra.mxu0 0
    %4289 = vmatprep.subr.bf16.mxu0 0
    %4290 = vmatpush1.bf16.msra.mxu0 0
    %4291 = vmatprep.subr.bf16.mxu0 0
    %4292 = vmatpush1.bf16.msra.mxu0 0
    %4293 = vmatprep.subr.bf16.mxu0 0
    %4294 = vmatpush1.bf16.msra.mxu0 0
    %4295 = vmatprep.subr.bf16.mxu0 0
    %4296 = vmatpush1.bf16.msra.mxu0 0
    %4297 = vmatprep.subr.bf16.mxu0 0
    %4298 = vmatpush1.bf16.msra.mxu0 0
    %4299 = vmatprep.subr.bf16.mxu0 0
    %4300 = vmatpush1.bf16.msra.mxu0 0
    %4301 = vmatprep.subr.bf16.mxu0 0
    %4302 = vmatpush1.bf16.msra.mxu0 0
    %4303 = vmatprep.subr.bf16.mxu0 0
    %4304 = vmatpush1.bf16.msra.mxu0 0
    %4305 = vmatprep.subr.bf16.mxu0 0
    %4306 = vmatpush1.bf16.msra.mxu0 0
    %4307 = vmatprep.subr.bf16.mxu0 0
    %4308 = vmatpush1.bf16.msra.mxu0 0
    %4309 = vmatprep.subr.bf16.mxu0 0
    %4310 = vmatpush1.bf16.msra.mxu0 0
    %4311 = vmatprep.subr.bf16.mxu0 0
    %4312 = vmatpush1.bf16.msra.mxu0 0
    %4313 = vmatprep.mubr.bf16.mxu0 0
    %4314 = vmatmul.mubr.bf16.gmra.mrb[0].mxu0 %v4276
    %v4315 = vpop.f32.mrb[0].mxu0
    %v4316 = vadd.f32 0.0, %v4315
    %v4317 = vpop.f32.mrb[0].mxu0
    %v4318 = vpop.f32.mrb[0].mxu0
    %v4319 = vpop.f32.mrb[0].mxu0
    %4320 = vdwg.mxu0
    %v4322 = vsel %vm2569, %v2951, 0
    %v4325 = vsel %vm2989, %v2983, 0
    %4327 = vmatprep.subr.bf16.mxu0 0
    %4328 = vmatpush1.bf16.msra.mxu0 %v4325
    %4329 = vmatprep.subr.bf16.mxu0 0
    %4330 = vmatpush1.bf16.msra.mxu0 0
    %4331 = vmatprep.subr.bf16.mxu0 0
    %4332 = vmatpush1.bf16.msra.mxu0 0
    %4333 = vmatprep.subr.bf16.mxu0 0
    %4334 = vmatpush1.bf16.msra.mxu0 0
    %4335 = vmatprep.subr.bf16.mxu0 0
    %4336 = vmatpush1.bf16.msra.mxu0 0
    %4337 = vmatprep.subr.bf16.mxu0 0
    %4338 = vmatpush1.bf16.msra.mxu0 0
    %4339 = vmatprep.subr.bf16.mxu0 0
    %4340 = vmatpush1.bf16.msra.mxu0 0
    %4341 = vmatprep.subr.bf16.mxu0 0
    %4342 = vmatpush1.bf16.msra.mxu0 0
    %4343 = vmatprep.subr.bf16.mxu0 0
    %4344 = vmatpush1.bf16.msra.mxu0 0
    %4345 = vmatprep.subr.bf16.mxu0 0
    %4346 = vmatpush1.bf16.msra.mxu0 0
    %4347 = vmatprep.subr.bf16.mxu0 0
    %4348 = vmatpush1.bf16.msra.mxu0 0
    %4349 = vmatprep.subr.bf16.mxu0 0
    %4350 = vmatpush1.bf16.msra.mxu0 0
    %4351 = vmatprep.subr.bf16.mxu0 0
    %4352 = vmatpush1.bf16.msra.mxu0 0
    %4353 = vmatprep.subr.bf16.mxu0 0
    %4354 = vmatpush1.bf16.msra.mxu0 0
    %4355 = vmatprep.subr.bf16.mxu0 0
    %4356 = vmatpush1.bf16.msra.mxu0 0
    %4357 = vmatprep.subr.bf16.mxu0 0
    %4358 = vmatpush1.bf16.msra.mxu0 0
    %4359 = vmatprep.mubr.bf16.mxu0 0
    %4360 = vmatmul.mubr.bf16.gmra.mrb[0].mxu0 %v4322
    %v4361 = vpop.f32.mrb[0].mxu0
    %v4362 = vadd.f32 0.0, %v4361
    %v4363 = vpop.f32.mrb[0].mxu0
    %v4364 = vpop.f32.mrb[0].mxu0
    %v4365 = vpop.f32.mrb[0].mxu0
    %4366 = vdwg.mxu0
    %v4368 = vsel %vm2569, %v2952, 0
    %v4371 = vsel %vm2989, %v2984, 0
    %4373 = vmatprep.subr.bf16.mxu0 0
    %4374 = vmatpush1.bf16.msra.mxu0 %v4371
    %4375 = vmatprep.subr.bf16.mxu0 0
    %4376 = vmatpush1.bf16.msra.mxu0 0
    %4377 = vmatprep.subr.bf16.mxu0 0
    %4378 = vmatpush1.bf16.msra.mxu0 0
    %4379 = vmatprep.subr.bf16.mxu0 0
    %4380 = vmatpush1.bf16.msra.mxu0 0
    %4381 = vmatprep.subr.bf16.mxu0 0
    %4382 = vmatpush1.bf16.msra.mxu0 0
    %4383 = vmatprep.subr.bf16.mxu0 0
    %4384 = vmatpush1.bf16.msra.mxu0 0
    %4385 = vmatprep.subr.bf16.mxu0 0
    %4386 = vmatpush1.bf16.msra.mxu0 0
    %4387 = vmatprep.subr.bf16.mxu0 0
    %4388 = vmatpush1.bf16.msra.mxu0 0
    %4389 = vmatprep.subr.bf16.mxu0 0
    %4390 = vmatpush1.bf16.msra.mxu0 0
    %4391 = vmatprep.subr.bf16.mxu0 0
    %4392 = vmatpush1.bf16.msra.mxu0 0
    %4393 = vmatprep.subr.bf16.mxu0 0
    %4394 = vmatpush1.bf16.msra.mxu0 0
    %4395 = vmatprep.subr.bf16.mxu0 0
    %4396 = vmatpush1.bf16.msra.mxu0 0
    %4397 = vmatprep.subr.bf16.mxu0 0
    %4398 = vmatpush1.bf16.msra.mxu0 0
    %4399 = vmatprep.subr.bf16.mxu0 0
    %4400 = vmatpush1.bf16.msra.mxu0 0
    %4401 = vmatprep.subr.bf16.mxu0 0
    %4402 = vmatpush1.bf16.msra.mxu0 0
    %4403 = vmatprep.subr.bf16.mxu0 0
    %4404 = vmatpush1.bf16.msra.mxu0 0
    %4405 = vmatprep.mubr.bf16.mxu0 0
    %4406 = vmatmul.mubr.bf16.gmra.mrb[0].mxu0 %v4368
    %v4407 = vpop.f32.mrb[0].mxu0
    %v4408 = vadd.f32 0.0, %v4407
    %v4409 = vpop.f32.mrb[0].mxu0
    %v4410 = vpop.f32.mrb[0].mxu0
    %v4411 = vpop.f32.mrb[0].mxu0
    %4412 = vdwg.mxu0
    %v4414 = vsel %vm2569, %v2953, 0
    %v4417 = vsel %vm2989, %v2985, 0
    %4419 = vmatprep.subr.bf16.mxu0 0
    %4420 = vmatpush1.bf16.msra.mxu0 %v4417
    %4421 = vmatprep.subr.bf16.mxu0 0
    %4422 = vmatpush1.bf16.msra.mxu0 0
    %4423 = vmatprep.subr.bf16.mxu0 0
    %4424 = vmatpush1.bf16.msra.mxu0 0
    %4425 = vmatprep.subr.bf16.mxu0 0
    %4426 = vmatpush1.bf16.msra.mxu0 0
    %4427 = vmatprep.subr.bf16.mxu0 0
    %4428 = vmatpush1.bf16.msra.mxu0 0
    %4429 = vmatprep.subr.bf16.mxu0 0
    %4430 = vmatpush1.bf16.msra.mxu0 0
    %4431 = vmatprep.subr.bf16.mxu0 0
    %4432 = vmatpush1.bf16.msra.mxu0 0
    %4433 = vmatprep.subr.bf16.mxu0 0
    %4434 = vmatpush1.bf16.msra.mxu0 0
    %4435 = vmatprep.subr.bf16.mxu0 0
    %4436 = vmatpush1.bf16.msra.mxu0 0
    %4437 = vmatprep.subr.bf16.mxu0 0
    %4438 = vmatpush1.bf16.msra.mxu0 0
    %4439 = vmatprep.subr.bf16.mxu0 0
    %4440 = vmatpush1.bf16.msra.mxu0 0
    %4441 = vmatprep.subr.bf16.mxu0 0
    %4442 = vmatpush1.bf16.msra.mxu0 0
    %4443 = vmatprep.subr.bf16.mxu0 0
    %4444 = vmatpush1.bf16.msra.mxu0 0
    %4445 = vmatprep.subr.bf16.mxu0 0
    %4446 = vmatpush1.bf16.msra.mxu0 0
    %4447 = vmatprep.subr.bf16.mxu0 0
    %4448 = vmatpush1.bf16.msra.mxu0 0
    %4449 = vmatprep.subr.bf16.mxu0 0
    %4450 = vmatpush1.bf16.msra.mxu0 0
    %4451 = vmatprep.mubr.bf16.mxu0 0
    %4452 = vmatmul.mubr.bf16.gmra.mrb[0].mxu0 %v4414
    %v4453 = vpop.f32.mrb[0].mxu0
    %v4454 = vadd.f32 0.0, %v4453
    %v4455 = vpop.f32.mrb[0].mxu0
    %v4456 = vpop.f32.mrb[0].mxu0
    %v4457 = vpop.f32.mrb[0].mxu0
    %4458 = vdwg.mxu0
    %v4459 = vpack.c.bf16 %v3074, %v3028
    %v4460 = vpack.c.bf16 %v3166, %v3120
    %v4461 = vpack.c.bf16 %v3258, %v3212
    %v4462 = vpack.c.bf16 %v3350, %v3304
    %v4463 = vpack.c.bf16 %v3442, %v3396
    %v4464 = vpack.c.bf16 %v3534, %v3488
    %v4465 = vpack.c.bf16 %v3626, %v3580
    %v4466 = vpack.c.bf16 %v3718, %v3672
    %v4467 = vpack.c.bf16 %v3810, %v3764
    %v4468 = vpack.c.bf16 %v3902, %v3856
    %v4469 = vpack.c.bf16 %v3994, %v3948
    %v4470 = vpack.c.bf16 %v4086, %v4040
    %v4471 = vpack.c.bf16 %v4178, %v4132
    %v4472 = vpack.c.bf16 %v4270, %v4224
    %v4473 = vpack.c.bf16 %v4362, %v4316
    %v4474 = vpack.c.bf16 %v4454, %v4408
    %v4475 = vld [vmem:[#allocation9] sm:$0xf]
    %v4476 = vld [vmem:[#allocation9 + $0x4] sm:$0xf]
    %v4477 = vld [vmem:[#allocation9 + $0x8] sm:$0xf]
    %v4478 = vld [vmem:[#allocation9 + $0xc] sm:$0xf]
    %v4479 = vld [vmem:[#allocation9 + $0x10] sm:$0xf]
    %v4480 = vld [vmem:[#allocation9 + $0x14] sm:$0xf]
    %v4481 = vld [vmem:[#allocation9 + $0x18] sm:$0xf]
    %v4482 = vld [vmem:[#allocation9 + $0x1c] sm:$0xf]
    %v4483 = vld [vmem:[#allocation9 + $0x20] sm:$0xf]
    %v4484 = vld [vmem:[#allocation9 + $0x24] sm:$0xf]
    %v4485 = vld [vmem:[#allocation9 + $0x28] sm:$0xf]
    %v4486 = vld [vmem:[#allocation9 + $0x2c] sm:$0xf]
    %v4487 = vld [vmem:[#allocation9 + $0x30] sm:$0xf]
    %v4488 = vld [vmem:[#allocation9 + $0x34] sm:$0xf]
    %v4489 = vld [vmem:[#allocation9 + $0x38] sm:$0xf]
    %v4490 = vld [vmem:[#allocation9 + $0x3c] sm:$0xf]
    %v4507 = vunpack.c.l.b16 %v4475
    %v4508 = vunpack.c.l.b16 %v4476
    %v4509 = vunpack.c.l.b16 %v4477
    %v4510 = vunpack.c.l.b16 %v4478
    %v4511 = vunpack.c.l.b16 %v4479
    %v4512 = vunpack.c.l.b16 %v4480
    %v4513 = vunpack.c.l.b16 %v4481
    %v4514 = vunpack.c.l.b16 %v4482
    %v4515 = vunpack.c.l.b16 %v4483
    %v4516 = vunpack.c.l.b16 %v4484
    %v4517 = vunpack.c.l.b16 %v4485
    %v4518 = vunpack.c.l.b16 %v4486
    %v4519 = vunpack.c.l.b16 %v4487
    %v4520 = vunpack.c.l.b16 %v4488
    %v4521 = vunpack.c.l.b16 %v4489
    %v4522 = vunpack.c.l.b16 %v4490
    %v4523 = vpack.c.b16 %v4508, %v4507
    %v4524 = vpack.c.b16 %v4510, %v4509
    %v4525 = vpack.c.b16 %v4512, %v4511
    %v4526 = vpack.c.b16 %v4514, %v4513
    %v4527 = vpack.c.b16 %v4516, %v4515
    %v4528 = vpack.c.b16 %v4518, %v4517
    %v4529 = vpack.c.b16 %v4520, %v4519
    %v4530 = vpack.c.b16 %v4522, %v4521
    %4539 = vmatprep.subr.bf16.mxu0 0
    %4540 = vmatpush1.bf16.msra.mxu0 %v4523
    %4541 = vmatprep.subr.bf16.mxu0 0
    %4542 = vmatpush1.bf16.msra.mxu0 %v4524
    %4543 = vmatprep.subr.bf16.mxu0 0
    %4544 = vmatpush1.bf16.msra.mxu0 %v4525
    %4545 = vmatprep.subr.bf16.mxu0 0
    %4546 = vmatpush1.bf16.msra.mxu0 %v4526
    %4547 = vmatprep.subr.bf16.mxu0 0
    %4548 = vmatpush1.bf16.msra.mxu0 %v4527
    %4549 = vmatprep.subr.bf16.mxu0 0
    %4550 = vmatpush1.bf16.msra.mxu0 %v4528
    %4551 = vmatprep.subr.bf16.mxu0 0
    %4552 = vmatpush1.bf16.msra.mxu0 %v4529
    %4553 = vmatprep.subr.bf16.mxu0 0
    %4554 = vmatpush1.bf16.msra.mxu0 %v4530
    %4555 = vmatprep.subr.bf16.mxu0 0
    %4556 = vmatpush1.bf16.msra.mxu0 0
    %4557 = vmatprep.subr.bf16.mxu0 0
    %4558 = vmatpush1.bf16.msra.mxu0 0
    %4559 = vmatprep.subr.bf16.mxu0 0
    %4560 = vmatpush1.bf16.msra.mxu0 0
    %4561 = vmatprep.subr.bf16.mxu0 0
    %4562 = vmatpush1.bf16.msra.mxu0 0
    %4563 = vmatprep.subr.bf16.mxu0 0
    %4564 = vmatpush1.bf16.msra.mxu0 0
    %4565 = vmatprep.subr.bf16.mxu0 0
    %4566 = vmatpush1.bf16.msra.mxu0 0
    %4567 = vmatprep.subr.bf16.mxu0 0
    %4568 = vmatpush1.bf16.msra.mxu0 0
    %4569 = vmatprep.subr.bf16.mxu0 0
    %4570 = vmatpush1.bf16.msra.mxu0 0
    %4571 = vmatprep.mubr.bf16.mxu0 0
    %4572 = vmatmul.mubr.bf16.gmra.mrb[0].mxu0 %v4459
    %v4573 = vpop.f32.mrb[0].mxu0
    %v4574 = vadd.f32 0.0, %v4573
    %v4575 = vpop.f32.mrb[0].mxu0
    %v4576 = vpop.f32.mrb[0].mxu0
    %v4577 = vadd.f32 0.0, %v4576
    %v4578 = vpop.f32.mrb[0].mxu0
    %4579 = vmatprep.mubr.bf16.mxu0 0
    %4580 = vmatmul.mubr.bf16.gmra.mrb[0].mxu0 %v4460
    %v4581 = vpop.f32.mrb[0].mxu0
    %v4582 = vadd.f32 0.0, %v4581
    %v4583 = vpop.f32.mrb[0].mxu0
    %v4584 = vpop.f32.mrb[0].mxu0
    %v4585 = vadd.f32 0.0, %v4584
    %v4586 = vpop.f32.mrb[0].mxu0
    %4587 = vmatprep.mubr.bf16.mxu0 0
    %4588 = vmatmul.mubr.bf16.gmra.mrb[0].mxu0 %v4461
    %v4589 = vpop.f32.mrb[0].mxu0
    %v4590 = vadd.f32 0.0, %v4589
    %v4591 = vpop.f32.mrb[0].mxu0
    %v4592 = vpop.f32.mrb[0].mxu0
    %v4593 = vadd.f32 0.0, %v4592
    %v4594 = vpop.f32.mrb[0].mxu0
    %4595 = vmatprep.mubr.bf16.mxu0 0
    %4596 = vmatmul.mubr.bf16.gmra.mrb[0].mxu0 %v4462
    %v4597 = vpop.f32.mrb[0].mxu0
    %v4598 = vadd.f32 0.0, %v4597
    %v4599 = vpop.f32.mrb[0].mxu0
    %v4600 = vpop.f32.mrb[0].mxu0
    %v4601 = vadd.f32 0.0, %v4600
    %v4602 = vpop.f32.mrb[0].mxu0
    %4603 = vmatprep.mubr.bf16.mxu0 0
    %4604 = vmatmul.mubr.bf16.gmra.mrb[0].mxu0 %v4463
    %v4605 = vpop.f32.mrb[0].mxu0
    %v4606 = vadd.f32 0.0, %v4605
    %v4607 = vpop.f32.mrb[0].mxu0
    %v4608 = vpop.f32.mrb[0].mxu0
    %v4609 = vadd.f32 0.0, %v4608
    %v4610 = vpop.f32.mrb[0].mxu0
    %4611 = vmatprep.mubr.bf16.mxu0 0
    %4612 = vmatmul.mubr.bf16.gmra.mrb[0].mxu0 %v4464
    %v4613 = vpop.f32.mrb[0].mxu0
    %v4614 = vadd.f32 0.0, %v4613
    %v4615 = vpop.f32.mrb[0].mxu0
    %v4616 = vpop.f32.mrb[0].mxu0
    %v4617 = vadd.f32 0.0, %v4616
    %v4618 = vpop.f32.mrb[0].mxu0
    %4619 = vmatprep.mubr.bf16.mxu0 0
    %4620 = vmatmul.mubr.bf16.gmra.mrb[0].mxu0 %v4465
    %v4621 = vpop.f32.mrb[0].mxu0
    %v4622 = vadd.f32 0.0, %v4621
    %v4623 = vpop.f32.mrb[0].mxu0
    %v4624 = vpop.f32.mrb[0].mxu0
    %v4625 = vadd.f32 0.0, %v4624
    %v4626 = vpop.f32.mrb[0].mxu0
    %4627 = vmatprep.mubr.bf16.mxu0 0
    %4628 = vmatmul.mubr.bf16.gmra.mrb[0].mxu0 %v4466
    %v4629 = vpop.f32.mrb[0].mxu0
    %v4630 = vadd.f32 0.0, %v4629
    %v4631 = vpop.f32.mrb[0].mxu0
    %v4632 = vpop.f32.mrb[0].mxu0
    %v4633 = vadd.f32 0.0, %v4632
    %v4634 = vpop.f32.mrb[0].mxu0
    %4635 = vmatprep.mubr.bf16.mxu0 0
    %4636 = vmatmul.mubr.bf16.gmra.mrb[0].mxu0 %v4467
    %v4637 = vpop.f32.mrb[0].mxu0
    %v4638 = vadd.f32 0.0, %v4637
    %v4639 = vpop.f32.mrb[0].mxu0
    %v4640 = vpop.f32.mrb[0].mxu0
    %v4641 = vadd.f32 0.0, %v4640
    %v4642 = vpop.f32.mrb[0].mxu0
    %4643 = vmatprep.mubr.bf16.mxu0 0
    %4644 = vmatmul.mubr.bf16.gmra.mrb[0].mxu0 %v4468
    %v4645 = vpop.f32.mrb[0].mxu0
    %v4646 = vadd.f32 0.0, %v4645
    %v4647 = vpop.f32.mrb[0].mxu0
    %v4648 = vpop.f32.mrb[0].mxu0
    %v4649 = vadd.f32 0.0, %v4648
    %v4650 = vpop.f32.mrb[0].mxu0
    %4651 = vmatprep.mubr.bf16.mxu0 0
    %4652 = vmatmul.mubr.bf16.gmra.mrb[0].mxu0 %v4469
    %v4653 = vpop.f32.mrb[0].mxu0
    %v4654 = vadd.f32 0.0, %v4653
    %v4655 = vpop.f32.mrb[0].mxu0
    %v4656 = vpop.f32.mrb[0].mxu0
    %v4657 = vadd.f32 0.0, %v4656
    %v4658 = vpop.f32.mrb[0].mxu0
    %4659 = vmatprep.mubr.bf16.mxu0 0
    %4660 = vmatmul.mubr.bf16.gmra.mrb[0].mxu0 %v4470
    %v4661 = vpop.f32.mrb[0].mxu0
    %v4662 = vadd.f32 0.0, %v4661
    %v4663 = vpop.f32.mrb[0].mxu0
    %v4664 = vpop.f32.mrb[0].mxu0
    %v4665 = vadd.f32 0.0, %v4664
    %v4666 = vpop.f32.mrb[0].mxu0
    %4667 = vmatprep.mubr.bf16.mxu0 0
    %4668 = vmatmul.mubr.bf16.gmra.mrb[0].mxu0 %v4471
    %v4669 = vpop.f32.mrb[0].mxu0
    %v4670 = vadd.f32 0.0, %v4669
    %v4671 = vpop.f32.mrb[0].mxu0
    %v4672 = vpop.f32.mrb[0].mxu0
    %v4673 = vadd.f32 0.0, %v4672
    %v4674 = vpop.f32.mrb[0].mxu0
    %4675 = vmatprep.mubr.bf16.mxu0 0
    %4676 = vmatmul.mubr.bf16.gmra.mrb[0].mxu0 %v4472
    %v4677 = vpop.f32.mrb[0].mxu0
    %v4678 = vadd.f32 0.0, %v4677
    %v4679 = vpop.f32.mrb[0].mxu0
    %v4680 = vpop.f32.mrb[0].mxu0
    %v4681 = vadd.f32 0.0, %v4680
    %v4682 = vpop.f32.mrb[0].mxu0
    %4683 = vmatprep.mubr.bf16.mxu0 0
    %4684 = vmatmul.mubr.bf16.gmra.mrb[0].mxu0 %v4473
    %v4685 = vpop.f32.mrb[0].mxu0
    %v4686 = vadd.f32 0.0, %v4685
    %v4687 = vpop.f32.mrb[0].mxu0
    %v4688 = vpop.f32.mrb[0].mxu0
    %v4689 = vadd.f32 0.0, %v4688
    %v4690 = vpop.f32.mrb[0].mxu0
    %4691 = vmatprep.mubr.bf16.mxu0 0
    %4692 = vmatmul.mubr.bf16.gmra.mrb[0].mxu0 %v4474
    %v4693 = vpop.f32.mrb[0].mxu0
    %v4694 = vadd.f32 0.0, %v4693
    %v4695 = vpop.f32.mrb[0].mxu0
    %v4696 = vpop.f32.mrb[0].mxu0
    %v4697 = vadd.f32 0.0, %v4696
    %v4698 = vpop.f32.mrb[0].mxu0
    %4699 = vdwg.mxu0
    %v4700 = vadd.f32 %v199, %v4574
    %v4701 = vadd.f32 %v200, %v4577
    %v4702 = vadd.f32 %v201, %v4582
    %v4703 = vadd.f32 %v202, %v4585
    %v4704 = vadd.f32 %v203, %v4590
    %v4705 = vadd.f32 %v204, %v4593
    %v4706 = vadd.f32 %v205, %v4598
    %v4707 = vadd.f32 %v206, %v4601
    %v4708 = vadd.f32 %v207, %v4606
    %v4709 = vadd.f32 %v208, %v4609
    %v4710 = vadd.f32 %v209, %v4614
    %v4711 = vadd.f32 %v210, %v4617
    %v4712 = vadd.f32 %v211, %v4622
    %v4713 = vadd.f32 %v212, %v4625
    %v4714 = vadd.f32 %v213, %v4630
    %v4715 = vadd.f32 %v214, %v4633
    %v4716 = vadd.f32 %v215, %v4638
    %v4717 = vadd.f32 %v216, %v4641
    %v4718 = vadd.f32 %v217, %v4646
    %v4719 = vadd.f32 %v218, %v4649
    %v4720 = vadd.f32 %v219, %v4654
    %v4721 = vadd.f32 %v220, %v4657
    %v4722 = vadd.f32 %v221, %v4662
    %v4723 = vadd.f32 %v222, %v4665
    %v4724 = vadd.f32 %v223, %v4670
    %v4725 = vadd.f32 %v224, %v4673
    %v4726 = vadd.f32 %v225, %v4678
    %v4727 = vadd.f32 %v226, %v4681
    %v4728 = vadd.f32 %v227, %v4686
    %v4729 = vadd.f32 %v228, %v4689
    %v4730 = vadd.f32 %v229, %v4694
    %v4731 = vadd.f32 %v230, %v4697
    %4732 = vadd.xlane.f32.xlu0 %v4700
    %v4733 = vpop.xlane.xlu0 %4732
    %4734 = vadd.xlane.f32.xlu0 %v4701
    %v4735 = vpop.xlane.xlu0 %4734
    %4736 = vadd.xlane.f32.xlu0 %v4702
    %v4737 = vpop.xlane.xlu0 %4736
    %4738 = vadd.xlane.f32.xlu0 %v4703
    %v4739 = vpop.xlane.xlu0 %4738
    %4740 = vadd.xlane.f32.xlu0 %v4704
    %v4741 = vpop.xlane.xlu0 %4740
    %4742 = vadd.xlane.f32.xlu0 %v4705
    %v4743 = vpop.xlane.xlu0 %4742
    %4744 = vadd.xlane.f32.xlu0 %v4706
    %v4745 = vpop.xlane.xlu0 %4744
    %4746 = vadd.xlane.f32.xlu0 %v4707
    %v4747 = vpop.xlane.xlu0 %4746
    %4748 = vadd.xlane.f32.xlu0 %v4708
    %v4749 = vpop.xlane.xlu0 %4748
    %4750 = vadd.xlane.f32.xlu0 %v4709
    %v4751 = vpop.xlane.xlu0 %4750
    %4752 = vadd.xlane.f32.xlu0 %v4710
    %v4753 = vpop.xlane.xlu0 %4752
    %4754 = vadd.xlane.f32.xlu0 %v4711
    %v4755 = vpop.xlane.xlu0 %4754
    %4756 = vadd.xlane.f32.xlu0 %v4712
    %v4757 = vpop.xlane.xlu0 %4756
    %4758 = vadd.xlane.f32.xlu0 %v4713
    %v4759 = vpop.xlane.xlu0 %4758
    %4760 = vadd.xlane.f32.xlu0 %v4714
    %v4761 = vpop.xlane.xlu0 %4760
    %4762 = vadd.xlane.f32.xlu0 %v4715
    %v4763 = vpop.xlane.xlu0 %4762
    %4764 = vadd.xlane.f32.xlu0 %v4716
    %v4765 = vpop.xlane.xlu0 %4764
    %4766 = vadd.xlane.f32.xlu0 %v4717
    %v4767 = vpop.xlane.xlu0 %4766
    %4768 = vadd.xlane.f32.xlu0 %v4718
    %v4769 = vpop.xlane.xlu0 %4768
    %4770 = vadd.xlane.f32.xlu0 %v4719
    %v4771 = vpop.xlane.xlu0 %4770
    %4772 = vadd.xlane.f32.xlu0 %v4720
    %v4773 = vpop.xlane.xlu0 %4772
    %4774 = vadd.xlane.f32.xlu0 %v4721
    %v4775 = vpop.xlane.xlu0 %4774
    %4776 = vadd.xlane.f32.xlu0 %v4722
    %v4777 = vpop.xlane.xlu0 %4776
    %4778 = vadd.xlane.f32.xlu0 %v4723
    %v4779 = vpop.xlane.xlu0 %4778
    %4780 = vadd.xlane.f32.xlu0 %v4724
    %v4781 = vpop.xlane.xlu0 %4780
    %4782 = vadd.xlane.f32.xlu0 %v4725
    %v4783 = vpop.xlane.xlu0 %4782
    %4784 = vadd.xlane.f32.xlu0 %v4726
    %v4785 = vpop.xlane.xlu0 %4784
    %4786 = vadd.xlane.f32.xlu0 %v4727
    %v4787 = vpop.xlane.xlu0 %4786
    %4788 = vadd.xlane.f32.xlu0 %v4728
    %v4789 = vpop.xlane.xlu0 %4788
    %4790 = vadd.xlane.f32.xlu0 %v4729
    %v4791 = vpop.xlane.xlu0 %4790
    %4792 = vadd.xlane.f32.xlu0 %v4730
    %v4793 = vpop.xlane.xlu0 %4792
    %4794 = vadd.xlane.f32.xlu0 %v4731
    %v4795 = vpop.xlane.xlu0 %4794
    %v4796 = vmul.f32 %v4733, %v295
    %v4797 = vmul.f32 %v4735, %v295
    %v4798 = vmul.f32 %v4737, %v295
    %v4799 = vmul.f32 %v4739, %v295
    %v4800 = vmul.f32 %v4741, %v295
    %v4801 = vmul.f32 %v4743, %v295
    %v4802 = vmul.f32 %v4745, %v295
    %v4803 = vmul.f32 %v4747, %v295
    %v4804 = vmul.f32 %v4749, %v295
    %v4805 = vmul.f32 %v4751, %v295
    %v4806 = vmul.f32 %v4753, %v295
    %v4807 = vmul.f32 %v4755, %v295
    %v4808 = vmul.f32 %v4757, %v295
    %v4809 = vmul.f32 %v4759, %v295
    %v4810 = vmul.f32 %v4761, %v295
    %v4811 = vmul.f32 %v4763, %v295
    %v4812 = vmul.f32 %v4765, %v295
    %v4813 = vmul.f32 %v4767, %v295
    %v4814 = vmul.f32 %v4769, %v295
    %v4815 = vmul.f32 %v4771, %v295
    %v4816 = vmul.f32 %v4773, %v295
    %v4817 = vmul.f32 %v4775, %v295
    %v4818 = vmul.f32 %v4777, %v295
    %v4819 = vmul.f32 %v4779, %v295
    %v4820 = vmul.f32 %v4781, %v295
    %v4821 = vmul.f32 %v4783, %v295
    %v4822 = vmul.f32 %v4785, %v295
    %v4823 = vmul.f32 %v4787, %v295
    %v4824 = vmul.f32 %v4789, %v295
    %v4825 = vmul.f32 %v4791, %v295
    %v4826 = vmul.f32 %v4793, %v295
    %v4827 = vmul.f32 %v4795, %v295
    %v4828 = vsub.f32 %v4700, %v4796
    %v4829 = vsub.f32 %v4701, %v4797
    %v4830 = vsub.f32 %v4702, %v4798
    %v4831 = vsub.f32 %v4703, %v4799
    %v4832 = vsub.f32 %v4704, %v4800
    %v4833 = vsub.f32 %v4705, %v4801
    %v4834 = vsub.f32 %v4706, %v4802
    %v4835 = vsub.f32 %v4707, %v4803
    %v4836 = vsub.f32 %v4708, %v4804
    %v4837 = vsub.f32 %v4709, %v4805
    %v4838 = vsub.f32 %v4710, %v4806
    %v4839 = vsub.f32 %v4711, %v4807
    %v4840 = vsub.f32 %v4712, %v4808
    %v4841 = vsub.f32 %v4713, %v4809
    %v4842 = vsub.f32 %v4714, %v4810
    %v4843 = vsub.f32 %v4715, %v4811
    %v4844 = vsub.f32 %v4716, %v4812
    %v4845 = vsub.f32 %v4717, %v4813
    %v4846 = vsub.f32 %v4718, %v4814
    %v4847 = vsub.f32 %v4719, %v4815
    %v4848 = vsub.f32 %v4720, %v4816
    %v4849 = vsub.f32 %v4721, %v4817
    %v4850 = vsub.f32 %v4722, %v4818
    %v4851 = vsub.f32 %v4723, %v4819
    %v4852 = vsub.f32 %v4724, %v4820
    %v4853 = vsub.f32 %v4725, %v4821
    %v4854 = vsub.f32 %v4726, %v4822
    %v4855 = vsub.f32 %v4727, %v4823
    %v4856 = vsub.f32 %v4728, %v4824
    %v4857 = vsub.f32 %v4729, %v4825
    %v4858 = vsub.f32 %v4730, %v4826
    %v4859 = vsub.f32 %v4731, %v4827
    %v4860 = vmul.f32 %v4828, %v4828
    %v4861 = vmul.f32 %v4829, %v4829
    %v4862 = vmul.f32 %v4830, %v4830
    %v4863 = vmul.f32 %v4831, %v4831
    %v4864 = vmul.f32 %v4832, %v4832
    %v4865 = vmul.f32 %v4833, %v4833
    %v4866 = vmul.f32 %v4834, %v4834
    %v4867 = vmul.f32 %v4835, %v4835
    %v4868 = vmul.f32 %v4836, %v4836
    %v4869 = vmul.f32 %v4837, %v4837
    %v4870 = vmul.f32 %v4838, %v4838
    %v4871 = vmul.f32 %v4839, %v4839
    %v4872 = vmul.f32 %v4840, %v4840
    %v4873 = vmul.f32 %v4841, %v4841
    %v4874 = vmul.f32 %v4842, %v4842
    %v4875 = vmul.f32 %v4843, %v4843
    %v4876 = vmul.f32 %v4844, %v4844
    %v4877 = vmul.f32 %v4845, %v4845
    %v4878 = vmul.f32 %v4846, %v4846
    %v4879 = vmul.f32 %v4847, %v4847
    %v4880 = vmul.f32 %v4848, %v4848
    %v4881 = vmul.f32 %v4849, %v4849
    %v4882 = vmul.f32 %v4850, %v4850
    %v4883 = vmul.f32 %v4851, %v4851
    %v4884 = vmul.f32 %v4852, %v4852
    %v4885 = vmul.f32 %v4853, %v4853
    %v4886 = vmul.f32 %v4854, %v4854
    %v4887 = vmul.f32 %v4855, %v4855
    %v4888 = vmul.f32 %v4856, %v4856
    %v4889 = vmul.f32 %v4857, %v4857
    %v4890 = vmul.f32 %v4858, %v4858
    %v4891 = vmul.f32 %v4859, %v4859
    %4892 = vadd.xlane.f32.xlu0 %v4860
    %v4893 = vpop.xlane.xlu0 %4892
    %4894 = vadd.xlane.f32.xlu0 %v4861
    %v4895 = vpop.xlane.xlu0 %4894
    %4896 = vadd.xlane.f32.xlu0 %v4862
    %v4897 = vpop.xlane.xlu0 %4896
    %4898 = vadd.xlane.f32.xlu0 %v4863
    %v4899 = vpop.xlane.xlu0 %4898
    %4900 = vadd.xlane.f32.xlu0 %v4864
    %v4901 = vpop.xlane.xlu0 %4900
    %4902 = vadd.xlane.f32.xlu0 %v4865
    %v4903 = vpop.xlane.xlu0 %4902
    %4904 = vadd.xlane.f32.xlu0 %v4866
    %v4905 = vpop.xlane.xlu0 %4904
    %4906 = vadd.xlane.f32.xlu0 %v4867
    %v4907 = vpop.xlane.xlu0 %4906
    %4908 = vadd.xlane.f32.xlu0 %v4868
    %v4909 = vpop.xlane.xlu0 %4908
    %4910 = vadd.xlane.f32.xlu0 %v4869
    %v4911 = vpop.xlane.xlu0 %4910
    %4912 = vadd.xlane.f32.xlu0 %v4870
    %v4913 = vpop.xlane.xlu0 %4912
    %4914 = vadd.xlane.f32.xlu0 %v4871
    %v4915 = vpop.xlane.xlu0 %4914
    %4916 = vadd.xlane.f32.xlu0 %v4872
    %v4917 = vpop.xlane.xlu0 %4916
    %4918 = vadd.xlane.f32.xlu0 %v4873
    %v4919 = vpop.xlane.xlu0 %4918
    %4920 = vadd.xlane.f32.xlu0 %v4874
    %v4921 = vpop.xlane.xlu0 %4920
    %4922 = vadd.xlane.f32.xlu0 %v4875
    %v4923 = vpop.xlane.xlu0 %4922
    %4924 = vadd.xlane.f32.xlu0 %v4876
    %v4925 = vpop.xlane.xlu0 %4924
    %4926 = vadd.xlane.f32.xlu0 %v4877
    %v4927 = vpop.xlane.xlu0 %4926
    %4928 = vadd.xlane.f32.xlu0 %v4878
    %v4929 = vpop.xlane.xlu0 %4928
    %4930 = vadd.xlane.f32.xlu0 %v4879
    %v4931 = vpop.xlane.xlu0 %4930
    %4932 = vadd.xlane.f32.xlu0 %v4880
    %v4933 = vpop.xlane.xlu0 %4932
    %4934 = vadd.xlane.f32.xlu0 %v4881
    %v4935 = vpop.xlane.xlu0 %4934
    %4936 = vadd.xlane.f32.xlu0 %v4882
    %v4937 = vpop.xlane.xlu0 %4936
    %4938 = vadd.xlane.f32.xlu0 %v4883
    %v4939 = vpop.xlane.xlu0 %4938
    %4940 = vadd.xlane.f32.xlu0 %v4884
    %v4941 = vpop.xlane.xlu0 %4940
    %4942 = vadd.xlane.f32.xlu0 %v4885
    %v4943 = vpop.xlane.xlu0 %4942
    %4944 = vadd.xlane.f32.xlu0 %v4886
    %v4945 = vpop.xlane.xlu0 %4944
    %4946 = vadd.xlane.f32.xlu0 %v4887
    %v4947 = vpop.xlane.xlu0 %4946
    %4948 = vadd.xlane.f32.xlu0 %v4888
    %v4949 = vpop.xlane.xlu0 %4948
    %4950 = vadd.xlane.f32.xlu0 %v4889
    %v4951 = vpop.xlane.xlu0 %4950
    %4952 = vadd.xlane.f32.xlu0 %v4890
    %v4953 = vpop.xlane.xlu0 %4952
    %4954 = vadd.xlane.f32.xlu0 %v4891
    %v4955 = vpop.xlane.xlu0 %4954
    %v4956 = vmul.f32 %v4893, %v295
    %v4957 = vmul.f32 %v4895, %v295
    %v4958 = vmul.f32 %v4897, %v295
    %v4959 = vmul.f32 %v4899, %v295
    %v4960 = vmul.f32 %v4901, %v295
    %v4961 = vmul.f32 %v4903, %v295
    %v4962 = vmul.f32 %v4905, %v295
    %v4963 = vmul.f32 %v4907, %v295
    %v4964 = vmul.f32 %v4909, %v295
    %v4965 = vmul.f32 %v4911, %v295
    %v4966 = vmul.f32 %v4913, %v295
    %v4967 = vmul.f32 %v4915, %v295
    %v4968 = vmul.f32 %v4917, %v295
    %v4969 = vmul.f32 %v4919, %v295
    %v4970 = vmul.f32 %v4921, %v295
    %v4971 = vmul.f32 %v4923, %v295
    %v4972 = vmul.f32 %v4925, %v295
    %v4973 = vmul.f32 %v4927, %v295
    %v4974 = vmul.f32 %v4929, %v295
    %v4975 = vmul.f32 %v4931, %v295
    %v4976 = vmul.f32 %v4933, %v295
    %v4977 = vmul.f32 %v4935, %v295
    %v4978 = vmul.f32 %v4937, %v295
    %v4979 = vmul.f32 %v4939, %v295
    %v4980 = vmul.f32 %v4941, %v295
    %v4981 = vmul.f32 %v4943, %v295
    %v4982 = vmul.f32 %v4945, %v295
    %v4983 = vmul.f32 %v4947, %v295
    %v4984 = vmul.f32 %v4949, %v295
    %v4985 = vmul.f32 %v4951, %v295
    %v4986 = vmul.f32 %v4953, %v295
    %v4987 = vmul.f32 %v4955, %v295
    %v4988 = vadd.f32 %v4956, 1e-05
    %v4989 = vadd.f32 %v4957, 1e-05
    %v4990 = vadd.f32 %v4958, 1e-05
    %v4991 = vadd.f32 %v4959, 1e-05
    %v4992 = vadd.f32 %v4960, 1e-05
    %v4993 = vadd.f32 %v4961, 1e-05
    %v4994 = vadd.f32 %v4962, 1e-05
    %v4995 = vadd.f32 %v4963, 1e-05
    %v4996 = vadd.f32 %v4964, 1e-05
    %v4997 = vadd.f32 %v4965, 1e-05
    %v4998 = vadd.f32 %v4966, 1e-05
    %v4999 = vadd.f32 %v4967, 1e-05
    %v5000 = vadd.f32 %v4968, 1e-05
    %v5001 = vadd.f32 %v4969, 1e-05
    %v5002 = vadd.f32 %v4970, 1e-05
    %v5003 = vadd.f32 %v4971, 1e-05
    %v5004 = vadd.f32 %v4972, 1e-05
    %v5005 = vadd.f32 %v4973, 1e-05
    %v5006 = vadd.f32 %v4974, 1e-05
    %v5007 = vadd.f32 %v4975, 1e-05
    %v5008 = vadd.f32 %v4976, 1e-05
    %v5009 = vadd.f32 %v4977, 1e-05
    %v5010 = vadd.f32 %v4978, 1e-05
    %v5011 = vadd.f32 %v4979, 1e-05
    %v5012 = vadd.f32 %v4980, 1e-05
    %v5013 = vadd.f32 %v4981, 1e-05
    %v5014 = vadd.f32 %v4982, 1e-05
    %v5015 = vadd.f32 %v4983, 1e-05
    %v5016 = vadd.f32 %v4984, 1e-05
    %v5017 = vadd.f32 %v4985, 1e-05
    %v5018 = vadd.f32 %v4986, 1e-05
    %v5019 = vadd.f32 %v4987, 1e-05
    %v5020 = vrsqrt.pop %v4988
    %v5021 = vrsqrt.pop %v4989
    %v5022 = vrsqrt.pop %v4990
    %v5023 = vrsqrt.pop %v4991
    %v5024 = vrsqrt.pop %v4992
    %v5025 = vrsqrt.pop %v4993
    %v5026 = vrsqrt.pop %v4994
    %v5027 = vrsqrt.pop %v4995
    %v5028 = vrsqrt.pop %v4996
    %v5029 = vrsqrt.pop %v4997
    %v5030 = vrsqrt.pop %v4998
    %v5031 = vrsqrt.pop %v4999
    %v5032 = vrsqrt.pop %v5000
    %v5033 = vrsqrt.pop %v5001
    %v5034 = vrsqrt.pop %v5002
    %v5035 = vrsqrt.pop %v5003
    %v5036 = vrsqrt.pop %v5004
    %v5037 = vrsqrt.pop %v5005
    %v5038 = vrsqrt.pop %v5006
    %v5039 = vrsqrt.pop %v5007
    %v5040 = vrsqrt.pop %v5008
    %v5041 = vrsqrt.pop %v5009
    %v5042 = vrsqrt.pop %v5010
    %v5043 = vrsqrt.pop %v5011
    %v5044 = vrsqrt.pop %v5012
    %v5045 = vrsqrt.pop %v5013
    %v5046 = vrsqrt.pop %v5014
    %v5047 = vrsqrt.pop %v5015
    %v5048 = vrsqrt.pop %v5016
    %v5049 = vrsqrt.pop %v5017
    %v5050 = vrsqrt.pop %v5018
    %v5051 = vrsqrt.pop %v5019
    %v5052 = vmul.f32 %v4828, %v5020
    %v5053 = vmul.f32 %v4829, %v5021
    %v5054 = vmul.f32 %v4830, %v5022
    %v5055 = vmul.f32 %v4831, %v5023
    %v5056 = vmul.f32 %v4832, %v5024
    %v5057 = vmul.f32 %v4833, %v5025
    %v5058 = vmul.f32 %v4834, %v5026
    %v5059 = vmul.f32 %v4835, %v5027
    %v5060 = vmul.f32 %v4836, %v5028
    %v5061 = vmul.f32 %v4837, %v5029
    %v5062 = vmul.f32 %v4838, %v5030
    %v5063 = vmul.f32 %v4839, %v5031
    %v5064 = vmul.f32 %v4840, %v5032
    %v5065 = vmul.f32 %v4841, %v5033
    %v5066 = vmul.f32 %v4842, %v5034
    %v5067 = vmul.f32 %v4843, %v5035
    %v5068 = vmul.f32 %v4844, %v5036
    %v5069 = vmul.f32 %v4845, %v5037
    %v5070 = vmul.f32 %v4846, %v5038
    %v5071 = vmul.f32 %v4847, %v5039
    %v5072 = vmul.f32 %v4848, %v5040
    %v5073 = vmul.f32 %v4849, %v5041
    %v5074 = vmul.f32 %v4850, %v5042
    %v5075 = vmul.f32 %v4851, %v5043
    %v5076 = vmul.f32 %v4852, %v5044
    %v5077 = vmul.f32 %v4853, %v5045
    %v5078 = vmul.f32 %v4854, %v5046
    %v5079 = vmul.f32 %v4855, %v5047
    %v5080 = vmul.f32 %v4856, %v5048
    %v5081 = vmul.f32 %v4857, %v5049
    %v5082 = vmul.f32 %v4858, %v5050
    %v5083 = vmul.f32 %v4859, %v5051
    %v5084 = vlaneseq
    %v5085 = vshrl.u32 %v5084, 7
    %v5086 = vsub.s32 3, %v5085
    %v5087 = vrot.slane %v129, %v5086
    %v5088 = vmul.f32 %v5052, %v5087
    %v5089 = vmul.f32 %v5053, %v5087
    %v5090 = vmul.f32 %v5054, %v5087
    %v5091 = vmul.f32 %v5055, %v5087
    %v5092 = vmul.f32 %v5056, %v5087
    %v5093 = vmul.f32 %v5057, %v5087
    %v5094 = vmul.f32 %v5058, %v5087
    %v5095 = vmul.f32 %v5059, %v5087
    %v5096 = vmul.f32 %v5060, %v5087
    %v5097 = vmul.f32 %v5061, %v5087
    %v5098 = vmul.f32 %v5062, %v5087
    %v5099 = vmul.f32 %v5063, %v5087
    %v5100 = vmul.f32 %v5064, %v5087
    %v5101 = vmul.f32 %v5065, %v5087
    %v5102 = vmul.f32 %v5066, %v5087
    %v5103 = vmul.f32 %v5067, %v5087
    %v5104 = vmul.f32 %v5068, %v5087
    %v5105 = vmul.f32 %v5069, %v5087
    %v5106 = vmul.f32 %v5070, %v5087
    %v5107 = vmul.f32 %v5071, %v5087
    %v5108 = vmul.f32 %v5072, %v5087
    %v5109 = vmul.f32 %v5073, %v5087
    %v5110 = vmul.f32 %v5074, %v5087
    %v5111 = vmul.f32 %v5075, %v5087
    %v5112 = vmul.f32 %v5076, %v5087
    %v5113 = vmul.f32 %v5077, %v5087
    %v5114 = vmul.f32 %v5078, %v5087
    %v5115 = vmul.f32 %v5079, %v5087
    %v5116 = vmul.f32 %v5080, %v5087
    %v5117 = vmul.f32 %v5081, %v5087
    %v5118 = vmul.f32 %v5082, %v5087
    %v5119 = vmul.f32 %v5083, %v5087
    %v5120 = vlaneseq
    %v5121 = vshrl.u32 %v5120, 7
    %v5122 = vsub.s32 4, %v5121
    %v5123 = vrot.slane %v129, %v5122
    %v5124 = vadd.f32 %v5088, %v5123
    %v5125 = vadd.f32 %v5089, %v5123
    %v5126 = vadd.f32 %v5090, %v5123
    %v5127 = vadd.f32 %v5091, %v5123
    %v5128 = vadd.f32 %v5092, %v5123
    %v5129 = vadd.f32 %v5093, %v5123
    %v5130 = vadd.f32 %v5094, %v5123
    %v5131 = vadd.f32 %v5095, %v5123
    %v5132 = vadd.f32 %v5096, %v5123
    %v5133 = vadd.f32 %v5097, %v5123
    %v5134 = vadd.f32 %v5098, %v5123
    %v5135 = vadd.f32 %v5099, %v5123
    %v5136 = vadd.f32 %v5100, %v5123
    %v5137 = vadd.f32 %v5101, %v5123
    %v5138 = vadd.f32 %v5102, %v5123
    %v5139 = vadd.f32 %v5103, %v5123
    %v5140 = vadd.f32 %v5104, %v5123
    %v5141 = vadd.f32 %v5105, %v5123
    %v5142 = vadd.f32 %v5106, %v5123
    %v5143 = vadd.f32 %v5107, %v5123
    %v5144 = vadd.f32 %v5108, %v5123
    %v5145 = vadd.f32 %v5109, %v5123
    %v5146 = vadd.f32 %v5110, %v5123
    %v5147 = vadd.f32 %v5111, %v5123
    %v5148 = vadd.f32 %v5112, %v5123
    %v5149 = vadd.f32 %v5113, %v5123
    %v5150 = vadd.f32 %v5114, %v5123
    %v5151 = vadd.f32 %v5115, %v5123
    %v5152 = vadd.f32 %v5116, %v5123
    %v5153 = vadd.f32 %v5117, %v5123
    %v5154 = vadd.f32 %v5118, %v5123
    %v5155 = vadd.f32 %v5119, %v5123
    %v5156 = vpack.c.bf16 %v5125, %v5124
    %v5157 = vpack.c.bf16 %v5127, %v5126
    %v5158 = vpack.c.bf16 %v5129, %v5128
    %v5159 = vpack.c.bf16 %v5131, %v5130
    %v5160 = vpack.c.bf16 %v5133, %v5132
    %v5161 = vpack.c.bf16 %v5135, %v5134
    %v5162 = vpack.c.bf16 %v5137, %v5136
    %v5163 = vpack.c.bf16 %v5139, %v5138
    %v5164 = vpack.c.bf16 %v5141, %v5140
    %v5165 = vpack.c.bf16 %v5143, %v5142
    %v5166 = vpack.c.bf16 %v5145, %v5144
    %v5167 = vpack.c.bf16 %v5147, %v5146
    %v5168 = vpack.c.bf16 %v5149, %v5148
    %v5169 = vpack.c.bf16 %v5151, %v5150
    %v5170 = vpack.c.bf16 %v5153, %v5152
    %v5171 = vpack.c.bf16 %v5155, %v5154
    %v5172 = vld [vmem:[#allocation10] sm:$0xff]
    %v5173 = vld [vmem:[#allocation10 + $0x8] sm:$0xff]
    %v5174 = vld [vmem:[#allocation10 + $0x10] sm:$0xff]
    %v5175 = vld [vmem:[#allocation10 + $0x18] sm:$0xff]
    %v5176 = vld [vmem:[#allocation10 + $0x20] sm:$0xff]
    %v5177 = vld [vmem:[#allocation10 + $0x28] sm:$0xff]
    %v5178 = vld [vmem:[#allocation10 + $0x30] sm:$0xff]
    %v5179 = vld [vmem:[#allocation10 + $0x38] sm:$0xff]
    %v5180 = vld [vmem:[#allocation10 + $0x40] sm:$0xff]
    %v5181 = vld [vmem:[#allocation10 + $0x48] sm:$0xff]
    %v5182 = vld [vmem:[#allocation10 + $0x50] sm:$0xff]
    %v5183 = vld [vmem:[#allocation10 + $0x58] sm:$0xff]
    %v5184 = vld [vmem:[#allocation10 + $0x60] sm:$0xff]
    %v5185 = vld [vmem:[#allocation10 + $0x68] sm:$0xff]
    %v5186 = vld [vmem:[#allocation10 + $0x70] sm:$0xff]
    %v5187 = vld [vmem:[#allocation10 + $0x78] sm:$0xff]
    %v5188 = vld [vmem:[#allocation10 + $0x80] sm:$0xff]
    %v5189 = vld [vmem:[#allocation10 + $0x88] sm:$0xff]
    %v5190 = vld [vmem:[#allocation10 + $0x90] sm:$0xff]
    %v5191 = vld [vmem:[#allocation10 + $0x98] sm:$0xff]
    %v5192 = vld [vmem:[#allocation10 + $0xa0] sm:$0xff]
    %v5193 = vld [vmem:[#allocation10 + $0xa8] sm:$0xff]
    %v5194 = vld [vmem:[#allocation10 + $0xb0] sm:$0xff]
    %v5195 = vld [vmem:[#allocation10 + $0xb8] sm:$0xff]
    %v5196 = vld [vmem:[#allocation10 + $0xc0] sm:$0xff]
    %v5197 = vld [vmem:[#allocation10 + $0xc8] sm:$0xff]
    %v5198 = vld [vmem:[#allocation10 + $0xd0] sm:$0xff]
    %v5199 = vld [vmem:[#allocation10 + $0xd8] sm:$0xff]
    %v5200 = vld [vmem:[#allocation10 + $0xe0] sm:$0xff]
    %v5201 = vld [vmem:[#allocation10 + $0xe8] sm:$0xff]
    %v5202 = vld [vmem:[#allocation10 + $0xf0] sm:$0xff]
    %v5203 = vld [vmem:[#allocation10 + $0xf8] sm:$0xff]
    %v5204 = vlaneseq
    %v5205 = vshrl.u32 %v5204, 7
    %v5206 = vsub.s32 0, %v5205
    %v5207 = vrot.slane %v129, %v5206
    %v5208 = vlaneseq
    %v5209 = vshrl.u32 %v5208, 7
    %v5210 = vsub.s32 0, %v5209
    %v5211 = vrot.slane %v130, %v5210
    %v5212 = vlaneseq
    %v5213 = vshrl.u32 %v5212, 7
    %v5214 = vsub.s32 0, %v5213
    %v5215 = vrot.slane %v131, %v5214
    %v5216 = vlaneseq
    %v5217 = vshrl.u32 %v5216, 7
    %v5218 = vsub.s32 0, %v5217
    %v5219 = vrot.slane %v132, %v5218
    %v5252 = vunpack.c.l.b16 %v5172
    %v5253 = vunpack.c.h.b16 %v5172
    %v5254 = vunpack.c.l.b16 %v5173
    %v5255 = vunpack.c.h.b16 %v5173
    %v5256 = vunpack.c.l.b16 %v5174
    %v5257 = vunpack.c.h.b16 %v5174
    %v5258 = vunpack.c.l.b16 %v5175
    %v5259 = vunpack.c.h.b16 %v5175
    %v5260 = vunpack.c.l.b16 %v5176
    %v5261 = vunpack.c.h.b16 %v5176
    %v5262 = vunpack.c.l.b16 %v5177
    %v5263 = vunpack.c.h.b16 %v5177
    %v5264 = vunpack.c.l.b16 %v5178
    %v5265 = vunpack.c.h.b16 %v5178
    %v5266 = vunpack.c.l.b16 %v5179
    %v5267 = vunpack.c.h.b16 %v5179
    %v5268 = vunpack.c.l.b16 %v5180
    %v5269 = vunpack.c.h.b16 %v5180
    %v5270 = vunpack.c.l.b16 %v5181
    %v5271 = vunpack.c.h.b16 %v5181
    %v5272 = vunpack.c.l.b16 %v5182
    %v5273 = vunpack.c.h.b16 %v5182
    %v5274 = vunpack.c.l.b16 %v5183
    %v5275 = vunpack.c.h.b16 %v5183
    %v5276 = vunpack.c.l.b16 %v5184
    %v5277 = vunpack.c.h.b16 %v5184
    %v5278 = vunpack.c.l.b16 %v5185
    %v5279 = vunpack.c.h.b16 %v5185
    %v5280 = vunpack.c.l.b16 %v5186
    %v5281 = vunpack.c.h.b16 %v5186
    %v5282 = vunpack.c.l.b16 %v5187
    %v5283 = vunpack.c.h.b16 %v5187
    %v5284 = vunpack.c.l.b16 %v5188
    %v5285 = vunpack.c.h.b16 %v5188
    %v5286 = vunpack.c.l.b16 %v5189
    %v5287 = vunpack.c.h.b16 %v5189
    %v5288 = vunpack.c.l.b16 %v5190
    %v5289 = vunpack.c.h.b16 %v5190
    %v5290 = vunpack.c.l.b16 %v5191
    %v5291 = vunpack.c.h.b16 %v5191
    %v5292 = vunpack.c.l.b16 %v5192
    %v5293 = vunpack.c.h.b16 %v5192
    %v5294 = vunpack.c.l.b16 %v5193
    %v5295 = vunpack.c.h.b16 %v5193
    %v5296 = vunpack.c.l.b16 %v5194
    %v5297 = vunpack.c.h.b16 %v5194
    %v5298 = vunpack.c.l.b16 %v5195
    %v5299 = vunpack.c.h.b16 %v5195
    %v5300 = vunpack.c.l.b16 %v5196
    %v5301 = vunpack.c.h.b16 %v5196
    %v5302 = vunpack.c.l.b16 %v5197
    %v5303 = vunpack.c.h.b16 %v5197
    %v5304 = vunpack.c.l.b16 %v5198
    %v5305 = vunpack.c.h.b16 %v5198
    %v5306 = vunpack.c.l.b16 %v5199
    %v5307 = vunpack.c.h.b16 %v5199
    %v5308 = vunpack.c.l.b16 %v5200
    %v5309 = vunpack.c.h.b16 %v5200
    %v5310 = vunpack.c.l.b16 %v5201
    %v5311 = vunpack.c.h.b16 %v5201
    %v5312 = vunpack.c.l.b16 %v5202
    %v5313 = vunpack.c.h.b16 %v5202
    %v5314 = vunpack.c.l.b16 %v5203
    %v5315 = vunpack.c.h.b16 %v5203
    %v5316 = vpack.c.b16 %v5256, %v5252
    %v5317 = vpack.c.b16 %v5257, %v5253
    %v5318 = vpack.c.b16 %v5258, %v5254
    %v5319 = vpack.c.b16 %v5259, %v5255
    %v5320 = vpack.c.b16 %v5264, %v5260
    %v5321 = vpack.c.b16 %v5265, %v5261
    %v5322 = vpack.c.b16 %v5266, %v5262
    %v5323 = vpack.c.b16 %v5267, %v5263
    %v5324 = vpack.c.b16 %v5272, %v5268
    %v5325 = vpack.c.b16 %v5273, %v5269
    %v5326 = vpack.c.b16 %v5274, %v5270
    %v5327 = vpack.c.b16 %v5275, %v5271
    %v5328 = vpack.c.b16 %v5280, %v5276
    %v5329 = vpack.c.b16 %v5281, %v5277
    %v5330 = vpack.c.b16 %v5282, %v5278
    %v5331 = vpack.c.b16 %v5283, %v5279
    %v5332 = vpack.c.b16 %v5288, %v5284
    %v5333 = vpack.c.b16 %v5289, %v5285
    %v5334 = vpack.c.b16 %v5290, %v5286
    %v5335 = vpack.c.b16 %v5291, %v5287
    %v5336 = vpack.c.b16 %v5296, %v5292
    %v5337 = vpack.c.b16 %v5297, %v5293
    %v5338 = vpack.c.b16 %v5298, %v5294
    %v5339 = vpack.c.b16 %v5299, %v5295
    %v5340 = vpack.c.b16 %v5304, %v5300
    %v5341 = vpack.c.b16 %v5305, %v5301
    %v5342 = vpack.c.b16 %v5306, %v5302
    %v5343 = vpack.c.b16 %v5307, %v5303
    %v5344 = vpack.c.b16 %v5312, %v5308
    %v5345 = vpack.c.b16 %v5313, %v5309
    %v5346 = vpack.c.b16 %v5314, %v5310
    %v5347 = vpack.c.b16 %v5315, %v5311
    %5380 = vmatprep.subr.bf16.mxu0 %v5317
    %5381 = vmatpush1.bf16.msra.mxu0 %v5316
    %5382 = vmatprep.subr.bf16.mxu0 %v5321
    %5383 = vmatpush1.bf16.msra.mxu0 %v5320
    %5384 = vmatprep.subr.bf16.mxu0 %v5325
    %5385 = vmatpush1.bf16.msra.mxu0 %v5324
    %5386 = vmatprep.subr.bf16.mxu0 %v5329
    %5387 = vmatpush1.bf16.msra.mxu0 %v5328
    %5388 = vmatprep.subr.bf16.mxu0 %v5333
    %5389 = vmatpush1.bf16.msra.mxu0 %v5332
    %5390 = vmatprep.subr.bf16.mxu0 %v5337
    %5391 = vmatpush1.bf16.msra.mxu0 %v5336
    %5392 = vmatprep.subr.bf16.mxu0 %v5341
    %5393 = vmatpush1.bf16.msra.mxu0 %v5340
    %5394 = vmatprep.subr.bf16.mxu0 %v5345
    %5395 = vmatpush1.bf16.msra.mxu0 %v5344
    %5396 = vmatprep.subr.bf16.mxu0 0
    %5397 = vmatpush1.bf16.msra.mxu0 0
    %5398 = vmatprep.subr.bf16.mxu0 0
    %5399 = vmatpush1.bf16.msra.mxu0 0
    %5400 = vmatprep.subr.bf16.mxu0 0
    %5401 = vmatpush1.bf16.msra.mxu0 0
    %5402 = vmatprep.subr.bf16.mxu0 0
    %5403 = vmatpush1.bf16.msra.mxu0 0
    %5404 = vmatprep.subr.bf16.mxu0 0
    %5405 = vmatpush1.bf16.msra.mxu0 0
    %5406 = vmatprep.subr.bf16.mxu0 0
    %5407 = vmatpush1.bf16.msra.mxu0 0
    %5408 = vmatprep.subr.bf16.mxu0 0
    %5409 = vmatpush1.bf16.msra.mxu0 0
    %5410 = vmatprep.subr.bf16.mxu0 0
    %5411 = vmatpush1.bf16.msra.mxu0 0
    %5412 = vmatprep.mubr.bf16.mxu0 0
    %5413 = vmatmul.mubr.bf16.gmra.mrb[0].mxu0 %v5156
    %v5414 = vpop.f32.mrb[0].mxu0
    %v5415 = vadd.f32 %v5207, %v5414
    %v5416 = vpop.f32.mrb[0].mxu0
    %v5417 = vadd.f32 %v5211, %v5416
    %v5418 = vpop.f32.mrb[0].mxu0
    %v5419 = vadd.f32 %v5207, %v5418
    %v5420 = vpop.f32.mrb[0].mxu0
    %v5421 = vadd.f32 %v5211, %v5420
    %5422 = vmatprep.mubr.bf16.mxu0 0
    %5423 = vmatmul.mubr.bf16.gmra.mrb[0].mxu0 %v5157
    %v5424 = vpop.f32.mrb[0].mxu0
    %v5425 = vadd.f32 %v5207, %v5424
    %v5426 = vpop.f32.mrb[0].mxu0
    %v5427 = vadd.f32 %v5211, %v5426
    %v5428 = vpop.f32.mrb[0].mxu0
    %v5429 = vadd.f32 %v5207, %v5428
    %v5430 = vpop.f32.mrb[0].mxu0
    %v5431 = vadd.f32 %v5211, %v5430
    %5432 = vmatprep.mubr.bf16.mxu0 0
    %5433 = vmatmul.mubr.bf16.gmra.mrb[0].mxu0 %v5158
    %v5434 = vpop.f32.mrb[0].mxu0
    %v5435 = vadd.f32 %v5207, %v5434
    %v5436 = vpop.f32.mrb[0].mxu0
    %v5437 = vadd.f32 %v5211, %v5436
    %v5438 = vpop.f32.mrb[0].mxu0
    %v5439 = vadd.f32 %v5207, %v5438
    %v5440 = vpop.f32.mrb[0].mxu0
    %v5441 = vadd.f32 %v5211, %v5440
    %5442 = vmatprep.mubr.bf16.mxu0 0
    %5443 = vmatmul.mubr.bf16.gmra.mrb[0].mxu0 %v5159
    %v5444 = vpop.f32.mrb[0].mxu0
    %v5445 = vadd.f32 %v5207, %v5444
    %v5446 = vpop.f32.mrb[0].mxu0
    %v5447 = vadd.f32 %v5211, %v5446
    %v5448 = vpop.f32.mrb[0].mxu0
    %v5449 = vadd.f32 %v5207, %v5448
    %v5450 = vpop.f32.mrb[0].mxu0
    %v5451 = vadd.f32 %v5211, %v5450
    %5452 = vmatprep.mubr.bf16.mxu0 0
    %5453 = vmatmul.mubr.bf16.gmra.mrb[0].mxu0 %v5160
    %v5454 = vpop.f32.mrb[0].mxu0
    %v5455 = vadd.f32 %v5207, %v5454
    %v5456 = vpop.f32.mrb[0].mxu0
    %v5457 = vadd.f32 %v5211, %v5456
    %v5458 = vpop.f32.mrb[0].mxu0
    %v5459 = vadd.f32 %v5207, %v5458
    %v5460 = vpop.f32.mrb[0].mxu0
    %v5461 = vadd.f32 %v5211, %v5460
    %5462 = vmatprep.mubr.bf16.mxu0 0
    %5463 = vmatmul.mubr.bf16.gmra.mrb[0].mxu0 %v5161
    %v5464 = vpop.f32.mrb[0].mxu0
    %v5465 = vadd.f32 %v5207, %v5464
    %v5466 = vpop.f32.mrb[0].mxu0
    %v5467 = vadd.f32 %v5211, %v5466
    %v5468 = vpop.f32.mrb[0].mxu0
    %v5469 = vadd.f32 %v5207, %v5468
    %v5470 = vpop.f32.mrb[0].mxu0
    %v5471 = vadd.f32 %v5211, %v5470
    %5472 = vmatprep.mubr.bf16.mxu0 0
    %5473 = vmatmul.mubr.bf16.gmra.mrb[0].mxu0 %v5162
    %v5474 = vpop.f32.mrb[0].mxu0
    %v5475 = vadd.f32 %v5207, %v5474
    %v5476 = vpop.f32.mrb[0].mxu0
    %v5477 = vadd.f32 %v5211, %v5476
    %v5478 = vpop.f32.mrb[0].mxu0
    %v5479 = vadd.f32 %v5207, %v5478
    %v5480 = vpop.f32.mrb[0].mxu0
    %v5481 = vadd.f32 %v5211, %v5480
    %5482 = vmatprep.mubr.bf16.mxu0 0
    %5483 = vmatmul.mubr.bf16.gmra.mrb[0].mxu0 %v5163
    %v5484 = vpop.f32.mrb[0].mxu0
    %v5485 = vadd.f32 %v5207, %v5484
    %v5486 = vpop.f32.mrb[0].mxu0
    %v5487 = vadd.f32 %v5211, %v5486
    %v5488 = vpop.f32.mrb[0].mxu0
    %v5489 = vadd.f32 %v5207, %v5488
    %v5490 = vpop.f32.mrb[0].mxu0
    %v5491 = vadd.f32 %v5211, %v5490
    %5492 = vmatprep.mubr.bf16.mxu0 0
    %5493 = vmatmul.mubr.bf16.gmra.mrb[0].mxu0 %v5164
    %v5494 = vpop.f32.mrb[0].mxu0
    %v5495 = vadd.f32 %v5207, %v5494
    %v5496 = vpop.f32.mrb[0].mxu0
    %v5497 = vadd.f32 %v5211, %v5496
    %v5498 = vpop.f32.mrb[0].mxu0
    %v5499 = vadd.f32 %v5207, %v5498
    %v5500 = vpop.f32.mrb[0].mxu0
    %v5501 = vadd.f32 %v5211, %v5500
    %5502 = vmatprep.mubr.bf16.mxu0 0
    %5503 = vmatmul.mubr.bf16.gmra.mrb[0].mxu0 %v5165
    %v5504 = vpop.f32.mrb[0].mxu0
    %v5505 = vadd.f32 %v5207, %v5504
    %v5506 = vpop.f32.mrb[0].mxu0
    %v5507 = vadd.f32 %v5211, %v5506
    %v5508 = vpop.f32.mrb[0].mxu0
    %v5509 = vadd.f32 %v5207, %v5508
    %v5510 = vpop.f32.mrb[0].mxu0
    %v5511 = vadd.f32 %v5211, %v5510
    %5512 = vmatprep.mubr.bf16.mxu0 0
    %5513 = vmatmul.mubr.bf16.gmra.mrb[0].mxu0 %v5166
    %v5514 = vpop.f32.mrb[0].mxu0
    %v5515 = vadd.f32 %v5207, %v5514
    %v5516 = vpop.f32.mrb[0].mxu0
    %v5517 = vadd.f32 %v5211, %v5516
    %v5518 = vpop.f32.mrb[0].mxu0
    %v5519 = vadd.f32 %v5207, %v5518
    %v5520 = vpop.f32.mrb[0].mxu0
    %v5521 = vadd.f32 %v5211, %v5520
    %5522 = vmatprep.mubr.bf16.mxu0 0
    %5523 = vmatmul.mubr.bf16.gmra.mrb[0].mxu0 %v5167
    %v5524 = vpop.f32.mrb[0].mxu0
    %v5525 = vadd.f32 %v5207, %v5524
    %v5526 = vpop.f32.mrb[0].mxu0
    %v5527 = vadd.f32 %v5211, %v5526
    %v5528 = vpop.f32.mrb[0].mxu0
    %v5529 = vadd.f32 %v5207, %v5528
    %v5530 = vpop.f32.mrb[0].mxu0
    %v5531 = vadd.f32 %v5211, %v5530
    %5532 = vmatprep.mubr.bf16.mxu0 0
    %5533 = vmatmul.mubr.bf16.gmra.mrb[0].mxu0 %v5168
    %v5534 = vpop.f32.mrb[0].mxu0
    %v5535 = vadd.f32 %v5207, %v5534
    %v5536 = vpop.f32.mrb[0].mxu0
    %v5537 = vadd.f32 %v5211, %v5536
    %v5538 = vpop.f32.mrb[0].mxu0
    %v5539 = vadd.f32 %v5207, %v5538
    %v5540 = vpop.f32.mrb[0].mxu0
    %v5541 = vadd.f32 %v5211, %v5540
    %5542 = vmatprep.mubr.bf16.mxu0 0
    %5543 = vmatmul.mubr.bf16.gmra.mrb[0].mxu0 %v5169
    %v5544 = vpop.f32.mrb[0].mxu0
    %v5545 = vadd.f32 %v5207, %v5544
    %v5546 = vpop.f32.mrb[0].mxu0
    %v5547 = vadd.f32 %v5211, %v5546
    %v5548 = vpop.f32.mrb[0].mxu0
    %v5549 = vadd.f32 %v5207, %v5548
    %v5550 = vpop.f32.mrb[0].mxu0
    %v5551 = vadd.f32 %v5211, %v5550
    %5552 = vmatprep.mubr.bf16.mxu0 0
    %5553 = vmatmul.mubr.bf16.gmra.mrb[0].mxu0 %v5170
    %v5554 = vpop.f32.mrb[0].mxu0
    %v5555 = vadd.f32 %v5207, %v5554
    %v5556 = vpop.f32.mrb[0].mxu0
    %v5557 = vadd.f32 %v5211, %v5556
    %v5558 = vpop.f32.mrb[0].mxu0
    %v5559 = vadd.f32 %v5207, %v5558
    %v5560 = vpop.f32.mrb[0].mxu0
    %v5561 = vadd.f32 %v5211, %v5560
    %5562 = vmatprep.mubr.bf16.mxu0 0
    %5563 = vmatmul.mubr.bf16.gmra.mrb[0].mxu0 %v5171
    %v5564 = vpop.f32.mrb[0].mxu0
    %v5565 = vadd.f32 %v5207, %v5564
    %v5566 = vpop.f32.mrb[0].mxu0
    %v5567 = vadd.f32 %v5211, %v5566
    %v5568 = vpop.f32.mrb[0].mxu0
    %v5569 = vadd.f32 %v5207, %v5568
    %v5570 = vpop.f32.mrb[0].mxu0
    %v5571 = vadd.f32 %v5211, %v5570
    %5572 = vdwg.mxu0
    %5573 = vmatprep.subr.bf16.mxu0 %v5319
    %5574 = vmatpush1.bf16.msra.mxu0 %v5318
    %5575 = vmatprep.subr.bf16.mxu0 %v5323
    %5576 = vmatpush1.bf16.msra.mxu0 %v5322
    %5577 = vmatprep.subr.bf16.mxu0 %v5327
    %5578 = vmatpush1.bf16.msra.mxu0 %v5326
    %5579 = vmatprep.subr.bf16.mxu0 %v5331
    %5580 = vmatpush1.bf16.msra.mxu0 %v5330
    %5581 = vmatprep.subr.bf16.mxu0 %v5335
    %5582 = vmatpush1.bf16.msra.mxu0 %v5334
    %5583 = vmatprep.subr.bf16.mxu0 %v5339
    %5584 = vmatpush1.bf16.msra.mxu0 %v5338
    %5585 = vmatprep.subr.bf16.mxu0 %v5343
    %5586 = vmatpush1.bf16.msra.mxu0 %v5342
    %5587 = vmatprep.subr.bf16.mxu0 %v5347
    %5588 = vmatpush1.bf16.msra.mxu0 %v5346
    %5589 = vmatprep.subr.bf16.mxu0 0
    %5590 = vmatpush1.bf16.msra.mxu0 0
    %5591 = vmatprep.subr.bf16.mxu0 0
    %5592 = vmatpush1.bf16.msra.mxu0 0
    %5593 = vmatprep.subr.bf16.mxu0 0
    %5594 = vmatpush1.bf16.msra.mxu0 0
    %5595 = vmatprep.subr.bf16.mxu0 0
    %5596 = vmatpush1.bf16.msra.mxu0 0
    %5597 = vmatprep.subr.bf16.mxu0 0
    %5598 = vmatpush1.bf16.msra.mxu0 0
    %5599 = vmatprep.subr.bf16.mxu0 0
    %5600 = vmatpush1.bf16.msra.mxu0 0
    %5601 = vmatprep.subr.bf16.mxu0 0
    %5602 = vmatpush1.bf16.msra.mxu0 0
    %5603 = vmatprep.subr.bf16.mxu0 0
    %5604 = vmatpush1.bf16.msra.mxu0 0
    %5605 = vmatprep.mubr.bf16.mxu0 0
    %5606 = vmatmul.mubr.bf16.gmra.mrb[0].mxu0 %v5156
    %v5607 = vpop.f32.mrb[0].mxu0
    %v5608 = vadd.f32 %v5215, %v5607
    %v5609 = vpop.f32.mrb[0].mxu0
    %v5610 = vadd.f32 %v5219, %v5609
    %v5611 = vpop.f32.mrb[0].mxu0
    %v5612 = vadd.f32 %v5215, %v5611
    %v5613 = vpop.f32.mrb[0].mxu0
    %v5614 = vadd.f32 %v5219, %v5613
    %5615 = vmatprep.mubr.bf16.mxu0 0
    %5616 = vmatmul.mubr.bf16.gmra.mrb[0].mxu0 %v5157
    %v5617 = vpop.f32.mrb[0].mxu0
    %v5618 = vadd.f32 %v5215, %v5617
    %v5619 = vpop.f32.mrb[0].mxu0
    %v5620 = vadd.f32 %v5219, %v5619
    %v5621 = vpop.f32.mrb[0].mxu0
    %v5622 = vadd.f32 %v5215, %v5621
    %v5623 = vpop.f32.mrb[0].mxu0
    %v5624 = vadd.f32 %v5219, %v5623
    %5625 = vmatprep.mubr.bf16.mxu0 0
    %5626 = vmatmul.mubr.bf16.gmra.mrb[0].mxu0 %v5158
    %v5627 = vpop.f32.mrb[0].mxu0
    %v5628 = vadd.f32 %v5215, %v5627
    %v5629 = vpop.f32.mrb[0].mxu0
    %v5630 = vadd.f32 %v5219, %v5629
    %v5631 = vpop.f32.mrb[0].mxu0
    %v5632 = vadd.f32 %v5215, %v5631
    %v5633 = vpop.f32.mrb[0].mxu0
    %v5634 = vadd.f32 %v5219, %v5633
    %5635 = vmatprep.mubr.bf16.mxu0 0
    %5636 = vmatmul.mubr.bf16.gmra.mrb[0].mxu0 %v5159
    %v5637 = vpop.f32.mrb[0].mxu0
    %v5638 = vadd.f32 %v5215, %v5637
    %v5639 = vpop.f32.mrb[0].mxu0
    %v5640 = vadd.f32 %v5219, %v5639
    %v5641 = vpop.f32.mrb[0].mxu0
    %v5642 = vadd.f32 %v5215, %v5641
    %v5643 = vpop.f32.mrb[0].mxu0
    %v5644 = vadd.f32 %v5219, %v5643
    %5645 = vmatprep.mubr.bf16.mxu0 0
    %5646 = vmatmul.mubr.bf16.gmra.mrb[0].mxu0 %v5160
    %v5647 = vpop.f32.mrb[0].mxu0
    %v5648 = vadd.f32 %v5215, %v5647
    %v5649 = vpop.f32.mrb[0].mxu0
    %v5650 = vadd.f32 %v5219, %v5649
    %v5651 = vpop.f32.mrb[0].mxu0
    %v5652 = vadd.f32 %v5215, %v5651
    %v5653 = vpop.f32.mrb[0].mxu0
    %v5654 = vadd.f32 %v5219, %v5653
    %5655 = vmatprep.mubr.bf16.mxu0 0
    %5656 = vmatmul.mubr.bf16.gmra.mrb[0].mxu0 %v5161
    %v5657 = vpop.f32.mrb[0].mxu0
    %v5658 = vadd.f32 %v5215, %v5657
    %v5659 = vpop.f32.mrb[0].mxu0
    %v5660 = vadd.f32 %v5219, %v5659
    %v5661 = vpop.f32.mrb[0].mxu0
    %v5662 = vadd.f32 %v5215, %v5661
    %v5663 = vpop.f32.mrb[0].mxu0
    %v5664 = vadd.f32 %v5219, %v5663
    %5665 = vmatprep.mubr.bf16.mxu0 0
    %5666 = vmatmul.mubr.bf16.gmra.mrb[0].mxu0 %v5162
    %v5667 = vpop.f32.mrb[0].mxu0
    %v5668 = vadd.f32 %v5215, %v5667
    %v5669 = vpop.f32.mrb[0].mxu0
    %v5670 = vadd.f32 %v5219, %v5669
    %v5671 = vpop.f32.mrb[0].mxu0
    %v5672 = vadd.f32 %v5215, %v5671
    %v5673 = vpop.f32.mrb[0].mxu0
    %v5674 = vadd.f32 %v5219, %v5673
    %5675 = vmatprep.mubr.bf16.mxu0 0
    %5676 = vmatmul.mubr.bf16.gmra.mrb[0].mxu0 %v5163
    %v5677 = vpop.f32.mrb[0].mxu0
    %v5678 = vadd.f32 %v5215, %v5677
    %v5679 = vpop.f32.mrb[0].mxu0
    %v5680 = vadd.f32 %v5219, %v5679
    %v5681 = vpop.f32.mrb[0].mxu0
    %v5682 = vadd.f32 %v5215, %v5681
    %v5683 = vpop.f32.mrb[0].mxu0
    %v5684 = vadd.f32 %v5219, %v5683
    %5685 = vmatprep.mubr.bf16.mxu0 0
    %5686 = vmatmul.mubr.bf16.gmra.mrb[0].mxu0 %v5164
    %v5687 = vpop.f32.mrb[0].mxu0
    %v5688 = vadd.f32 %v5215, %v5687
    %v5689 = vpop.f32.mrb[0].mxu0
    %v5690 = vadd.f32 %v5219, %v5689
    %v5691 = vpop.f32.mrb[0].mxu0
    %v5692 = vadd.f32 %v5215, %v5691
    %v5693 = vpop.f32.mrb[0].mxu0
    %v5694 = vadd.f32 %v5219, %v5693
    %5695 = vmatprep.mubr.bf16.mxu0 0
    %5696 = vmatmul.mubr.bf16.gmra.mrb[0].mxu0 %v5165
    %v5697 = vpop.f32.mrb[0].mxu0
    %v5698 = vadd.f32 %v5215, %v5697
    %v5699 = vpop.f32.mrb[0].mxu0
    %v5700 = vadd.f32 %v5219, %v5699
    %v5701 = vpop.f32.mrb[0].mxu0
    %v5702 = vadd.f32 %v5215, %v5701
    %v5703 = vpop.f32.mrb[0].mxu0
    %v5704 = vadd.f32 %v5219, %v5703
    %5705 = vmatprep.mubr.bf16.mxu0 0
    %5706 = vmatmul.mubr.bf16.gmra.mrb[0].mxu0 %v5166
    %v5707 = vpop.f32.mrb[0].mxu0
    %v5708 = vadd.f32 %v5215, %v5707
    %v5709 = vpop.f32.mrb[0].mxu0
    %v5710 = vadd.f32 %v5219, %v5709
    %v5711 = vpop.f32.mrb[0].mxu0
    %v5712 = vadd.f32 %v5215, %v5711
    %v5713 = vpop.f32.mrb[0].mxu0
    %v5714 = vadd.f32 %v5219, %v5713
    %5715 = vmatprep.mubr.bf16.mxu0 0
    %5716 = vmatmul.mubr.bf16.gmra.mrb[0].mxu0 %v5167
    %v5717 = vpop.f32.mrb[0].mxu0
    %v5718 = vadd.f32 %v5215, %v5717
    %v5719 = vpop.f32.mrb[0].mxu0
    %v5720 = vadd.f32 %v5219, %v5719
    %v5721 = vpop.f32.mrb[0].mxu0
    %v5722 = vadd.f32 %v5215, %v5721
    %v5723 = vpop.f32.mrb[0].mxu0
    %v5724 = vadd.f32 %v5219, %v5723
    %5725 = vmatprep.mubr.bf16.mxu0 0
    %5726 = vmatmul.mubr.bf16.gmra.mrb[0].mxu0 %v5168
    %v5727 = vpop.f32.mrb[0].mxu0
    %v5728 = vadd.f32 %v5215, %v5727
    %v5729 = vpop.f32.mrb[0].mxu0
    %v5730 = vadd.f32 %v5219, %v5729
    %v5731 = vpop.f32.mrb[0].mxu0
    %v5732 = vadd.f32 %v5215, %v5731
    %v5733 = vpop.f32.mrb[0].mxu0
    %v5734 = vadd.f32 %v5219, %v5733
    %5735 = vmatprep.mubr.bf16.mxu0 0
    %5736 = vmatmul.mubr.bf16.gmra.mrb[0].mxu0 %v5169
    %v5737 = vpop.f32.mrb[0].mxu0
    %v5738 = vadd.f32 %v5215, %v5737
    %v5739 = vpop.f32.mrb[0].mxu0
    %v5740 = vadd.f32 %v5219, %v5739
    %v5741 = vpop.f32.mrb[0].mxu0
    %v5742 = vadd.f32 %v5215, %v5741
    %v5743 = vpop.f32.mrb[0].mxu0
    %v5744 = vadd.f32 %v5219, %v5743
    %5745 = vmatprep.mubr.bf16.mxu0 0
    %5746 = vmatmul.mubr.bf16.gmra.mrb[0].mxu0 %v5170
    %v5747 = vpop.f32.mrb[0].mxu0
    %v5748 = vadd.f32 %v5215, %v5747
    %v5749 = vpop.f32.mrb[0].mxu0
    %v5750 = vadd.f32 %v5219, %v5749
    %v5751 = vpop.f32.mrb[0].mxu0
    %v5752 = vadd.f32 %v5215, %v5751
    %v5753 = vpop.f32.mrb[0].mxu0
    %v5754 = vadd.f32 %v5219, %v5753
    %5755 = vmatprep.mubr.bf16.mxu0 0
    %5756 = vmatmul.mubr.bf16.gmra.mrb[0].mxu0 %v5171
    %v5757 = vpop.f32.mrb[0].mxu0
    %v5758 = vadd.f32 %v5215, %v5757
    %v5759 = vpop.f32.mrb[0].mxu0
    %v5760 = vadd.f32 %v5219, %v5759
    %v5761 = vpop.f32.mrb[0].mxu0
    %v5762 = vadd.f32 %v5215, %v5761
    %v5763 = vpop.f32.mrb[0].mxu0
    %v5764 = vadd.f32 %v5219, %v5763
    %5765 = vdwg.mxu0
    %v5766 = vmul.f32 %v5415, %v5415
    %v5767 = vmul.f32 %v5417, %v5417
    %v5768 = vmul.f32 %v5608, %v5608
    %v5769 = vmul.f32 %v5610, %v5610
    %v5770 = vmul.f32 %v5419, %v5419
    %v5771 = vmul.f32 %v5421, %v5421
    %v5772 = vmul.f32 %v5612, %v5612
    %v5773 = vmul.f32 %v5614, %v5614
    %v5774 = vmul.f32 %v5425, %v5425
    %v5775 = vmul.f32 %v5427, %v5427
    %v5776 = vmul.f32 %v5618, %v5618
    %v5777 = vmul.f32 %v5620, %v5620
    %v5778 = vmul.f32 %v5429, %v5429
    %v5779 = vmul.f32 %v5431, %v5431
    %v5780 = vmul.f32 %v5622, %v5622
    %v5781 = vmul.f32 %v5624, %v5624
    %v5782 = vmul.f32 %v5435, %v5435
    %v5783 = vmul.f32 %v5437, %v5437
    %v5784 = vmul.f32 %v5628, %v5628
    %v5785 = vmul.f32 %v5630, %v5630
    %v5786 = vmul.f32 %v5439, %v5439
    %v5787 = vmul.f32 %v5441, %v5441
    %v5788 = vmul.f32 %v5632, %v5632
    %v5789 = vmul.f32 %v5634, %v5634
    %v5790 = vmul.f32 %v5445, %v5445
    %v5791 = vmul.f32 %v5447, %v5447
    %v5792 = vmul.f32 %v5638, %v5638
    %v5793 = vmul.f32 %v5640, %v5640
    %v5794 = vmul.f32 %v5449, %v5449
    %v5795 = vmul.f32 %v5451, %v5451
    %v5796 = vmul.f32 %v5642, %v5642
    %v5797 = vmul.f32 %v5644, %v5644
    %v5798 = vmul.f32 %v5455, %v5455
    %v5799 = vmul.f32 %v5457, %v5457
    %v5800 = vmul.f32 %v5648, %v5648
    %v5801 = vmul.f32 %v5650, %v5650
    %v5802 = vmul.f32 %v5459, %v5459
    %v5803 = vmul.f32 %v5461, %v5461
    %v5804 = vmul.f32 %v5652, %v5652
    %v5805 = vmul.f32 %v5654, %v5654
    %v5806 = vmul.f32 %v5465, %v5465
    %v5807 = vmul.f32 %v5467, %v5467
    %v5808 = vmul.f32 %v5658, %v5658
    %v5809 = vmul.f32 %v5660, %v5660
    %v5810 = vmul.f32 %v5469, %v5469
    %v5811 = vmul.f32 %v5471, %v5471
    %v5812 = vmul.f32 %v5662, %v5662
    %v5813 = vmul.f32 %v5664, %v5664
    %v5814 = vmul.f32 %v5475, %v5475
    %v5815 = vmul.f32 %v5477, %v5477
    %v5816 = vmul.f32 %v5668, %v5668
    %v5817 = vmul.f32 %v5670, %v5670
    %v5818 = vmul.f32 %v5479, %v5479
    %v5819 = vmul.f32 %v5481, %v5481
    %v5820 = vmul.f32 %v5672, %v5672
    %v5821 = vmul.f32 %v5674, %v5674
    %v5822 = vmul.f32 %v5485, %v5485
    %v5823 = vmul.f32 %v5487, %v5487
    %v5824 = vmul.f32 %v5678, %v5678
    %v5825 = vmul.f32 %v5680, %v5680
    %v5826 = vmul.f32 %v5489, %v5489
    %v5827 = vmul.f32 %v5491, %v5491
    %v5828 = vmul.f32 %v5682, %v5682
    %v5829 = vmul.f32 %v5684, %v5684
    %v5830 = vmul.f32 %v5495, %v5495
    %v5831 = vmul.f32 %v5497, %v5497
    %v5832 = vmul.f32 %v5688, %v5688
    %v5833 = vmul.f32 %v5690, %v5690
    %v5834 = vmul.f32 %v5499, %v5499
    %v5835 = vmul.f32 %v5501, %v5501
    %v5836 = vmul.f32 %v5692, %v5692
    %v5837 = vmul.f32 %v5694, %v5694
    %v5838 = vmul.f32 %v5505, %v5505
    %v5839 = vmul.f32 %v5507, %v5507
    %v5840 = vmul.f32 %v5698, %v5698
    %v5841 = vmul.f32 %v5700, %v5700
    %v5842 = vmul.f32 %v5509, %v5509
    %v5843 = vmul.f32 %v5511, %v5511
    %v5844 = vmul.f32 %v5702, %v5702
    %v5845 = vmul.f32 %v5704, %v5704
    %v5846 = vmul.f32 %v5515, %v5515
    %v5847 = vmul.f32 %v5517, %v5517
    %v5848 = vmul.f32 %v5708, %v5708
    %v5849 = vmul.f32 %v5710, %v5710
    %v5850 = vmul.f32 %v5519, %v5519
    %v5851 = vmul.f32 %v5521, %v5521
    %v5852 = vmul.f32 %v5712, %v5712
    %v5853 = vmul.f32 %v5714, %v5714
    %v5854 = vmul.f32 %v5525, %v5525
    %v5855 = vmul.f32 %v5527, %v5527
    %v5856 = vmul.f32 %v5718, %v5718
    %v5857 = vmul.f32 %v5720, %v5720
    %v5858 = vmul.f32 %v5529, %v5529
    %v5859 = vmul.f32 %v5531, %v5531
    %v5860 = vmul.f32 %v5722, %v5722
    %v5861 = vmul.f32 %v5724, %v5724
    %v5862 = vmul.f32 %v5535, %v5535
    %v5863 = vmul.f32 %v5537, %v5537
    %v5864 = vmul.f32 %v5728, %v5728
    %v5865 = vmul.f32 %v5730, %v5730
    %v5866 = vmul.f32 %v5539, %v5539
    %v5867 = vmul.f32 %v5541, %v5541
    %v5868 = vmul.f32 %v5732, %v5732
    %v5869 = vmul.f32 %v5734, %v5734
    %v5870 = vmul.f32 %v5545, %v5545
    %v5871 = vmul.f32 %v5547, %v5547
    %v5872 = vmul.f32 %v5738, %v5738
    %v5873 = vmul.f32 %v5740, %v5740
    %v5874 = vmul.f32 %v5549, %v5549
    %v5875 = vmul.f32 %v5551, %v5551
    %v5876 = vmul.f32 %v5742, %v5742
    %v5877 = vmul.f32 %v5744, %v5744
    %v5878 = vmul.f32 %v5555, %v5555
    %v5879 = vmul.f32 %v5557, %v5557
    %v5880 = vmul.f32 %v5748, %v5748
    %v5881 = vmul.f32 %v5750, %v5750
    %v5882 = vmul.f32 %v5559, %v5559
    %v5883 = vmul.f32 %v5561, %v5561
    %v5884 = vmul.f32 %v5752, %v5752
    %v5885 = vmul.f32 %v5754, %v5754
    %v5886 = vmul.f32 %v5565, %v5565
    %v5887 = vmul.f32 %v5567, %v5567
    %v5888 = vmul.f32 %v5758, %v5758
    %v5889 = vmul.f32 %v5760, %v5760
    %v5890 = vmul.f32 %v5569, %v5569
    %v5891 = vmul.f32 %v5571, %v5571
    %v5892 = vmul.f32 %v5762, %v5762
    %v5893 = vmul.f32 %v5764, %v5764
    %v5894 = vmul.f32 %v5415, %v5766
    %v5895 = vmul.f32 %v5417, %v5767
    %v5896 = vmul.f32 %v5608, %v5768
    %v5897 = vmul.f32 %v5610, %v5769
    %v5898 = vmul.f32 %v5419, %v5770
    %v5899 = vmul.f32 %v5421, %v5771
    %v5900 = vmul.f32 %v5612, %v5772
    %v5901 = vmul.f32 %v5614, %v5773
    %v5902 = vmul.f32 %v5425, %v5774
    %v5903 = vmul.f32 %v5427, %v5775
    %v5904 = vmul.f32 %v5618, %v5776
    %v5905 = vmul.f32 %v5620, %v5777
    %v5906 = vmul.f32 %v5429, %v5778
    %v5907 = vmul.f32 %v5431, %v5779
    %v5908 = vmul.f32 %v5622, %v5780
    %v5909 = vmul.f32 %v5624, %v5781
    %v5910 = vmul.f32 %v5435, %v5782
    %v5911 = vmul.f32 %v5437, %v5783
    %v5912 = vmul.f32 %v5628, %v5784
    %v5913 = vmul.f32 %v5630, %v5785
    %v5914 = vmul.f32 %v5439, %v5786
    %v5915 = vmul.f32 %v5441, %v5787
    %v5916 = vmul.f32 %v5632, %v5788
    %v5917 = vmul.f32 %v5634, %v5789
    %v5918 = vmul.f32 %v5445, %v5790
    %v5919 = vmul.f32 %v5447, %v5791
    %v5920 = vmul.f32 %v5638, %v5792
    %v5921 = vmul.f32 %v5640, %v5793
    %v5922 = vmul.f32 %v5449, %v5794
    %v5923 = vmul.f32 %v5451, %v5795
    %v5924 = vmul.f32 %v5642, %v5796
    %v5925 = vmul.f32 %v5644, %v5797
    %v5926 = vmul.f32 %v5455, %v5798
    %v5927 = vmul.f32 %v5457, %v5799
    %v5928 = vmul.f32 %v5648, %v5800
    %v5929 = vmul.f32 %v5650, %v5801
    %v5930 = vmul.f32 %v5459, %v5802
    %v5931 = vmul.f32 %v5461, %v5803
    %v5932 = vmul.f32 %v5652, %v5804
    %v5933 = vmul.f32 %v5654, %v5805
    %v5934 = vmul.f32 %v5465, %v5806
    %v5935 = vmul.f32 %v5467, %v5807
    %v5936 = vmul.f32 %v5658, %v5808
    %v5937 = vmul.f32 %v5660, %v5809
    %v5938 = vmul.f32 %v5469, %v5810
    %v5939 = vmul.f32 %v5471, %v5811
    %v5940 = vmul.f32 %v5662, %v5812
    %v5941 = vmul.f32 %v5664, %v5813
    %v5942 = vmul.f32 %v5475, %v5814
    %v5943 = vmul.f32 %v5477, %v5815
    %v5944 = vmul.f32 %v5668, %v5816
    %v5945 = vmul.f32 %v5670, %v5817
    %v5946 = vmul.f32 %v5479, %v5818
    %v5947 = vmul.f32 %v5481, %v5819
    %v5948 = vmul.f32 %v5672, %v5820
    %v5949 = vmul.f32 %v5674, %v5821
    %v5950 = vmul.f32 %v5485, %v5822
    %v5951 = vmul.f32 %v5487, %v5823
    %v5952 = vmul.f32 %v5678, %v5824
    %v5953 = vmul.f32 %v5680, %v5825
    %v5954 = vmul.f32 %v5489, %v5826
    %v5955 = vmul.f32 %v5491, %v5827
    %v5956 = vmul.f32 %v5682, %v5828
    %v5957 = vmul.f32 %v5684, %v5829
    %v5958 = vmul.f32 %v5495, %v5830
    %v5959 = vmul.f32 %v5497, %v5831
    %v5960 = vmul.f32 %v5688, %v5832
    %v5961 = vmul.f32 %v5690, %v5833
    %v5962 = vmul.f32 %v5499, %v5834
    %v5963 = vmul.f32 %v5501, %v5835
    %v5964 = vmul.f32 %v5692, %v5836
    %v5965 = vmul.f32 %v5694, %v5837
    %v5966 = vmul.f32 %v5505, %v5838
    %v5967 = vmul.f32 %v5507, %v5839
    %v5968 = vmul.f32 %v5698, %v5840
    %v5969 = vmul.f32 %v5700, %v5841
    %v5970 = vmul.f32 %v5509, %v5842
    %v5971 = vmul.f32 %v5511, %v5843
    %v5972 = vmul.f32 %v5702, %v5844
    %v5973 = vmul.f32 %v5704, %v5845
    %v5974 = vmul.f32 %v5515, %v5846
    %v5975 = vmul.f32 %v5517, %v5847
    %v5976 = vmul.f32 %v5708, %v5848
    %v5977 = vmul.f32 %v5710, %v5849
    %v5978 = vmul.f32 %v5519, %v5850
    %v5979 = vmul.f32 %v5521, %v5851
    %v5980 = vmul.f32 %v5712, %v5852
    %v5981 = vmul.f32 %v5714, %v5853
    %v5982 = vmul.f32 %v5525, %v5854
    %v5983 = vmul.f32 %v5527, %v5855
    %v5984 = vmul.f32 %v5718, %v5856
    %v5985 = vmul.f32 %v5720, %v5857
    %v5986 = vmul.f32 %v5529, %v5858
    %v5987 = vmul.f32 %v5531, %v5859
    %v5988 = vmul.f32 %v5722, %v5860
    %v5989 = vmul.f32 %v5724, %v5861
    %v5990 = vmul.f32 %v5535, %v5862
    %v5991 = vmul.f32 %v5537, %v5863
    %v5992 = vmul.f32 %v5728, %v5864
    %v5993 = vmul.f32 %v5730, %v5865
    %v5994 = vmul.f32 %v5539, %v5866
    %v5995 = vmul.f32 %v5541, %v5867
    %v5996 = vmul.f32 %v5732, %v5868
    %v5997 = vmul.f32 %v5734, %v5869
    %v5998 = vmul.f32 %v5545, %v5870
    %v5999 = vmul.f32 %v5547, %v5871
    %v6000 = vmul.f32 %v5738, %v5872
    %v6001 = vmul.f32 %v5740, %v5873
    %v6002 = vmul.f32 %v5549, %v5874
    %v6003 = vmul.f32 %v5551, %v5875
    %v6004 = vmul.f32 %v5742, %v5876
    %v6005 = vmul.f32 %v5744, %v5877
    %v6006 = vmul.f32 %v5555, %v5878
    %v6007 = vmul.f32 %v5557, %v5879
    %v6008 = vmul.f32 %v5748, %v5880
    %v6009 = vmul.f32 %v5750, %v5881
    %v6010 = vmul.f32 %v5559, %v5882
    %v6011 = vmul.f32 %v5561, %v5883
    %v6012 = vmul.f32 %v5752, %v5884
    %v6013 = vmul.f32 %v5754, %v5885
    %v6014 = vmul.f32 %v5565, %v5886
    %v6015 = vmul.f32 %v5567, %v5887
    %v6016 = vmul.f32 %v5758, %v5888
    %v6017 = vmul.f32 %v5760, %v5889
    %v6018 = vmul.f32 %v5569, %v5890
    %v6019 = vmul.f32 %v5571, %v5891
    %v6020 = vmul.f32 %v5762, %v5892
    %v6021 = vmul.f32 %v5764, %v5893
    %v6022 = vmul.f32 %v5894, 0.044715
    %v6023 = vmul.f32 %v5895, 0.044715
    %v6024 = vmul.f32 %v5896, 0.044715
    %v6025 = vmul.f32 %v5897, 0.044715
    %v6026 = vmul.f32 %v5898, 0.044715
    %v6027 = vmul.f32 %v5899, 0.044715
    %v6028 = vmul.f32 %v5900, 0.044715
    %v6029 = vmul.f32 %v5901, 0.044715
    %v6030 = vmul.f32 %v5902, 0.044715
    %v6031 = vmul.f32 %v5903, 0.044715
    %v6032 = vmul.f32 %v5904, 0.044715
    %v6033 = vmul.f32 %v5905, 0.044715
    %v6034 = vmul.f32 %v5906, 0.044715
    %v6035 = vmul.f32 %v5907, 0.044715
    %v6036 = vmul.f32 %v5908, 0.044715
    %v6037 = vmul.f32 %v5909, 0.044715
    %v6038 = vmul.f32 %v5910, 0.044715
    %v6039 = vmul.f32 %v5911, 0.044715
    %v6040 = vmul.f32 %v5912, 0.044715
    %v6041 = vmul.f32 %v5913, 0.044715
    %v6042 = vmul.f32 %v5914, 0.044715
    %v6043 = vmul.f32 %v5915, 0.044715
    %v6044 = vmul.f32 %v5916, 0.044715
    %v6045 = vmul.f32 %v5917, 0.044715
    %v6046 = vmul.f32 %v5918, 0.044715
    %v6047 = vmul.f32 %v5919, 0.044715
    %v6048 = vmul.f32 %v5920, 0.044715
    %v6049 = vmul.f32 %v5921, 0.044715
    %v6050 = vmul.f32 %v5922, 0.044715
    %v6051 = vmul.f32 %v5923, 0.044715
    %v6052 = vmul.f32 %v5924, 0.044715
    %v6053 = vmul.f32 %v5925, 0.044715
    %v6054 = vmul.f32 %v5926, 0.044715
    %v6055 = vmul.f32 %v5927, 0.044715
    %v6056 = vmul.f32 %v5928, 0.044715
    %v6057 = vmul.f32 %v5929, 0.044715
    %v6058 = vmul.f32 %v5930, 0.044715
    %v6059 = vmul.f32 %v5931, 0.044715
    %v6060 = vmul.f32 %v5932, 0.044715
    %v6061 = vmul.f32 %v5933, 0.044715
    %v6062 = vmul.f32 %v5934, 0.044715
    %v6063 = vmul.f32 %v5935, 0.044715
    %v6064 = vmul.f32 %v5936, 0.044715
    %v6065 = vmul.f32 %v5937, 0.044715
    %v6066 = vmul.f32 %v5938, 0.044715
    %v6067 = vmul.f32 %v5939, 0.044715
    %v6068 = vmul.f32 %v5940, 0.044715
    %v6069 = vmul.f32 %v5941, 0.044715
    %v6070 = vmul.f32 %v5942, 0.044715
    %v6071 = vmul.f32 %v5943, 0.044715
    %v6072 = vmul.f32 %v5944, 0.044715
    %v6073 = vmul.f32 %v5945, 0.044715
    %v6074 = vmul.f32 %v5946, 0.044715
    %v6075 = vmul.f32 %v5947, 0.044715
    %v6076 = vmul.f32 %v5948, 0.044715
    %v6077 = vmul.f32 %v5949, 0.044715
    %v6078 = vmul.f32 %v5950, 0.044715
    %v6079 = vmul.f32 %v5951, 0.044715
    %v6080 = vmul.f32 %v5952, 0.044715
    %v6081 = vmul.f32 %v5953, 0.044715
    %v6082 = vmul.f32 %v5954, 0.044715
    %v6083 = vmul.f32 %v5955, 0.044715
    %v6084 = vmul.f32 %v5956, 0.044715
    %v6085 = vmul.f32 %v5957, 0.044715
    %v6086 = vmul.f32 %v5958, 0.044715
    %v6087 = vmul.f32 %v5959, 0.044715
    %v6088 = vmul.f32 %v5960, 0.044715
    %v6089 = vmul.f32 %v5961, 0.044715
    %v6090 = vmul.f32 %v5962, 0.044715
    %v6091 = vmul.f32 %v5963, 0.044715
    %v6092 = vmul.f32 %v5964, 0.044715
    %v6093 = vmul.f32 %v5965, 0.044715
    %v6094 = vmul.f32 %v5966, 0.044715
    %v6095 = vmul.f32 %v5967, 0.044715
    %v6096 = vmul.f32 %v5968, 0.044715
    %v6097 = vmul.f32 %v5969, 0.044715
    %v6098 = vmul.f32 %v5970, 0.044715
    %v6099 = vmul.f32 %v5971, 0.044715
    %v6100 = vmul.f32 %v5972, 0.044715
    %v6101 = vmul.f32 %v5973, 0.044715
    %v6102 = vmul.f32 %v5974, 0.044715
    %v6103 = vmul.f32 %v5975, 0.044715
    %v6104 = vmul.f32 %v5976, 0.044715
    %v6105 = vmul.f32 %v5977, 0.044715
    %v6106 = vmul.f32 %v5978, 0.044715
    %v6107 = vmul.f32 %v5979, 0.044715
    %v6108 = vmul.f32 %v5980, 0.044715
    %v6109 = vmul.f32 %v5981, 0.044715
    %v6110 = vmul.f32 %v5982, 0.044715
    %v6111 = vmul.f32 %v5983, 0.044715
    %v6112 = vmul.f32 %v5984, 0.044715
    %v6113 = vmul.f32 %v5985, 0.044715
    %v6114 = vmul.f32 %v5986, 0.044715
    %v6115 = vmul.f32 %v5987, 0.044715
    %v6116 = vmul.f32 %v5988, 0.044715
    %v6117 = vmul.f32 %v5989, 0.044715
    %v6118 = vmul.f32 %v5990, 0.044715
    %v6119 = vmul.f32 %v5991, 0.044715
    %v6120 = vmul.f32 %v5992, 0.044715
    %v6121 = vmul.f32 %v5993, 0.044715
    %v6122 = vmul.f32 %v5994, 0.044715
    %v6123 = vmul.f32 %v5995, 0.044715
    %v6124 = vmul.f32 %v5996, 0.044715
    %v6125 = vmul.f32 %v5997, 0.044715
    %v6126 = vmul.f32 %v5998, 0.044715
    %v6127 = vmul.f32 %v5999, 0.044715
    %v6128 = vmul.f32 %v6000, 0.044715
    %v6129 = vmul.f32 %v6001, 0.044715
    %v6130 = vmul.f32 %v6002, 0.044715
    %v6131 = vmul.f32 %v6003, 0.044715
    %v6132 = vmul.f32 %v6004, 0.044715
    %v6133 = vmul.f32 %v6005, 0.044715
    %v6134 = vmul.f32 %v6006, 0.044715
    %v6135 = vmul.f32 %v6007, 0.044715
    %v6136 = vmul.f32 %v6008, 0.044715
    %v6137 = vmul.f32 %v6009, 0.044715
    %v6138 = vmul.f32 %v6010, 0.044715
    %v6139 = vmul.f32 %v6011, 0.044715
    %v6140 = vmul.f32 %v6012, 0.044715
    %v6141 = vmul.f32 %v6013, 0.044715
    %v6142 = vmul.f32 %v6014, 0.044715
    %v6143 = vmul.f32 %v6015, 0.044715
    %v6144 = vmul.f32 %v6016, 0.044715
    %v6145 = vmul.f32 %v6017, 0.044715
    %v6146 = vmul.f32 %v6018, 0.044715
    %v6147 = vmul.f32 %v6019, 0.044715
    %v6148 = vmul.f32 %v6020, 0.044715
    %v6149 = vmul.f32 %v6021, 0.044715
    %v6150 = vadd.f32 %v5415, %v6022
    %v6151 = vadd.f32 %v5417, %v6023
    %v6152 = vadd.f32 %v5608, %v6024
    %v6153 = vadd.f32 %v5610, %v6025
    %v6154 = vadd.f32 %v5419, %v6026
    %v6155 = vadd.f32 %v5421, %v6027
    %v6156 = vadd.f32 %v5612, %v6028
    %v6157 = vadd.f32 %v5614, %v6029
    %v6158 = vadd.f32 %v5425, %v6030
    %v6159 = vadd.f32 %v5427, %v6031
    %v6160 = vadd.f32 %v5618, %v6032
    %v6161 = vadd.f32 %v5620, %v6033
    %v6162 = vadd.f32 %v5429, %v6034
    %v6163 = vadd.f32 %v5431, %v6035
    %v6164 = vadd.f32 %v5622, %v6036
    %v6165 = vadd.f32 %v5624, %v6037
    %v6166 = vadd.f32 %v5435, %v6038
    %v6167 = vadd.f32 %v5437, %v6039
    %v6168 = vadd.f32 %v5628, %v6040
    %v6169 = vadd.f32 %v5630, %v6041
    %v6170 = vadd.f32 %v5439, %v6042
    %v6171 = vadd.f32 %v5441, %v6043
    %v6172 = vadd.f32 %v5632, %v6044
    %v6173 = vadd.f32 %v5634, %v6045
    %v6174 = vadd.f32 %v5445, %v6046
    %v6175 = vadd.f32 %v5447, %v6047
    %v6176 = vadd.f32 %v5638, %v6048
    %v6177 = vadd.f32 %v5640, %v6049
    %v6178 = vadd.f32 %v5449, %v6050
    %v6179 = vadd.f32 %v5451, %v6051
    %v6180 = vadd.f32 %v5642, %v6052
    %v6181 = vadd.f32 %v5644, %v6053
    %v6182 = vadd.f32 %v5455, %v6054
    %v6183 = vadd.f32 %v5457, %v6055
    %v6184 = vadd.f32 %v5648, %v6056
    %v6185 = vadd.f32 %v5650, %v6057
    %v6186 = vadd.f32 %v5459, %v6058
    %v6187 = vadd.f32 %v5461, %v6059
    %v6188 = vadd.f32 %v5652, %v6060
    %v6189 = vadd.f32 %v5654, %v6061
    %v6190 = vadd.f32 %v5465, %v6062
    %v6191 = vadd.f32 %v5467, %v6063
    %v6192 = vadd.f32 %v5658, %v6064
    %v6193 = vadd.f32 %v5660, %v6065
    %v6194 = vadd.f32 %v5469, %v6066
    %v6195 = vadd.f32 %v5471, %v6067
    %v6196 = vadd.f32 %v5662, %v6068
    %v6197 = vadd.f32 %v5664, %v6069
    %v6198 = vadd.f32 %v5475, %v6070
    %v6199 = vadd.f32 %v5477, %v6071
    %v6200 = vadd.f32 %v5668, %v6072
    %v6201 = vadd.f32 %v5670, %v6073
    %v6202 = vadd.f32 %v5479, %v6074
    %v6203 = vadd.f32 %v5481, %v6075
    %v6204 = vadd.f32 %v5672, %v6076
    %v6205 = vadd.f32 %v5674, %v6077
    %v6206 = vadd.f32 %v5485, %v6078
    %v6207 = vadd.f32 %v5487, %v6079
    %v6208 = vadd.f32 %v5678, %v6080
    %v6209 = vadd.f32 %v5680, %v6081
    %v6210 = vadd.f32 %v5489, %v6082
    %v6211 = vadd.f32 %v5491, %v6083
    %v6212 = vadd.f32 %v5682, %v6084
    %v6213 = vadd.f32 %v5684, %v6085
    %v6214 = vadd.f32 %v5495, %v6086
    %v6215 = vadd.f32 %v5497, %v6087
    %v6216 = vadd.f32 %v5688, %v6088
    %v6217 = vadd.f32 %v5690, %v6089
    %v6218 = vadd.f32 %v5499, %v6090
    %v6219 = vadd.f32 %v5501, %v6091
    %v6220 = vadd.f32 %v5692, %v6092
    %v6221 = vadd.f32 %v5694, %v6093
    %v6222 = vadd.f32 %v5505, %v6094
    %v6223 = vadd.f32 %v5507, %v6095
    %v6224 = vadd.f32 %v5698, %v6096
    %v6225 = vadd.f32 %v5700, %v6097
    %v6226 = vadd.f32 %v5509, %v6098
    %v6227 = vadd.f32 %v5511, %v6099
    %v6228 = vadd.f32 %v5702, %v6100
    %v6229 = vadd.f32 %v5704, %v6101
    %v6230 = vadd.f32 %v5515, %v6102
    %v6231 = vadd.f32 %v5517, %v6103
    %v6232 = vadd.f32 %v5708, %v6104
    %v6233 = vadd.f32 %v5710, %v6105
    %v6234 = vadd.f32 %v5519, %v6106
    %v6235 = vadd.f32 %v5521, %v6107
    %v6236 = vadd.f32 %v5712, %v6108
    %v6237 = vadd.f32 %v5714, %v6109
    %v6238 = vadd.f32 %v5525, %v6110
    %v6239 = vadd.f32 %v5527, %v6111
    %v6240 = vadd.f32 %v5718, %v6112
    %v6241 = vadd.f32 %v5720, %v6113
    %v6242 = vadd.f32 %v5529, %v6114
    %v6243 = vadd.f32 %v5531, %v6115
    %v6244 = vadd.f32 %v5722, %v6116
    %v6245 = vadd.f32 %v5724, %v6117
    %v6246 = vadd.f32 %v5535, %v6118
    %v6247 = vadd.f32 %v5537, %v6119
    %v6248 = vadd.f32 %v5728, %v6120
    %v6249 = vadd.f32 %v5730, %v6121
    %v6250 = vadd.f32 %v5539, %v6122
    %v6251 = vadd.f32 %v5541, %v6123
    %v6252 = vadd.f32 %v5732, %v6124
    %v6253 = vadd.f32 %v5734, %v6125
    %v6254 = vadd.f32 %v5545, %v6126
    %v6255 = vadd.f32 %v5547, %v6127
    %v6256 = vadd.f32 %v5738, %v6128
    %v6257 = vadd.f32 %v5740, %v6129
    %v6258 = vadd.f32 %v5549, %v6130
    %v6259 = vadd.f32 %v5551, %v6131
    %v6260 = vadd.f32 %v5742, %v6132
    %v6261 = vadd.f32 %v5744, %v6133
    %v6262 = vadd.f32 %v5555, %v6134
    %v6263 = vadd.f32 %v5557, %v6135
    %v6264 = vadd.f32 %v5748, %v6136
    %v6265 = vadd.f32 %v5750, %v6137
    %v6266 = vadd.f32 %v5559, %v6138
    %v6267 = vadd.f32 %v5561, %v6139
    %v6268 = vadd.f32 %v5752, %v6140
    %v6269 = vadd.f32 %v5754, %v6141
    %v6270 = vadd.f32 %v5565, %v6142
    %v6271 = vadd.f32 %v5567, %v6143
    %v6272 = vadd.f32 %v5758, %v6144
    %v6273 = vadd.f32 %v5760, %v6145
    %v6274 = vadd.f32 %v5569, %v6146
    %v6275 = vadd.f32 %v5571, %v6147
    %v6276 = vadd.f32 %v5762, %v6148
    %v6277 = vadd.f32 %v5764, %v6149
    %v6278 = vmul.f32 %v6150, 0.7978846
    %v6279 = vmul.f32 %v6151, 0.7978846
    %v6280 = vmul.f32 %v6152, 0.7978846
    %v6281 = vmul.f32 %v6153, 0.7978846
    %v6282 = vmul.f32 %v6154, 0.7978846
    %v6283 = vmul.f32 %v6155, 0.7978846
    %v6284 = vmul.f32 %v6156, 0.7978846
    %v6285 = vmul.f32 %v6157, 0.7978846
    %v6286 = vmul.f32 %v6158, 0.7978846
    %v6287 = vmul.f32 %v6159, 0.7978846
    %v6288 = vmul.f32 %v6160, 0.7978846
    %v6289 = vmul.f32 %v6161, 0.7978846
    %v6290 = vmul.f32 %v6162, 0.7978846
    %v6291 = vmul.f32 %v6163, 0.7978846
    %v6292 = vmul.f32 %v6164, 0.7978846
    %v6293 = vmul.f32 %v6165, 0.7978846
    %v6294 = vmul.f32 %v6166, 0.7978846
    %v6295 = vmul.f32 %v6167, 0.7978846
    %v6296 = vmul.f32 %v6168, 0.7978846
    %v6297 = vmul.f32 %v6169, 0.7978846
    %v6298 = vmul.f32 %v6170, 0.7978846
    %v6299 = vmul.f32 %v6171, 0.7978846
    %v6300 = vmul.f32 %v6172, 0.7978846
    %v6301 = vmul.f32 %v6173, 0.7978846
    %v6302 = vmul.f32 %v6174, 0.7978846
    %v6303 = vmul.f32 %v6175, 0.7978846
    %v6304 = vmul.f32 %v6176, 0.7978846
    %v6305 = vmul.f32 %v6177, 0.7978846
    %v6306 = vmul.f32 %v6178, 0.7978846
    %v6307 = vmul.f32 %v6179, 0.7978846
    %v6308 = vmul.f32 %v6180, 0.7978846
    %v6309 = vmul.f32 %v6181, 0.7978846
    %v6310 = vmul.f32 %v6182, 0.7978846
    %v6311 = vmul.f32 %v6183, 0.7978846
    %v6312 = vmul.f32 %v6184, 0.7978846
    %v6313 = vmul.f32 %v6185, 0.7978846
    %v6314 = vmul.f32 %v6186, 0.7978846
    %v6315 = vmul.f32 %v6187, 0.7978846
    %v6316 = vmul.f32 %v6188, 0.7978846
    %v6317 = vmul.f32 %v6189, 0.7978846
    %v6318 = vmul.f32 %v6190, 0.7978846
    %v6319 = vmul.f32 %v6191, 0.7978846
    %v6320 = vmul.f32 %v6192, 0.7978846
    %v6321 = vmul.f32 %v6193, 0.7978846
    %v6322 = vmul.f32 %v6194, 0.7978846
    %v6323 = vmul.f32 %v6195, 0.7978846
    %v6324 = vmul.f32 %v6196, 0.7978846
    %v6325 = vmul.f32 %v6197, 0.7978846
    %v6326 = vmul.f32 %v6198, 0.7978846
    %v6327 = vmul.f32 %v6199, 0.7978846
    %v6328 = vmul.f32 %v6200, 0.7978846
    %v6329 = vmul.f32 %v6201, 0.7978846
    %v6330 = vmul.f32 %v6202, 0.7978846
    %v6331 = vmul.f32 %v6203, 0.7978846
    %v6332 = vmul.f32 %v6204, 0.7978846
    %v6333 = vmul.f32 %v6205, 0.7978846
    %v6334 = vmul.f32 %v6206, 0.7978846
    %v6335 = vmul.f32 %v6207, 0.7978846
    %v6336 = vmul.f32 %v6208, 0.7978846
    %v6337 = vmul.f32 %v6209, 0.7978846
    %v6338 = vmul.f32 %v6210, 0.7978846
    %v6339 = vmul.f32 %v6211, 0.7978846
    %v6340 = vmul.f32 %v6212, 0.7978846
    %v6341 = vmul.f32 %v6213, 0.7978846
    %v6342 = vmul.f32 %v6214, 0.7978846
    %v6343 = vmul.f32 %v6215, 0.7978846
    %v6344 = vmul.f32 %v6216, 0.7978846
    %v6345 = vmul.f32 %v6217, 0.7978846
    %v6346 = vmul.f32 %v6218, 0.7978846
    %v6347 = vmul.f32 %v6219, 0.7978846
    %v6348 = vmul.f32 %v6220, 0.7978846
    %v6349 = vmul.f32 %v6221, 0.7978846
    %v6350 = vmul.f32 %v6222, 0.7978846
    %v6351 = vmul.f32 %v6223, 0.7978846
    %v6352 = vmul.f32 %v6224, 0.7978846
    %v6353 = vmul.f32 %v6225, 0.7978846
    %v6354 = vmul.f32 %v6226, 0.7978846
    %v6355 = vmul.f32 %v6227, 0.7978846
    %v6356 = vmul.f32 %v6228, 0.7978846
    %v6357 = vmul.f32 %v6229, 0.7978846
    %v6358 = vmul.f32 %v6230, 0.7978846
    %v6359 = vmul.f32 %v6231, 0.7978846
    %v6360 = vmul.f32 %v6232, 0.7978846
    %v6361 = vmul.f32 %v6233, 0.7978846
    %v6362 = vmul.f32 %v6234, 0.7978846
    %v6363 = vmul.f32 %v6235, 0.7978846
    %v6364 = vmul.f32 %v6236, 0.7978846
    %v6365 = vmul.f32 %v6237, 0.7978846
    %v6366 = vmul.f32 %v6238, 0.7978846
    %v6367 = vmul.f32 %v6239, 0.7978846
    %v6368 = vmul.f32 %v6240, 0.7978846
    %v6369 = vmul.f32 %v6241, 0.7978846
    %v6370 = vmul.f32 %v6242, 0.7978846
    %v6371 = vmul.f32 %v6243, 0.7978846
    %v6372 = vmul.f32 %v6244, 0.7978846
    %v6373 = vmul.f32 %v6245, 0.7978846
    %v6374 = vmul.f32 %v6246, 0.7978846
    %v6375 = vmul.f32 %v6247, 0.7978846
    %v6376 = vmul.f32 %v6248, 0.7978846
    %v6377 = vmul.f32 %v6249, 0.7978846
    %v6378 = vmul.f32 %v6250, 0.7978846
    %v6379 = vmul.f32 %v6251, 0.7978846
    %v6380 = vmul.f32 %v6252, 0.7978846
    %v6381 = vmul.f32 %v6253, 0.7978846
    %v6382 = vmul.f32 %v6254, 0.7978846
    %v6383 = vmul.f32 %v6255, 0.7978846
    %v6384 = vmul.f32 %v6256, 0.7978846
    %v6385 = vmul.f32 %v6257, 0.7978846
    %v6386 = vmul.f32 %v6258, 0.7978846
    %v6387 = vmul.f32 %v6259, 0.7978846
    %v6388 = vmul.f32 %v6260, 0.7978846
    %v6389 = vmul.f32 %v6261, 0.7978846
    %v6390 = vmul.f32 %v6262, 0.7978846
    %v6391 = vmul.f32 %v6263, 0.7978846
    %v6392 = vmul.f32 %v6264, 0.7978846
    %v6393 = vmul.f32 %v6265, 0.7978846
    %v6394 = vmul.f32 %v6266, 0.7978846
    %v6395 = vmul.f32 %v6267, 0.7978846
    %v6396 = vmul.f32 %v6268, 0.7978846
    %v6397 = vmul.f32 %v6269, 0.7978846
    %v6398 = vmul.f32 %v6270, 0.7978846
    %v6399 = vmul.f32 %v6271, 0.7978846
    %v6400 = vmul.f32 %v6272, 0.7978846
    %v6401 = vmul.f32 %v6273, 0.7978846
    %v6402 = vmul.f32 %v6274, 0.7978846
    %v6403 = vmul.f32 %v6275, 0.7978846
    %v6404 = vmul.f32 %v6276, 0.7978846
    %v6405 = vmul.f32 %v6277, 0.7978846
    %v6406 = vtanh.pop %v6278
    %v6407 = vtanh.pop %v6279
    %v6408 = vtanh.pop %v6280
    %v6409 = vtanh.pop %v6281
    %v6410 = vtanh.pop %v6282
    %v6411 = vtanh.pop %v6283
    %v6412 = vtanh.pop %v6284
    %v6413 = vtanh.pop %v6285
    %v6414 = vtanh.pop %v6286
    %v6415 = vtanh.pop %v6287
    %v6416 = vtanh.pop %v6288
    %v6417 = vtanh.pop %v6289
    %v6418 = vtanh.pop %v6290
    %v6419 = vtanh.pop %v6291
    %v6420 = vtanh.pop %v6292
    %v6421 = vtanh.pop %v6293
    %v6422 = vtanh.pop %v6294
    %v6423 = vtanh.pop %v6295
    %v6424 = vtanh.pop %v6296
    %v6425 = vtanh.pop %v6297
    %v6426 = vtanh.pop %v6298
    %v6427 = vtanh.pop %v6299
    %v6428 = vtanh.pop %v6300
    %v6429 = vtanh.pop %v6301
    %v6430 = vtanh.pop %v6302
    %v6431 = vtanh.pop %v6303
    %v6432 = vtanh.pop %v6304
    %v6433 = vtanh.pop %v6305
    %v6434 = vtanh.pop %v6306
    %v6435 = vtanh.pop %v6307
    %v6436 = vtanh.pop %v6308
    %v6437 = vtanh.pop %v6309
    %v6438 = vtanh.pop %v6310
    %v6439 = vtanh.pop %v6311
    %v6440 = vtanh.pop %v6312
    %v6441 = vtanh.pop %v6313
    %v6442 = vtanh.pop %v6314
    %v6443 = vtanh.pop %v6315
    %v6444 = vtanh.pop %v6316
    %v6445 = vtanh.pop %v6317
    %v6446 = vtanh.pop %v6318
    %v6447 = vtanh.pop %v6319
    %v6448 = vtanh.pop %v6320
    %v6449 = vtanh.pop %v6321
    %v6450 = vtanh.pop %v6322
    %v6451 = vtanh.pop %v6323
    %v6452 = vtanh.pop %v6324
    %v6453 = vtanh.pop %v6325
    %v6454 = vtanh.pop %v6326
    %v6455 = vtanh.pop %v6327
    %v6456 = vtanh.pop %v6328
    %v6457 = vtanh.pop %v6329
    %v6458 = vtanh.pop %v6330
    %v6459 = vtanh.pop %v6331
    %v6460 = vtanh.pop %v6332
    %v6461 = vtanh.pop %v6333
    %v6462 = vtanh.pop %v6334
    %v6463 = vtanh.pop %v6335
    %v6464 = vtanh.pop %v6336
    %v6465 = vtanh.pop %v6337
    %v6466 = vtanh.pop %v6338
    %v6467 = vtanh.pop %v6339
    %v6468 = vtanh.pop %v6340
    %v6469 = vtanh.pop %v6341
    %v6470 = vtanh.pop %v6342
    %v6471 = vtanh.pop %v6343
    %v6472 = vtanh.pop %v6344
    %v6473 = vtanh.pop %v6345
    %v6474 = vtanh.pop %v6346
    %v6475 = vtanh.pop %v6347
    %v6476 = vtanh.pop %v6348
    %v6477 = vtanh.pop %v6349
    %v6478 = vtanh.pop %v6350
    %v6479 = vtanh.pop %v6351
    %v6480 = vtanh.pop %v6352
    %v6481 = vtanh.pop %v6353
    %v6482 = vtanh.pop %v6354
    %v6483 = vtanh.pop %v6355
    %v6484 = vtanh.pop %v6356
    %v6485 = vtanh.pop %v6357
    %v6486 = vtanh.pop %v6358
    %v6487 = vtanh.pop %v6359
    %v6488 = vtanh.pop %v6360
    %v6489 = vtanh.pop %v6361
    %v6490 = vtanh.pop %v6362
    %v6491 = vtanh.pop %v6363
    %v6492 = vtanh.pop %v6364
    %v6493 = vtanh.pop %v6365
    %v6494 = vtanh.pop %v6366
    %v6495 = vtanh.pop %v6367
    %v6496 = vtanh.pop %v6368
    %v6497 = vtanh.pop %v6369
    %v6498 = vtanh.pop %v6370
    %v6499 = vtanh.pop %v6371
    %v6500 = vtanh.pop %v6372
    %v6501 = vtanh.pop %v6373
    %v6502 = vtanh.pop %v6374
    %v6503 = vtanh.pop %v6375
    %v6504 = vtanh.pop %v6376
    %v6505 = vtanh.pop %v6377
    %v6506 = vtanh.pop %v6378
    %v6507 = vtanh.pop %v6379
    %v6508 = vtanh.pop %v6380
    %v6509 = vtanh.pop %v6381
    %v6510 = vtanh.pop %v6382
    %v6511 = vtanh.pop %v6383
    %v6512 = vtanh.pop %v6384
    %v6513 = vtanh.pop %v6385
    %v6514 = vtanh.pop %v6386
    %v6515 = vtanh.pop %v6387
    %v6516 = vtanh.pop %v6388
    %v6517 = vtanh.pop %v6389
    %v6518 = vtanh.pop %v6390
    %v6519 = vtanh.pop %v6391
    %v6520 = vtanh.pop %v6392
    %v6521 = vtanh.pop %v6393
    %v6522 = vtanh.pop %v6394
    %v6523 = vtanh.pop %v6395
    %v6524 = vtanh.pop %v6396
    %v6525 = vtanh.pop %v6397
    %v6526 = vtanh.pop %v6398
    %v6527 = vtanh.pop %v6399
    %v6528 = vtanh.pop %v6400
    %v6529 = vtanh.pop %v6401
    %v6530 = vtanh.pop %v6402
    %v6531 = vtanh.pop %v6403
    %v6532 = vtanh.pop %v6404
    %v6533 = vtanh.pop %v6405
    %v6534 = vadd.f32 %v6406, 1.0
    %v6535 = vadd.f32 %v6407, 1.0
    %v6536 = vadd.f32 %v6408, 1.0
    %v6537 = vadd.f32 %v6409, 1.0
    %v6538 = vadd.f32 %v6410, 1.0
    %v6539 = vadd.f32 %v6411, 1.0
    %v6540 = vadd.f32 %v6412, 1.0
    %v6541 = vadd.f32 %v6413, 1.0
    %v6542 = vadd.f32 %v6414, 1.0
    %v6543 = vadd.f32 %v6415, 1.0
    %v6544 = vadd.f32 %v6416, 1.0
    %v6545 = vadd.f32 %v6417, 1.0
    %v6546 = vadd.f32 %v6418, 1.0
    %v6547 = vadd.f32 %v6419, 1.0
    %v6548 = vadd.f32 %v6420, 1.0
    %v6549 = vadd.f32 %v6421, 1.0
    %v6550 = vadd.f32 %v6422, 1.0
    %v6551 = vadd.f32 %v6423, 1.0
    %v6552 = vadd.f32 %v6424, 1.0
    %v6553 = vadd.f32 %v6425, 1.0
    %v6554 = vadd.f32 %v6426, 1.0
    %v6555 = vadd.f32 %v6427, 1.0
    %v6556 = vadd.f32 %v6428, 1.0
    %v6557 = vadd.f32 %v6429, 1.0
    %v6558 = vadd.f32 %v6430, 1.0
    %v6559 = vadd.f32 %v6431, 1.0
    %v6560 = vadd.f32 %v6432, 1.0
    %v6561 = vadd.f32 %v6433, 1.0
    %v6562 = vadd.f32 %v6434, 1.0
    %v6563 = vadd.f32 %v6435, 1.0
    %v6564 = vadd.f32 %v6436, 1.0
    %v6565 = vadd.f32 %v6437, 1.0
    %v6566 = vadd.f32 %v6438, 1.0
    %v6567 = vadd.f32 %v6439, 1.0
    %v6568 = vadd.f32 %v6440, 1.0
    %v6569 = vadd.f32 %v6441, 1.0
    %v6570 = vadd.f32 %v6442, 1.0
    %v6571 = vadd.f32 %v6443, 1.0
    %v6572 = vadd.f32 %v6444, 1.0
    %v6573 = vadd.f32 %v6445, 1.0
    %v6574 = vadd.f32 %v6446, 1.0
    %v6575 = vadd.f32 %v6447, 1.0
    %v6576 = vadd.f32 %v6448, 1.0
    %v6577 = vadd.f32 %v6449, 1.0
    %v6578 = vadd.f32 %v6450, 1.0
    %v6579 = vadd.f32 %v6451, 1.0
    %v6580 = vadd.f32 %v6452, 1.0
    %v6581 = vadd.f32 %v6453, 1.0
    %v6582 = vadd.f32 %v6454, 1.0
    %v6583 = vadd.f32 %v6455, 1.0
    %v6584 = vadd.f32 %v6456, 1.0
    %v6585 = vadd.f32 %v6457, 1.0
    %v6586 = vadd.f32 %v6458, 1.0
    %v6587 = vadd.f32 %v6459, 1.0
    %v6588 = vadd.f32 %v6460, 1.0
    %v6589 = vadd.f32 %v6461, 1.0
    %v6590 = vadd.f32 %v6462, 1.0
    %v6591 = vadd.f32 %v6463, 1.0
    %v6592 = vadd.f32 %v6464, 1.0
    %v6593 = vadd.f32 %v6465, 1.0
    %v6594 = vadd.f32 %v6466, 1.0
    %v6595 = vadd.f32 %v6467, 1.0
    %v6596 = vadd.f32 %v6468, 1.0
    %v6597 = vadd.f32 %v6469, 1.0
    %v6598 = vadd.f32 %v6470, 1.0
    %v6599 = vadd.f32 %v6471, 1.0
    %v6600 = vadd.f32 %v6472, 1.0
    %v6601 = vadd.f32 %v6473, 1.0
    %v6602 = vadd.f32 %v6474, 1.0
    %v6603 = vadd.f32 %v6475, 1.0
    %v6604 = vadd.f32 %v6476, 1.0
    %v6605 = vadd.f32 %v6477, 1.0
    %v6606 = vadd.f32 %v6478, 1.0
    %v6607 = vadd.f32 %v6479, 1.0
    %v6608 = vadd.f32 %v6480, 1.0
    %v6609 = vadd.f32 %v6481, 1.0
    %v6610 = vadd.f32 %v6482, 1.0
    %v6611 = vadd.f32 %v6483, 1.0
    %v6612 = vadd.f32 %v6484, 1.0
    %v6613 = vadd.f32 %v6485, 1.0
    %v6614 = vadd.f32 %v6486, 1.0
    %v6615 = vadd.f32 %v6487, 1.0
    %v6616 = vadd.f32 %v6488, 1.0
    %v6617 = vadd.f32 %v6489, 1.0
    %v6618 = vadd.f32 %v6490, 1.0
    %v6619 = vadd.f32 %v6491, 1.0
    %v6620 = vadd.f32 %v6492, 1.0
    %v6621 = vadd.f32 %v6493, 1.0
    %v6622 = vadd.f32 %v6494, 1.0
    %v6623 = vadd.f32 %v6495, 1.0
    %v6624 = vadd.f32 %v6496, 1.0
    %v6625 = vadd.f32 %v6497, 1.0
    %v6626 = vadd.f32 %v6498, 1.0
    %v6627 = vadd.f32 %v6499, 1.0
    %v6628 = vadd.f32 %v6500, 1.0
    %v6629 = vadd.f32 %v6501, 1.0
    %v6630 = vadd.f32 %v6502, 1.0
    %v6631 = vadd.f32 %v6503, 1.0
    %v6632 = vadd.f32 %v6504, 1.0
    %v6633 = vadd.f32 %v6505, 1.0
    %v6634 = vadd.f32 %v6506, 1.0
    %v6635 = vadd.f32 %v6507, 1.0
    %v6636 = vadd.f32 %v6508, 1.0
    %v6637 = vadd.f32 %v6509, 1.0
    %v6638 = vadd.f32 %v6510, 1.0
    %v6639 = vadd.f32 %v6511, 1.0
    %v6640 = vadd.f32 %v6512, 1.0
    %v6641 = vadd.f32 %v6513, 1.0
    %v6642 = vadd.f32 %v6514, 1.0
    %v6643 = vadd.f32 %v6515, 1.0
    %v6644 = vadd.f32 %v6516, 1.0
    %v6645 = vadd.f32 %v6517, 1.0
    %v6646 = vadd.f32 %v6518, 1.0
    %v6647 = vadd.f32 %v6519, 1.0
    %v6648 = vadd.f32 %v6520, 1.0
    %v6649 = vadd.f32 %v6521, 1.0
    %v6650 = vadd.f32 %v6522, 1.0
    %v6651 = vadd.f32 %v6523, 1.0
    %v6652 = vadd.f32 %v6524, 1.0
    %v6653 = vadd.f32 %v6525, 1.0
    %v6654 = vadd.f32 %v6526, 1.0
    %v6655 = vadd.f32 %v6527, 1.0
    %v6656 = vadd.f32 %v6528, 1.0
    %v6657 = vadd.f32 %v6529, 1.0
    %v6658 = vadd.f32 %v6530, 1.0
    %v6659 = vadd.f32 %v6531, 1.0
    %v6660 = vadd.f32 %v6532, 1.0
    %v6661 = vadd.f32 %v6533, 1.0
    %v6662 = vmul.f32 %v6534, 0.5
    %v6663 = vmul.f32 %v6535, 0.5
    %v6664 = vmul.f32 %v6536, 0.5
    %v6665 = vmul.f32 %v6537, 0.5
    %v6666 = vmul.f32 %v6538, 0.5
    %v6667 = vmul.f32 %v6539, 0.5
    %v6668 = vmul.f32 %v6540, 0.5
    %v6669 = vmul.f32 %v6541, 0.5
    %v6670 = vmul.f32 %v6542, 0.5
    %v6671 = vmul.f32 %v6543, 0.5
    %v6672 = vmul.f32 %v6544, 0.5
    %v6673 = vmul.f32 %v6545, 0.5
    %v6674 = vmul.f32 %v6546, 0.5
    %v6675 = vmul.f32 %v6547, 0.5
    %v6676 = vmul.f32 %v6548, 0.5
    %v6677 = vmul.f32 %v6549, 0.5
    %v6678 = vmul.f32 %v6550, 0.5
    %v6679 = vmul.f32 %v6551, 0.5
    %v6680 = vmul.f32 %v6552, 0.5
    %v6681 = vmul.f32 %v6553, 0.5
    %v6682 = vmul.f32 %v6554, 0.5
    %v6683 = vmul.f32 %v6555, 0.5
    %v6684 = vmul.f32 %v6556, 0.5
    %v6685 = vmul.f32 %v6557, 0.5
    %v6686 = vmul.f32 %v6558, 0.5
    %v6687 = vmul.f32 %v6559, 0.5
    %v6688 = vmul.f32 %v6560, 0.5
    %v6689 = vmul.f32 %v6561, 0.5
    %v6690 = vmul.f32 %v6562, 0.5
    %v6691 = vmul.f32 %v6563, 0.5
    %v6692 = vmul.f32 %v6564, 0.5
    %v6693 = vmul.f32 %v6565, 0.5
    %v6694 = vmul.f32 %v6566, 0.5
    %v6695 = vmul.f32 %v6567, 0.5
    %v6696 = vmul.f32 %v6568, 0.5
    %v6697 = vmul.f32 %v6569, 0.5
    %v6698 = vmul.f32 %v6570, 0.5
    %v6699 = vmul.f32 %v6571, 0.5
    %v6700 = vmul.f32 %v6572, 0.5
    %v6701 = vmul.f32 %v6573, 0.5
    %v6702 = vmul.f32 %v6574, 0.5
    %v6703 = vmul.f32 %v6575, 0.5
    %v6704 = vmul.f32 %v6576, 0.5
    %v6705 = vmul.f32 %v6577, 0.5
    %v6706 = vmul.f32 %v6578, 0.5
    %v6707 = vmul.f32 %v6579, 0.5
    %v6708 = vmul.f32 %v6580, 0.5
    %v6709 = vmul.f32 %v6581, 0.5
    %v6710 = vmul.f32 %v6582, 0.5
    %v6711 = vmul.f32 %v6583, 0.5
    %v6712 = vmul.f32 %v6584, 0.5
    %v6713 = vmul.f32 %v6585, 0.5
    %v6714 = vmul.f32 %v6586, 0.5
    %v6715 = vmul.f32 %v6587, 0.5
    %v6716 = vmul.f32 %v6588, 0.5
    %v6717 = vmul.f32 %v6589, 0.5
    %v6718 = vmul.f32 %v6590, 0.5
    %v6719 = vmul.f32 %v6591, 0.5
    %v6720 = vmul.f32 %v6592, 0.5
    %v6721 = vmul.f32 %v6593, 0.5
    %v6722 = vmul.f32 %v6594, 0.5
    %v6723 = vmul.f32 %v6595, 0.5
    %v6724 = vmul.f32 %v6596, 0.5
    %v6725 = vmul.f32 %v6597, 0.5
    %v6726 = vmul.f32 %v6598, 0.5
    %v6727 = vmul.f32 %v6599, 0.5
    %v6728 = vmul.f32 %v6600, 0.5
    %v6729 = vmul.f32 %v6601, 0.5
    %v6730 = vmul.f32 %v6602, 0.5
    %v6731 = vmul.f32 %v6603, 0.5
    %v6732 = vmul.f32 %v6604, 0.5
    %v6733 = vmul.f32 %v6605, 0.5
    %v6734 = vmul.f32 %v6606, 0.5
    %v6735 = vmul.f32 %v6607, 0.5
    %v6736 = vmul.f32 %v6608, 0.5
    %v6737 = vmul.f32 %v6609, 0.5
    %v6738 = vmul.f32 %v6610, 0.5
    %v6739 = vmul.f32 %v6611, 0.5
    %v6740 = vmul.f32 %v6612, 0.5
    %v6741 = vmul.f32 %v6613, 0.5
    %v6742 = vmul.f32 %v6614, 0.5
    %v6743 = vmul.f32 %v6615, 0.5
    %v6744 = vmul.f32 %v6616, 0.5
    %v6745 = vmul.f32 %v6617, 0.5
    %v6746 = vmul.f32 %v6618, 0.5
    %v6747 = vmul.f32 %v6619, 0.5
    %v6748 = vmul.f32 %v6620, 0.5
    %v6749 = vmul.f32 %v6621, 0.5
    %v6750 = vmul.f32 %v6622, 0.5
    %v6751 = vmul.f32 %v6623, 0.5
    %v6752 = vmul.f32 %v6624, 0.5
    %v6753 = vmul.f32 %v6625, 0.5
    %v6754 = vmul.f32 %v6626, 0.5
    %v6755 = vmul.f32 %v6627, 0.5
    %v6756 = vmul.f32 %v6628, 0.5
    %v6757 = vmul.f32 %v6629, 0.5
    %v6758 = vmul.f32 %v6630, 0.5
    %v6759 = vmul.f32 %v6631, 0.5
    %v6760 = vmul.f32 %v6632, 0.5
    %v6761 = vmul.f32 %v6633, 0.5
    %v6762 = vmul.f32 %v6634, 0.5
    %v6763 = vmul.f32 %v6635, 0.5
    %v6764 = vmul.f32 %v6636, 0.5
    %v6765 = vmul.f32 %v6637, 0.5
    %v6766 = vmul.f32 %v6638, 0.5
    %v6767 = vmul.f32 %v6639, 0.5
    %v6768 = vmul.f32 %v6640, 0.5
    %v6769 = vmul.f32 %v6641, 0.5
    %v6770 = vmul.f32 %v6642, 0.5
    %v6771 = vmul.f32 %v6643, 0.5
    %v6772 = vmul.f32 %v6644, 0.5
    %v6773 = vmul.f32 %v6645, 0.5
    %v6774 = vmul.f32 %v6646, 0.5
    %v6775 = vmul.f32 %v6647, 0.5
    %v6776 = vmul.f32 %v6648, 0.5
    %v6777 = vmul.f32 %v6649, 0.5
    %v6778 = vmul.f32 %v6650, 0.5
    %v6779 = vmul.f32 %v6651, 0.5
    %v6780 = vmul.f32 %v6652, 0.5
    %v6781 = vmul.f32 %v6653, 0.5
    %v6782 = vmul.f32 %v6654, 0.5
    %v6783 = vmul.f32 %v6655, 0.5
    %v6784 = vmul.f32 %v6656, 0.5
    %v6785 = vmul.f32 %v6657, 0.5
    %v6786 = vmul.f32 %v6658, 0.5
    %v6787 = vmul.f32 %v6659, 0.5
    %v6788 = vmul.f32 %v6660, 0.5
    %v6789 = vmul.f32 %v6661, 0.5
    %v6790 = vmul.f32 %v5415, %v6662
    %v6791 = vmul.f32 %v5417, %v6663
    %v6792 = vmul.f32 %v5608, %v6664
    %v6793 = vmul.f32 %v5610, %v6665
    %v6794 = vmul.f32 %v5419, %v6666
    %v6795 = vmul.f32 %v5421, %v6667
    %v6796 = vmul.f32 %v5612, %v6668
    %v6797 = vmul.f32 %v5614, %v6669
    %v6798 = vmul.f32 %v5425, %v6670
    %v6799 = vmul.f32 %v5427, %v6671
    %v6800 = vmul.f32 %v5618, %v6672
    %v6801 = vmul.f32 %v5620, %v6673
    %v6802 = vmul.f32 %v5429, %v6674
    %v6803 = vmul.f32 %v5431, %v6675
    %v6804 = vmul.f32 %v5622, %v6676
    %v6805 = vmul.f32 %v5624, %v6677
    %v6806 = vmul.f32 %v5435, %v6678
    %v6807 = vmul.f32 %v5437, %v6679
    %v6808 = vmul.f32 %v5628, %v6680
    %v6809 = vmul.f32 %v5630, %v6681
    %v6810 = vmul.f32 %v5439, %v6682
    %v6811 = vmul.f32 %v5441, %v6683
    %v6812 = vmul.f32 %v5632, %v6684
    %v6813 = vmul.f32 %v5634, %v6685
    %v6814 = vmul.f32 %v5445, %v6686
    %v6815 = vmul.f32 %v5447, %v6687
    %v6816 = vmul.f32 %v5638, %v6688
    %v6817 = vmul.f32 %v5640, %v6689
    %v6818 = vmul.f32 %v5449, %v6690
    %v6819 = vmul.f32 %v5451, %v6691
    %v6820 = vmul.f32 %v5642, %v6692
    %v6821 = vmul.f32 %v5644, %v6693
    %v6822 = vmul.f32 %v5455, %v6694
    %v6823 = vmul.f32 %v5457, %v6695
    %v6824 = vmul.f32 %v5648, %v6696
    %v6825 = vmul.f32 %v5650, %v6697
    %v6826 = vmul.f32 %v5459, %v6698
    %v6827 = vmul.f32 %v5461, %v6699
    %v6828 = vmul.f32 %v5652, %v6700
    %v6829 = vmul.f32 %v5654, %v6701
    %v6830 = vmul.f32 %v5465, %v6702
    %v6831 = vmul.f32 %v5467, %v6703
    %v6832 = vmul.f32 %v5658, %v6704
    %v6833 = vmul.f32 %v5660, %v6705
    %v6834 = vmul.f32 %v5469, %v6706
    %v6835 = vmul.f32 %v5471, %v6707
    %v6836 = vmul.f32 %v5662, %v6708
    %v6837 = vmul.f32 %v5664, %v6709
    %v6838 = vmul.f32 %v5475, %v6710
    %v6839 = vmul.f32 %v5477, %v6711
    %v6840 = vmul.f32 %v5668, %v6712
    %v6841 = vmul.f32 %v5670, %v6713
    %v6842 = vmul.f32 %v5479, %v6714
    %v6843 = vmul.f32 %v5481, %v6715
    %v6844 = vmul.f32 %v5672, %v6716
    %v6845 = vmul.f32 %v5674, %v6717
    %v6846 = vmul.f32 %v5485, %v6718
    %v6847 = vmul.f32 %v5487, %v6719
    %v6848 = vmul.f32 %v5678, %v6720
    %v6849 = vmul.f32 %v5680, %v6721
    %v6850 = vmul.f32 %v5489, %v6722
    %v6851 = vmul.f32 %v5491, %v6723
    %v6852 = vmul.f32 %v5682, %v6724
    %v6853 = vmul.f32 %v5684, %v6725
    %v6854 = vmul.f32 %v5495, %v6726
    %v6855 = vmul.f32 %v5497, %v6727
    %v6856 = vmul.f32 %v5688, %v6728
    %v6857 = vmul.f32 %v5690, %v6729
    %v6858 = vmul.f32 %v5499, %v6730
    %v6859 = vmul.f32 %v5501, %v6731
    %v6860 = vmul.f32 %v5692, %v6732
    %v6861 = vmul.f32 %v5694, %v6733
    %v6862 = vmul.f32 %v5505, %v6734
    %v6863 = vmul.f32 %v5507, %v6735
    %v6864 = vmul.f32 %v5698, %v6736
    %v6865 = vmul.f32 %v5700, %v6737
    %v6866 = vmul.f32 %v5509, %v6738
    %v6867 = vmul.f32 %v5511, %v6739
    %v6868 = vmul.f32 %v5702, %v6740
    %v6869 = vmul.f32 %v5704, %v6741
    %v6870 = vmul.f32 %v5515, %v6742
    %v6871 = vmul.f32 %v5517, %v6743
    %v6872 = vmul.f32 %v5708, %v6744
    %v6873 = vmul.f32 %v5710, %v6745
    %v6874 = vmul.f32 %v5519, %v6746
    %v6875 = vmul.f32 %v5521, %v6747
    %v6876 = vmul.f32 %v5712, %v6748
    %v6877 = vmul.f32 %v5714, %v6749
    %v6878 = vmul.f32 %v5525, %v6750
    %v6879 = vmul.f32 %v5527, %v6751
    %v6880 = vmul.f32 %v5718, %v6752
    %v6881 = vmul.f32 %v5720, %v6753
    %v6882 = vmul.f32 %v5529, %v6754
    %v6883 = vmul.f32 %v5531, %v6755
    %v6884 = vmul.f32 %v5722, %v6756
    %v6885 = vmul.f32 %v5724, %v6757
    %v6886 = vmul.f32 %v5535, %v6758
    %v6887 = vmul.f32 %v5537, %v6759
    %v6888 = vmul.f32 %v5728, %v6760
    %v6889 = vmul.f32 %v5730, %v6761
    %v6890 = vmul.f32 %v5539, %v6762
    %v6891 = vmul.f32 %v5541, %v6763
    %v6892 = vmul.f32 %v5732, %v6764
    %v6893 = vmul.f32 %v5734, %v6765
    %v6894 = vmul.f32 %v5545, %v6766
    %v6895 = vmul.f32 %v5547, %v6767
    %v6896 = vmul.f32 %v5738, %v6768
    %v6897 = vmul.f32 %v5740, %v6769
    %v6898 = vmul.f32 %v5549, %v6770
    %v6899 = vmul.f32 %v5551, %v6771
    %v6900 = vmul.f32 %v5742, %v6772
    %v6901 = vmul.f32 %v5744, %v6773
    %v6902 = vmul.f32 %v5555, %v6774
    %v6903 = vmul.f32 %v5557, %v6775
    %v6904 = vmul.f32 %v5748, %v6776
    %v6905 = vmul.f32 %v5750, %v6777
    %v6906 = vmul.f32 %v5559, %v6778
    %v6907 = vmul.f32 %v5561, %v6779
    %v6908 = vmul.f32 %v5752, %v6780
    %v6909 = vmul.f32 %v5754, %v6781
    %v6910 = vmul.f32 %v5565, %v6782
    %v6911 = vmul.f32 %v5567, %v6783
    %v6912 = vmul.f32 %v5758, %v6784
    %v6913 = vmul.f32 %v5760, %v6785
    %v6914 = vmul.f32 %v5569, %v6786
    %v6915 = vmul.f32 %v5571, %v6787
    %v6916 = vmul.f32 %v5762, %v6788
    %v6917 = vmul.f32 %v5764, %v6789
    %v6918 = vpack.c.bf16 %v6794, %v6790
    %v6919 = vpack.c.bf16 %v6795, %v6791
    %v6920 = vpack.c.bf16 %v6796, %v6792
    %v6921 = vpack.c.bf16 %v6797, %v6793
    %v6922 = vpack.c.bf16 %v6802, %v6798
    %v6923 = vpack.c.bf16 %v6803, %v6799
    %v6924 = vpack.c.bf16 %v6804, %v6800
    %v6925 = vpack.c.bf16 %v6805, %v6801
    %v6926 = vpack.c.bf16 %v6810, %v6806
    %v6927 = vpack.c.bf16 %v6811, %v6807
    %v6928 = vpack.c.bf16 %v6812, %v6808
    %v6929 = vpack.c.bf16 %v6813, %v6809
    %v6930 = vpack.c.bf16 %v6818, %v6814
    %v6931 = vpack.c.bf16 %v6819, %v6815
    %v6932 = vpack.c.bf16 %v6820, %v6816
    %v6933 = vpack.c.bf16 %v6821, %v6817
    %v6934 = vpack.c.bf16 %v6826, %v6822
    %v6935 = vpack.c.bf16 %v6827, %v6823
    %v6936 = vpack.c.bf16 %v6828, %v6824
    %v6937 = vpack.c.bf16 %v6829, %v6825
    %v6938 = vpack.c.bf16 %v6834, %v6830
    %v6939 = vpack.c.bf16 %v6835, %v6831
    %v6940 = vpack.c.bf16 %v6836, %v6832
    %v6941 = vpack.c.bf16 %v6837, %v6833
    %v6942 = vpack.c.bf16 %v6842, %v6838
    %v6943 = vpack.c.bf16 %v6843, %v6839
    %v6944 = vpack.c.bf16 %v6844, %v6840
    %v6945 = vpack.c.bf16 %v6845, %v6841
    %v6946 = vpack.c.bf16 %v6850, %v6846
    %v6947 = vpack.c.bf16 %v6851, %v6847
    %v6948 = vpack.c.bf16 %v6852, %v6848
    %v6949 = vpack.c.bf16 %v6853, %v6849
    %v6950 = vpack.c.bf16 %v6858, %v6854
    %v6951 = vpack.c.bf16 %v6859, %v6855
    %v6952 = vpack.c.bf16 %v6860, %v6856
    %v6953 = vpack.c.bf16 %v6861, %v6857
    %v6954 = vpack.c.bf16 %v6866, %v6862
    %v6955 = vpack.c.bf16 %v6867, %v6863
    %v6956 = vpack.c.bf16 %v6868, %v6864
    %v6957 = vpack.c.bf16 %v6869, %v6865
    %v6958 = vpack.c.bf16 %v6874, %v6870
    %v6959 = vpack.c.bf16 %v6875, %v6871
    %v6960 = vpack.c.bf16 %v6876, %v6872
    %v6961 = vpack.c.bf16 %v6877, %v6873
    %v6962 = vpack.c.bf16 %v6882, %v6878
    %v6963 = vpack.c.bf16 %v6883, %v6879
    %v6964 = vpack.c.bf16 %v6884, %v6880
    %v6965 = vpack.c.bf16 %v6885, %v6881
    %v6966 = vpack.c.bf16 %v6890, %v6886
    %v6967 = vpack.c.bf16 %v6891, %v6887
    %v6968 = vpack.c.bf16 %v6892, %v6888
    %v6969 = vpack.c.bf16 %v6893, %v6889
    %v6970 = vpack.c.bf16 %v6898, %v6894
    %v6971 = vpack.c.bf16 %v6899, %v6895
    %v6972 = vpack.c.bf16 %v6900, %v6896
    %v6973 = vpack.c.bf16 %v6901, %v6897
    %v6974 = vpack.c.bf16 %v6906, %v6902
    %v6975 = vpack.c.bf16 %v6907, %v6903
    %v6976 = vpack.c.bf16 %v6908, %v6904
    %v6977 = vpack.c.bf16 %v6909, %v6905
    %v6978 = vpack.c.bf16 %v6914, %v6910
    %v6979 = vpack.c.bf16 %v6915, %v6911
    %v6980 = vpack.c.bf16 %v6916, %v6912
    %v6981 = vpack.c.bf16 %v6917, %v6913
    %v6982 = vld [vmem:[#allocation12] sm:$0xf]
    %v6983 = vld [vmem:[#allocation12 + $0x4] sm:$0xf]
    %v6984 = vld [vmem:[#allocation12 + $0x8] sm:$0xf]
    %v6985 = vld [vmem:[#allocation12 + $0xc] sm:$0xf]
    %v6986 = vld [vmem:[#allocation12 + $0x10] sm:$0xf]
    %v6987 = vld [vmem:[#allocation12 + $0x14] sm:$0xf]
    %v6988 = vld [vmem:[#allocation12 + $0x18] sm:$0xf]
    %v6989 = vld [vmem:[#allocation12 + $0x1c] sm:$0xf]
    %v6990 = vld [vmem:[#allocation12 + $0x20] sm:$0xf]
    %v6991 = vld [vmem:[#allocation12 + $0x24] sm:$0xf]
    %v6992 = vld [vmem:[#allocation12 + $0x28] sm:$0xf]
    %v6993 = vld [vmem:[#allocation12 + $0x2c] sm:$0xf]
    %v6994 = vld [vmem:[#allocation12 + $0x30] sm:$0xf]
    %v6995 = vld [vmem:[#allocation12 + $0x34] sm:$0xf]
    %v6996 = vld [vmem:[#allocation12 + $0x38] sm:$0xf]
    %v6997 = vld [vmem:[#allocation12 + $0x3c] sm:$0xf]
    %v6998 = vld [vmem:[#allocation12 + $0x40] sm:$0xf]
    %v6999 = vld [vmem:[#allocation12 + $0x44] sm:$0xf]
    %v7000 = vld [vmem:[#allocation12 + $0x48] sm:$0xf]
    %v7001 = vld [vmem:[#allocation12 + $0x4c] sm:$0xf]
    %v7002 = vld [vmem:[#allocation12 + $0x50] sm:$0xf]
    %v7003 = vld [vmem:[#allocation12 + $0x54] sm:$0xf]
    %v7004 = vld [vmem:[#allocation12 + $0x58] sm:$0xf]
    %v7005 = vld [vmem:[#allocation12 + $0x5c] sm:$0xf]
    %v7006 = vld [vmem:[#allocation12 + $0x60] sm:$0xf]
    %v7007 = vld [vmem:[#allocation12 + $0x64] sm:$0xf]
    %v7008 = vld [vmem:[#allocation12 + $0x68] sm:$0xf]
    %v7009 = vld [vmem:[#allocation12 + $0x6c] sm:$0xf]
    %v7010 = vld [vmem:[#allocation12 + $0x70] sm:$0xf]
    %v7011 = vld [vmem:[#allocation12 + $0x74] sm:$0xf]
    %v7012 = vld [vmem:[#allocation12 + $0x78] sm:$0xf]
    %v7013 = vld [vmem:[#allocation12 + $0x7c] sm:$0xf]
    %v7014 = vld [vmem:[#allocation12 + $0x80] sm:$0xf]
    %v7015 = vld [vmem:[#allocation12 + $0x84] sm:$0xf]
    %v7016 = vld [vmem:[#allocation12 + $0x88] sm:$0xf]
    %v7017 = vld [vmem:[#allocation12 + $0x8c] sm:$0xf]
    %v7018 = vld [vmem:[#allocation12 + $0x90] sm:$0xf]
    %v7019 = vld [vmem:[#allocation12 + $0x94] sm:$0xf]
    %v7020 = vld [vmem:[#allocation12 + $0x98] sm:$0xf]
    %v7021 = vld [vmem:[#allocation12 + $0x9c] sm:$0xf]
    %v7022 = vld [vmem:[#allocation12 + $0xa0] sm:$0xf]
    %v7023 = vld [vmem:[#allocation12 + $0xa4] sm:$0xf]
    %v7024 = vld [vmem:[#allocation12 + $0xa8] sm:$0xf]
    %v7025 = vld [vmem:[#allocation12 + $0xac] sm:$0xf]
    %v7026 = vld [vmem:[#allocation12 + $0xb0] sm:$0xf]
    %v7027 = vld [vmem:[#allocation12 + $0xb4] sm:$0xf]
    %v7028 = vld [vmem:[#allocation12 + $0xb8] sm:$0xf]
    %v7029 = vld [vmem:[#allocation12 + $0xbc] sm:$0xf]
    %v7030 = vld [vmem:[#allocation12 + $0xc0] sm:$0xf]
    %v7031 = vld [vmem:[#allocation12 + $0xc4] sm:$0xf]
    %v7032 = vld [vmem:[#allocation12 + $0xc8] sm:$0xf]
    %v7033 = vld [vmem:[#allocation12 + $0xcc] sm:$0xf]
    %v7034 = vld [vmem:[#allocation12 + $0xd0] sm:$0xf]
    %v7035 = vld [vmem:[#allocation12 + $0xd4] sm:$0xf]
    %v7036 = vld [vmem:[#allocation12 + $0xd8] sm:$0xf]
    %v7037 = vld [vmem:[#allocation12 + $0xdc] sm:$0xf]
    %v7038 = vld [vmem:[#allocation12 + $0xe0] sm:$0xf]
    %v7039 = vld [vmem:[#allocation12 + $0xe4] sm:$0xf]
    %v7040 = vld [vmem:[#allocation12 + $0xe8] sm:$0xf]
    %v7041 = vld [vmem:[#allocation12 + $0xec] sm:$0xf]
    %v7042 = vld [vmem:[#allocation12 + $0xf0] sm:$0xf]
    %v7043 = vld [vmem:[#allocation12 + $0xf4] sm:$0xf]
    %v7044 = vld [vmem:[#allocation12 + $0xf8] sm:$0xf]
    %v7045 = vld [vmem:[#allocation12 + $0xfc] sm:$0xf]
    %v7110 = vunpack.c.l.b16 %v6982
    %v7111 = vunpack.c.l.b16 %v6983
    %v7112 = vunpack.c.l.b16 %v6984
    %v7113 = vunpack.c.l.b16 %v6985
    %v7114 = vunpack.c.l.b16 %v6986
    %v7115 = vunpack.c.l.b16 %v6987
    %v7116 = vunpack.c.l.b16 %v6988
    %v7117 = vunpack.c.l.b16 %v6989
    %v7118 = vunpack.c.l.b16 %v6990
    %v7119 = vunpack.c.l.b16 %v6991
    %v7120 = vunpack.c.l.b16 %v6992
    %v7121 = vunpack.c.l.b16 %v6993
    %v7122 = vunpack.c.l.b16 %v6994
    %v7123 = vunpack.c.l.b16 %v6995
    %v7124 = vunpack.c.l.b16 %v6996
    %v7125 = vunpack.c.l.b16 %v6997
    %v7126 = vunpack.c.l.b16 %v6998
    %v7127 = vunpack.c.l.b16 %v6999
    %v7128 = vunpack.c.l.b16 %v7000
    %v7129 = vunpack.c.l.b16 %v7001
    %v7130 = vunpack.c.l.b16 %v7002
    %v7131 = vunpack.c.l.b16 %v7003
    %v7132 = vunpack.c.l.b16 %v7004
    %v7133 = vunpack.c.l.b16 %v7005
    %v7134 = vunpack.c.l.b16 %v7006
    %v7135 = vunpack.c.l.b16 %v7007
    %v7136 = vunpack.c.l.b16 %v7008
    %v7137 = vunpack.c.l.b16 %v7009
    %v7138 = vunpack.c.l.b16 %v7010
    %v7139 = vunpack.c.l.b16 %v7011
    %v7140 = vunpack.c.l.b16 %v7012
    %v7141 = vunpack.c.l.b16 %v7013
    %v7142 = vunpack.c.l.b16 %v7014
    %v7143 = vunpack.c.l.b16 %v7015
    %v7144 = vunpack.c.l.b16 %v7016
    %v7145 = vunpack.c.l.b16 %v7017
    %v7146 = vunpack.c.l.b16 %v7018
    %v7147 = vunpack.c.l.b16 %v7019
    %v7148 = vunpack.c.l.b16 %v7020
    %v7149 = vunpack.c.l.b16 %v7021
    %v7150 = vunpack.c.l.b16 %v7022
    %v7151 = vunpack.c.l.b16 %v7023
    %v7152 = vunpack.c.l.b16 %v7024
    %v7153 = vunpack.c.l.b16 %v7025
    %v7154 = vunpack.c.l.b16 %v7026
    %v7155 = vunpack.c.l.b16 %v7027
    %v7156 = vunpack.c.l.b16 %v7028
    %v7157 = vunpack.c.l.b16 %v7029
    %v7158 = vunpack.c.l.b16 %v7030
    %v7159 = vunpack.c.l.b16 %v7031
    %v7160 = vunpack.c.l.b16 %v7032
    %v7161 = vunpack.c.l.b16 %v7033
    %v7162 = vunpack.c.l.b16 %v7034
    %v7163 = vunpack.c.l.b16 %v7035
    %v7164 = vunpack.c.l.b16 %v7036
    %v7165 = vunpack.c.l.b16 %v7037
    %v7166 = vunpack.c.l.b16 %v7038
    %v7167 = vunpack.c.l.b16 %v7039
    %v7168 = vunpack.c.l.b16 %v7040
    %v7169 = vunpack.c.l.b16 %v7041
    %v7170 = vunpack.c.l.b16 %v7042
    %v7171 = vunpack.c.l.b16 %v7043
    %v7172 = vunpack.c.l.b16 %v7044
    %v7173 = vunpack.c.l.b16 %v7045
    %v7174 = vpack.c.b16 %v7111, %v7110
    %v7175 = vpack.c.b16 %v7113, %v7112
    %v7176 = vpack.c.b16 %v7115, %v7114
    %v7177 = vpack.c.b16 %v7117, %v7116
    %v7178 = vpack.c.b16 %v7119, %v7118
    %v7179 = vpack.c.b16 %v7121, %v7120
    %v7180 = vpack.c.b16 %v7123, %v7122
    %v7181 = vpack.c.b16 %v7125, %v7124
    %v7182 = vpack.c.b16 %v7127, %v7126
    %v7183 = vpack.c.b16 %v7129, %v7128
    %v7184 = vpack.c.b16 %v7131, %v7130
    %v7185 = vpack.c.b16 %v7133, %v7132
    %v7186 = vpack.c.b16 %v7135, %v7134
    %v7187 = vpack.c.b16 %v7137, %v7136
    %v7188 = vpack.c.b16 %v7139, %v7138
    %v7189 = vpack.c.b16 %v7141, %v7140
    %v7190 = vpack.c.b16 %v7143, %v7142
    %v7191 = vpack.c.b16 %v7145, %v7144
    %v7192 = vpack.c.b16 %v7147, %v7146
    %v7193 = vpack.c.b16 %v7149, %v7148
    %v7194 = vpack.c.b16 %v7151, %v7150
    %v7195 = vpack.c.b16 %v7153, %v7152
    %v7196 = vpack.c.b16 %v7155, %v7154
    %v7197 = vpack.c.b16 %v7157, %v7156
    %v7198 = vpack.c.b16 %v7159, %v7158
    %v7199 = vpack.c.b16 %v7161, %v7160
    %v7200 = vpack.c.b16 %v7163, %v7162
    %v7201 = vpack.c.b16 %v7165, %v7164
    %v7202 = vpack.c.b16 %v7167, %v7166
    %v7203 = vpack.c.b16 %v7169, %v7168
    %v7204 = vpack.c.b16 %v7171, %v7170
    %v7205 = vpack.c.b16 %v7173, %v7172
    %7238 = vmatprep.subr.bf16.mxu0 0
    %7239 = vmatpush1.bf16.msra.mxu0 %v7174
    %7240 = vmatprep.subr.bf16.mxu0 0
    %7241 = vmatpush1.bf16.msra.mxu0 %v7175
    %7242 = vmatprep.subr.bf16.mxu0 0
    %7243 = vmatpush1.bf16.msra.mxu0 %v7176
    %7244 = vmatprep.subr.bf16.mxu0 0
    %7245 = vmatpush1.bf16.msra.mxu0 %v7177
    %7246 = vmatprep.subr.bf16.mxu0 0
    %7247 = vmatpush1.bf16.msra.mxu0 %v7178
    %7248 = vmatprep.subr.bf16.mxu0 0
    %7249 = vmatpush1.bf16.msra.mxu0 %v7179
    %7250 = vmatprep.subr.bf16.mxu0 0
    %7251 = vmatpush1.bf16.msra.mxu0 %v7180
    %7252 = vmatprep.subr.bf16.mxu0 0
    %7253 = vmatpush1.bf16.msra.mxu0 %v7181
    %7254 = vmatprep.subr.bf16.mxu0 0
    %7255 = vmatpush1.bf16.msra.mxu0 %v7182
    %7256 = vmatprep.subr.bf16.mxu0 0
    %7257 = vmatpush1.bf16.msra.mxu0 %v7183
    %7258 = vmatprep.subr.bf16.mxu0 0
    %7259 = vmatpush1.bf16.msra.mxu0 %v7184
    %7260 = vmatprep.subr.bf16.mxu0 0
    %7261 = vmatpush1.bf16.msra.mxu0 %v7185
    %7262 = vmatprep.subr.bf16.mxu0 0
    %7263 = vmatpush1.bf16.msra.mxu0 %v7186
    %7264 = vmatprep.subr.bf16.mxu0 0
    %7265 = vmatpush1.bf16.msra.mxu0 %v7187
    %7266 = vmatprep.subr.bf16.mxu0 0
    %7267 = vmatpush1.bf16.msra.mxu0 %v7188
    %7268 = vmatprep.subr.bf16.mxu0 0
    %7269 = vmatpush1.bf16.msra.mxu0 %v7189
    %7270 = vmatprep.mubr.bf16.mxu0 %v6919
    %7271 = vmatmul.mubr.bf16.gmra.mrb[0].mxu0 %v6918
    %v7272 = vpop.f32.mrb[0].mxu0
    %v7273 = vadd.f32 0.0, %v7272
    %v7274 = vpop.f32.mrb[0].mxu0
    %v7275 = vpop.f32.mrb[0].mxu0
    %v7276 = vadd.f32 0.0, %v7275
    %v7277 = vpop.f32.mrb[0].mxu0
    %7278 = vmatprep.mubr.bf16.mxu0 %v6923
    %7279 = vmatmul.mubr.bf16.gmra.mrb[0].mxu0 %v6922
    %v7280 = vpop.f32.mrb[0].mxu0
    %v7281 = vadd.f32 0.0, %v7280
    %v7282 = vpop.f32.mrb[0].mxu0
    %v7283 = vpop.f32.mrb[0].mxu0
    %v7284 = vadd.f32 0.0, %v7283
    %v7285 = vpop.f32.mrb[0].mxu0
    %7286 = vmatprep.mubr.bf16.mxu0 %v6927
    %7287 = vmatmul.mubr.bf16.gmra.mrb[0].mxu0 %v6926
    %v7288 = vpop.f32.mrb[0].mxu0
    %v7289 = vadd.f32 0.0, %v7288
    %v7290 = vpop.f32.mrb[0].mxu0
    %v7291 = vpop.f32.mrb[0].mxu0
    %v7292 = vadd.f32 0.0, %v7291
    %v7293 = vpop.f32.mrb[0].mxu0
    %7294 = vmatprep.mubr.bf16.mxu0 %v6931
    %7295 = vmatmul.mubr.bf16.gmra.mrb[0].mxu0 %v6930
    %v7296 = vpop.f32.mrb[0].mxu0
    %v7297 = vadd.f32 0.0, %v7296
    %v7298 = vpop.f32.mrb[0].mxu0
    %v7299 = vpop.f32.mrb[0].mxu0
    %v7300 = vadd.f32 0.0, %v7299
    %v7301 = vpop.f32.mrb[0].mxu0
    %7302 = vmatprep.mubr.bf16.mxu0 %v6935
    %7303 = vmatmul.mubr.bf16.gmra.mrb[0].mxu0 %v6934
    %v7304 = vpop.f32.mrb[0].mxu0
    %v7305 = vadd.f32 0.0, %v7304
    %v7306 = vpop.f32.mrb[0].mxu0
    %v7307 = vpop.f32.mrb[0].mxu0
    %v7308 = vadd.f32 0.0, %v7307
    %v7309 = vpop.f32.mrb[0].mxu0
    %7310 = vmatprep.mubr.bf16.mxu0 %v6939
    %7311 = vmatmul.mubr.bf16.gmra.mrb[0].mxu0 %v6938
    %v7312 = vpop.f32.mrb[0].mxu0
    %v7313 = vadd.f32 0.0, %v7312
    %v7314 = vpop.f32.mrb[0].mxu0
    %v7315 = vpop.f32.mrb[0].mxu0
    %v7316 = vadd.f32 0.0, %v7315
    %v7317 = vpop.f32.mrb[0].mxu0
    %7318 = vmatprep.mubr.bf16.mxu0 %v6943
    %7319 = vmatmul.mubr.bf16.gmra.mrb[0].mxu0 %v6942
    %v7320 = vpop.f32.mrb[0].mxu0
    %v7321 = vadd.f32 0.0, %v7320
    %v7322 = vpop.f32.mrb[0].mxu0
    %v7323 = vpop.f32.mrb[0].mxu0
    %v7324 = vadd.f32 0.0, %v7323
    %v7325 = vpop.f32.mrb[0].mxu0
    %7326 = vmatprep.mubr.bf16.mxu0 %v6947
    %7327 = vmatmul.mubr.bf16.gmra.mrb[0].mxu0 %v6946
    %v7328 = vpop.f32.mrb[0].mxu0
    %v7329 = vadd.f32 0.0, %v7328
    %v7330 = vpop.f32.mrb[0].mxu0
    %v7331 = vpop.f32.mrb[0].mxu0
    %v7332 = vadd.f32 0.0, %v7331
    %v7333 = vpop.f32.mrb[0].mxu0
    %7334 = vmatprep.mubr.bf16.mxu0 %v6951
    %7335 = vmatmul.mubr.bf16.gmra.mrb[0].mxu0 %v6950
    %v7336 = vpop.f32.mrb[0].mxu0
    %v7337 = vadd.f32 0.0, %v7336
    %v7338 = vpop.f32.mrb[0].mxu0
    %v7339 = vpop.f32.mrb[0].mxu0
    %v7340 = vadd.f32 0.0, %v7339
    %v7341 = vpop.f32.mrb[0].mxu0
    %7342 = vmatprep.mubr.bf16.mxu0 %v6955
    %7343 = vmatmul.mubr.bf16.gmra.mrb[0].mxu0 %v6954
    %v7344 = vpop.f32.mrb[0].mxu0
    %v7345 = vadd.f32 0.0, %v7344
    %v7346 = vpop.f32.mrb[0].mxu0
    %v7347 = vpop.f32.mrb[0].mxu0
    %v7348 = vadd.f32 0.0, %v7347
    %v7349 = vpop.f32.mrb[0].mxu0
    %7350 = vmatprep.mubr.bf16.mxu0 %v6959
    %7351 = vmatmul.mubr.bf16.gmra.mrb[0].mxu0 %v6958
    %v7352 = vpop.f32.mrb[0].mxu0
    %v7353 = vadd.f32 0.0, %v7352
    %v7354 = vpop.f32.mrb[0].mxu0
    %v7355 = vpop.f32.mrb[0].mxu0
    %v7356 = vadd.f32 0.0, %v7355
    %v7357 = vpop.f32.mrb[0].mxu0
    %7358 = vmatprep.mubr.bf16.mxu0 %v6963
    %7359 = vmatmul.mubr.bf16.gmra.mrb[0].mxu0 %v6962
    %v7360 = vpop.f32.mrb[0].mxu0
    %v7361 = vadd.f32 0.0, %v7360
    %v7362 = vpop.f32.mrb[0].mxu0
    %v7363 = vpop.f32.mrb[0].mxu0
    %v7364 = vadd.f32 0.0, %v7363
    %v7365 = vpop.f32.mrb[0].mxu0
    %7366 = vmatprep.mubr.bf16.mxu0 %v6967
    %7367 = vmatmul.mubr.bf16.gmra.mrb[0].mxu0 %v6966
    %v7368 = vpop.f32.mrb[0].mxu0
    %v7369 = vadd.f32 0.0, %v7368
    %v7370 = vpop.f32.mrb[0].mxu0
    %v7371 = vpop.f32.mrb[0].mxu0
    %v7372 = vadd.f32 0.0, %v7371
    %v7373 = vpop.f32.mrb[0].mxu0
    %7374 = vmatprep.mubr.bf16.mxu0 %v6971
    %7375 = vmatmul.mubr.bf16.gmra.mrb[0].mxu0 %v6970
    %v7376 = vpop.f32.mrb[0].mxu0
    %v7377 = vadd.f32 0.0, %v7376
    %v7378 = vpop.f32.mrb[0].mxu0
    %v7379 = vpop.f32.mrb[0].mxu0
    %v7380 = vadd.f32 0.0, %v7379
    %v7381 = vpop.f32.mrb[0].mxu0
    %7382 = vmatprep.mubr.bf16.mxu0 %v6975
    %7383 = vmatmul.mubr.bf16.gmra.mrb[0].mxu0 %v6974
    %v7384 = vpop.f32.mrb[0].mxu0
    %v7385 = vadd.f32 0.0, %v7384
    %v7386 = vpop.f32.mrb[0].mxu0
    %v7387 = vpop.f32.mrb[0].mxu0
    %v7388 = vadd.f32 0.0, %v7387
    %v7389 = vpop.f32.mrb[0].mxu0
    %7390 = vmatprep.mubr.bf16.mxu0 %v6979
    %7391 = vmatmul.mubr.bf16.gmra.mrb[0].mxu0 %v6978
    %v7392 = vpop.f32.mrb[0].mxu0
    %v7393 = vadd.f32 0.0, %v7392
    %v7394 = vpop.f32.mrb[0].mxu0
    %v7395 = vpop.f32.mrb[0].mxu0
    %v7396 = vadd.f32 0.0, %v7395
    %v7397 = vpop.f32.mrb[0].mxu0
    %7398 = vdwg.mxu0
    %7399 = vmatprep.subr.bf16.mxu0 0
    %7400 = vmatpush1.bf16.msra.mxu0 %v7190
    %7401 = vmatprep.subr.bf16.mxu0 0
    %7402 = vmatpush1.bf16.msra.mxu0 %v7191
    %7403 = vmatprep.subr.bf16.mxu0 0
    %7404 = vmatpush1.bf16.msra.mxu0 %v7192
    %7405 = vmatprep.subr.bf16.mxu0 0
    %7406 = vmatpush1.bf16.msra.mxu0 %v7193
    %7407 = vmatprep.subr.bf16.mxu0 0
    %7408 = vmatpush1.bf16.msra.mxu0 %v7194
    %7409 = vmatprep.subr.bf16.mxu0 0
    %7410 = vmatpush1.bf16.msra.mxu0 %v7195
    %7411 = vmatprep.subr.bf16.mxu0 0
    %7412 = vmatpush1.bf16.msra.mxu0 %v7196
    %7413 = vmatprep.subr.bf16.mxu0 0
    %7414 = vmatpush1.bf16.msra.mxu0 %v7197
    %7415 = vmatprep.subr.bf16.mxu0 0
    %7416 = vmatpush1.bf16.msra.mxu0 %v7198
    %7417 = vmatprep.subr.bf16.mxu0 0
    %7418 = vmatpush1.bf16.msra.mxu0 %v7199
    %7419 = vmatprep.subr.bf16.mxu0 0
    %7420 = vmatpush1.bf16.msra.mxu0 %v7200
    %7421 = vmatprep.subr.bf16.mxu0 0
    %7422 = vmatpush1.bf16.msra.mxu0 %v7201
    %7423 = vmatprep.subr.bf16.mxu0 0
    %7424 = vmatpush1.bf16.msra.mxu0 %v7202
    %7425 = vmatprep.subr.bf16.mxu0 0
    %7426 = vmatpush1.bf16.msra.mxu0 %v7203
    %7427 = vmatprep.subr.bf16.mxu0 0
    %7428 = vmatpush1.bf16.msra.mxu0 %v7204
    %7429 = vmatprep.subr.bf16.mxu0 0
    %7430 = vmatpush1.bf16.msra.mxu0 %v7205
    %7431 = vmatprep.mubr.bf16.mxu0 %v6921
    %7432 = vmatmul.mubr.bf16.gmra.mrb[0].mxu0 %v6920
    %v7433 = vpop.f32.mrb[0].mxu0
    %v7434 = vadd.f32 %v7273, %v7433
    %v7435 = vpop.f32.mrb[0].mxu0
    %v7436 = vpop.f32.mrb[0].mxu0
    %v7437 = vadd.f32 %v7276, %v7436
    %v7438 = vpop.f32.mrb[0].mxu0
    %7439 = vmatprep.mubr.bf16.mxu0 %v6925
    %7440 = vmatmul.mubr.bf16.gmra.mrb[0].mxu0 %v6924
    %v7441 = vpop.f32.mrb[0].mxu0
    %v7442 = vadd.f32 %v7281, %v7441
    %v7443 = vpop.f32.mrb[0].mxu0
    %v7444 = vpop.f32.mrb[0].mxu0
    %v7445 = vadd.f32 %v7284, %v7444
    %v7446 = vpop.f32.mrb[0].mxu0
    %7447 = vmatprep.mubr.bf16.mxu0 %v6929
    %7448 = vmatmul.mubr.bf16.gmra.mrb[0].mxu0 %v6928
    %v7449 = vpop.f32.mrb[0].mxu0
    %v7450 = vadd.f32 %v7289, %v7449
    %v7451 = vpop.f32.mrb[0].mxu0
    %v7452 = vpop.f32.mrb[0].mxu0
    %v7453 = vadd.f32 %v7292, %v7452
    %v7454 = vpop.f32.mrb[0].mxu0
    %7455 = vmatprep.mubr.bf16.mxu0 %v6933
    %7456 = vmatmul.mubr.bf16.gmra.mrb[0].mxu0 %v6932
    %v7457 = vpop.f32.mrb[0].mxu0
    %v7458 = vadd.f32 %v7297, %v7457
    %v7459 = vpop.f32.mrb[0].mxu0
    %v7460 = vpop.f32.mrb[0].mxu0
    %v7461 = vadd.f32 %v7300, %v7460
    %v7462 = vpop.f32.mrb[0].mxu0
    %7463 = vmatprep.mubr.bf16.mxu0 %v6937
    %7464 = vmatmul.mubr.bf16.gmra.mrb[0].mxu0 %v6936
    %v7465 = vpop.f32.mrb[0].mxu0
    %v7466 = vadd.f32 %v7305, %v7465
    %v7467 = vpop.f32.mrb[0].mxu0
    %v7468 = vpop.f32.mrb[0].mxu0
    %v7469 = vadd.f32 %v7308, %v7468
    %v7470 = vpop.f32.mrb[0].mxu0
    %7471 = vmatprep.mubr.bf16.mxu0 %v6941
    %7472 = vmatmul.mubr.bf16.gmra.mrb[0].mxu0 %v6940
    %v7473 = vpop.f32.mrb[0].mxu0
    %v7474 = vadd.f32 %v7313, %v7473
    %v7475 = vpop.f32.mrb[0].mxu0
    %v7476 = vpop.f32.mrb[0].mxu0
    %v7477 = vadd.f32 %v7316, %v7476
    %v7478 = vpop.f32.mrb[0].mxu0
    %7479 = vmatprep.mubr.bf16.mxu0 %v6945
    %7480 = vmatmul.mubr.bf16.gmra.mrb[0].mxu0 %v6944
    %v7481 = vpop.f32.mrb[0].mxu0
    %v7482 = vadd.f32 %v7321, %v7481
    %v7483 = vpop.f32.mrb[0].mxu0
    %v7484 = vpop.f32.mrb[0].mxu0
    %v7485 = vadd.f32 %v7324, %v7484
    %v7486 = vpop.f32.mrb[0].mxu0
    %7487 = vmatprep.mubr.bf16.mxu0 %v6949
    %7488 = vmatmul.mubr.bf16.gmra.mrb[0].mxu0 %v6948
    %v7489 = vpop.f32.mrb[0].mxu0
    %v7490 = vadd.f32 %v7329, %v7489
    %v7491 = vpop.f32.mrb[0].mxu0
    %v7492 = vpop.f32.mrb[0].mxu0
    %v7493 = vadd.f32 %v7332, %v7492
    %v7494 = vpop.f32.mrb[0].mxu0
    %7495 = vmatprep.mubr.bf16.mxu0 %v6953
    %7496 = vmatmul.mubr.bf16.gmra.mrb[0].mxu0 %v6952
    %v7497 = vpop.f32.mrb[0].mxu0
    %v7498 = vadd.f32 %v7337, %v7497
    %v7499 = vpop.f32.mrb[0].mxu0
    %v7500 = vpop.f32.mrb[0].mxu0
    %v7501 = vadd.f32 %v7340, %v7500
    %v7502 = vpop.f32.mrb[0].mxu0
    %7503 = vmatprep.mubr.bf16.mxu0 %v6957
    %7504 = vmatmul.mubr.bf16.gmra.mrb[0].mxu0 %v6956
    %v7505 = vpop.f32.mrb[0].mxu0
    %v7506 = vadd.f32 %v7345, %v7505
    %v7507 = vpop.f32.mrb[0].mxu0
    %v7508 = vpop.f32.mrb[0].mxu0
    %v7509 = vadd.f32 %v7348, %v7508
    %v7510 = vpop.f32.mrb[0].mxu0
    %7511 = vmatprep.mubr.bf16.mxu0 %v6961
    %7512 = vmatmul.mubr.bf16.gmra.mrb[0].mxu0 %v6960
    %v7513 = vpop.f32.mrb[0].mxu0
    %v7514 = vadd.f32 %v7353, %v7513
    %v7515 = vpop.f32.mrb[0].mxu0
    %v7516 = vpop.f32.mrb[0].mxu0
    %v7517 = vadd.f32 %v7356, %v7516
    %v7518 = vpop.f32.mrb[0].mxu0
    %7519 = vmatprep.mubr.bf16.mxu0 %v6965
    %7520 = vmatmul.mubr.bf16.gmra.mrb[0].mxu0 %v6964
    %v7521 = vpop.f32.mrb[0].mxu0
    %v7522 = vadd.f32 %v7361, %v7521
    %v7523 = vpop.f32.mrb[0].mxu0
    %v7524 = vpop.f32.mrb[0].mxu0
    %v7525 = vadd.f32 %v7364, %v7524
    %v7526 = vpop.f32.mrb[0].mxu0
    %7527 = vmatprep.mubr.bf16.mxu0 %v6969
    %7528 = vmatmul.mubr.bf16.gmra.mrb[0].mxu0 %v6968
    %v7529 = vpop.f32.mrb[0].mxu0
    %v7530 = vadd.f32 %v7369, %v7529
    %v7531 = vpop.f32.mrb[0].mxu0
    %v7532 = vpop.f32.mrb[0].mxu0
    %v7533 = vadd.f32 %v7372, %v7532
    %v7534 = vpop.f32.mrb[0].mxu0
    %7535 = vmatprep.mubr.bf16.mxu0 %v6973
    %7536 = vmatmul.mubr.bf16.gmra.mrb[0].mxu0 %v6972
    %v7537 = vpop.f32.mrb[0].mxu0
    %v7538 = vadd.f32 %v7377, %v7537
    %v7539 = vpop.f32.mrb[0].mxu0
    %v7540 = vpop.f32.mrb[0].mxu0
    %v7541 = vadd.f32 %v7380, %v7540
    %v7542 = vpop.f32.mrb[0].mxu0
    %7543 = vmatprep.mubr.bf16.mxu0 %v6977
    %7544 = vmatmul.mubr.bf16.gmra.mrb[0].mxu0 %v6976
    %v7545 = vpop.f32.mrb[0].mxu0
    %v7546 = vadd.f32 %v7385, %v7545
    %v7547 = vpop.f32.mrb[0].mxu0
    %v7548 = vpop.f32.mrb[0].mxu0
    %v7549 = vadd.f32 %v7388, %v7548
    %v7550 = vpop.f32.mrb[0].mxu0
    %7551 = vmatprep.mubr.bf16.mxu0 %v6981
    %7552 = vmatmul.mubr.bf16.gmra.mrb[0].mxu0 %v6980
    %v7553 = vpop.f32.mrb[0].mxu0
    %v7554 = vadd.f32 %v7393, %v7553
    %v7555 = vpop.f32.mrb[0].mxu0
    %v7556 = vpop.f32.mrb[0].mxu0
    %v7557 = vadd.f32 %v7396, %v7556
    %v7558 = vpop.f32.mrb[0].mxu0
    %7559 = vdwg.mxu0
    %v7560 = vadd.f32 %v4700, %v7434
    %v7561 = vadd.f32 %v4701, %v7437
    %v7562 = vadd.f32 %v4702, %v7442
    %v7563 = vadd.f32 %v4703, %v7445
    %v7564 = vadd.f32 %v4704, %v7450
    %v7565 = vadd.f32 %v4705, %v7453
    %v7566 = vadd.f32 %v4706, %v7458
    %v7567 = vadd.f32 %v4707, %v7461
    %v7568 = vadd.f32 %v4708, %v7466
    %v7569 = vadd.f32 %v4709, %v7469
    %v7570 = vadd.f32 %v4710, %v7474
    %v7571 = vadd.f32 %v4711, %v7477
    %v7572 = vadd.f32 %v4712, %v7482
    %v7573 = vadd.f32 %v4713, %v7485
    %v7574 = vadd.f32 %v4714, %v7490
    %v7575 = vadd.f32 %v4715, %v7493
    %v7576 = vadd.f32 %v4716, %v7498
    %v7577 = vadd.f32 %v4717, %v7501
    %v7578 = vadd.f32 %v4718, %v7506
    %v7579 = vadd.f32 %v4719, %v7509
    %v7580 = vadd.f32 %v4720, %v7514
    %v7581 = vadd.f32 %v4721, %v7517
    %v7582 = vadd.f32 %v4722, %v7522
    %v7583 = vadd.f32 %v4723, %v7525
    %v7584 = vadd.f32 %v4724, %v7530
    %v7585 = vadd.f32 %v4725, %v7533
    %v7586 = vadd.f32 %v4726, %v7538
    %v7587 = vadd.f32 %v4727, %v7541
    %v7588 = vadd.f32 %v4728, %v7546
    %v7589 = vadd.f32 %v4729, %v7549
    %v7590 = vadd.f32 %v4730, %v7554
    %v7591 = vadd.f32 %v4731, %v7557
    %v7592 = vlaneseq
    %v7593 = vshrl.u32 %v7592, 7
    %v7594 = vsub.s32 7, %v7593
    %v7595 = vrot.slane %v129, %v7594
    %v7596 = vadd.f32 %v7560, %v7595
    %v7597 = vadd.f32 %v7561, %v7595
    %v7598 = vadd.f32 %v7562, %v7595
    %v7599 = vadd.f32 %v7563, %v7595
    %v7600 = vadd.f32 %v7564, %v7595
    %v7601 = vadd.f32 %v7565, %v7595
    %v7602 = vadd.f32 %v7566, %v7595
    %v7603 = vadd.f32 %v7567, %v7595
    %v7604 = vadd.f32 %v7568, %v7595
    %v7605 = vadd.f32 %v7569, %v7595
    %v7606 = vadd.f32 %v7570, %v7595
    %v7607 = vadd.f32 %v7571, %v7595
    %v7608 = vadd.f32 %v7572, %v7595
    %v7609 = vadd.f32 %v7573, %v7595
    %v7610 = vadd.f32 %v7574, %v7595
    %v7611 = vadd.f32 %v7575, %v7595
    %v7612 = vadd.f32 %v7576, %v7595
    %v7613 = vadd.f32 %v7577, %v7595
    %v7614 = vadd.f32 %v7578, %v7595
    %v7615 = vadd.f32 %v7579, %v7595
    %v7616 = vadd.f32 %v7580, %v7595
    %v7617 = vadd.f32 %v7581, %v7595
    %v7618 = vadd.f32 %v7582, %v7595
    %v7619 = vadd.f32 %v7583, %v7595
    %v7620 = vadd.f32 %v7584, %v7595
    %v7621 = vadd.f32 %v7585, %v7595
    %v7622 = vadd.f32 %v7586, %v7595
    %v7623 = vadd.f32 %v7587, %v7595
    %v7624 = vadd.f32 %v7588, %v7595
    %v7625 = vadd.f32 %v7589, %v7595
    %v7626 = vadd.f32 %v7590, %v7595
    %v7627 = vadd.f32 %v7591, %v7595
    %s7628 = smul.u32 0, 32
    %v7629 = vadd.s32 %v2531, 8
    %v7630 = vadd.s32 %v2531, 16
    %v7631 = vadd.s32 %v2531, 24
    %s7632 = sld [smem:[#allocation3 + %s7628]]
    %vm7633 = vcmp.eq.s32.totalorder %v2531, 0
    %vm7634 = vcmp.eq.s32.totalorder %v7629, 0
    %vm7635 = vcmp.eq.s32.totalorder %v7630, 0
    %vm7636 = vcmp.eq.s32.totalorder %v7631, 0
    %v7637 = vstv %s7632
    %vm7638 = vcmp.eq.s32.totalorder %v2533, %v7637
    %vm7639 = vmand %vm7633, %vm7638
    %vm7640 = vmand %vm7634, %vm7638
    %vm7641 = vmand %vm7635, %vm7638
    %vm7642 = vmand %vm7636, %vm7638
    %v7643 = vsel %vm7639, 1.0, 0.0
    %v7644 = vsel %vm7640, 1.0, 0.0
    %v7645 = vsel %vm7641, 1.0, 0.0
    %v7646 = vsel %vm7642, 1.0, 0.0
    %s7647 = sadd.s32 %s7628, 1
    %s7648 = sld [smem:[#allocation3 + %s7647]]
    %vm7649 = vcmp.eq.s32.totalorder %v2531, 1
    %vm7650 = vcmp.eq.s32.totalorder %v7629, 1
    %vm7651 = vcmp.eq.s32.totalorder %v7630, 1
    %vm7652 = vcmp.eq.s32.totalorder %v7631, 1
    %v7653 = vstv %s7648
    %vm7654 = vcmp.eq.s32.totalorder %v2533, %v7653
    %vm7655 = vmand %vm7649, %vm7654
    %vm7656 = vmand %vm7650, %vm7654
    %vm7657 = vmand %vm7651, %vm7654
    %vm7658 = vmand %vm7652, %vm7654
    %v7659 = vsel %vm7655, 1.0, %v7643
    %v7660 = vsel %vm7656, 1.0, %v7644
    %v7661 = vsel %vm7657, 1.0, %v7645
    %v7662 = vsel %vm7658, 1.0, %v7646
    %s7663 = sadd.s32 %s7628, 2
    %s7664 = sld [smem:[#allocation3 + %s7663]]
    %vm7665 = vcmp.eq.s32.totalorder %v2531, 2
    %vm7666 = vcmp.eq.s32.totalorder %v7629, 2
    %vm7667 = vcmp.eq.s32.totalorder %v7630, 2
    %vm7668 = vcmp.eq.s32.totalorder %v7631, 2
    %v7669 = vstv %s7664
    %vm7670 = vcmp.eq.s32.totalorder %v2533, %v7669
    %vm7671 = vmand %vm7665, %vm7670
    %vm7672 = vmand %vm7666, %vm7670
    %vm7673 = vmand %vm7667, %vm7670
    %vm7674 = vmand %vm7668, %vm7670
    %v7675 = vsel %vm7671, 1.0, %v7659
    %v7676 = vsel %vm7672, 1.0, %v7660
    %v7677 = vsel %vm7673, 1.0, %v7661
    %v7678 = vsel %vm7674, 1.0, %v7662
    %s7679 = sadd.s32 %s7628, 3
    %s7680 = sld [smem:[#allocation3 + %s7679]]
    %vm7681 = vcmp.eq.s32.totalorder %v2531, 3
    %vm7682 = vcmp.eq.s32.totalorder %v7629, 3
    %vm7683 = vcmp.eq.s32.totalorder %v7630, 3
    %vm7684 = vcmp.eq.s32.totalorder %v7631, 3
    %v7685 = vstv %s7680
    %vm7686 = vcmp.eq.s32.totalorder %v2533, %v7685
    %vm7687 = vmand %vm7681, %vm7686
    %vm7688 = vmand %vm7682, %vm7686
    %vm7689 = vmand %vm7683, %vm7686
    %vm7690 = vmand %vm7684, %vm7686
    %v7691 = vsel %vm7687, 1.0, %v7675
    %v7692 = vsel %vm7688, 1.0, %v7676
    %v7693 = vsel %vm7689, 1.0, %v7677
    %v7694 = vsel %vm7690, 1.0, %v7678
    %s7695 = sadd.s32 %s7628, 4
    %s7696 = sld [smem:[#allocation3 + %s7695]]
    %vm7697 = vcmp.eq.s32.totalorder %v2531, 4
    %vm7698 = vcmp.eq.s32.totalorder %v7629, 4
    %vm7699 = vcmp.eq.s32.totalorder %v7630, 4
    %vm7700 = vcmp.eq.s32.totalorder %v7631, 4
    %v7701 = vstv %s7696
    %vm7702 = vcmp.eq.s32.totalorder %v2533, %v7701
    %vm7703 = vmand %vm7697, %vm7702
    %vm7704 = vmand %vm7698, %vm7702
    %vm7705 = vmand %vm7699, %vm7702
    %vm7706 = vmand %vm7700, %vm7702
    %v7707 = vsel %vm7703, 1.0, %v7691
    %v7708 = vsel %vm7704, 1.0, %v7692
    %v7709 = vsel %vm7705, 1.0, %v7693
    %v7710 = vsel %vm7706, 1.0, %v7694
    %s7711 = sadd.s32 %s7628, 5
    %s7712 = sld [smem:[#allocation3 + %s7711]]
    %vm7713 = vcmp.eq.s32.totalorder %v2531, 5
    %vm7714 = vcmp.eq.s32.totalorder %v7629, 5
    %vm7715 = vcmp.eq.s32.totalorder %v7630, 5
    %vm7716 = vcmp.eq.s32.totalorder %v7631, 5
    %v7717 = vstv %s7712
    %vm7718 = vcmp.eq.s32.totalorder %v2533, %v7717
    %vm7719 = vmand %vm7713, %vm7718
    %vm7720 = vmand %vm7714, %vm7718
    %vm7721 = vmand %vm7715, %vm7718
    %vm7722 = vmand %vm7716, %vm7718
    %v7723 = vsel %vm7719, 1.0, %v7707
    %v7724 = vsel %vm7720, 1.0, %v7708
    %v7725 = vsel %vm7721, 1.0, %v7709
    %v7726 = vsel %vm7722, 1.0, %v7710
    %s7727 = sadd.s32 %s7628, 6
    %s7728 = sld [smem:[#allocation3 + %s7727]]
    %vm7729 = vcmp.eq.s32.totalorder %v2531, 6
    %vm7730 = vcmp.eq.s32.totalorder %v7629, 6
    %vm7731 = vcmp.eq.s32.totalorder %v7630, 6
    %vm7732 = vcmp.eq.s32.totalorder %v7631, 6
    %v7733 = vstv %s7728
    %vm7734 = vcmp.eq.s32.totalorder %v2533, %v7733
    %vm7735 = vmand %vm7729, %vm7734
    %vm7736 = vmand %vm7730, %vm7734
    %vm7737 = vmand %vm7731, %vm7734
    %vm7738 = vmand %vm7732, %vm7734
    %v7739 = vsel %vm7735, 1.0, %v7723
    %v7740 = vsel %vm7736, 1.0, %v7724
    %v7741 = vsel %vm7737, 1.0, %v7725
    %v7742 = vsel %vm7738, 1.0, %v7726
    %s7743 = sadd.s32 %s7628, 7
    %s7744 = sld [smem:[#allocation3 + %s7743]]
    %vm7745 = vcmp.eq.s32.totalorder %v2531, 7
    %vm7746 = vcmp.eq.s32.totalorder %v7629, 7
    %vm7747 = vcmp.eq.s32.totalorder %v7630, 7
    %vm7748 = vcmp.eq.s32.totalorder %v7631, 7
    %v7749 = vstv %s7744
    %vm7750 = vcmp.eq.s32.totalorder %v2533, %v7749
    %vm7751 = vmand %vm7745, %vm7750
    %vm7752 = vmand %vm7746, %vm7750
    %vm7753 = vmand %vm7747, %vm7750
    %vm7754 = vmand %vm7748, %vm7750
    %v7755 = vsel %vm7751, 1.0, %v7739
    %v7756 = vsel %vm7752, 1.0, %v7740
    %v7757 = vsel %vm7753, 1.0, %v7741
    %v7758 = vsel %vm7754, 1.0, %v7742
    %s7759 = sadd.s32 %s7628, 8
    %s7760 = sld [smem:[#allocation3 + %s7759]]
    %vm7761 = vcmp.eq.s32.totalorder %v2531, 8
    %vm7762 = vcmp.eq.s32.totalorder %v7629, 8
    %vm7763 = vcmp.eq.s32.totalorder %v7630, 8
    %vm7764 = vcmp.eq.s32.totalorder %v7631, 8
    %v7765 = vstv %s7760
    %vm7766 = vcmp.eq.s32.totalorder %v2533, %v7765
    %vm7767 = vmand %vm7761, %vm7766
    %vm7768 = vmand %vm7762, %vm7766
    %vm7769 = vmand %vm7763, %vm7766
    %vm7770 = vmand %vm7764, %vm7766
    %v7771 = vsel %vm7767, 1.0, %v7755
    %v7772 = vsel %vm7768, 1.0, %v7756
    %v7773 = vsel %vm7769, 1.0, %v7757
    %v7774 = vsel %vm7770, 1.0, %v7758
    %s7775 = sadd.s32 %s7628, 9
    %s7776 = sld [smem:[#allocation3 + %s7775]]
    %vm7777 = vcmp.eq.s32.totalorder %v2531, 9
    %vm7778 = vcmp.eq.s32.totalorder %v7629, 9
    %vm7779 = vcmp.eq.s32.totalorder %v7630, 9
    %vm7780 = vcmp.eq.s32.totalorder %v7631, 9
    %v7781 = vstv %s7776
    %vm7782 = vcmp.eq.s32.totalorder %v2533, %v7781
    %vm7783 = vmand %vm7777, %vm7782
    %vm7784 = vmand %vm7778, %vm7782
    %vm7785 = vmand %vm7779, %vm7782
    %vm7786 = vmand %vm7780, %vm7782
    %v7787 = vsel %vm7783, 1.0, %v7771
    %v7788 = vsel %vm7784, 1.0, %v7772
    %v7789 = vsel %vm7785, 1.0, %v7773
    %v7790 = vsel %vm7786, 1.0, %v7774
    %s7791 = sadd.s32 %s7628, 10
    %s7792 = sld [smem:[#allocation3 + %s7791]]
    %vm7793 = vcmp.eq.s32.totalorder %v2531, 10
    %vm7794 = vcmp.eq.s32.totalorder %v7629, 10
    %vm7795 = vcmp.eq.s32.totalorder %v7630, 10
    %vm7796 = vcmp.eq.s32.totalorder %v7631, 10
    %v7797 = vstv %s7792
    %vm7798 = vcmp.eq.s32.totalorder %v2533, %v7797
    %vm7799 = vmand %vm7793, %vm7798
    %vm7800 = vmand %vm7794, %vm7798
    %vm7801 = vmand %vm7795, %vm7798
    %vm7802 = vmand %vm7796, %vm7798
    %v7803 = vsel %vm7799, 1.0, %v7787
    %v7804 = vsel %vm7800, 1.0, %v7788
    %v7805 = vsel %vm7801, 1.0, %v7789
    %v7806 = vsel %vm7802, 1.0, %v7790
    %s7807 = sadd.s32 %s7628, 11
    %s7808 = sld [smem:[#allocation3 + %s7807]]
    %vm7809 = vcmp.eq.s32.totalorder %v2531, 11
    %vm7810 = vcmp.eq.s32.totalorder %v7629, 11
    %vm7811 = vcmp.eq.s32.totalorder %v7630, 11
    %vm7812 = vcmp.eq.s32.totalorder %v7631, 11
    %v7813 = vstv %s7808
    %vm7814 = vcmp.eq.s32.totalorder %v2533, %v7813
    %vm7815 = vmand %vm7809, %vm7814
    %vm7816 = vmand %vm7810, %vm7814
    %vm7817 = vmand %vm7811, %vm7814
    %vm7818 = vmand %vm7812, %vm7814
    %v7819 = vsel %vm7815, 1.0, %v7803
    %v7820 = vsel %vm7816, 1.0, %v7804
    %v7821 = vsel %vm7817, 1.0, %v7805
    %v7822 = vsel %vm7818, 1.0, %v7806
    %s7823 = sadd.s32 %s7628, 12
    %s7824 = sld [smem:[#allocation3 + %s7823]]
    %vm7825 = vcmp.eq.s32.totalorder %v2531, 12
    %vm7826 = vcmp.eq.s32.totalorder %v7629, 12
    %vm7827 = vcmp.eq.s32.totalorder %v7630, 12
    %vm7828 = vcmp.eq.s32.totalorder %v7631, 12
    %v7829 = vstv %s7824
    %vm7830 = vcmp.eq.s32.totalorder %v2533, %v7829
    %vm7831 = vmand %vm7825, %vm7830
    %vm7832 = vmand %vm7826, %vm7830
    %vm7833 = vmand %vm7827, %vm7830
    %vm7834 = vmand %vm7828, %vm7830
    %v7835 = vsel %vm7831, 1.0, %v7819
    %v7836 = vsel %vm7832, 1.0, %v7820
    %v7837 = vsel %vm7833, 1.0, %v7821
    %v7838 = vsel %vm7834, 1.0, %v7822
    %s7839 = sadd.s32 %s7628, 13
    %s7840 = sld [smem:[#allocation3 + %s7839]]
    %vm7841 = vcmp.eq.s32.totalorder %v2531, 13
    %vm7842 = vcmp.eq.s32.totalorder %v7629, 13
    %vm7843 = vcmp.eq.s32.totalorder %v7630, 13
    %vm7844 = vcmp.eq.s32.totalorder %v7631, 13
    %v7845 = vstv %s7840
    %vm7846 = vcmp.eq.s32.totalorder %v2533, %v7845
    %vm7847 = vmand %vm7841, %vm7846
    %vm7848 = vmand %vm7842, %vm7846
    %vm7849 = vmand %vm7843, %vm7846
    %vm7850 = vmand %vm7844, %vm7846
    %v7851 = vsel %vm7847, 1.0, %v7835
    %v7852 = vsel %vm7848, 1.0, %v7836
    %v7853 = vsel %vm7849, 1.0, %v7837
    %v7854 = vsel %vm7850, 1.0, %v7838
    %s7855 = sadd.s32 %s7628, 14
    %s7856 = sld [smem:[#allocation3 + %s7855]]
    %vm7857 = vcmp.eq.s32.totalorder %v2531, 14
    %vm7858 = vcmp.eq.s32.totalorder %v7629, 14
    %vm7859 = vcmp.eq.s32.totalorder %v7630, 14
    %vm7860 = vcmp.eq.s32.totalorder %v7631, 14
    %v7861 = vstv %s7856
    %vm7862 = vcmp.eq.s32.totalorder %v2533, %v7861
    %vm7863 = vmand %vm7857, %vm7862
    %vm7864 = vmand %vm7858, %vm7862
    %vm7865 = vmand %vm7859, %vm7862
    %vm7866 = vmand %vm7860, %vm7862
    %v7867 = vsel %vm7863, 1.0, %v7851
    %v7868 = vsel %vm7864, 1.0, %v7852
    %v7869 = vsel %vm7865, 1.0, %v7853
    %v7870 = vsel %vm7866, 1.0, %v7854
    %s7871 = sadd.s32 %s7628, 15
    %s7872 = sld [smem:[#allocation3 + %s7871]]
    %vm7873 = vcmp.eq.s32.totalorder %v2531, 15
    %vm7874 = vcmp.eq.s32.totalorder %v7629, 15
    %vm7875 = vcmp.eq.s32.totalorder %v7630, 15
    %vm7876 = vcmp.eq.s32.totalorder %v7631, 15
    %v7877 = vstv %s7872
    %vm7878 = vcmp.eq.s32.totalorder %v2533, %v7877
    %vm7879 = vmand %vm7873, %vm7878
    %vm7880 = vmand %vm7874, %vm7878
    %vm7881 = vmand %vm7875, %vm7878
    %vm7882 = vmand %vm7876, %vm7878
    %v7883 = vsel %vm7879, 1.0, %v7867
    %v7884 = vsel %vm7880, 1.0, %v7868
    %v7885 = vsel %vm7881, 1.0, %v7869
    %v7886 = vsel %vm7882, 1.0, %v7870
    %s7887 = sadd.s32 %s7628, 16
    %s7888 = sld [smem:[#allocation3 + %s7887]]
    %vm7889 = vcmp.eq.s32.totalorder %v2531, 16
    %vm7890 = vcmp.eq.s32.totalorder %v7629, 16
    %vm7891 = vcmp.eq.s32.totalorder %v7630, 16
    %vm7892 = vcmp.eq.s32.totalorder %v7631, 16
    %v7893 = vstv %s7888
    %vm7894 = vcmp.eq.s32.totalorder %v2533, %v7893
    %vm7895 = vmand %vm7889, %vm7894
    %vm7896 = vmand %vm7890, %vm7894
    %vm7897 = vmand %vm7891, %vm7894
    %vm7898 = vmand %vm7892, %vm7894
    %v7899 = vsel %vm7895, 1.0, %v7883
    %v7900 = vsel %vm7896, 1.0, %v7884
    %v7901 = vsel %vm7897, 1.0, %v7885
    %v7902 = vsel %vm7898, 1.0, %v7886
    %s7903 = sadd.s32 %s7628, 17
    %s7904 = sld [smem:[#allocation3 + %s7903]]
    %vm7905 = vcmp.eq.s32.totalorder %v2531, 17
    %vm7906 = vcmp.eq.s32.totalorder %v7629, 17
    %vm7907 = vcmp.eq.s32.totalorder %v7630, 17
    %vm7908 = vcmp.eq.s32.totalorder %v7631, 17
    %v7909 = vstv %s7904
    %vm7910 = vcmp.eq.s32.totalorder %v2533, %v7909
    %vm7911 = vmand %vm7905, %vm7910
    %vm7912 = vmand %vm7906, %vm7910
    %vm7913 = vmand %vm7907, %vm7910
    %vm7914 = vmand %vm7908, %vm7910
    %v7915 = vsel %vm7911, 1.0, %v7899
    %v7916 = vsel %vm7912, 1.0, %v7900
    %v7917 = vsel %vm7913, 1.0, %v7901
    %v7918 = vsel %vm7914, 1.0, %v7902
    %s7919 = sadd.s32 %s7628, 18
    %s7920 = sld [smem:[#allocation3 + %s7919]]
    %vm7921 = vcmp.eq.s32.totalorder %v2531, 18
    %vm7922 = vcmp.eq.s32.totalorder %v7629, 18
    %vm7923 = vcmp.eq.s32.totalorder %v7630, 18
    %vm7924 = vcmp.eq.s32.totalorder %v7631, 18
    %v7925 = vstv %s7920
    %vm7926 = vcmp.eq.s32.totalorder %v2533, %v7925
    %vm7927 = vmand %vm7921, %vm7926
    %vm7928 = vmand %vm7922, %vm7926
    %vm7929 = vmand %vm7923, %vm7926
    %vm7930 = vmand %vm7924, %vm7926
    %v7931 = vsel %vm7927, 1.0, %v7915
    %v7932 = vsel %vm7928, 1.0, %v7916
    %v7933 = vsel %vm7929, 1.0, %v7917
    %v7934 = vsel %vm7930, 1.0, %v7918
    %s7935 = sadd.s32 %s7628, 19
    %s7936 = sld [smem:[#allocation3 + %s7935]]
    %vm7937 = vcmp.eq.s32.totalorder %v2531, 19
    %vm7938 = vcmp.eq.s32.totalorder %v7629, 19
    %vm7939 = vcmp.eq.s32.totalorder %v7630, 19
    %vm7940 = vcmp.eq.s32.totalorder %v7631, 19
    %v7941 = vstv %s7936
    %vm7942 = vcmp.eq.s32.totalorder %v2533, %v7941
    %vm7943 = vmand %vm7937, %vm7942
    %vm7944 = vmand %vm7938, %vm7942
    %vm7945 = vmand %vm7939, %vm7942
    %vm7946 = vmand %vm7940, %vm7942
    %v7947 = vsel %vm7943, 1.0, %v7931
    %v7948 = vsel %vm7944, 1.0, %v7932
    %v7949 = vsel %vm7945, 1.0, %v7933
    %v7950 = vsel %vm7946, 1.0, %v7934
    %s7951 = sadd.s32 %s7628, 20
    %s7952 = sld [smem:[#allocation3 + %s7951]]
    %vm7953 = vcmp.eq.s32.totalorder %v2531, 20
    %vm7954 = vcmp.eq.s32.totalorder %v7629, 20
    %vm7955 = vcmp.eq.s32.totalorder %v7630, 20
    %vm7956 = vcmp.eq.s32.totalorder %v7631, 20
    %v7957 = vstv %s7952
    %vm7958 = vcmp.eq.s32.totalorder %v2533, %v7957
    %vm7959 = vmand %vm7953, %vm7958
    %vm7960 = vmand %vm7954, %vm7958
    %vm7961 = vmand %vm7955, %vm7958
    %vm7962 = vmand %vm7956, %vm7958
    %v7963 = vsel %vm7959, 1.0, %v7947
    %v7964 = vsel %vm7960, 1.0, %v7948
    %v7965 = vsel %vm7961, 1.0, %v7949
    %v7966 = vsel %vm7962, 1.0, %v7950
    %s7967 = sadd.s32 %s7628, 21
    %s7968 = sld [smem:[#allocation3 + %s7967]]
    %vm7969 = vcmp.eq.s32.totalorder %v2531, 21
    %vm7970 = vcmp.eq.s32.totalorder %v7629, 21
    %vm7971 = vcmp.eq.s32.totalorder %v7630, 21
    %vm7972 = vcmp.eq.s32.totalorder %v7631, 21
    %v7973 = vstv %s7968
    %vm7974 = vcmp.eq.s32.totalorder %v2533, %v7973
    %vm7975 = vmand %vm7969, %vm7974
    %vm7976 = vmand %vm7970, %vm7974
    %vm7977 = vmand %vm7971, %vm7974
    %vm7978 = vmand %vm7972, %vm7974
    %v7979 = vsel %vm7975, 1.0, %v7963
    %v7980 = vsel %vm7976, 1.0, %v7964
    %v7981 = vsel %vm7977, 1.0, %v7965
    %v7982 = vsel %vm7978, 1.0, %v7966
    %s7983 = sadd.s32 %s7628, 22
    %s7984 = sld [smem:[#allocation3 + %s7983]]
    %vm7985 = vcmp.eq.s32.totalorder %v2531, 22
    %vm7986 = vcmp.eq.s32.totalorder %v7629, 22
    %vm7987 = vcmp.eq.s32.totalorder %v7630, 22
    %vm7988 = vcmp.eq.s32.totalorder %v7631, 22
    %v7989 = vstv %s7984
    %vm7990 = vcmp.eq.s32.totalorder %v2533, %v7989
    %vm7991 = vmand %vm7985, %vm7990
    %vm7992 = vmand %vm7986, %vm7990
    %vm7993 = vmand %vm7987, %vm7990
    %vm7994 = vmand %vm7988, %vm7990
    %v7995 = vsel %vm7991, 1.0, %v7979
    %v7996 = vsel %vm7992, 1.0, %v7980
    %v7997 = vsel %vm7993, 1.0, %v7981
    %v7998 = vsel %vm7994, 1.0, %v7982
    %s7999 = sadd.s32 %s7628, 23
    %s8000 = sld [smem:[#allocation3 + %s7999]]
    %vm8001 = vcmp.eq.s32.totalorder %v2531, 23
    %vm8002 = vcmp.eq.s32.totalorder %v7629, 23
    %vm8003 = vcmp.eq.s32.totalorder %v7630, 23
    %vm8004 = vcmp.eq.s32.totalorder %v7631, 23
    %v8005 = vstv %s8000
    %vm8006 = vcmp.eq.s32.totalorder %v2533, %v8005
    %vm8007 = vmand %vm8001, %vm8006
    %vm8008 = vmand %vm8002, %vm8006
    %vm8009 = vmand %vm8003, %vm8006
    %vm8010 = vmand %vm8004, %vm8006
    %v8011 = vsel %vm8007, 1.0, %v7995
    %v8012 = vsel %vm8008, 1.0, %v7996
    %v8013 = vsel %vm8009, 1.0, %v7997
    %v8014 = vsel %vm8010, 1.0, %v7998
    %s8015 = sadd.s32 %s7628, 24
    %s8016 = sld [smem:[#allocation3 + %s8015]]
    %vm8017 = vcmp.eq.s32.totalorder %v2531, 24
    %vm8018 = vcmp.eq.s32.totalorder %v7629, 24
    %vm8019 = vcmp.eq.s32.totalorder %v7630, 24
    %vm8020 = vcmp.eq.s32.totalorder %v7631, 24
    %v8021 = vstv %s8016
    %vm8022 = vcmp.eq.s32.totalorder %v2533, %v8021
    %vm8023 = vmand %vm8017, %vm8022
    %vm8024 = vmand %vm8018, %vm8022
    %vm8025 = vmand %vm8019, %vm8022
    %vm8026 = vmand %vm8020, %vm8022
    %v8027 = vsel %vm8023, 1.0, %v8011
    %v8028 = vsel %vm8024, 1.0, %v8012
    %v8029 = vsel %vm8025, 1.0, %v8013
    %v8030 = vsel %vm8026, 1.0, %v8014
    %s8031 = sadd.s32 %s7628, 25
    %s8032 = sld [smem:[#allocation3 + %s8031]]
    %vm8033 = vcmp.eq.s32.totalorder %v2531, 25
    %vm8034 = vcmp.eq.s32.totalorder %v7629, 25
    %vm8035 = vcmp.eq.s32.totalorder %v7630, 25
    %vm8036 = vcmp.eq.s32.totalorder %v7631, 25
    %v8037 = vstv %s8032
    %vm8038 = vcmp.eq.s32.totalorder %v2533, %v8037
    %vm8039 = vmand %vm8033, %vm8038
    %vm8040 = vmand %vm8034, %vm8038
    %vm8041 = vmand %vm8035, %vm8038
    %vm8042 = vmand %vm8036, %vm8038
    %v8043 = vsel %vm8039, 1.0, %v8027
    %v8044 = vsel %vm8040, 1.0, %v8028
    %v8045 = vsel %vm8041, 1.0, %v8029
    %v8046 = vsel %vm8042, 1.0, %v8030
    %s8047 = sadd.s32 %s7628, 26
    %s8048 = sld [smem:[#allocation3 + %s8047]]
    %vm8049 = vcmp.eq.s32.totalorder %v2531, 26
    %vm8050 = vcmp.eq.s32.totalorder %v7629, 26
    %vm8051 = vcmp.eq.s32.totalorder %v7630, 26
    %vm8052 = vcmp.eq.s32.totalorder %v7631, 26
    %v8053 = vstv %s8048
    %vm8054 = vcmp.eq.s32.totalorder %v2533, %v8053
    %vm8055 = vmand %vm8049, %vm8054
    %vm8056 = vmand %vm8050, %vm8054
    %vm8057 = vmand %vm8051, %vm8054
    %vm8058 = vmand %vm8052, %vm8054
    %v8059 = vsel %vm8055, 1.0, %v8043
    %v8060 = vsel %vm8056, 1.0, %v8044
    %v8061 = vsel %vm8057, 1.0, %v8045
    %v8062 = vsel %vm8058, 1.0, %v8046
    %s8063 = sadd.s32 %s7628, 27
    %s8064 = sld [smem:[#allocation3 + %s8063]]
    %vm8065 = vcmp.eq.s32.totalorder %v2531, 27
    %vm8066 = vcmp.eq.s32.totalorder %v7629, 27
    %vm8067 = vcmp.eq.s32.totalorder %v7630, 27
    %vm8068 = vcmp.eq.s32.totalorder %v7631, 27
    %v8069 = vstv %s8064
    %vm8070 = vcmp.eq.s32.totalorder %v2533, %v8069
    %vm8071 = vmand %vm8065, %vm8070
    %vm8072 = vmand %vm8066, %vm8070
    %vm8073 = vmand %vm8067, %vm8070
    %vm8074 = vmand %vm8068, %vm8070
    %v8075 = vsel %vm8071, 1.0, %v8059
    %v8076 = vsel %vm8072, 1.0, %v8060
    %v8077 = vsel %vm8073, 1.0, %v8061
    %v8078 = vsel %vm8074, 1.0, %v8062
    %s8079 = sadd.s32 %s7628, 28
    %s8080 = sld [smem:[#allocation3 + %s8079]]
    %vm8081 = vcmp.eq.s32.totalorder %v2531, 28
    %vm8082 = vcmp.eq.s32.totalorder %v7629, 28
    %vm8083 = vcmp.eq.s32.totalorder %v7630, 28
    %vm8084 = vcmp.eq.s32.totalorder %v7631, 28
    %v8085 = vstv %s8080
    %vm8086 = vcmp.eq.s32.totalorder %v2533, %v8085
    %vm8087 = vmand %vm8081, %vm8086
    %vm8088 = vmand %vm8082, %vm8086
    %vm8089 = vmand %vm8083, %vm8086
    %vm8090 = vmand %vm8084, %vm8086
    %v8091 = vsel %vm8087, 1.0, %v8075
    %v8092 = vsel %vm8088, 1.0, %v8076
    %v8093 = vsel %vm8089, 1.0, %v8077
    %v8094 = vsel %vm8090, 1.0, %v8078
    %s8095 = sadd.s32 %s7628, 29
    %s8096 = sld [smem:[#allocation3 + %s8095]]
    %vm8097 = vcmp.eq.s32.totalorder %v2531, 29
    %vm8098 = vcmp.eq.s32.totalorder %v7629, 29
    %vm8099 = vcmp.eq.s32.totalorder %v7630, 29
    %vm8100 = vcmp.eq.s32.totalorder %v7631, 29
    %v8101 = vstv %s8096
    %vm8102 = vcmp.eq.s32.totalorder %v2533, %v8101
    %vm8103 = vmand %vm8097, %vm8102
    %vm8104 = vmand %vm8098, %vm8102
    %vm8105 = vmand %vm8099, %vm8102
    %vm8106 = vmand %vm8100, %vm8102
    %v8107 = vsel %vm8103, 1.0, %v8091
    %v8108 = vsel %vm8104, 1.0, %v8092
    %v8109 = vsel %vm8105, 1.0, %v8093
    %v8110 = vsel %vm8106, 1.0, %v8094
    %s8111 = sadd.s32 %s7628, 30
    %s8112 = sld [smem:[#allocation3 + %s8111]]
    %vm8113 = vcmp.eq.s32.totalorder %v2531, 30
    %vm8114 = vcmp.eq.s32.totalorder %v7629, 30
    %vm8115 = vcmp.eq.s32.totalorder %v7630, 30
    %vm8116 = vcmp.eq.s32.totalorder %v7631, 30
    %v8117 = vstv %s8112
    %vm8118 = vcmp.eq.s32.totalorder %v2533, %v8117
    %vm8119 = vmand %vm8113, %vm8118
    %vm8120 = vmand %vm8114, %vm8118
    %vm8121 = vmand %vm8115, %vm8118
    %vm8122 = vmand %vm8116, %vm8118
    %v8123 = vsel %vm8119, 1.0, %v8107
    %v8124 = vsel %vm8120, 1.0, %v8108
    %v8125 = vsel %vm8121, 1.0, %v8109
    %v8126 = vsel %vm8122, 1.0, %v8110
    %s8127 = sadd.s32 %s7628, 31
    %s8128 = sld [smem:[#allocation3 + %s8127]]
    %vm8129 = vcmp.eq.s32.totalorder %v2531, 31
    %vm8130 = vcmp.eq.s32.totalorder %v7629, 31
    %vm8131 = vcmp.eq.s32.totalorder %v7630, 31
    %vm8132 = vcmp.eq.s32.totalorder %v7631, 31
    %v8133 = vstv %s8128
    %vm8134 = vcmp.eq.s32.totalorder %v2533, %v8133
    %vm8135 = vmand %vm8129, %vm8134
    %vm8136 = vmand %vm8130, %vm8134
    %vm8137 = vmand %vm8131, %vm8134
    %vm8138 = vmand %vm8132, %vm8134
    %v8139 = vsel %vm8135, 1.0, %v8123
    %v8140 = vsel %vm8136, 1.0, %v8124
    %v8141 = vsel %vm8137, 1.0, %v8125
    %v8142 = vsel %vm8138, 1.0, %v8126
    %v8143 = vlaneseq
    %v8144 = vshrl.u32 %v8143, 7
    %v8145 = vsub.s32 0, %v8144
    %v8146 = vrot.slane %v8139, %v8145
    %8148 = vbcast.lane.b32.xlu0 %v8146, 256
    %v8149 = vpop.permute.xlu0 %8148
    %v8150 = vlaneseq
    %v8151 = vshrl.u32 %v8150, 7
    %v8152 = vsub.s32 1, %v8151
    %v8153 = vrot.slane %v8139, %v8152
    %8155 = vbcast.lane.b32.xlu0 %v8153, 256
    %v8156 = vpop.permute.xlu0 %8155
    %v8157 = vlaneseq
    %v8158 = vshrl.u32 %v8157, 7
    %v8159 = vsub.s32 2, %v8158
    %v8160 = vrot.slane %v8139, %v8159
    %8162 = vbcast.lane.b32.xlu0 %v8160, 256
    %v8163 = vpop.permute.xlu0 %8162
    %v8164 = vlaneseq
    %v8165 = vshrl.u32 %v8164, 7
    %v8166 = vsub.s32 3, %v8165
    %v8167 = vrot.slane %v8139, %v8166
    %8169 = vbcast.lane.b32.xlu0 %v8167, 256
    %v8170 = vpop.permute.xlu0 %8169
    %v8171 = vlaneseq
    %v8172 = vshrl.u32 %v8171, 7
    %v8173 = vsub.s32 4, %v8172
    %v8174 = vrot.slane %v8139, %v8173
    %8176 = vbcast.lane.b32.xlu0 %v8174, 256
    %v8177 = vpop.permute.xlu0 %8176
    %v8178 = vlaneseq
    %v8179 = vshrl.u32 %v8178, 7
    %v8180 = vsub.s32 5, %v8179
    %v8181 = vrot.slane %v8139, %v8180
    %8183 = vbcast.lane.b32.xlu0 %v8181, 256
    %v8184 = vpop.permute.xlu0 %8183
    %v8185 = vlaneseq
    %v8186 = vshrl.u32 %v8185, 7
    %v8187 = vsub.s32 6, %v8186
    %v8188 = vrot.slane %v8139, %v8187
    %8190 = vbcast.lane.b32.xlu0 %v8188, 256
    %v8191 = vpop.permute.xlu0 %8190
    %v8192 = vlaneseq
    %v8193 = vshrl.u32 %v8192, 7
    %v8194 = vsub.s32 7, %v8193
    %v8195 = vrot.slane %v8139, %v8194
    %8197 = vbcast.lane.b32.xlu0 %v8195, 256
    %v8198 = vpop.permute.xlu0 %8197
    %v8199 = vlaneseq
    %v8200 = vshrl.u32 %v8199, 7
    %v8201 = vsub.s32 0, %v8200
    %v8202 = vrot.slane %v8140, %v8201
    %8204 = vbcast.lane.b32.xlu0 %v8202, 256
    %v8205 = vpop.permute.xlu0 %8204
    %v8206 = vlaneseq
    %v8207 = vshrl.u32 %v8206, 7
    %v8208 = vsub.s32 1, %v8207
    %v8209 = vrot.slane %v8140, %v8208
    %8211 = vbcast.lane.b32.xlu0 %v8209, 256
    %v8212 = vpop.permute.xlu0 %8211
    %v8213 = vlaneseq
    %v8214 = vshrl.u32 %v8213, 7
    %v8215 = vsub.s32 2, %v8214
    %v8216 = vrot.slane %v8140, %v8215
    %8218 = vbcast.lane.b32.xlu0 %v8216, 256
    %v8219 = vpop.permute.xlu0 %8218
    %v8220 = vlaneseq
    %v8221 = vshrl.u32 %v8220, 7
    %v8222 = vsub.s32 3, %v8221
    %v8223 = vrot.slane %v8140, %v8222
    %8225 = vbcast.lane.b32.xlu0 %v8223, 256
    %v8226 = vpop.permute.xlu0 %8225
    %v8227 = vlaneseq
    %v8228 = vshrl.u32 %v8227, 7
    %v8229 = vsub.s32 4, %v8228
    %v8230 = vrot.slane %v8140, %v8229
    %8232 = vbcast.lane.b32.xlu0 %v8230, 256
    %v8233 = vpop.permute.xlu0 %8232
    %v8234 = vlaneseq
    %v8235 = vshrl.u32 %v8234, 7
    %v8236 = vsub.s32 5, %v8235
    %v8237 = vrot.slane %v8140, %v8236
    %8239 = vbcast.lane.b32.xlu0 %v8237, 256
    %v8240 = vpop.permute.xlu0 %8239
    %v8241 = vlaneseq
    %v8242 = vshrl.u32 %v8241, 7
    %v8243 = vsub.s32 6, %v8242
    %v8244 = vrot.slane %v8140, %v8243
    %8246 = vbcast.lane.b32.xlu0 %v8244, 256
    %v8247 = vpop.permute.xlu0 %8246
    %v8248 = vlaneseq
    %v8249 = vshrl.u32 %v8248, 7
    %v8250 = vsub.s32 7, %v8249
    %v8251 = vrot.slane %v8140, %v8250
    %8253 = vbcast.lane.b32.xlu0 %v8251, 256
    %v8254 = vpop.permute.xlu0 %8253
    %v8255 = vlaneseq
    %v8256 = vshrl.u32 %v8255, 7
    %v8257 = vsub.s32 0, %v8256
    %v8258 = vrot.slane %v8141, %v8257
    %8260 = vbcast.lane.b32.xlu0 %v8258, 256
    %v8261 = vpop.permute.xlu0 %8260
    %v8262 = vlaneseq
    %v8263 = vshrl.u32 %v8262, 7
    %v8264 = vsub.s32 1, %v8263
    %v8265 = vrot.slane %v8141, %v8264
    %8267 = vbcast.lane.b32.xlu0 %v8265, 256
    %v8268 = vpop.permute.xlu0 %8267
    %v8269 = vlaneseq
    %v8270 = vshrl.u32 %v8269, 7
    %v8271 = vsub.s32 2, %v8270
    %v8272 = vrot.slane %v8141, %v8271
    %8274 = vbcast.lane.b32.xlu0 %v8272, 256
    %v8275 = vpop.permute.xlu0 %8274
    %v8276 = vlaneseq
    %v8277 = vshrl.u32 %v8276, 7
    %v8278 = vsub.s32 3, %v8277
    %v8279 = vrot.slane %v8141, %v8278
    %8281 = vbcast.lane.b32.xlu0 %v8279, 256
    %v8282 = vpop.permute.xlu0 %8281
    %v8283 = vlaneseq
    %v8284 = vshrl.u32 %v8283, 7
    %v8285 = vsub.s32 4, %v8284
    %v8286 = vrot.slane %v8141, %v8285
    %8288 = vbcast.lane.b32.xlu0 %v8286, 256
    %v8289 = vpop.permute.xlu0 %8288
    %v8290 = vlaneseq
    %v8291 = vshrl.u32 %v8290, 7
    %v8292 = vsub.s32 5, %v8291
    %v8293 = vrot.slane %v8141, %v8292
    %8295 = vbcast.lane.b32.xlu0 %v8293, 256
    %v8296 = vpop.permute.xlu0 %8295
    %v8297 = vlaneseq
    %v8298 = vshrl.u32 %v8297, 7
    %v8299 = vsub.s32 6, %v8298
    %v8300 = vrot.slane %v8141, %v8299
    %8302 = vbcast.lane.b32.xlu0 %v8300, 256
    %v8303 = vpop.permute.xlu0 %8302
    %v8304 = vlaneseq
    %v8305 = vshrl.u32 %v8304, 7
    %v8306 = vsub.s32 7, %v8305
    %v8307 = vrot.slane %v8141, %v8306
    %8309 = vbcast.lane.b32.xlu0 %v8307, 256
    %v8310 = vpop.permute.xlu0 %8309
    %v8311 = vlaneseq
    %v8312 = vshrl.u32 %v8311, 7
    %v8313 = vsub.s32 0, %v8312
    %v8314 = vrot.slane %v8142, %v8313
    %8316 = vbcast.lane.b32.xlu0 %v8314, 256
    %v8317 = vpop.permute.xlu0 %8316
    %v8318 = vlaneseq
    %v8319 = vshrl.u32 %v8318, 7
    %v8320 = vsub.s32 1, %v8319
    %v8321 = vrot.slane %v8142, %v8320
    %8323 = vbcast.lane.b32.xlu0 %v8321, 256
    %v8324 = vpop.permute.xlu0 %8323
    %v8325 = vlaneseq
    %v8326 = vshrl.u32 %v8325, 7
    %v8327 = vsub.s32 2, %v8326
    %v8328 = vrot.slane %v8142, %v8327
    %8330 = vbcast.lane.b32.xlu0 %v8328, 256
    %v8331 = vpop.permute.xlu0 %8330
    %v8332 = vlaneseq
    %v8333 = vshrl.u32 %v8332, 7
    %v8334 = vsub.s32 3, %v8333
    %v8335 = vrot.slane %v8142, %v8334
    %8337 = vbcast.lane.b32.xlu0 %v8335, 256
    %v8338 = vpop.permute.xlu0 %8337
    %v8339 = vlaneseq
    %v8340 = vshrl.u32 %v8339, 7
    %v8341 = vsub.s32 4, %v8340
    %v8342 = vrot.slane %v8142, %v8341
    %8344 = vbcast.lane.b32.xlu0 %v8342, 256
    %v8345 = vpop.permute.xlu0 %8344
    %v8346 = vlaneseq
    %v8347 = vshrl.u32 %v8346, 7
    %v8348 = vsub.s32 5, %v8347
    %v8349 = vrot.slane %v8142, %v8348
    %8351 = vbcast.lane.b32.xlu0 %v8349, 256
    %v8352 = vpop.permute.xlu0 %8351
    %v8353 = vlaneseq
    %v8354 = vshrl.u32 %v8353, 7
    %v8355 = vsub.s32 6, %v8354
    %v8356 = vrot.slane %v8142, %v8355
    %8358 = vbcast.lane.b32.xlu0 %v8356, 256
    %v8359 = vpop.permute.xlu0 %8358
    %v8360 = vlaneseq
    %v8361 = vshrl.u32 %v8360, 7
    %v8362 = vsub.s32 7, %v8361
    %v8363 = vrot.slane %v8142, %v8362
    %8365 = vbcast.lane.b32.xlu0 %v8363, 256
    %v8366 = vpop.permute.xlu0 %8365
    %v8367 = vmul.f32 %v8149, %v7596
    %v8368 = vmul.f32 %v8156, %v7597
    %v8369 = vmul.f32 %v8163, %v7598
    %v8370 = vmul.f32 %v8170, %v7599
    %v8371 = vmul.f32 %v8177, %v7600
    %v8372 = vmul.f32 %v8184, %v7601
    %v8373 = vmul.f32 %v8191, %v7602
    %v8374 = vmul.f32 %v8198, %v7603
    %v8375 = vmul.f32 %v8205, %v7604
    %v8376 = vmul.f32 %v8212, %v7605
    %v8377 = vmul.f32 %v8219, %v7606
    %v8378 = vmul.f32 %v8226, %v7607
    %v8379 = vmul.f32 %v8233, %v7608
    %v8380 = vmul.f32 %v8240, %v7609
    %v8381 = vmul.f32 %v8247, %v7610
    %v8382 = vmul.f32 %v8254, %v7611
    %v8383 = vmul.f32 %v8261, %v7612
    %v8384 = vmul.f32 %v8268, %v7613
    %v8385 = vmul.f32 %v8275, %v7614
    %v8386 = vmul.f32 %v8282, %v7615
    %v8387 = vmul.f32 %v8289, %v7616
    %v8388 = vmul.f32 %v8296, %v7617
    %v8389 = vmul.f32 %v8303, %v7618
    %v8390 = vmul.f32 %v8310, %v7619
    %v8391 = vmul.f32 %v8317, %v7620
    %v8392 = vmul.f32 %v8324, %v7621
    %v8393 = vmul.f32 %v8331, %v7622
    %v8394 = vmul.f32 %v8338, %v7623
    %v8395 = vmul.f32 %v8345, %v7624
    %v8396 = vmul.f32 %v8352, %v7625
    %v8397 = vmul.f32 %v8359, %v7626
    %v8398 = vmul.f32 %v8366, %v7627
    %v8399 = vrot.slane %v8367, 4
    %v8400 = vadd.f32 %v8367, %v8399
    %v8401 = vrot.slane %v8400, 2
    %v8402 = vadd.f32 %v8400, %v8401
    %v8403 = vrot.slane %v8402, 1
    %v8404 = vadd.f32 %v8402, %v8403
    %v8405 = vrot.slane %v8368, 4
    %v8406 = vadd.f32 %v8368, %v8405
    %v8407 = vrot.slane %v8406, 2
    %v8408 = vadd.f32 %v8406, %v8407
    %v8409 = vrot.slane %v8408, 1
    %v8410 = vadd.f32 %v8408, %v8409
    %v8411 = vrot.slane %v8369, 4
    %v8412 = vadd.f32 %v8369, %v8411
    %v8413 = vrot.slane %v8412, 2
    %v8414 = vadd.f32 %v8412, %v8413
    %v8415 = vrot.slane %v8414, 1
    %v8416 = vadd.f32 %v8414, %v8415
    %v8417 = vrot.slane %v8370, 4
    %v8418 = vadd.f32 %v8370, %v8417
    %v8419 = vrot.slane %v8418, 2
    %v8420 = vadd.f32 %v8418, %v8419
    %v8421 = vrot.slane %v8420, 1
    %v8422 = vadd.f32 %v8420, %v8421
    %v8423 = vrot.slane %v8371, 4
    %v8424 = vadd.f32 %v8371, %v8423
    %v8425 = vrot.slane %v8424, 2
    %v8426 = vadd.f32 %v8424, %v8425
    %v8427 = vrot.slane %v8426, 1
    %v8428 = vadd.f32 %v8426, %v8427
    %v8429 = vrot.slane %v8372, 4
    %v8430 = vadd.f32 %v8372, %v8429
    %v8431 = vrot.slane %v8430, 2
    %v8432 = vadd.f32 %v8430, %v8431
    %v8433 = vrot.slane %v8432, 1
    %v8434 = vadd.f32 %v8432, %v8433
    %v8435 = vrot.slane %v8373, 4
    %v8436 = vadd.f32 %v8373, %v8435
    %v8437 = vrot.slane %v8436, 2
    %v8438 = vadd.f32 %v8436, %v8437
    %v8439 = vrot.slane %v8438, 1
    %v8440 = vadd.f32 %v8438, %v8439
    %v8441 = vrot.slane %v8374, 4
    %v8442 = vadd.f32 %v8374, %v8441
    %v8443 = vrot.slane %v8442, 2
    %v8444 = vadd.f32 %v8442, %v8443
    %v8445 = vrot.slane %v8444, 1
    %v8446 = vadd.f32 %v8444, %v8445
    %v8447 = vrot.slane %v8375, 4
    %v8448 = vadd.f32 %v8375, %v8447
    %v8449 = vrot.slane %v8448, 2
    %v8450 = vadd.f32 %v8448, %v8449
    %v8451 = vrot.slane %v8450, 1
    %v8452 = vadd.f32 %v8450, %v8451
    %v8453 = vrot.slane %v8376, 4
    %v8454 = vadd.f32 %v8376, %v8453
    %v8455 = vrot.slane %v8454, 2
    %v8456 = vadd.f32 %v8454, %v8455
    %v8457 = vrot.slane %v8456, 1
    %v8458 = vadd.f32 %v8456, %v8457
    %v8459 = vrot.slane %v8377, 4
    %v8460 = vadd.f32 %v8377, %v8459
    %v8461 = vrot.slane %v8460, 2
    %v8462 = vadd.f32 %v8460, %v8461
    %v8463 = vrot.slane %v8462, 1
    %v8464 = vadd.f32 %v8462, %v8463
    %v8465 = vrot.slane %v8378, 4
    %v8466 = vadd.f32 %v8378, %v8465
    %v8467 = vrot.slane %v8466, 2
    %v8468 = vadd.f32 %v8466, %v8467
    %v8469 = vrot.slane %v8468, 1
    %v8470 = vadd.f32 %v8468, %v8469
    %v8471 = vrot.slane %v8379, 4
    %v8472 = vadd.f32 %v8379, %v8471
    %v8473 = vrot.slane %v8472, 2
    %v8474 = vadd.f32 %v8472, %v8473
    %v8475 = vrot.slane %v8474, 1
    %v8476 = vadd.f32 %v8474, %v8475
    %v8477 = vrot.slane %v8380, 4
    %v8478 = vadd.f32 %v8380, %v8477
    %v8479 = vrot.slane %v8478, 2
    %v8480 = vadd.f32 %v8478, %v8479
    %v8481 = vrot.slane %v8480, 1
    %v8482 = vadd.f32 %v8480, %v8481
    %v8483 = vrot.slane %v8381, 4
    %v8484 = vadd.f32 %v8381, %v8483
    %v8485 = vrot.slane %v8484, 2
    %v8486 = vadd.f32 %v8484, %v8485
    %v8487 = vrot.slane %v8486, 1
    %v8488 = vadd.f32 %v8486, %v8487
    %v8489 = vrot.slane %v8382, 4
    %v8490 = vadd.f32 %v8382, %v8489
    %v8491 = vrot.slane %v8490, 2
    %v8492 = vadd.f32 %v8490, %v8491
    %v8493 = vrot.slane %v8492, 1
    %v8494 = vadd.f32 %v8492, %v8493
    %v8495 = vrot.slane %v8383, 4
    %v8496 = vadd.f32 %v8383, %v8495
    %v8497 = vrot.slane %v8496, 2
    %v8498 = vadd.f32 %v8496, %v8497
    %v8499 = vrot.slane %v8498, 1
    %v8500 = vadd.f32 %v8498, %v8499
    %v8501 = vrot.slane %v8384, 4
    %v8502 = vadd.f32 %v8384, %v8501
    %v8503 = vrot.slane %v8502, 2
    %v8504 = vadd.f32 %v8502, %v8503
    %v8505 = vrot.slane %v8504, 1
    %v8506 = vadd.f32 %v8504, %v8505
    %v8507 = vrot.slane %v8385, 4
    %v8508 = vadd.f32 %v8385, %v8507
    %v8509 = vrot.slane %v8508, 2
    %v8510 = vadd.f32 %v8508, %v8509
    %v8511 = vrot.slane %v8510, 1
    %v8512 = vadd.f32 %v8510, %v8511
    %v8513 = vrot.slane %v8386, 4
    %v8514 = vadd.f32 %v8386, %v8513
    %v8515 = vrot.slane %v8514, 2
    %v8516 = vadd.f32 %v8514, %v8515
    %v8517 = vrot.slane %v8516, 1
    %v8518 = vadd.f32 %v8516, %v8517
    %v8519 = vrot.slane %v8387, 4
    %v8520 = vadd.f32 %v8387, %v8519
    %v8521 = vrot.slane %v8520, 2
    %v8522 = vadd.f32 %v8520, %v8521
    %v8523 = vrot.slane %v8522, 1
    %v8524 = vadd.f32 %v8522, %v8523
    %v8525 = vrot.slane %v8388, 4
    %v8526 = vadd.f32 %v8388, %v8525
    %v8527 = vrot.slane %v8526, 2
    %v8528 = vadd.f32 %v8526, %v8527
    %v8529 = vrot.slane %v8528, 1
    %v8530 = vadd.f32 %v8528, %v8529
    %v8531 = vrot.slane %v8389, 4
    %v8532 = vadd.f32 %v8389, %v8531
    %v8533 = vrot.slane %v8532, 2
    %v8534 = vadd.f32 %v8532, %v8533
    %v8535 = vrot.slane %v8534, 1
    %v8536 = vadd.f32 %v8534, %v8535
    %v8537 = vrot.slane %v8390, 4
    %v8538 = vadd.f32 %v8390, %v8537
    %v8539 = vrot.slane %v8538, 2
    %v8540 = vadd.f32 %v8538, %v8539
    %v8541 = vrot.slane %v8540, 1
    %v8542 = vadd.f32 %v8540, %v8541
    %v8543 = vrot.slane %v8391, 4
    %v8544 = vadd.f32 %v8391, %v8543
    %v8545 = vrot.slane %v8544, 2
    %v8546 = vadd.f32 %v8544, %v8545
    %v8547 = vrot.slane %v8546, 1
    %v8548 = vadd.f32 %v8546, %v8547
    %v8549 = vrot.slane %v8392, 4
    %v8550 = vadd.f32 %v8392, %v8549
    %v8551 = vrot.slane %v8550, 2
    %v8552 = vadd.f32 %v8550, %v8551
    %v8553 = vrot.slane %v8552, 1
    %v8554 = vadd.f32 %v8552, %v8553
    %v8555 = vrot.slane %v8393, 4
    %v8556 = vadd.f32 %v8393, %v8555
    %v8557 = vrot.slane %v8556, 2
    %v8558 = vadd.f32 %v8556, %v8557
    %v8559 = vrot.slane %v8558, 1
    %v8560 = vadd.f32 %v8558, %v8559
    %v8561 = vrot.slane %v8394, 4
    %v8562 = vadd.f32 %v8394, %v8561
    %v8563 = vrot.slane %v8562, 2
    %v8564 = vadd.f32 %v8562, %v8563
    %v8565 = vrot.slane %v8564, 1
    %v8566 = vadd.f32 %v8564, %v8565
    %v8567 = vrot.slane %v8395, 4
    %v8568 = vadd.f32 %v8395, %v8567
    %v8569 = vrot.slane %v8568, 2
    %v8570 = vadd.f32 %v8568, %v8569
    %v8571 = vrot.slane %v8570, 1
    %v8572 = vadd.f32 %v8570, %v8571
    %v8573 = vrot.slane %v8396, 4
    %v8574 = vadd.f32 %v8396, %v8573
    %v8575 = vrot.slane %v8574, 2
    %v8576 = vadd.f32 %v8574, %v8575
    %v8577 = vrot.slane %v8576, 1
    %v8578 = vadd.f32 %v8576, %v8577
    %v8579 = vrot.slane %v8397, 4
    %v8580 = vadd.f32 %v8397, %v8579
    %v8581 = vrot.slane %v8580, 2
    %v8582 = vadd.f32 %v8580, %v8581
    %v8583 = vrot.slane %v8582, 1
    %v8584 = vadd.f32 %v8582, %v8583
    %v8585 = vrot.slane %v8398, 4
    %v8586 = vadd.f32 %v8398, %v8585
    %v8587 = vrot.slane %v8586, 2
    %v8588 = vadd.f32 %v8586, %v8587
    %v8589 = vrot.slane %v8588, 1
    %v8590 = vadd.f32 %v8588, %v8589
    %vm8623 = vcmask 1041409
    %v8624 = vsel %vm8623, %v8410, %v8404
    %vm8625 = vcmask 1042434
    %v8626 = vsel %vm8625, %v8416, %v8624
    %vm8627 = vcmask 1043459
    %v8628 = vsel %vm8627, %v8422, %v8626
    %vm8629 = vcmask 1044484
    %v8630 = vsel %vm8629, %v8428, %v8628
    %vm8631 = vcmask 1045509
    %v8632 = vsel %vm8631, %v8434, %v8630
    %vm8633 = vcmask 1046534
    %v8634 = vsel %vm8633, %v8440, %v8632
    %vm8635 = vcmask 1047559
    %v8636 = vsel %vm8635, %v8446, %v8634
    %v8637 = vsel %vm8623, %v8458, %v8452
    %v8638 = vsel %vm8625, %v8464, %v8637
    %v8639 = vsel %vm8627, %v8470, %v8638
    %v8640 = vsel %vm8629, %v8476, %v8639
    %v8641 = vsel %vm8631, %v8482, %v8640
    %v8642 = vsel %vm8633, %v8488, %v8641
    %v8643 = vsel %vm8635, %v8494, %v8642
    %v8644 = vsel %vm8623, %v8506, %v8500
    %v8645 = vsel %vm8625, %v8512, %v8644
    %v8646 = vsel %vm8627, %v8518, %v8645
    %v8647 = vsel %vm8629, %v8524, %v8646
    %v8648 = vsel %vm8631, %v8530, %v8647
    %v8649 = vsel %vm8633, %v8536, %v8648
    %v8650 = vsel %vm8635, %v8542, %v8649
    %v8651 = vsel %vm8623, %v8554, %v8548
    %v8652 = vsel %vm8625, %v8560, %v8651
    %v8653 = vsel %vm8627, %v8566, %v8652
    %v8654 = vsel %vm8629, %v8572, %v8653
    %v8655 = vsel %vm8631, %v8578, %v8654
    %v8656 = vsel %vm8633, %v8584, %v8655
    %v8657 = vsel %vm8635, %v8590, %v8656
    %8662 = vadd.xlane.f32.xlu0 %v8636
    %v8663 = vpop.xlane.xlu0 %8662
    %8664 = vadd.xlane.f32.xlu0 %v8643
    %v8665 = vpop.xlane.xlu0 %8664
    %8666 = vadd.xlane.f32.xlu0 %v8650
    %v8667 = vpop.xlane.xlu0 %8666
    %8668 = vadd.xlane.f32.xlu0 %v8657
    %v8669 = vpop.xlane.xlu0 %8668
    %v8670 = vmul.f32 %v8663, %v295
    %v8671 = vmul.f32 %v8665, %v295
    %v8672 = vmul.f32 %v8667, %v295
    %v8673 = vmul.f32 %v8669, %v295
    %v8678 = vrot.slane %v8670, 1
    %v8679 = vrot.slane %v8670, 2
    %v8680 = vrot.slane %v8670, 3
    %v8681 = vrot.slane %v8670, 4
    %v8682 = vrot.slane %v8670, 5
    %v8683 = vrot.slane %v8670, 6
    %v8684 = vrot.slane %v8670, 7
    %v8685 = vrot.slane %v8671, 1
    %v8686 = vrot.slane %v8671, 2
    %v8687 = vrot.slane %v8671, 3
    %v8688 = vrot.slane %v8671, 4
    %v8689 = vrot.slane %v8671, 5
    %v8690 = vrot.slane %v8671, 6
    %v8691 = vrot.slane %v8671, 7
    %v8692 = vrot.slane %v8672, 1
    %v8693 = vrot.slane %v8672, 2
    %v8694 = vrot.slane %v8672, 3
    %v8695 = vrot.slane %v8672, 4
    %v8696 = vrot.slane %v8672, 5
    %v8697 = vrot.slane %v8672, 6
    %v8698 = vrot.slane %v8672, 7
    %v8699 = vrot.slane %v8673, 1
    %v8700 = vrot.slane %v8673, 2
    %v8701 = vrot.slane %v8673, 3
    %v8702 = vrot.slane %v8673, 4
    %v8703 = vrot.slane %v8673, 5
    %v8704 = vrot.slane %v8673, 6
    %v8705 = vrot.slane %v8673, 7
    %v8738 = vsub.f32 %v8404, %v8670
    %v8739 = vsub.f32 %v8410, %v8678
    %v8740 = vsub.f32 %v8416, %v8679
    %v8741 = vsub.f32 %v8422, %v8680
    %v8742 = vsub.f32 %v8428, %v8681
    %v8743 = vsub.f32 %v8434, %v8682
    %v8744 = vsub.f32 %v8440, %v8683
    %v8745 = vsub.f32 %v8446, %v8684
    %v8746 = vsub.f32 %v8452, %v8671
    %v8747 = vsub.f32 %v8458, %v8685
    %v8748 = vsub.f32 %v8464, %v8686
    %v8749 = vsub.f32 %v8470, %v8687
    %v8750 = vsub.f32 %v8476, %v8688
    %v8751 = vsub.f32 %v8482, %v8689
    %v8752 = vsub.f32 %v8488, %v8690
    %v8753 = vsub.f32 %v8494, %v8691
    %v8754 = vsub.f32 %v8500, %v8672
    %v8755 = vsub.f32 %v8506, %v8692
    %v8756 = vsub.f32 %v8512, %v8693
    %v8757 = vsub.f32 %v8518, %v8694
    %v8758 = vsub.f32 %v8524, %v8695
    %v8759 = vsub.f32 %v8530, %v8696
    %v8760 = vsub.f32 %v8536, %v8697
    %v8761 = vsub.f32 %v8542, %v8698
    %v8762 = vsub.f32 %v8548, %v8673
    %v8763 = vsub.f32 %v8554, %v8699
    %v8764 = vsub.f32 %v8560, %v8700
    %v8765 = vsub.f32 %v8566, %v8701
    %v8766 = vsub.f32 %v8572, %v8702
    %v8767 = vsub.f32 %v8578, %v8703
    %v8768 = vsub.f32 %v8584, %v8704
    %v8769 = vsub.f32 %v8590, %v8705
    %v8770 = vmul.f32 %v8738, %v8738
    %v8771 = vmul.f32 %v8739, %v8739
    %v8772 = vmul.f32 %v8740, %v8740
    %v8773 = vmul.f32 %v8741, %v8741
    %v8774 = vmul.f32 %v8742, %v8742
    %v8775 = vmul.f32 %v8743, %v8743
    %v8776 = vmul.f32 %v8744, %v8744
    %v8777 = vmul.f32 %v8745, %v8745
    %v8778 = vmul.f32 %v8746, %v8746
    %v8779 = vmul.f32 %v8747, %v8747
    %v8780 = vmul.f32 %v8748, %v8748
    %v8781 = vmul.f32 %v8749, %v8749
    %v8782 = vmul.f32 %v8750, %v8750
    %v8783 = vmul.f32 %v8751, %v8751
    %v8784 = vmul.f32 %v8752, %v8752
    %v8785 = vmul.f32 %v8753, %v8753
    %v8786 = vmul.f32 %v8754, %v8754
    %v8787 = vmul.f32 %v8755, %v8755
    %v8788 = vmul.f32 %v8756, %v8756
    %v8789 = vmul.f32 %v8757, %v8757
    %v8790 = vmul.f32 %v8758, %v8758
    %v8791 = vmul.f32 %v8759, %v8759
    %v8792 = vmul.f32 %v8760, %v8760
    %v8793 = vmul.f32 %v8761, %v8761
    %v8794 = vmul.f32 %v8762, %v8762
    %v8795 = vmul.f32 %v8763, %v8763
    %v8796 = vmul.f32 %v8764, %v8764
    %v8797 = vmul.f32 %v8765, %v8765
    %v8798 = vmul.f32 %v8766, %v8766
    %v8799 = vmul.f32 %v8767, %v8767
    %v8800 = vmul.f32 %v8768, %v8768
    %v8801 = vmul.f32 %v8769, %v8769
    %v8834 = vrot.slane %v8771, 7
    %v8835 = vsel %vm8623, %v8834, %v8770
    %v8836 = vrot.slane %v8772, 6
    %v8837 = vsel %vm8625, %v8836, %v8835
    %v8838 = vrot.slane %v8773, 5
    %v8839 = vsel %vm8627, %v8838, %v8837
    %v8840 = vrot.slane %v8774, 4
    %v8841 = vsel %vm8629, %v8840, %v8839
    %v8842 = vrot.slane %v8775, 3
    %v8843 = vsel %vm8631, %v8842, %v8841
    %v8844 = vrot.slane %v8776, 2
    %v8845 = vsel %vm8633, %v8844, %v8843
    %v8846 = vrot.slane %v8777, 1
    %v8847 = vsel %vm8635, %v8846, %v8845
    %v8848 = vrot.slane %v8779, 7
    %v8849 = vsel %vm8623, %v8848, %v8778
    %v8850 = vrot.slane %v8780, 6
    %v8851 = vsel %vm8625, %v8850, %v8849
    %v8852 = vrot.slane %v8781, 5
    %v8853 = vsel %vm8627, %v8852, %v8851
    %v8854 = vrot.slane %v8782, 4
    %v8855 = vsel %vm8629, %v8854, %v8853
    %v8856 = vrot.slane %v8783, 3
    %v8857 = vsel %vm8631, %v8856, %v8855
    %v8858 = vrot.slane %v8784, 2
    %v8859 = vsel %vm8633, %v8858, %v8857
    %v8860 = vrot.slane %v8785, 1
    %v8861 = vsel %vm8635, %v8860, %v8859
    %v8862 = vrot.slane %v8787, 7
    %v8863 = vsel %vm8623, %v8862, %v8786
    %v8864 = vrot.slane %v8788, 6
    %v8865 = vsel %vm8625, %v8864, %v8863
    %v8866 = vrot.slane %v8789, 5
    %v8867 = vsel %vm8627, %v8866, %v8865
    %v8868 = vrot.slane %v8790, 4
    %v8869 = vsel %vm8629, %v8868, %v8867
    %v8870 = vrot.slane %v8791, 3
    %v8871 = vsel %vm8631, %v8870, %v8869
    %v8872 = vrot.slane %v8792, 2
    %v8873 = vsel %vm8633, %v8872, %v8871
    %v8874 = vrot.slane %v8793, 1
    %v8875 = vsel %vm8635, %v8874, %v8873
    %v8876 = vrot.slane %v8795, 7
    %v8877 = vsel %vm8623, %v8876, %v8794
    %v8878 = vrot.slane %v8796, 6
    %v8879 = vsel %vm8625, %v8878, %v8877
    %v8880 = vrot.slane %v8797, 5
    %v8881 = vsel %vm8627, %v8880, %v8879
    %v8882 = vrot.slane %v8798, 4
    %v8883 = vsel %vm8629, %v8882, %v8881
    %v8884 = vrot.slane %v8799, 3
    %v8885 = vsel %vm8631, %v8884, %v8883
    %v8886 = vrot.slane %v8800, 2
    %v8887 = vsel %vm8633, %v8886, %v8885
    %v8888 = vrot.slane %v8801, 1
    %v8889 = vsel %vm8635, %v8888, %v8887
    %8894 = vadd.xlane.f32.xlu0 %v8847
    %v8895 = vpop.xlane.xlu0 %8894
    %8896 = vadd.xlane.f32.xlu0 %v8861
    %v8897 = vpop.xlane.xlu0 %8896
    %8898 = vadd.xlane.f32.xlu0 %v8875
    %v8899 = vpop.xlane.xlu0 %8898
    %8900 = vadd.xlane.f32.xlu0 %v8889
    %v8901 = vpop.xlane.xlu0 %8900
    %v8902 = vmul.f32 %v8895, %v295
    %v8903 = vmul.f32 %v8897, %v295
    %v8904 = vmul.f32 %v8899, %v295
    %v8905 = vmul.f32 %v8901, %v295
    %v8906 = vadd.f32 %v8902, 1e-05
    %v8907 = vadd.f32 %v8903, 1e-05
    %v8908 = vadd.f32 %v8904, 1e-05
    %v8909 = vadd.f32 %v8905, 1e-05
    %v8910 = vrsqrt.pop %v8906
    %v8911 = vrsqrt.pop %v8907
    %v8912 = vrsqrt.pop %v8908
    %v8913 = vrsqrt.pop %v8909
    %v8918 = vrot.slane %v8910, 1
    %v8919 = vrot.slane %v8910, 2
    %v8920 = vrot.slane %v8910, 3
    %v8921 = vrot.slane %v8910, 4
    %v8922 = vrot.slane %v8910, 5
    %v8923 = vrot.slane %v8910, 6
    %v8924 = vrot.slane %v8910, 7
    %v8925 = vrot.slane %v8911, 1
    %v8926 = vrot.slane %v8911, 2
    %v8927 = vrot.slane %v8911, 3
    %v8928 = vrot.slane %v8911, 4
    %v8929 = vrot.slane %v8911, 5
    %v8930 = vrot.slane %v8911, 6
    %v8931 = vrot.slane %v8911, 7
    %v8932 = vrot.slane %v8912, 1
    %v8933 = vrot.slane %v8912, 2
    %v8934 = vrot.slane %v8912, 3
    %v8935 = vrot.slane %v8912, 4
    %v8936 = vrot.slane %v8912, 5
    %v8937 = vrot.slane %v8912, 6
    %v8938 = vrot.slane %v8912, 7
    %v8939 = vrot.slane %v8913, 1
    %v8940 = vrot.slane %v8913, 2
    %v8941 = vrot.slane %v8913, 3
    %v8942 = vrot.slane %v8913, 4
    %v8943 = vrot.slane %v8913, 5
    %v8944 = vrot.slane %v8913, 6
    %v8945 = vrot.slane %v8913, 7
    %v8978 = vmul.f32 %v8738, %v8910
    %v8979 = vmul.f32 %v8739, %v8918
    %v8980 = vmul.f32 %v8740, %v8919
    %v8981 = vmul.f32 %v8741, %v8920
    %v8982 = vmul.f32 %v8742, %v8921
    %v8983 = vmul.f32 %v8743, %v8922
    %v8984 = vmul.f32 %v8744, %v8923
    %v8985 = vmul.f32 %v8745, %v8924
    %v8986 = vmul.f32 %v8746, %v8911
    %v8987 = vmul.f32 %v8747, %v8925
    %v8988 = vmul.f32 %v8748, %v8926
    %v8989 = vmul.f32 %v8749, %v8927
    %v8990 = vmul.f32 %v8750, %v8928
    %v8991 = vmul.f32 %v8751, %v8929
    %v8992 = vmul.f32 %v8752, %v8930
    %v8993 = vmul.f32 %v8753, %v8931
    %v8994 = vmul.f32 %v8754, %v8912
    %v8995 = vmul.f32 %v8755, %v8932
    %v8996 = vmul.f32 %v8756, %v8933
    %v8997 = vmul.f32 %v8757, %v8934
    %v8998 = vmul.f32 %v8758, %v8935
    %v8999 = vmul.f32 %v8759, %v8936
    %v9000 = vmul.f32 %v8760, %v8937
    %v9001 = vmul.f32 %v8761, %v8938
    %v9002 = vmul.f32 %v8762, %v8913
    %v9003 = vmul.f32 %v8763, %v8939
    %v9004 = vmul.f32 %v8764, %v8940
    %v9005 = vmul.f32 %v8765, %v8941
    %v9006 = vmul.f32 %v8766, %v8942
    %v9007 = vmul.f32 %v8767, %v8943
    %v9008 = vmul.f32 %v8768, %v8944
    %v9009 = vmul.f32 %v8769, %v8945
    %v9010 = vlaneseq
    %v9011 = vshrl.u32 %v9010, 7
    %v9012 = vsub.s32 5, %v9011
    %v9013 = vrot.slane %v129, %v9012
    %v9014 = vmul.f32 %v8978, %v9013
    %v9015 = vmul.f32 %v8979, %v9013
    %v9016 = vmul.f32 %v8980, %v9013
    %v9017 = vmul.f32 %v8981, %v9013
    %v9018 = vmul.f32 %v8982, %v9013
    %v9019 = vmul.f32 %v8983, %v9013
    %v9020 = vmul.f32 %v8984, %v9013
    %v9021 = vmul.f32 %v8985, %v9013
    %v9022 = vmul.f32 %v8986, %v9013
    %v9023 = vmul.f32 %v8987, %v9013
    %v9024 = vmul.f32 %v8988, %v9013
    %v9025 = vmul.f32 %v8989, %v9013
    %v9026 = vmul.f32 %v8990, %v9013
    %v9027 = vmul.f32 %v8991, %v9013
    %v9028 = vmul.f32 %v8992, %v9013
    %v9029 = vmul.f32 %v8993, %v9013
    %v9030 = vmul.f32 %v8994, %v9013
    %v9031 = vmul.f32 %v8995, %v9013
    %v9032 = vmul.f32 %v8996, %v9013
    %v9033 = vmul.f32 %v8997, %v9013
    %v9034 = vmul.f32 %v8998, %v9013
    %v9035 = vmul.f32 %v8999, %v9013
    %v9036 = vmul.f32 %v9000, %v9013
    %v9037 = vmul.f32 %v9001, %v9013
    %v9038 = vmul.f32 %v9002, %v9013
    %v9039 = vmul.f32 %v9003, %v9013
    %v9040 = vmul.f32 %v9004, %v9013
    %v9041 = vmul.f32 %v9005, %v9013
    %v9042 = vmul.f32 %v9006, %v9013
    %v9043 = vmul.f32 %v9007, %v9013
    %v9044 = vmul.f32 %v9008, %v9013
    %v9045 = vmul.f32 %v9009, %v9013
    %v9046 = vlaneseq
    %v9047 = vshrl.u32 %v9046, 7
    %v9048 = vsub.s32 6, %v9047
    %v9049 = vrot.slane %v129, %v9048
    %v9050 = vadd.f32 %v9014, %v9049
    %v9051 = vadd.f32 %v9015, %v9049
    %v9052 = vadd.f32 %v9016, %v9049
    %v9053 = vadd.f32 %v9017, %v9049
    %v9054 = vadd.f32 %v9018, %v9049
    %v9055 = vadd.f32 %v9019, %v9049
    %v9056 = vadd.f32 %v9020, %v9049
    %v9057 = vadd.f32 %v9021, %v9049
    %v9058 = vadd.f32 %v9022, %v9049
    %v9059 = vadd.f32 %v9023, %v9049
    %v9060 = vadd.f32 %v9024, %v9049
    %v9061 = vadd.f32 %v9025, %v9049
    %v9062 = vadd.f32 %v9026, %v9049
    %v9063 = vadd.f32 %v9027, %v9049
    %v9064 = vadd.f32 %v9028, %v9049
    %v9065 = vadd.f32 %v9029, %v9049
    %v9066 = vadd.f32 %v9030, %v9049
    %v9067 = vadd.f32 %v9031, %v9049
    %v9068 = vadd.f32 %v9032, %v9049
    %v9069 = vadd.f32 %v9033, %v9049
    %v9070 = vadd.f32 %v9034, %v9049
    %v9071 = vadd.f32 %v9035, %v9049
    %v9072 = vadd.f32 %v9036, %v9049
    %v9073 = vadd.f32 %v9037, %v9049
    %v9074 = vadd.f32 %v9038, %v9049
    %v9075 = vadd.f32 %v9039, %v9049
    %v9076 = vadd.f32 %v9040, %v9049
    %v9077 = vadd.f32 %v9041, %v9049
    %v9078 = vadd.f32 %v9042, %v9049
    %v9079 = vadd.f32 %v9043, %v9049
    %v9080 = vadd.f32 %v9044, %v9049
    %v9081 = vadd.f32 %v9045, %v9049
    %v9082 = vpack.c.bf16 %v9050, %v9050
    %v9083 = vpack.c.bf16 %v9051, %v9051
    %v9084 = vpack.c.bf16 %v9052, %v9052
    %v9085 = vpack.c.bf16 %v9053, %v9053
    %v9086 = vpack.c.bf16 %v9054, %v9054
    %v9087 = vpack.c.bf16 %v9055, %v9055
    %v9088 = vpack.c.bf16 %v9056, %v9056
    %v9089 = vpack.c.bf16 %v9057, %v9057
    %v9090 = vpack.c.bf16 %v9058, %v9058
    %v9091 = vpack.c.bf16 %v9059, %v9059
    %v9092 = vpack.c.bf16 %v9060, %v9060
    %v9093 = vpack.c.bf16 %v9061, %v9061
    %v9094 = vpack.c.bf16 %v9062, %v9062
    %v9095 = vpack.c.bf16 %v9063, %v9063
    %v9096 = vpack.c.bf16 %v9064, %v9064
    %v9097 = vpack.c.bf16 %v9065, %v9065
    %v9098 = vpack.c.bf16 %v9066, %v9066
    %v9099 = vpack.c.bf16 %v9067, %v9067
    %v9100 = vpack.c.bf16 %v9068, %v9068
    %v9101 = vpack.c.bf16 %v9069, %v9069
    %v9102 = vpack.c.bf16 %v9070, %v9070
    %v9103 = vpack.c.bf16 %v9071, %v9071
    %v9104 = vpack.c.bf16 %v9072, %v9072
    %v9105 = vpack.c.bf16 %v9073, %v9073
    %v9106 = vpack.c.bf16 %v9074, %v9074
    %v9107 = vpack.c.bf16 %v9075, %v9075
    %v9108 = vpack.c.bf16 %v9076, %v9076
    %v9109 = vpack.c.bf16 %v9077, %v9077
    %v9110 = vpack.c.bf16 %v9078, %v9078
    %v9111 = vpack.c.bf16 %v9079, %v9079
    %v9112 = vpack.c.bf16 %v9080, %v9080
    %v9113 = vpack.c.bf16 %v9081, %v9081
    %v9114 = vld [vmem:[#allocation13] sm:$0xf]
    %v9115 = vld [vmem:[#allocation13 + $0x4] sm:$0xf]
    %v9116 = vld [vmem:[#allocation13 + $0x8] sm:$0xf]
    %v9117 = vld [vmem:[#allocation13 + $0xc] sm:$0xf]
    %v9118 = vld [vmem:[#allocation13 + $0x10] sm:$0xf]
    %v9119 = vld [vmem:[#allocation13 + $0x14] sm:$0xf]
    %v9120 = vld [vmem:[#allocation13 + $0x18] sm:$0xf]
    %v9121 = vld [vmem:[#allocation13 + $0x1c] sm:$0xf]
    %v9122 = vld [vmem:[#allocation13 + $0x20] sm:$0xf]
    %v9123 = vld [vmem:[#allocation13 + $0x24] sm:$0xf]
    %v9124 = vld [vmem:[#allocation13 + $0x28] sm:$0xf]
    %v9125 = vld [vmem:[#allocation13 + $0x2c] sm:$0xf]
    %v9126 = vld [vmem:[#allocation13 + $0x30] sm:$0xf]
    %v9127 = vld [vmem:[#allocation13 + $0x34] sm:$0xf]
    %v9128 = vld [vmem:[#allocation13 + $0x38] sm:$0xf]
    %v9129 = vld [vmem:[#allocation13 + $0x3c] sm:$0xf]
    %v9162 = vunpack.c.l.b16 %v9082
    %v9163 = vunpack.c.l.b16 %v9083
    %v9164 = vunpack.c.l.b16 %v9084
    %v9165 = vunpack.c.l.b16 %v9085
    %v9166 = vunpack.c.l.b16 %v9086
    %v9167 = vunpack.c.l.b16 %v9087
    %v9168 = vunpack.c.l.b16 %v9088
    %v9169 = vunpack.c.l.b16 %v9089
    %v9170 = vunpack.c.l.b16 %v9090
    %v9171 = vunpack.c.l.b16 %v9091
    %v9172 = vunpack.c.l.b16 %v9092
    %v9173 = vunpack.c.l.b16 %v9093
    %v9174 = vunpack.c.l.b16 %v9094
    %v9175 = vunpack.c.l.b16 %v9095
    %v9176 = vunpack.c.l.b16 %v9096
    %v9177 = vunpack.c.l.b16 %v9097
    %v9178 = vunpack.c.l.b16 %v9098
    %v9179 = vunpack.c.l.b16 %v9099
    %v9180 = vunpack.c.l.b16 %v9100
    %v9181 = vunpack.c.l.b16 %v9101
    %v9182 = vunpack.c.l.b16 %v9102
    %v9183 = vunpack.c.l.b16 %v9103
    %v9184 = vunpack.c.l.b16 %v9104
    %v9185 = vunpack.c.l.b16 %v9105
    %v9186 = vunpack.c.l.b16 %v9106
    %v9187 = vunpack.c.l.b16 %v9107
    %v9188 = vunpack.c.l.b16 %v9108
    %v9189 = vunpack.c.l.b16 %v9109
    %v9190 = vunpack.c.l.b16 %v9110
    %v9191 = vunpack.c.l.b16 %v9111
    %v9192 = vunpack.c.l.b16 %v9112
    %v9193 = vunpack.c.l.b16 %v9113
    %v9194 = vrot.slane %v9163, 7
    %v9195 = vsel %vm8623, %v9194, %v9162
    %v9196 = vrot.slane %v9164, 6
    %v9197 = vsel %vm8625, %v9196, %v9195
    %v9198 = vrot.slane %v9165, 5
    %v9199 = vsel %vm8627, %v9198, %v9197
    %v9200 = vrot.slane %v9166, 4
    %v9201 = vsel %vm8629, %v9200, %v9199
    %v9202 = vrot.slane %v9167, 3
    %v9203 = vsel %vm8631, %v9202, %v9201
    %v9204 = vrot.slane %v9168, 2
    %v9205 = vsel %vm8633, %v9204, %v9203
    %v9206 = vrot.slane %v9169, 1
    %v9207 = vsel %vm8635, %v9206, %v9205
    %v9208 = vrot.slane %v9171, 7
    %v9209 = vsel %vm8623, %v9208, %v9170
    %v9210 = vrot.slane %v9172, 6
    %v9211 = vsel %vm8625, %v9210, %v9209
    %v9212 = vrot.slane %v9173, 5
    %v9213 = vsel %vm8627, %v9212, %v9211
    %v9214 = vrot.slane %v9174, 4
    %v9215 = vsel %vm8629, %v9214, %v9213
    %v9216 = vrot.slane %v9175, 3
    %v9217 = vsel %vm8631, %v9216, %v9215
    %v9218 = vrot.slane %v9176, 2
    %v9219 = vsel %vm8633, %v9218, %v9217
    %v9220 = vrot.slane %v9177, 1
    %v9221 = vsel %vm8635, %v9220, %v9219
    %v9222 = vrot.slane %v9179, 7
    %v9223 = vsel %vm8623, %v9222, %v9178
    %v9224 = vrot.slane %v9180, 6
    %v9225 = vsel %vm8625, %v9224, %v9223
    %v9226 = vrot.slane %v9181, 5
    %v9227 = vsel %vm8627, %v9226, %v9225
    %v9228 = vrot.slane %v9182, 4
    %v9229 = vsel %vm8629, %v9228, %v9227
    %v9230 = vrot.slane %v9183, 3
    %v9231 = vsel %vm8631, %v9230, %v9229
    %v9232 = vrot.slane %v9184, 2
    %v9233 = vsel %vm8633, %v9232, %v9231
    %v9234 = vrot.slane %v9185, 1
    %v9235 = vsel %vm8635, %v9234, %v9233
    %v9236 = vrot.slane %v9187, 7
    %v9237 = vsel %vm8623, %v9236, %v9186
    %v9238 = vrot.slane %v9188, 6
    %v9239 = vsel %vm8625, %v9238, %v9237
    %v9240 = vrot.slane %v9189, 5
    %v9241 = vsel %vm8627, %v9240, %v9239
    %v9242 = vrot.slane %v9190, 4
    %v9243 = vsel %vm8629, %v9242, %v9241
    %v9244 = vrot.slane %v9191, 3
    %v9245 = vsel %vm8631, %v9244, %v9243
    %v9246 = vrot.slane %v9192, 2
    %v9247 = vsel %vm8633, %v9246, %v9245
    %v9248 = vrot.slane %v9193, 1
    %v9249 = vsel %vm8635, %v9248, %v9247
    %v9250 = vpack.c.b16 %v9221, %v9207
    %v9251 = vpack.c.b16 %v9249, %v9235
    %v9270 = vunpack.c.l.b16 %v9114
    %v9271 = vunpack.c.l.b16 %v9115
    %v9272 = vunpack.c.l.b16 %v9116
    %v9273 = vunpack.c.l.b16 %v9117
    %v9274 = vunpack.c.l.b16 %v9118
    %v9275 = vunpack.c.l.b16 %v9119
    %v9276 = vunpack.c.l.b16 %v9120
    %v9277 = vunpack.c.l.b16 %v9121
    %v9278 = vunpack.c.l.b16 %v9122
    %v9279 = vunpack.c.l.b16 %v9123
    %v9280 = vunpack.c.l.b16 %v9124
    %v9281 = vunpack.c.l.b16 %v9125
    %v9282 = vunpack.c.l.b16 %v9126
    %v9283 = vunpack.c.l.b16 %v9127
    %v9284 = vunpack.c.l.b16 %v9128
    %v9285 = vunpack.c.l.b16 %v9129
    %v9286 = vpack.c.b16 %v9271, %v9270
    %v9287 = vpack.c.b16 %v9273, %v9272
    %v9288 = vpack.c.b16 %v9275, %v9274
    %v9289 = vpack.c.b16 %v9277, %v9276
    %v9290 = vpack.c.b16 %v9279, %v9278
    %v9291 = vpack.c.b16 %v9281, %v9280
    %v9292 = vpack.c.b16 %v9283, %v9282
    %v9293 = vpack.c.b16 %v9285, %v9284
    %9302 = vmatprep.subr.bf16.mxu0 0
    %9303 = vmatpush1.bf16.msra.mxu0 %v9286
    %9304 = vmatprep.subr.bf16.mxu0 0
    %9305 = vmatpush1.bf16.msra.mxu0 %v9287
    %9306 = vmatprep.subr.bf16.mxu0 0
    %9307 = vmatpush1.bf16.msra.mxu0 %v9288
    %9308 = vmatprep.subr.bf16.mxu0 0
    %9309 = vmatpush1.bf16.msra.mxu0 %v9289
    %9310 = vmatprep.subr.bf16.mxu0 0
    %9311 = vmatpush1.bf16.msra.mxu0 %v9290
    %9312 = vmatprep.subr.bf16.mxu0 0
    %9313 = vmatpush1.bf16.msra.mxu0 %v9291
    %9314 = vmatprep.subr.bf16.mxu0 0
    %9315 = vmatpush1.bf16.msra.mxu0 %v9292
    %9316 = vmatprep.subr.bf16.mxu0 0
    %9317 = vmatpush1.bf16.msra.mxu0 %v9293
    %9318 = vmatprep.subr.bf16.mxu0 0
    %9319 = vmatpush1.bf16.msra.mxu0 0
    %9320 = vmatprep.subr.bf16.mxu0 0
    %9321 = vmatpush1.bf16.msra.mxu0 0
    %9322 = vmatprep.subr.bf16.mxu0 0
    %9323 = vmatpush1.bf16.msra.mxu0 0
    %9324 = vmatprep.subr.bf16.mxu0 0
    %9325 = vmatpush1.bf16.msra.mxu0 0
    %9326 = vmatprep.subr.bf16.mxu0 0
    %9327 = vmatpush1.bf16.msra.mxu0 0
    %9328 = vmatprep.subr.bf16.mxu0 0
    %9329 = vmatpush1.bf16.msra.mxu0 0
    %9330 = vmatprep.subr.bf16.mxu0 0
    %9331 = vmatpush1.bf16.msra.mxu0 0
    %9332 = vmatprep.subr.bf16.mxu0 0
    %9333 = vmatpush1.bf16.msra.mxu0 0
    %9334 = vmatprep.mubr.bf16.mxu0 0
    %9335 = vmatmul.mubr.bf16.gmra.mrb[0].mxu0 %v9250
    %v9336 = vpop.f32.mrb[0].mxu0
    %v9337 = vadd.f32 0.0, %v9336
    %v9338 = vpop.f32.mrb[0].mxu0
    %v9339 = vpop.f32.mrb[0].mxu0
    %v9340 = vadd.f32 0.0, %v9339
    %v9341 = vpop.f32.mrb[0].mxu0
    %9342 = vmatprep.mubr.bf16.mxu0 0
    %9343 = vmatmul.mubr.bf16.gmra.mrb[0].mxu0 %v9251
    %v9344 = vpop.f32.mrb[0].mxu0
    %v9345 = vadd.f32 0.0, %v9344
    %v9346 = vpop.f32.mrb[0].mxu0
    %v9347 = vpop.f32.mrb[0].mxu0
    %v9348 = vadd.f32 0.0, %v9347
    %v9349 = vpop.f32.mrb[0].mxu0
    %9350 = vdwg.mxu0
    %9351 = vst [vmem:[#allocation16] sm:$0xff] %v9337
    %9352 = vst [vmem:[#allocation16 + $0x8] sm:$0xff] %v9340
    %9353 = vst [vmem:[#allocation16 + $0x10] sm:$0xff] %v9345
    %9354 = vst [vmem:[#allocation16 + $0x18] sm:$0xff] %v9348
    // Predicated region
    $region62: #{tpu_custom_call.1} parent=1 // pred_check
      _
    $region63: #{tpu_custom_call.1} parent=1 // pred_check_branch
      %9356 = sbr.rel (0) target = $region65
    $region64: #{tpu_custom_call.1} parent=1 // pred_region
      %s9358 = ssub.s32 512, 512
      %9359 = vsyncadd [#allocation6], %s9358
      %s9360 = sshll.u32 [#allocation16], 4
      %s9361 = int_to_ptr.vmem [resolvable:$true] %s9360
      %9366 = dma.vmem_to_hbm [thread:$0]  %s9361, 512, %s9, [#allocation6], 128, 128, 8
    $region65: #{tpu_custom_call.1} parent=1 // pred_fallthru
      _
    // Predicated region
    $region66: #{tpu_custom_call.1} parent=1 // pred_check
      _
    $region67: #{tpu_custom_call.1} parent=1 // pred_check_branch
      %9368 = sbr.rel (0) target = $region69
    $region68: #{tpu_custom_call.1} parent=1 // pred_region
      %9369 = dma.done [#allocation6], 512
    $region69: #{tpu_custom_call.1} parent=1 // pred_fallthru
      _
    %9370 = vsyncpa [#allocation5], 1
    %9371 = vsyncpa [#allocation8], 1
    %9372 = vsyncpa [#allocation11], 1
    %9373 = vsyncpa [#allocation14], 1
    %9374 = vsyncpa [#allocation6], 1

</llo_original>
